<compile_context>
chip_gen: v5e
topology: v5e:2x2
jax: 0.10.0
libtpu: 0.0.40
codegen_flags: <defaults>
</compile_context>

<pallas_src>
import functools

import numpy as np
import jax
import jax.numpy as jnp
from jax.experimental import pallas as pl
from jax.experimental.pallas import tpu as pltpu


# ----------------------------------------------------------------------------
# Fused recurrent kernel: conv11/21 -> conv12/22 -> conv31..34 -> conv41..44
# -> LSTM state update -> deconv1.  Everything stays in VMEM; all spatial
# plumbing (im2col / pad / concat) is pre-folded into constant matrices.
# ----------------------------------------------------------------------------
def _recurrent_kernel(featA_ref, featB_ref, hflat_ref,
                      wtapA_ref, wtapB_ref, bfront_ref, sel_ref,
                      m12_ref, m22_ref, b12_ref, b22_ref,
                      aa_ref, ba_ref, bh_ref, bc_ref,
                      v3_ref, b3e_ref, u4_ref, b4e_ref,
                      l1_ref, r1_ref, b1e_ref,
                      h_ref, c_ref, out1_ref):
    dot = lambda a, b: jnp.dot(a, b, preferred_element_type=jnp.float32)

    # conv11 / conv21 (3x3 valid, 512 -> 1) on relu(features): one matmul per
    # feature over interleaved per-tap rows, then constant 49->25 selections.
    fa = jnp.maximum(featA_ref[...], 0.0)
    fb = jnp.maximum(featB_ref[...], 0.0)
    t = dot(wtapA_ref[...], fa) + dot(wtapB_ref[...], fb)            # (18, 49)
    acc = jnp.zeros((2, 25), jnp.float32)
    for k in range(9):
        acc = acc + dot(t[2 * k:2 * k + 2, :], sel_ref[:, 25 * k:25 * (k + 1)])
    onetwo = jnp.maximum(acc + bfront_ref[...], 0.0)                  # (2, 25)

    # conv12 / conv22 (3x3, pad 1) folded into dense 25x25 matrices.
    one5 = jnp.maximum(dot(onetwo[0:1, :], m12_ref[...]) + b12_ref[...], 0.0)
    two5 = jnp.maximum(dot(onetwo[1:2, :], m22_ref[...]) + b22_ref[...], 0.0)

    # H = [one5 | h_state | two5]  (5, 15) via constant flat->2D bridge matmuls.
    aa = aa_ref[...]
    h_big = (dot(aa * one5, ba_ref[...])
             + dot(aa * hflat_ref[...], bh_ref[...])
             + dot(aa * two5, bc_ref[...]))                           # (5, 15)

    # conv31..34 (9x9 valid on the zero-extended 15x15 map) -> rows (oy, ch).
    hm = jnp.zeros((448, 7), jnp.float32)
    for kx in range(9):
        hm = hm + dot(v3_ref[:, 5 * kx:5 * (kx + 1)], h_big[:, kx:kx + 7])
    hm = jnp.maximum(hm + b3e_ref[...], 0.0)                          # (448, 7)

    # conv41..44 (3x3 valid) -> 4 gates, rows (gate, py).
    g = jnp.zeros((20, 5), jnp.float32)
    for tx in range(3):
        g = g + dot(u4_ref[:, 448 * tx:448 * (tx + 1)], hm[:, tx:tx + 5])
    g = g + b4e_ref[...]                                              # (20, 5)

    f_g = jax.nn.sigmoid(g[0:5, :])
    i_g = jnp.tanh(g[5:10, :])
    c_g = jax.nn.sigmoid(g[10:15, :])
    o_g = jax.nn.sigmoid(g[15:20, :])
    h_old = h_big[:, 5:10]                       # == previous h_state (5, 5)
    c_new = f_g * h_old + i_g * c_g              # faithful: f * old hidden state
    h_new = o_g * jnp.tanh(c_new)
    c_ref[...] = c_new
    h_ref[...] = h_new

    # deconv1 (10x10, stride 4) in spatial-row form -> (78, 26) = (3, 26, 26).
    z = dot(l1_ref[...], h_new)                                       # (780, 5)
    o1 = jnp.zeros((78, 26), jnp.float32)
    for kx in range(10):
        o1 = o1 + dot(z[78 * kx:78 * (kx + 1), :], r1_ref[:, 26 * kx:26 * (kx + 1)])
    out1_ref[...] = jnp.maximum(o1 + b1e_ref[...], 0.0)


# ----------------------------------------------------------------------------
# Small shared matmul(+bias+act) kernel for the decoder phase matmuls.
# ----------------------------------------------------------------------------
def _mm_bias_act_kernel(w_ref, x_ref, b_ref, o_ref, *, act):
    acc = jnp.dot(w_ref[...], x_ref[...], preferred_element_type=jnp.float32)
    acc = acc + b_ref[...]
    if act == "relu":
        acc = jnp.maximum(acc, 0.0)
    o_ref[...] = acc.astype(o_ref.dtype)


def matmul_bias_act(w, x, b, *, act="none", out_dtype=jnp.float32):
    n, _ = w.shape
    _, m = x.shape
    return pl.pallas_call(
        functools.partial(_mm_bias_act_kernel, act=act),
        out_shape=jax.ShapeDtypeStruct((n, m), out_dtype),
    )(w, x, b)


# ----------------------------------------------------------------------------
# Small XLA helpers (only used on the non-recurrent decoder glue).
# ----------------------------------------------------------------------------
def _im2col_km(x, kh, kw):
    """(C,H,W) -> patches (C*kh*kw, Ho*Wo); rows (c, ky, kx), cols (y, x)."""
    c, h, w = x.shape
    ho, wo = h - kh + 1, w - kw + 1
    cols = [x[:, dy:dy + ho, dx:dx + wo] for dy in range(kh) for dx in range(kw)]
    p = jnp.stack(cols, axis=1)
    return p.reshape(c * kh * kw, ho * wo)


# ----------------------------------------------------------------------------
# Raw parameters (deterministic, shapes from the module's __init__)
# ----------------------------------------------------------------------------
def init_params(key):
    def conv_init(k, cout, cin, ksz):
        kw, kb = jax.random.split(k)
        w = jax.random.normal(kw, (cout, cin, ksz, ksz), jnp.float32) / jnp.sqrt(cin * ksz * ksz)
        b = 0.01 * jax.random.normal(kb, (cout,), jnp.float32)
        return w, b

    def deconv_init(k, cin, cout, ksz):
        kw, kb = jax.random.split(k)
        w = jax.random.normal(kw, (cin, cout, ksz, ksz), jnp.float32) / jnp.sqrt(cin * ksz * ksz)
        b = 0.01 * jax.random.normal(kb, (cout,), jnp.float32)
        return w, b

    ks = jax.random.split(key, 15)
    p = {}
    p["conv11"] = conv_init(ks[0], 1, 512, 3)
    p["conv12"] = conv_init(ks[1], 1, 1, 3)
    p["conv21"] = conv_init(ks[2], 1, 512, 3)
    p["conv22"] = conv_init(ks[3], 1, 1, 3)
    p["conv31"] = conv_init(ks[4], 16, 1, 9)
    p["conv41"] = conv_init(ks[5], 1, 16, 3)
    p["conv32"] = conv_init(ks[6], 16, 1, 9)
    p["conv42"] = conv_init(ks[7], 1, 16, 3)
    p["conv33"] = conv_init(ks[8], 16, 1, 9)
    p["conv43"] = conv_init(ks[9], 1, 16, 3)
    p["conv34"] = conv_init(ks[10], 16, 1, 9)
    p["conv44"] = conv_init(ks[11], 1, 16, 3)
    p["deconv1"] = deconv_init(ks[12], 1, 3, 10)
    p["deconv2"] = deconv_init(ks[13], 3, 3, 11)
    p["deconv3"] = deconv_init(ks[14], 3, 3, 4)
    return p


# ----------------------------------------------------------------------------
# One-time weight packing (hoisted out of the per-step forward).
# ----------------------------------------------------------------------------
def pack_params(p):
    f32 = np.float32
    A = lambda x: np.asarray(x, dtype=f32)
    P = {}

    # conv11 / conv21: interleaved per-tap rows (row 2k = conv11 tap, 2k+1 = conv21).
    w11, b11 = A(p["conv11"][0]), A(p["conv11"][1])
    w21, b21 = A(p["conv21"][0]), A(p["conv21"][1])
    wtapA = np.zeros((18, 512), f32)
    wtapB = np.zeros((18, 512), f32)
    for ky in range(3):
        for kx in range(3):
            k = ky * 3 + kx
            wtapA[2 * k, :] = w11[0, :, ky, kx]
            wtapB[2 * k + 1, :] = w21[0, :, ky, kx]
    P["wtapA"], P["wtapB"] = wtapA, wtapB
    P["b_front"] = np.array([[b11[0]], [b21[0]]], f32)

    # 49 -> 25 tap-selection matrices, packed (49, 9*25).
    sel = np.zeros((49, 9 * 25), f32)
    for ky in range(3):
        for kx in range(3):
            k = ky * 3 + kx
            for oy in range(5):
                for ox in range(5):
                    sel[(oy + ky) * 7 + (ox + kx), 25 * k + oy * 5 + ox] = 1.0
    P["sel25"] = sel

    # conv12 / conv22 (3x3, padding=1) folded into dense 25x25 matrices.
    def dense3x3_same(w):
        m = np.zeros((25, 25), f32)
        for yo in range(5):
            for xo in range(5):
                for dy in range(3):
                    for dx in range(3):
                        yi, xi = yo + dy - 1, xo + dx - 1
                        if 0 <= yi < 5 and 0 <= xi < 5:
                            m[yi * 5 + xi, yo * 5 + xo] = w[0, 0, dy, dx]
        return m
    P["m12"] = dense3x3_same(A(p["conv12"][0]))
    P["m22"] = dense3x3_same(A(p["conv22"][0]))
    P["b12"] = np.full((1, 1), A(p["conv12"][1])[0], f32)
    P["b22"] = np.full((1, 1), A(p["conv22"][1])[0], f32)

    # Flat (1,25) row-vector -> columns of H (5,15) bridge matrices.
    aa = np.zeros((5, 25), f32)
    ba = np.zeros((25, 15), f32)
    bh = np.zeros((25, 15), f32)
    bc = np.zeros((25, 15), f32)
    for r in range(5):
        for c in range(5):
            j = r * 5 + c
            aa[r, j] = 1.0
            ba[j, c] = 1.0
            bh[j, 5 + c] = 1.0
            bc[j, 10 + c] = 1.0
    P["aa"], P["ba"], P["bh"], P["bc"] = aa, ba, bh, bc

    # conv31..34 (stacked 64 channels) structured per-kx weights (448, 9*5).
    w3 = np.concatenate([A(p[n][0]) for n in ("conv31", "conv32", "conv33", "conv34")], axis=0)
    b3 = np.concatenate([A(p[n][1]) for n in ("conv31", "conv32", "conv33", "conv34")])
    v3 = np.zeros((448, 9 * 5), f32)
    for kx in range(9):
        for oy in range(7):
            for c in range(64):
                for r in range(5):
                    ky = r - oy
                    if 0 <= ky <= 8:
                        v3[oy * 64 + c, 5 * kx + r] = w3[c, 0, ky, kx]
    P["v3"] = v3
    b3e = np.zeros((448, 1), f32)
    for oy in range(7):
        b3e[oy * 64:(oy + 1) * 64, 0] = b3
    P["b3e"] = b3e

    # conv41..44 structured per-tx weights (20, 3*448) (block-diagonal over gates).
    u4 = np.zeros((20, 3 * 448), f32)
    b4e = np.zeros((20, 1), f32)
    for g, n in enumerate(("conv41", "conv42", "conv43", "conv44")):
        w4, b4 = A(p[n][0]), A(p[n][1])          # (1,16,3,3), (1,)
        b4e[g * 5:(g + 1) * 5, 0] = b4[0]
        for tx in range(3):
            for py in range(5):
                for oy in range(7):
                    ty = oy - py
                    if 0 <= ty <= 2:
                        for ch in range(16):
                            u4[g * 5 + py, 448 * tx + oy * 64 + g * 16 + ch] = w4[0, ch, ty, tx]
    P["u4"], P["b4e"] = u4, b4e

    # deconv1 (10x10, stride 4) structured spatial-row form.
    wd1, bd1 = A(p["deconv1"][0]), A(p["deconv1"][1])     # (1,3,10,10), (3,)
    l1 = np.zeros((780, 5), f32)                          # rows: kx*78 + co*26 + gy
    r1 = np.zeros((5, 10 * 26), f32)                      # cols: 26*kx + gx
    for kx in range(10):
        for ix in range(5):
            r1[ix, 26 * kx + 4 * ix + kx] = 1.0
        for co in range(3):
            for gy in range(26):
                for iy in range(5):
                    ky = gy - 4 * iy
                    if 0 <= ky <= 9:
                        l1[kx * 78 + co * 26 + gy, iy] = wd1[0, co, ky, kx]
    P["l1"], P["r1"] = l1, r1
    b1e = np.zeros((78, 1), f32)
    for co in range(3):
        b1e[co * 26:(co + 1) * 26, 0] = bd1[co]
    P["b1e"] = b1e

    # deconv2 / deconv3 sub-pixel (stride-phase) weights.
    def deconv_phase(w, b, stride):
        cin, cout, kh, kw = w.shape
        s = stride
        t = -(-kh // s)
        kpad = s * t
        wp = np.zeros((cin, cout, kpad, kpad), f32)
        wp[:, :, :kh, :kw] = w
        wr = wp.reshape(cin, cout, t, s, t, s)
        wf = wr[:, :, ::-1, :, ::-1, :]                  # flip taps
        wmat = wf.transpose(3, 5, 1, 0, 2, 4).reshape(s * s * cout, cin * t * t)
        bmat = np.tile(np.asarray(b, f32), s * s).reshape(s * s * cout, 1)
        return np.ascontiguousarray(wmat), bmat
    P["w2mat"], P["b2vec"] = deconv_phase(A(p["deconv2"][0]), p["deconv2"][1], 4)
    P["w3mat"], P["b3vec"] = deconv_phase(A(p["deconv3"][0]), p["deconv3"][1], 2)
    return P


# ----------------------------------------------------------------------------
# Forward pass (mirrors model.forward)
# ----------------------------------------------------------------------------
def forward(packed, x_img, y_img, feat_one, feat_two, c_state, h_state):
    # x_img, y_img : (1,3,224,224) float32 scaled image tensors
    # feat_one/two : (1,512,7,7) resnet18 layer4 features of x_img / y_img
    # h_state, c_state : (5,5)
    del c_state  # temp_c_state is cloned but never used in the original forward
    one = x_img / 255.0
    two = y_img / 250.0                   # faithful to the original's 250.0
    one1 = one.reshape(1, 224, 224, 3)    # same memory-reinterpreting .view as torch
    two1 = two.reshape(1, 224, 224, 3)

    featA = feat_one.reshape(512, 49)
    featB = feat_two.reshape(512, 49)
    hflat = h_state.reshape(1, 25)

    # --- fused recurrent kernel: encoder + gates + LSTM + deconv1 -------------
    h_new, c_new, out1s = pl.pallas_call(
        _recurrent_kernel,
        out_shape=(jax.ShapeDtypeStruct((5, 5), jnp.float32),
                   jax.ShapeDtypeStruct((5, 5), jnp.float32),
                   jax.ShapeDtypeStruct((78, 26), jnp.float32)),
    )(featA, featB, hflat,
      packed["wtapA"], packed["wtapB"], packed["b_front"], packed["sel25"],
      packed["m12"], packed["m22"], packed["b12"], packed["b22"],
      packed["aa"], packed["ba"], packed["bh"], packed["bc"],
      packed["v3"], packed["b3e"], packed["u4"], packed["b4e"],
      packed["l1"], packed["r1"], packed["b1e"])

    # --- deconv2 (phase form, relu), bf16 output ------------------------------
    out1 = out1s.reshape(3, 26, 26)
    xp2 = jnp.pad(out1, ((0, 0), (2, 2), (2, 2)))                 # (3, 30, 30)
    patches2 = _im2col_km(xp2, 3, 3)                              # (27, 784)
    y2 = matmul_bias_act(packed["w2mat"], patches2, packed["b2vec"],
                         act="relu", out_dtype=jnp.bfloat16)      # (48, 784)

    # phase interleave -> (3,112,112), crop to 111, pad, im2col for deconv3
    out2 = y2.reshape(4, 4, 3, 28, 28).transpose(2, 3, 0, 4, 1).reshape(3, 112, 112)
    out2 = out2[:, :111, :111]
    xp3 = jnp.pad(out2, ((0, 0), (1, 1), (1, 1)))                 # (3,113,113) bf16
    patches3 = _im2col_km(xp3, 2, 2)                              # (12, 12544) bf16

    # --- deconv3 (phase form, no act), lane-dense 12544-wide matmul -----------
    y3 = matmul_bias_act(packed["w3mat"], patches3, packed["b3vec"],
                         act="none", out_dtype=jnp.float32)       # (12, 12544)
    out5 = y3.reshape(2, 2, 3, 112, 112).transpose(2, 3, 0, 4, 1).reshape(3, 224, 224)

    return (h_new.reshape(1, 1, 5, 5), c_new.reshape(1, 1, 5, 5),
            one1[0], out5.reshape(224, 224, 3),
            two1[0], out5)


# ----------------------------------------------------------------------------
if __name__ == "__main__":
    key = jax.random.PRNGKey(0)
    kp, kx, ky, kf1, kf2, kh, kc = jax.random.split(key, 7)
    params = init_params(kp)

    # One-time weight packing (hoisted off the per-step critical path).
    packed = jax.tree_util.tree_map(jnp.asarray, pack_params(params))
    packed["w3mat"] = packed["w3mat"].astype(jnp.bfloat16)   # decoder tail is bf16

    x_img = jax.random.uniform(kx, (1, 3, 224, 224), jnp.float32)
    y_img = jax.random.uniform(ky, (1, 3, 224, 224), jnp.float32)
    feat_one = jax.random.normal(kf1, (1, 512, 7, 7), jnp.float32)
    feat_two = jax.random.normal(kf2, (1, 512, 7, 7), jnp.float32)
    h_state = jax.random.normal(kh, (5, 5), jnp.float32)
    c_state = jax.random.normal(kc, (5, 5), jnp.float32)

    fwd = jax.jit(forward)
    outs = fwd(packed, x_img, y_img, feat_one, feat_two, c_state, h_state)
    outs = jax.block_until_ready(outs)

    assert outs[0].shape == (1, 1, 5, 5)      # h_state
    assert outs[1].shape == (1, 1, 5, 5)      # c_state
    assert outs[2].shape == (224, 224, 3)     # one1[0]
    assert outs[3].shape == (224, 224, 3)     # out5 viewed as (224,224,3)
    assert outs[4].shape == (224, 224, 3)     # two1[0]
    assert outs[5].shape == (3, 224, 224)     # out5[0]
    print("KERNEL_OK")
</pallas_src>

<mosaic_0001>
module attributes {stable_mosaic.version = 11 : i64} {
  func.func @_recurrent_kernel(%arg0: memref<512x49xf32, #tpu.memory_space<vmem>>, %arg1: memref<512x49xf32, #tpu.memory_space<vmem>>, %arg2: memref<1x25xf32, #tpu.memory_space<vmem>>, %arg3: memref<18x512xf32, #tpu.memory_space<vmem>>, %arg4: memref<18x512xf32, #tpu.memory_space<vmem>>, %arg5: memref<2x1xf32, #tpu.memory_space<vmem>>, %arg6: memref<49x225xf32, #tpu.memory_space<vmem>>, %arg7: memref<25x25xf32, #tpu.memory_space<vmem>>, %arg8: memref<25x25xf32, #tpu.memory_space<vmem>>, %arg9: memref<1x1xf32, #tpu.memory_space<vmem>>, %arg10: memref<1x1xf32, #tpu.memory_space<vmem>>, %arg11: memref<5x25xf32, #tpu.memory_space<vmem>>, %arg12: memref<25x15xf32, #tpu.memory_space<vmem>>, %arg13: memref<25x15xf32, #tpu.memory_space<vmem>>, %arg14: memref<25x15xf32, #tpu.memory_space<vmem>>, %arg15: memref<448x45xf32, #tpu.memory_space<vmem>>, %arg16: memref<448x1xf32, #tpu.memory_space<vmem>>, %arg17: memref<20x1344xf32, #tpu.memory_space<vmem>>, %arg18: memref<20x1xf32, #tpu.memory_space<vmem>>, %arg19: memref<780x5xf32, #tpu.memory_space<vmem>>, %arg20: memref<5x260xf32, #tpu.memory_space<vmem>>, %arg21: memref<78x1xf32, #tpu.memory_space<vmem>>, %arg22: memref<5x5xf32, #tpu.memory_space<vmem>>, %arg23: memref<5x5xf32, #tpu.memory_space<vmem>>, %arg24: memref<78x26xf32, #tpu.memory_space<vmem>>) attributes {dimension_semantics = [], scalar_prefetch = 0 : i64, scratch_operands = 0 : i64, tpu.core_type = #tpu.core_type<tc>} {
    %c0 = arith.constant 0 : index
    %c0_0 = arith.constant 0 : index
    %0 = vector.load %arg0[%c0, %c0_0] : memref<512x49xf32, #tpu.memory_space<vmem>>, vector<512x49xf32>
    %cst = arith.constant 0.000000e+00 : f32
    %1 = vector.broadcast %cst : f32 to vector<512x49xf32>
    %2 = arith.maximumf %0, %1 : vector<512x49xf32>
    %c0_1 = arith.constant 0 : index
    %c0_2 = arith.constant 0 : index
    %3 = vector.load %arg1[%c0_1, %c0_2] : memref<512x49xf32, #tpu.memory_space<vmem>>, vector<512x49xf32>
    %cst_3 = arith.constant 0.000000e+00 : f32
    %4 = vector.broadcast %cst_3 : f32 to vector<512x49xf32>
    %5 = arith.maximumf %3, %4 : vector<512x49xf32>
    %c0_4 = arith.constant 0 : index
    %c0_5 = arith.constant 0 : index
    %6 = vector.load %arg3[%c0_4, %c0_5] : memref<18x512xf32, #tpu.memory_space<vmem>>, vector<18x512xf32>
    %cst_6 = arith.constant dense<0.000000e+00> : vector<18x49xf32>
    %7 = tpu.matmul %6, %2, %cst_6 {dimension_numbers = #tpu.dot_dimension_numbers<[1], [0], [0], [1], [0, 0, 1, 1], [], []>} : vector<18x512xf32>, vector<512x49xf32>, vector<18x49xf32> -> vector<18x49xf32>
    %c0_7 = arith.constant 0 : index
    %c0_8 = arith.constant 0 : index
    %8 = vector.load %arg4[%c0_7, %c0_8] : memref<18x512xf32, #tpu.memory_space<vmem>>, vector<18x512xf32>
    %cst_9 = arith.constant dense<0.000000e+00> : vector<18x49xf32>
    %9 = tpu.matmul %8, %5, %cst_9 {dimension_numbers = #tpu.dot_dimension_numbers<[1], [0], [0], [1], [0, 0, 1, 1], [], []>} : vector<18x512xf32>, vector<512x49xf32>, vector<18x49xf32> -> vector<18x49xf32>
    %10 = arith.addf %7, %9 : vector<18x49xf32>
    %cst_10 = arith.constant 0.000000e+00 : f32
    %11 = vector.broadcast %cst_10 : f32 to vector<2x25xf32>
    %12 = vector.extract_strided_slice %10 {offsets = [0, 0], sizes = [2, 49], strides = [1, 1]} : vector<18x49xf32> to vector<2x49xf32>
    %c0_11 = arith.constant 0 : index
    %c0_12 = arith.constant 0 : index
    %13 = vector.load %arg6[%c0_11, %c0_12] : memref<49x225xf32, #tpu.memory_space<vmem>>, vector<49x25xf32>
    %cst_13 = arith.constant dense<0.000000e+00> : vector<2x25xf32>
    %14 = tpu.matmul %12, %13, %cst_13 {dimension_numbers = #tpu.dot_dimension_numbers<[1], [0], [0], [1], [0, 0, 1, 1], [], []>} : vector<2x49xf32>, vector<49x25xf32>, vector<2x25xf32> -> vector<2x25xf32>
    %15 = arith.addf %11, %14 : vector<2x25xf32>
    %16 = vector.extract_strided_slice %10 {offsets = [2, 0], sizes = [2, 49], strides = [1, 1]} : vector<18x49xf32> to vector<2x49xf32>
    %c0_14 = arith.constant 0 : index
    %c25 = arith.constant 25 : index
    %17 = vector.load %arg6[%c0_14, %c25] : memref<49x225xf32, #tpu.memory_space<vmem>>, vector<49x25xf32>
    %cst_15 = arith.constant dense<0.000000e+00> : vector<2x25xf32>
    %18 = tpu.matmul %16, %17, %cst_15 {dimension_numbers = #tpu.dot_dimension_numbers<[1], [0], [0], [1], [0, 0, 1, 1], [], []>} : vector<2x49xf32>, vector<49x25xf32>, vector<2x25xf32> -> vector<2x25xf32>
    %19 = arith.addf %15, %18 : vector<2x25xf32>
    %20 = vector.extract_strided_slice %10 {offsets = [4, 0], sizes = [2, 49], strides = [1, 1]} : vector<18x49xf32> to vector<2x49xf32>
    %c0_16 = arith.constant 0 : index
    %c50 = arith.constant 50 : index
    %21 = vector.load %arg6[%c0_16, %c50] : memref<49x225xf32, #tpu.memory_space<vmem>>, vector<49x25xf32>
    %cst_17 = arith.constant dense<0.000000e+00> : vector<2x25xf32>
    %22 = tpu.matmul %20, %21, %cst_17 {dimension_numbers = #tpu.dot_dimension_numbers<[1], [0], [0], [1], [0, 0, 1, 1], [], []>} : vector<2x49xf32>, vector<49x25xf32>, vector<2x25xf32> -> vector<2x25xf32>
    %23 = arith.addf %19, %22 : vector<2x25xf32>
    %24 = vector.extract_strided_slice %10 {offsets = [6, 0], sizes = [2, 49], strides = [1, 1]} : vector<18x49xf32> to vector<2x49xf32>
    %c0_18 = arith.constant 0 : index
    %c75 = arith.constant 75 : index
    %25 = vector.load %arg6[%c0_18, %c75] : memref<49x225xf32, #tpu.memory_space<vmem>>, vector<49x25xf32>
    %cst_19 = arith.constant dense<0.000000e+00> : vector<2x25xf32>
    %26 = tpu.matmul %24, %25, %cst_19 {dimension_numbers = #tpu.dot_dimension_numbers<[1], [0], [0], [1], [0, 0, 1, 1], [], []>} : vector<2x49xf32>, vector<49x25xf32>, vector<2x25xf32> -> vector<2x25xf32>
    %27 = arith.addf %23, %26 : vector<2x25xf32>
    %28 = vector.extract_strided_slice %10 {offsets = [8, 0], sizes = [2, 49], strides = [1, 1]} : vector<18x49xf32> to vector<2x49xf32>
    %c0_20 = arith.constant 0 : index
    %c100 = arith.constant 100 : index
    %29 = vector.load %arg6[%c0_20, %c100] : memref<49x225xf32, #tpu.memory_space<vmem>>, vector<49x25xf32>
    %cst_21 = arith.constant dense<0.000000e+00> : vector<2x25xf32>
    %30 = tpu.matmul %28, %29, %cst_21 {dimension_numbers = #tpu.dot_dimension_numbers<[1], [0], [0], [1], [0, 0, 1, 1], [], []>} : vector<2x49xf32>, vector<49x25xf32>, vector<2x25xf32> -> vector<2x25xf32>
    %31 = arith.addf %27, %30 : vector<2x25xf32>
    %32 = vector.extract_strided_slice %10 {offsets = [10, 0], sizes = [2, 49], strides = [1, 1]} : vector<18x49xf32> to vector<2x49xf32>
    %c0_22 = arith.constant 0 : index
    %c125 = arith.constant 125 : index
    %33 = vector.load %arg6[%c0_22, %c125] : memref<49x225xf32, #tpu.memory_space<vmem>>, vector<49x25xf32>
    %cst_23 = arith.constant dense<0.000000e+00> : vector<2x25xf32>
    %34 = tpu.matmul %32, %33, %cst_23 {dimension_numbers = #tpu.dot_dimension_numbers<[1], [0], [0], [1], [0, 0, 1, 1], [], []>} : vector<2x49xf32>, vector<49x25xf32>, vector<2x25xf32> -> vector<2x25xf32>
    %35 = arith.addf %31, %34 : vector<2x25xf32>
    %36 = vector.extract_strided_slice %10 {offsets = [12, 0], sizes = [2, 49], strides = [1, 1]} : vector<18x49xf32> to vector<2x49xf32>
    %c0_24 = arith.constant 0 : index
    %c150 = arith.constant 150 : index
    %37 = vector.load %arg6[%c0_24, %c150] : memref<49x225xf32, #tpu.memory_space<vmem>>, vector<49x25xf32>
    %cst_25 = arith.constant dense<0.000000e+00> : vector<2x25xf32>
    %38 = tpu.matmul %36, %37, %cst_25 {dimension_numbers = #tpu.dot_dimension_numbers<[1], [0], [0], [1], [0, 0, 1, 1], [], []>} : vector<2x49xf32>, vector<49x25xf32>, vector<2x25xf32> -> vector<2x25xf32>
    %39 = arith.addf %35, %38 : vector<2x25xf32>
    %40 = vector.extract_strided_slice %10 {offsets = [14, 0], sizes = [2, 49], strides = [1, 1]} : vector<18x49xf32> to vector<2x49xf32>
    %c0_26 = arith.constant 0 : index
    %c175 = arith.constant 175 : index
    %41 = vector.load %arg6[%c0_26, %c175] : memref<49x225xf32, #tpu.memory_space<vmem>>, vector<49x25xf32>
    %cst_27 = arith.constant dense<0.000000e+00> : vector<2x25xf32>
    %42 = tpu.matmul %40, %41, %cst_27 {dimension_numbers = #tpu.dot_dimension_numbers<[1], [0], [0], [1], [0, 0, 1, 1], [], []>} : vector<2x49xf32>, vector<49x25xf32>, vector<2x25xf32> -> vector<2x25xf32>
    %43 = arith.addf %39, %42 : vector<2x25xf32>
    %44 = vector.extract_strided_slice %10 {offsets = [16, 0], sizes = [2, 49], strides = [1, 1]} : vector<18x49xf32> to vector<2x49xf32>
    %c0_28 = arith.constant 0 : index
    %c200 = arith.constant 200 : index
    %45 = vector.load %arg6[%c0_28, %c200] : memref<49x225xf32, #tpu.memory_space<vmem>>, vector<49x25xf32>
    %cst_29 = arith.constant dense<0.000000e+00> : vector<2x25xf32>
    %46 = tpu.matmul %44, %45, %cst_29 {dimension_numbers = #tpu.dot_dimension_numbers<[1], [0], [0], [1], [0, 0, 1, 1], [], []>} : vector<2x49xf32>, vector<49x25xf32>, vector<2x25xf32> -> vector<2x25xf32>
    %47 = arith.addf %43, %46 : vector<2x25xf32>
    %c0_30 = arith.constant 0 : index
    %c0_31 = arith.constant 0 : index
    %48 = vector.load %arg5[%c0_30, %c0_31] : memref<2x1xf32, #tpu.memory_space<vmem>>, vector<2x1xf32>
    %49 = vector.broadcast %48 : vector<2x1xf32> to vector<2x25xf32>
    %50 = arith.addf %47, %49 : vector<2x25xf32>
    %cst_32 = arith.constant 0.000000e+00 : f32
    %51 = vector.broadcast %cst_32 : f32 to vector<2x25xf32>
    %52 = arith.maximumf %50, %51 : vector<2x25xf32>
    %53 = vector.extract_strided_slice %52 {offsets = [0, 0], sizes = [1, 25], strides = [1, 1]} : vector<2x25xf32> to vector<1x25xf32>
    %c0_33 = arith.constant 0 : index
    %c0_34 = arith.constant 0 : index
    %54 = vector.load %arg7[%c0_33, %c0_34] : memref<25x25xf32, #tpu.memory_space<vmem>>, vector<25x25xf32>
    %cst_35 = arith.constant dense<0.000000e+00> : vector<1x25xf32>
    %55 = tpu.matmul %53, %54, %cst_35 {dimension_numbers = #tpu.dot_dimension_numbers<[1], [0], [0], [1], [0, 0, 1, 1], [], []>} : vector<1x25xf32>, vector<25x25xf32>, vector<1x25xf32> -> vector<1x25xf32>
    %c0_36 = arith.constant 0 : index
    %c0_37 = arith.constant 0 : index
    %56 = vector.load %arg9[%c0_36, %c0_37] : memref<1x1xf32, #tpu.memory_space<vmem>>, vector<1x1xf32>
    %57 = vector.broadcast %56 : vector<1x1xf32> to vector<1x25xf32>
    %58 = arith.addf %55, %57 : vector<1x25xf32>
    %cst_38 = arith.constant 0.000000e+00 : f32
    %59 = vector.broadcast %cst_38 : f32 to vector<1x25xf32>
    %60 = arith.maximumf %58, %59 : vector<1x25xf32>
    %61 = vector.extract_strided_slice %52 {offsets = [1, 0], sizes = [1, 25], strides = [1, 1]} : vector<2x25xf32> to vector<1x25xf32>
    %c0_39 = arith.constant 0 : index
    %c0_40 = arith.constant 0 : index
    %62 = vector.load %arg8[%c0_39, %c0_40] : memref<25x25xf32, #tpu.memory_space<vmem>>, vector<25x25xf32>
    %cst_41 = arith.constant dense<0.000000e+00> : vector<1x25xf32>
    %63 = tpu.matmul %61, %62, %cst_41 {dimension_numbers = #tpu.dot_dimension_numbers<[1], [0], [0], [1], [0, 0, 1, 1], [], []>} : vector<1x25xf32>, vector<25x25xf32>, vector<1x25xf32> -> vector<1x25xf32>
    %c0_42 = arith.constant 0 : index
    %c0_43 = arith.constant 0 : index
    %64 = vector.load %arg10[%c0_42, %c0_43] : memref<1x1xf32, #tpu.memory_space<vmem>>, vector<1x1xf32>
    %65 = vector.broadcast %64 : vector<1x1xf32> to vector<1x25xf32>
    %66 = arith.addf %63, %65 : vector<1x25xf32>
    %cst_44 = arith.constant 0.000000e+00 : f32
    %67 = vector.broadcast %cst_44 : f32 to vector<1x25xf32>
    %68 = arith.maximumf %66, %67 : vector<1x25xf32>
    %c0_45 = arith.constant 0 : index
    %c0_46 = arith.constant 0 : index
    %69 = vector.load %arg11[%c0_45, %c0_46] : memref<5x25xf32, #tpu.memory_space<vmem>>, vector<5x25xf32>
    %70 = vector.broadcast %60 : vector<1x25xf32> to vector<5x25xf32>
    %71 = arith.mulf %69, %70 : vector<5x25xf32>
    %c0_47 = arith.constant 0 : index
    %c0_48 = arith.constant 0 : index
    %72 = vector.load %arg12[%c0_47, %c0_48] : memref<25x15xf32, #tpu.memory_space<vmem>>, vector<25x15xf32>
    %cst_49 = arith.constant dense<0.000000e+00> : vector<5x15xf32>
    %73 = tpu.matmul %71, %72, %cst_49 {dimension_numbers = #tpu.dot_dimension_numbers<[1], [0], [0], [1], [0, 0, 1, 1], [], []>} : vector<5x25xf32>, vector<25x15xf32>, vector<5x15xf32> -> vector<5x15xf32>
    %c0_50 = arith.constant 0 : index
    %c0_51 = arith.constant 0 : index
    %74 = vector.load %arg2[%c0_50, %c0_51] : memref<1x25xf32, #tpu.memory_space<vmem>>, vector<1x25xf32>
    %75 = vector.broadcast %74 : vector<1x25xf32> to vector<5x25xf32>
    %76 = arith.mulf %69, %75 : vector<5x25xf32>
    %c0_52 = arith.constant 0 : index
    %c0_53 = arith.constant 0 : index
    %77 = vector.load %arg13[%c0_52, %c0_53] : memref<25x15xf32, #tpu.memory_space<vmem>>, vector<25x15xf32>
    %cst_54 = arith.constant dense<0.000000e+00> : vector<5x15xf32>
    %78 = tpu.matmul %76, %77, %cst_54 {dimension_numbers = #tpu.dot_dimension_numbers<[1], [0], [0], [1], [0, 0, 1, 1], [], []>} : vector<5x25xf32>, vector<25x15xf32>, vector<5x15xf32> -> vector<5x15xf32>
    %79 = arith.addf %73, %78 : vector<5x15xf32>
    %80 = vector.broadcast %68 : vector<1x25xf32> to vector<5x25xf32>
    %81 = arith.mulf %69, %80 : vector<5x25xf32>
    %c0_55 = arith.constant 0 : index
    %c0_56 = arith.constant 0 : index
    %82 = vector.load %arg14[%c0_55, %c0_56] : memref<25x15xf32, #tpu.memory_space<vmem>>, vector<25x15xf32>
    %cst_57 = arith.constant dense<0.000000e+00> : vector<5x15xf32>
    %83 = tpu.matmul %81, %82, %cst_57 {dimension_numbers = #tpu.dot_dimension_numbers<[1], [0], [0], [1], [0, 0, 1, 1], [], []>} : vector<5x25xf32>, vector<25x15xf32>, vector<5x15xf32> -> vector<5x15xf32>
    %84 = arith.addf %79, %83 : vector<5x15xf32>
    %cst_58 = arith.constant 0.000000e+00 : f32
    %85 = vector.broadcast %cst_58 : f32 to vector<448x7xf32>
    %c0_59 = arith.constant 0 : index
    %c0_60 = arith.constant 0 : index
    %86 = vector.load %arg15[%c0_59, %c0_60] : memref<448x45xf32, #tpu.memory_space<vmem>>, vector<448x5xf32>
    %87 = vector.extract_strided_slice %84 {offsets = [0, 0], sizes = [5, 7], strides = [1, 1]} : vector<5x15xf32> to vector<5x7xf32>
    %cst_61 = arith.constant dense<0.000000e+00> : vector<448x7xf32>
    %88 = tpu.matmul %86, %87, %cst_61 {dimension_numbers = #tpu.dot_dimension_numbers<[1], [0], [0], [1], [0, 0, 1, 1], [], []>} : vector<448x5xf32>, vector<5x7xf32>, vector<448x7xf32> -> vector<448x7xf32>
    %89 = arith.addf %85, %88 : vector<448x7xf32>
    %c0_62 = arith.constant 0 : index
    %c5 = arith.constant 5 : index
    %90 = vector.load %arg15[%c0_62, %c5] : memref<448x45xf32, #tpu.memory_space<vmem>>, vector<448x5xf32>
    %91 = vector.extract_strided_slice %84 {offsets = [0, 1], sizes = [5, 7], strides = [1, 1]} : vector<5x15xf32> to vector<5x7xf32>
    %cst_63 = arith.constant dense<0.000000e+00> : vector<448x7xf32>
    %92 = tpu.matmul %90, %91, %cst_63 {dimension_numbers = #tpu.dot_dimension_numbers<[1], [0], [0], [1], [0, 0, 1, 1], [], []>} : vector<448x5xf32>, vector<5x7xf32>, vector<448x7xf32> -> vector<448x7xf32>
    %93 = arith.addf %89, %92 : vector<448x7xf32>
    %c0_64 = arith.constant 0 : index
    %c10 = arith.constant 10 : index
    %94 = vector.load %arg15[%c0_64, %c10] : memref<448x45xf32, #tpu.memory_space<vmem>>, vector<448x5xf32>
    %95 = vector.extract_strided_slice %84 {offsets = [0, 2], sizes = [5, 7], strides = [1, 1]} : vector<5x15xf32> to vector<5x7xf32>
    %cst_65 = arith.constant dense<0.000000e+00> : vector<448x7xf32>
    %96 = tpu.matmul %94, %95, %cst_65 {dimension_numbers = #tpu.dot_dimension_numbers<[1], [0], [0], [1], [0, 0, 1, 1], [], []>} : vector<448x5xf32>, vector<5x7xf32>, vector<448x7xf32> -> vector<448x7xf32>
    %97 = arith.addf %93, %96 : vector<448x7xf32>
    %c0_66 = arith.constant 0 : index
    %c15 = arith.constant 15 : index
    %98 = vector.load %arg15[%c0_66, %c15] : memref<448x45xf32, #tpu.memory_space<vmem>>, vector<448x5xf32>
    %99 = vector.extract_strided_slice %84 {offsets = [0, 3], sizes = [5, 7], strides = [1, 1]} : vector<5x15xf32> to vector<5x7xf32>
    %cst_67 = arith.constant dense<0.000000e+00> : vector<448x7xf32>
    %100 = tpu.matmul %98, %99, %cst_67 {dimension_numbers = #tpu.dot_dimension_numbers<[1], [0], [0], [1], [0, 0, 1, 1], [], []>} : vector<448x5xf32>, vector<5x7xf32>, vector<448x7xf32> -> vector<448x7xf32>
    %101 = arith.addf %97, %100 : vector<448x7xf32>
    %c0_68 = arith.constant 0 : index
    %c20 = arith.constant 20 : index
    %102 = vector.load %arg15[%c0_68, %c20] : memref<448x45xf32, #tpu.memory_space<vmem>>, vector<448x5xf32>
    %103 = vector.extract_strided_slice %84 {offsets = [0, 4], sizes = [5, 7], strides = [1, 1]} : vector<5x15xf32> to vector<5x7xf32>
    %cst_69 = arith.constant dense<0.000000e+00> : vector<448x7xf32>
    %104 = tpu.matmul %102, %103, %cst_69 {dimension_numbers = #tpu.dot_dimension_numbers<[1], [0], [0], [1], [0, 0, 1, 1], [], []>} : vector<448x5xf32>, vector<5x7xf32>, vector<448x7xf32> -> vector<448x7xf32>
    %105 = arith.addf %101, %104 : vector<448x7xf32>
    %c0_70 = arith.constant 0 : index
    %c25_71 = arith.constant 25 : index
    %106 = vector.load %arg15[%c0_70, %c25_71] : memref<448x45xf32, #tpu.memory_space<vmem>>, vector<448x5xf32>
    %107 = vector.extract_strided_slice %84 {offsets = [0, 5], sizes = [5, 7], strides = [1, 1]} : vector<5x15xf32> to vector<5x7xf32>
    %cst_72 = arith.constant dense<0.000000e+00> : vector<448x7xf32>
    %108 = tpu.matmul %106, %107, %cst_72 {dimension_numbers = #tpu.dot_dimension_numbers<[1], [0], [0], [1], [0, 0, 1, 1], [], []>} : vector<448x5xf32>, vector<5x7xf32>, vector<448x7xf32> -> vector<448x7xf32>
    %109 = arith.addf %105, %108 : vector<448x7xf32>
    %c0_73 = arith.constant 0 : index
    %c30 = arith.constant 30 : index
    %110 = vector.load %arg15[%c0_73, %c30] : memref<448x45xf32, #tpu.memory_space<vmem>>, vector<448x5xf32>
    %111 = vector.extract_strided_slice %84 {offsets = [0, 6], sizes = [5, 7], strides = [1, 1]} : vector<5x15xf32> to vector<5x7xf32>
    %cst_74 = arith.constant dense<0.000000e+00> : vector<448x7xf32>
    %112 = tpu.matmul %110, %111, %cst_74 {dimension_numbers = #tpu.dot_dimension_numbers<[1], [0], [0], [1], [0, 0, 1, 1], [], []>} : vector<448x5xf32>, vector<5x7xf32>, vector<448x7xf32> -> vector<448x7xf32>
    %113 = arith.addf %109, %112 : vector<448x7xf32>
    %c0_75 = arith.constant 0 : index
    %c35 = arith.constant 35 : index
    %114 = vector.load %arg15[%c0_75, %c35] : memref<448x45xf32, #tpu.memory_space<vmem>>, vector<448x5xf32>
    %115 = vector.extract_strided_slice %84 {offsets = [0, 7], sizes = [5, 7], strides = [1, 1]} : vector<5x15xf32> to vector<5x7xf32>
    %cst_76 = arith.constant dense<0.000000e+00> : vector<448x7xf32>
    %116 = tpu.matmul %114, %115, %cst_76 {dimension_numbers = #tpu.dot_dimension_numbers<[1], [0], [0], [1], [0, 0, 1, 1], [], []>} : vector<448x5xf32>, vector<5x7xf32>, vector<448x7xf32> -> vector<448x7xf32>
    %117 = arith.addf %113, %116 : vector<448x7xf32>
    %c0_77 = arith.constant 0 : index
    %c40 = arith.constant 40 : index
    %118 = vector.load %arg15[%c0_77, %c40] : memref<448x45xf32, #tpu.memory_space<vmem>>, vector<448x5xf32>
    %119 = vector.extract_strided_slice %84 {offsets = [0, 8], sizes = [5, 7], strides = [1, 1]} : vector<5x15xf32> to vector<5x7xf32>
    %cst_78 = arith.constant dense<0.000000e+00> : vector<448x7xf32>
    %120 = tpu.matmul %118, %119, %cst_78 {dimension_numbers = #tpu.dot_dimension_numbers<[1], [0], [0], [1], [0, 0, 1, 1], [], []>} : vector<448x5xf32>, vector<5x7xf32>, vector<448x7xf32> -> vector<448x7xf32>
    %121 = arith.addf %117, %120 : vector<448x7xf32>
    %c0_79 = arith.constant 0 : index
    %c0_80 = arith.constant 0 : index
    %122 = vector.load %arg16[%c0_79, %c0_80] : memref<448x1xf32, #tpu.memory_space<vmem>>, vector<448x1xf32>
    %123 = vector.broadcast %122 : vector<448x1xf32> to vector<448x7xf32>
    %124 = arith.addf %121, %123 : vector<448x7xf32>
    %cst_81 = arith.constant 0.000000e+00 : f32
    %125 = vector.broadcast %cst_81 : f32 to vector<448x7xf32>
    %126 = arith.maximumf %124, %125 : vector<448x7xf32>
    %cst_82 = arith.constant 0.000000e+00 : f32
    %127 = vector.broadcast %cst_82 : f32 to vector<20x5xf32>
    %c0_83 = arith.constant 0 : index
    %c0_84 = arith.constant 0 : index
    %128 = vector.load %arg17[%c0_83, %c0_84] : memref<20x1344xf32, #tpu.memory_space<vmem>>, vector<20x448xf32>
    %129 = vector.extract_strided_slice %126 {offsets = [0, 0], sizes = [448, 5], strides = [1, 1]} : vector<448x7xf32> to vector<448x5xf32>
    %cst_85 = arith.constant dense<0.000000e+00> : vector<20x5xf32>
    %130 = tpu.matmul %128, %129, %cst_85 {dimension_numbers = #tpu.dot_dimension_numbers<[1], [0], [0], [1], [0, 0, 1, 1], [], []>} : vector<20x448xf32>, vector<448x5xf32>, vector<20x5xf32> -> vector<20x5xf32>
    %131 = arith.addf %127, %130 : vector<20x5xf32>
    %c0_86 = arith.constant 0 : index
    %c448 = arith.constant 448 : index
    %132 = vector.load %arg17[%c0_86, %c448] : memref<20x1344xf32, #tpu.memory_space<vmem>>, vector<20x448xf32>
    %133 = vector.extract_strided_slice %126 {offsets = [0, 1], sizes = [448, 5], strides = [1, 1]} : vector<448x7xf32> to vector<448x5xf32>
    %cst_87 = arith.constant dense<0.000000e+00> : vector<20x5xf32>
    %134 = tpu.matmul %132, %133, %cst_87 {dimension_numbers = #tpu.dot_dimension_numbers<[1], [0], [0], [1], [0, 0, 1, 1], [], []>} : vector<20x448xf32>, vector<448x5xf32>, vector<20x5xf32> -> vector<20x5xf32>
    %135 = arith.addf %131, %134 : vector<20x5xf32>
    %c0_88 = arith.constant 0 : index
    %c896 = arith.constant 896 : index
    %136 = vector.load %arg17[%c0_88, %c896] : memref<20x1344xf32, #tpu.memory_space<vmem>>, vector<20x448xf32>
    %137 = vector.extract_strided_slice %126 {offsets = [0, 2], sizes = [448, 5], strides = [1, 1]} : vector<448x7xf32> to vector<448x5xf32>
    %cst_89 = arith.constant dense<0.000000e+00> : vector<20x5xf32>
    %138 = tpu.matmul %136, %137, %cst_89 {dimension_numbers = #tpu.dot_dimension_numbers<[1], [0], [0], [1], [0, 0, 1, 1], [], []>} : vector<20x448xf32>, vector<448x5xf32>, vector<20x5xf32> -> vector<20x5xf32>
    %139 = arith.addf %135, %138 : vector<20x5xf32>
    %c0_90 = arith.constant 0 : index
    %c0_91 = arith.constant 0 : index
    %140 = vector.load %arg18[%c0_90, %c0_91] : memref<20x1xf32, #tpu.memory_space<vmem>>, vector<20x1xf32>
    %141 = vector.broadcast %140 : vector<20x1xf32> to vector<20x5xf32>
    %142 = arith.addf %139, %141 : vector<20x5xf32>
    %143 = vector.extract_strided_slice %142 {offsets = [0, 0], sizes = [5, 5], strides = [1, 1]} : vector<20x5xf32> to vector<5x5xf32>
    %144 = arith.negf %143 : vector<5x5xf32>
    %145 = math.exp %144 : vector<5x5xf32>
    %cst_92 = arith.constant 1.000000e+00 : f32
    %146 = vector.broadcast %cst_92 : f32 to vector<5x5xf32>
    %147 = arith.addf %146, %145 : vector<5x5xf32>
    %148 = arith.divf %146, %147 : vector<5x5xf32>
    %149 = vector.extract_strided_slice %142 {offsets = [5, 0], sizes = [5, 5], strides = [1, 1]} : vector<20x5xf32> to vector<5x5xf32>
    %150 = math.tanh %149 : vector<5x5xf32>
    %151 = vector.extract_strided_slice %142 {offsets = [10, 0], sizes = [5, 5], strides = [1, 1]} : vector<20x5xf32> to vector<5x5xf32>
    %152 = arith.negf %151 : vector<5x5xf32>
    %153 = math.exp %152 : vector<5x5xf32>
    %cst_93 = arith.constant 1.000000e+00 : f32
    %154 = vector.broadcast %cst_93 : f32 to vector<5x5xf32>
    %155 = arith.addf %154, %153 : vector<5x5xf32>
    %156 = arith.divf %154, %155 : vector<5x5xf32>
    %157 = vector.extract_strided_slice %142 {offsets = [15, 0], sizes = [5, 5], strides = [1, 1]} : vector<20x5xf32> to vector<5x5xf32>
    %158 = arith.negf %157 : vector<5x5xf32>
    %159 = math.exp %158 : vector<5x5xf32>
    %cst_94 = arith.constant 1.000000e+00 : f32
    %160 = vector.broadcast %cst_94 : f32 to vector<5x5xf32>
    %161 = arith.addf %160, %159 : vector<5x5xf32>
    %162 = arith.divf %160, %161 : vector<5x5xf32>
    %163 = vector.extract_strided_slice %84 {offsets = [0, 5], sizes = [5, 5], strides = [1, 1]} : vector<5x15xf32> to vector<5x5xf32>
    %164 = arith.mulf %148, %163 : vector<5x5xf32>
    %165 = arith.mulf %150, %156 : vector<5x5xf32>
    %166 = arith.addf %164, %165 : vector<5x5xf32>
    %167 = math.tanh %166 : vector<5x5xf32>
    %168 = arith.mulf %162, %167 : vector<5x5xf32>
    %c0_95 = arith.constant 0 : index
    %c0_96 = arith.constant 0 : index
    %169 = vector.load %arg23[%c0_95, %c0_96] : memref<5x5xf32, #tpu.memory_space<vmem>>, vector<5x5xf32>
    tpu.vector_store %arg23[%c0_95, %c0_96], %166 {strides = array<i32>} : memref<5x5xf32, #tpu.memory_space<vmem>>, vector<5x5xf32>,
    %c0_97 = arith.constant 0 : index
    %c0_98 = arith.constant 0 : index
    %170 = vector.load %arg22[%c0_97, %c0_98] : memref<5x5xf32, #tpu.memory_space<vmem>>, vector<5x5xf32>
    tpu.vector_store %arg22[%c0_97, %c0_98], %168 {strides = array<i32>} : memref<5x5xf32, #tpu.memory_space<vmem>>, vector<5x5xf32>,
    %c0_99 = arith.constant 0 : index
    %c0_100 = arith.constant 0 : index
    %171 = vector.load %arg19[%c0_99, %c0_100] : memref<780x5xf32, #tpu.memory_space<vmem>>, vector<780x5xf32>
    %cst_101 = arith.constant dense<0.000000e+00> : vector<780x5xf32>
    %172 = tpu.matmul %171, %168, %cst_101 {dimension_numbers = #tpu.dot_dimension_numbers<[1], [0], [0], [1], [0, 0, 1, 1], [], []>} : vector<780x5xf32>, vector<5x5xf32>, vector<780x5xf32> -> vector<780x5xf32>
    %cst_102 = arith.constant 0.000000e+00 : f32
    %173 = vector.broadcast %cst_102 : f32 to vector<78x26xf32>
    %174 = vector.extract_strided_slice %172 {offsets = [0, 0], sizes = [78, 5], strides = [1, 1]} : vector<780x5xf32> to vector<78x5xf32>
    %c0_103 = arith.constant 0 : index
    %c0_104 = arith.constant 0 : index
    %175 = vector.load %arg20[%c0_103, %c0_104] : memref<5x260xf32, #tpu.memory_space<vmem>>, vector<5x26xf32>
    %cst_105 = arith.constant dense<0.000000e+00> : vector<78x26xf32>
    %176 = tpu.matmul %174, %175, %cst_105 {dimension_numbers = #tpu.dot_dimension_numbers<[1], [0], [0], [1], [0, 0, 1, 1], [], []>} : vector<78x5xf32>, vector<5x26xf32>, vector<78x26xf32> -> vector<78x26xf32>
    %177 = arith.addf %173, %176 : vector<78x26xf32>
    %178 = vector.extract_strided_slice %172 {offsets = [78, 0], sizes = [78, 5], strides = [1, 1]} : vector<780x5xf32> to vector<78x5xf32>
    %c0_106 = arith.constant 0 : index
    %c26 = arith.constant 26 : index
    %179 = vector.load %arg20[%c0_106, %c26] : memref<5x260xf32, #tpu.memory_space<vmem>>, vector<5x26xf32>
    %cst_107 = arith.constant dense<0.000000e+00> : vector<78x26xf32>
    %180 = tpu.matmul %178, %179, %cst_107 {dimension_numbers = #tpu.dot_dimension_numbers<[1], [0], [0], [1], [0, 0, 1, 1], [], []>} : vector<78x5xf32>, vector<5x26xf32>, vector<78x26xf32> -> vector<78x26xf32>
    %181 = arith.addf %177, %180 : vector<78x26xf32>
    %182 = vector.extract_strided_slice %172 {offsets = [156, 0], sizes = [78, 5], strides = [1, 1]} : vector<780x5xf32> to vector<78x5xf32>
    %c0_108 = arith.constant 0 : index
    %c52 = arith.constant 52 : index
    %183 = vector.load %arg20[%c0_108, %c52] : memref<5x260xf32, #tpu.memory_space<vmem>>, vector<5x26xf32>
    %cst_109 = arith.constant dense<0.000000e+00> : vector<78x26xf32>
    %184 = tpu.matmul %182, %183, %cst_109 {dimension_numbers = #tpu.dot_dimension_numbers<[1], [0], [0], [1], [0, 0, 1, 1], [], []>} : vector<78x5xf32>, vector<5x26xf32>, vector<78x26xf32> -> vector<78x26xf32>
    %185 = arith.addf %181, %184 : vector<78x26xf32>
    %186 = vector.extract_strided_slice %172 {offsets = [234, 0], sizes = [78, 5], strides = [1, 1]} : vector<780x5xf32> to vector<78x5xf32>
    %c0_110 = arith.constant 0 : index
    %c78 = arith.constant 78 : index
    %187 = vector.load %arg20[%c0_110, %c78] : memref<5x260xf32, #tpu.memory_space<vmem>>, vector<5x26xf32>
    %cst_111 = arith.constant dense<0.000000e+00> : vector<78x26xf32>
    %188 = tpu.matmul %186, %187, %cst_111 {dimension_numbers = #tpu.dot_dimension_numbers<[1], [0], [0], [1], [0, 0, 1, 1], [], []>} : vector<78x5xf32>, vector<5x26xf32>, vector<78x26xf32> -> vector<78x26xf32>
    %189 = arith.addf %185, %188 : vector<78x26xf32>
    %190 = vector.extract_strided_slice %172 {offsets = [312, 0], sizes = [78, 5], strides = [1, 1]} : vector<780x5xf32> to vector<78x5xf32>
    %c0_112 = arith.constant 0 : index
    %c104 = arith.constant 104 : index
    %191 = vector.load %arg20[%c0_112, %c104] : memref<5x260xf32, #tpu.memory_space<vmem>>, vector<5x26xf32>
    %cst_113 = arith.constant dense<0.000000e+00> : vector<78x26xf32>
    %192 = tpu.matmul %190, %191, %cst_113 {dimension_numbers = #tpu.dot_dimension_numbers<[1], [0], [0], [1], [0, 0, 1, 1], [], []>} : vector<78x5xf32>, vector<5x26xf32>, vector<78x26xf32> -> vector<78x26xf32>
    %193 = arith.addf %189, %192 : vector<78x26xf32>
    %194 = vector.extract_strided_slice %172 {offsets = [390, 0], sizes = [78, 5], strides = [1, 1]} : vector<780x5xf32> to vector<78x5xf32>
    %c0_114 = arith.constant 0 : index
    %c130 = arith.constant 130 : index
    %195 = vector.load %arg20[%c0_114, %c130] : memref<5x260xf32, #tpu.memory_space<vmem>>, vector<5x26xf32>
    %cst_115 = arith.constant dense<0.000000e+00> : vector<78x26xf32>
    %196 = tpu.matmul %194, %195, %cst_115 {dimension_numbers = #tpu.dot_dimension_numbers<[1], [0], [0], [1], [0, 0, 1, 1], [], []>} : vector<78x5xf32>, vector<5x26xf32>, vector<78x26xf32> -> vector<78x26xf32>
    %197 = arith.addf %193, %196 : vector<78x26xf32>
    %198 = vector.extract_strided_slice %172 {offsets = [468, 0], sizes = [78, 5], strides = [1, 1]} : vector<780x5xf32> to vector<78x5xf32>
    %c0_116 = arith.constant 0 : index
    %c156 = arith.constant 156 : index
    %199 = vector.load %arg20[%c0_116, %c156] : memref<5x260xf32, #tpu.memory_space<vmem>>, vector<5x26xf32>
    %cst_117 = arith.constant dense<0.000000e+00> : vector<78x26xf32>
    %200 = tpu.matmul %198, %199, %cst_117 {dimension_numbers = #tpu.dot_dimension_numbers<[1], [0], [0], [1], [0, 0, 1, 1], [], []>} : vector<78x5xf32>, vector<5x26xf32>, vector<78x26xf32> -> vector<78x26xf32>
    %201 = arith.addf %197, %200 : vector<78x26xf32>
    %202 = vector.extract_strided_slice %172 {offsets = [546, 0], sizes = [78, 5], strides = [1, 1]} : vector<780x5xf32> to vector<78x5xf32>
    %c0_118 = arith.constant 0 : index
    %c182 = arith.constant 182 : index
    %203 = vector.load %arg20[%c0_118, %c182] : memref<5x260xf32, #tpu.memory_space<vmem>>, vector<5x26xf32>
    %cst_119 = arith.constant dense<0.000000e+00> : vector<78x26xf32>
    %204 = tpu.matmul %202, %203, %cst_119 {dimension_numbers = #tpu.dot_dimension_numbers<[1], [0], [0], [1], [0, 0, 1, 1], [], []>} : vector<78x5xf32>, vector<5x26xf32>, vector<78x26xf32> -> vector<78x26xf32>
    %205 = arith.addf %201, %204 : vector<78x26xf32>
    %206 = vector.extract_strided_slice %172 {offsets = [624, 0], sizes = [78, 5], strides = [1, 1]} : vector<780x5xf32> to vector<78x5xf32>
    %c0_120 = arith.constant 0 : index
    %c208 = arith.constant 208 : index
    %207 = vector.load %arg20[%c0_120, %c208] : memref<5x260xf32, #tpu.memory_space<vmem>>, vector<5x26xf32>
    %cst_121 = arith.constant dense<0.000000e+00> : vector<78x26xf32>
    %208 = tpu.matmul %206, %207, %cst_121 {dimension_numbers = #tpu.dot_dimension_numbers<[1], [0], [0], [1], [0, 0, 1, 1], [], []>} : vector<78x5xf32>, vector<5x26xf32>, vector<78x26xf32> -> vector<78x26xf32>
    %209 = arith.addf %205, %208 : vector<78x26xf32>
    %210 = vector.extract_strided_slice %172 {offsets = [702, 0], sizes = [78, 5], strides = [1, 1]} : vector<780x5xf32> to vector<78x5xf32>
    %c0_122 = arith.constant 0 : index
    %c234 = arith.constant 234 : index
    %211 = vector.load %arg20[%c0_122, %c234] : memref<5x260xf32, #tpu.memory_space<vmem>>, vector<5x26xf32>
    %cst_123 = arith.constant dense<0.000000e+00> : vector<78x26xf32>
    %212 = tpu.matmul %210, %211, %cst_123 {dimension_numbers = #tpu.dot_dimension_numbers<[1], [0], [0], [1], [0, 0, 1, 1], [], []>} : vector<78x5xf32>, vector<5x26xf32>, vector<78x26xf32> -> vector<78x26xf32>
    %213 = arith.addf %209, %212 : vector<78x26xf32>
    %c0_124 = arith.constant 0 : index
    %c0_125 = arith.constant 0 : index
    %214 = vector.load %arg21[%c0_124, %c0_125] : memref<78x1xf32, #tpu.memory_space<vmem>>, vector<78x1xf32>
    %215 = vector.broadcast %214 : vector<78x1xf32> to vector<78x26xf32>
    %216 = arith.addf %213, %215 : vector<78x26xf32>
    %cst_126 = arith.constant 0.000000e+00 : f32
    %217 = vector.broadcast %cst_126 : f32 to vector<78x26xf32>
    %218 = arith.maximumf %216, %217 : vector<78x26xf32>
    %c0_127 = arith.constant 0 : index
    %c0_128 = arith.constant 0 : index
    %219 = vector.load %arg24[%c0_127, %c0_128] : memref<78x26xf32, #tpu.memory_space<vmem>>, vector<78x26xf32>
    tpu.vector_store %arg24[%c0_127, %c0_128], %218 {strides = array<i32>} : memref<78x26xf32, #tpu.memory_space<vmem>>, vector<78x26xf32>,
    return
  }
}

module attributes {stable_mosaic.version = 11 : i64} {
  func.func @_mm_bias_act_kernel(%arg0: memref<48x27xf32, #tpu.memory_space<vmem>>, %arg1: memref<27x784xf32, #tpu.memory_space<vmem>>, %arg2: memref<48x1xf32, #tpu.memory_space<vmem>>, %arg3: memref<48x784xbf16, #tpu.memory_space<vmem>>) attributes {dimension_semantics = [], scalar_prefetch = 0 : i64, scratch_operands = 0 : i64, tpu.core_type = #tpu.core_type<tc>} {
    %c0 = arith.constant 0 : index
    %c0_0 = arith.constant 0 : index
    %0 = vector.load %arg0[%c0, %c0_0] : memref<48x27xf32, #tpu.memory_space<vmem>>, vector<48x27xf32>
    %c0_1 = arith.constant 0 : index
    %c0_2 = arith.constant 0 : index
    %1 = vector.load %arg1[%c0_1, %c0_2] : memref<27x784xf32, #tpu.memory_space<vmem>>, vector<27x784xf32>
    %cst = arith.constant dense<0.000000e+00> : vector<48x784xf32>
    %2 = tpu.matmul %0, %1, %cst {dimension_numbers = #tpu.dot_dimension_numbers<[1], [0], [0], [1], [0, 0, 1, 1], [], []>} : vector<48x27xf32>, vector<27x784xf32>, vector<48x784xf32> -> vector<48x784xf32>
    %c0_3 = arith.constant 0 : index
    %c0_4 = arith.constant 0 : index
    %3 = vector.load %arg2[%c0_3, %c0_4] : memref<48x1xf32, #tpu.memory_space<vmem>>, vector<48x1xf32>
    %4 = vector.broadcast %3 : vector<48x1xf32> to vector<48x784xf32>
    %5 = arith.addf %2, %4 : vector<48x784xf32>
    %cst_5 = arith.constant 0.000000e+00 : f32
    %6 = vector.broadcast %cst_5 : f32 to vector<48x784xf32>
    %7 = arith.maximumf %5, %6 : vector<48x784xf32>
    %8 = arith.truncf %7 : vector<48x784xf32> to vector<48x784xbf16>
    %c0_6 = arith.constant 0 : index
    %c0_7 = arith.constant 0 : index
    %9 = vector.load %arg3[%c0_6, %c0_7] : memref<48x784xbf16, #tpu.memory_space<vmem>>, vector<48x784xbf16>
    tpu.vector_store %arg3[%c0_6, %c0_7], %8 {strides = array<i32>} : memref<48x784xbf16, #tpu.memory_space<vmem>>, vector<48x784xbf16>,
    return
  }
}

module attributes {stable_mosaic.version = 11 : i64} {
  func.func @_mm_bias_act_kernel(%arg0: memref<12x12xbf16, #tpu.memory_space<vmem>>, %arg1: memref<12x12544xbf16, #tpu.memory_space<vmem>>, %arg2: memref<12x1xf32, #tpu.memory_space<vmem>>, %arg3: memref<12x12544xf32, #tpu.memory_space<vmem>>) attributes {dimension_semantics = [], scalar_prefetch = 0 : i64, scratch_operands = 0 : i64, tpu.core_type = #tpu.core_type<tc>} {
    %c0 = arith.constant 0 : index
    %c0_0 = arith.constant 0 : index
    %0 = vector.load %arg0[%c0, %c0_0] : memref<12x12xbf16, #tpu.memory_space<vmem>>, vector<12x12xbf16>
    %c0_1 = arith.constant 0 : index
    %c0_2 = arith.constant 0 : index
    %1 = vector.load %arg1[%c0_1, %c0_2] : memref<12x12544xbf16, #tpu.memory_space<vmem>>, vector<12x12544xbf16>
    %cst = arith.constant dense<0.000000e+00> : vector<12x12544xf32>
    %2 = tpu.matmul %0, %1, %cst {dimension_numbers = #tpu.dot_dimension_numbers<[1], [0], [0], [1], [0, 0, 1, 1], [], []>} : vector<12x12xbf16>, vector<12x12544xbf16>, vector<12x12544xf32> -> vector<12x12544xf32>
    %c0_3 = arith.constant 0 : index
    %c0_4 = arith.constant 0 : index
    %3 = vector.load %arg2[%c0_3, %c0_4] : memref<12x1xf32, #tpu.memory_space<vmem>>, vector<12x1xf32>
    %4 = vector.broadcast %3 : vector<12x1xf32> to vector<12x12544xf32>
    %5 = arith.addf %2, %4 : vector<12x12544xf32>
    %c0_5 = arith.constant 0 : index
    %c0_6 = arith.constant 0 : index
    %6 = vector.load %arg3[%c0_5, %c0_6] : memref<12x12544xf32, #tpu.memory_space<vmem>>, vector<12x12544xf32>
    tpu.vector_store %arg3[%c0_5, %c0_6], %5 {strides = array<i32>} : memref<12x12544xf32, #tpu.memory_space<vmem>>, vector<12x12544xf32>,
    return
  }
}

</mosaic_0001>

<llo_original>
// kernel: forward.4
$region0: #{forward.4}
  #allocation0 [shape = 'u32[]', space=smem, size = 0x4, offset = 0x4, fixed_abs, tag = 'smem constant byte address 0x4 - core index']
  #allocation1 [shape = 'u32[72,128]{1,0:T(1,128)}', space=vmem, size = 0x9000, scoped, tag = 'internal scratch']
  %s0 = inlined_call_operand.vmem [shape: f32[48,27], index: 0, kind: input, shape index: {}]
  %s1 = inlined_call_operand.vmem [shape: f32[27,784], index: 1, kind: input, shape index: {}]
  %s2 = inlined_call_operand.vmem [shape: f32[48,1], index: 2, kind: input, shape index: {}]
  %s3 = inlined_call_operand.vmem [shape: bf16[48,784], index: 3, kind: output, shape index: {}]
  %s4 = sld [smem:[#allocation0]]
  $region22: #{forward.4} parent=0
    _
  %s6 = ssub.s32 1, %s4
  %s7 = scalar_select 0, %s6, %s4
  // Predicated region
  $region2: #{forward.4} parent=0 // pred_check
    _
  $region3: #{forward.4} parent=0 // pred_check_branch
    %9 = sbr.rel (0) target = $region5
  $region4: #{forward.4} parent=0 // pred_region
    _
  $region5: #{forward.4} parent=0 // pred_fallthru
    _
  // Predicated region
  $region6: #{forward.4} parent=0 // pred_check
    _
  $region7: #{forward.4} parent=0 // pred_check_branch
    %11 = sbr.rel (0) target = $region9
  $region8: #{forward.4} parent=0 // pred_region
    _
  $region9: #{forward.4} parent=0 // pred_fallthru
    _
  // Predicated region
  $region10: #{forward.4} parent=0 // pred_check
    _
  $region11: #{forward.4} parent=0 // pred_check_branch
    %13 = sbr.rel (0) target = $region13
  $region12: #{forward.4} parent=0 // pred_region
    _
  $region13: #{forward.4} parent=0 // pred_fallthru
    _
  %v14 = vld [vmem:[%s0] sm:$0xff]
  %v15 = vld [vmem:[%s0 + $0x8] sm:$0xff]
  %v16 = vld [vmem:[%s0 + $0x10] sm:$0xff]
  %v17 = vld [vmem:[%s0 + $0x18] sm:$0xff]
  %v18 = vld [vmem:[%s0 + $0x20] sm:$0xff]
  %v19 = vld [vmem:[%s0 + $0x28] sm:$0xff]
  %v20 = vld [vmem:[%s1] sm:$0xff]
  %v21 = vld [vmem:[%s1 + $0x8] sm:$0xff]
  %v22 = vld [vmem:[%s1 + $0x10] sm:$0xff]
  %v23 = vld [vmem:[%s1 + $0x18] sm:$0xff]
  %v24 = vld [vmem:[%s1 + $0x20] sm:$0xff]
  %v25 = vld [vmem:[%s1 + $0x28] sm:$0xff]
  %v26 = vld [vmem:[%s1 + $0x30] sm:$0xff]
  %v27 = vld [vmem:[%s1 + $0x38] sm:$0xff]
  %v28 = vld [vmem:[%s1 + $0x40] sm:$0xff]
  %v29 = vld [vmem:[%s1 + $0x48] sm:$0xff]
  %v30 = vld [vmem:[%s1 + $0x50] sm:$0xff]
  %v31 = vld [vmem:[%s1 + $0x58] sm:$0xff]
  %v32 = vld [vmem:[%s1 + $0x60] sm:$0xff]
  %v33 = vld [vmem:[%s1 + $0x68] sm:$0xff]
  %v34 = vld [vmem:[%s1 + $0x70] sm:$0xff]
  %v35 = vld [vmem:[%s1 + $0x78] sm:$0xff]
  %v36 = vld [vmem:[%s1 + $0x80] sm:$0xff]
  %v37 = vld [vmem:[%s1 + $0x88] sm:$0xff]
  %v38 = vld [vmem:[%s1 + $0x90] sm:$0xff]
  %v39 = vld [vmem:[%s1 + $0x98] sm:$0xff]
  %v40 = vld [vmem:[%s1 + $0xa0] sm:$0xff]
  %v41 = vld [vmem:[%s1 + $0xa8] sm:$0x7]
  %v42 = vld [vmem:[%s1 + $0xb0] sm:$0x7]
  %v43 = vld [vmem:[%s1 + $0xb8] sm:$0x7]
  %v44 = vld [vmem:[%s1 + $0xc0] sm:$0x7]
  %v45 = vld [vmem:[%s1 + $0xc8] sm:$0x7]
  %v46 = vld [vmem:[%s1 + $0xd0] sm:$0x7]
  %v47 = vld [vmem:[%s1 + $0xd8] sm:$0x7]
  %v48 = vld [vmem:[%s2] sm:$0xff]
  %v49 = vld [vmem:[%s2 + $0x8] sm:$0xff]
  %v50 = vld [vmem:[%s2 + $0x10] sm:$0xff]
  %v51 = vld [vmem:[%s2 + $0x18] sm:$0xff]
  %v52 = vld [vmem:[%s2 + $0x20] sm:$0xff]
  %v53 = vld [vmem:[%s2 + $0x28] sm:$0xff]
  %55 = vset.pattern.permute.xlu0 0
  %56 = vperm.xlu0 %55, %v48
  %v57 = vpop.permute.xlu0 %56
  %60 = vset.pattern.permute.xlu0 0
  %61 = vperm.xlu0 %60, %v49
  %v62 = vpop.permute.xlu0 %61
  %65 = vset.pattern.permute.xlu0 0
  %66 = vperm.xlu0 %65, %v50
  %v67 = vpop.permute.xlu0 %66
  %70 = vset.pattern.permute.xlu0 0
  %71 = vperm.xlu0 %70, %v51
  %v72 = vpop.permute.xlu0 %71
  %75 = vset.pattern.permute.xlu0 0
  %76 = vperm.xlu0 %75, %v52
  %v77 = vpop.permute.xlu0 %76
  %80 = vset.pattern.permute.xlu0 0
  %81 = vperm.xlu0 %80, %v53
  %v82 = vpop.permute.xlu0 %81
  %vm84 = vcmask 220160
  %v86 = vsel %vm84, %v14, 0
  %v89 = vsel %vm84, %v15, 0
  %v92 = vsel %vm84, %v16, 0
  %v95 = vsel %vm84, %v17, 0
  %v98 = vsel %vm84, %v18, 0
  %v101 = vsel %vm84, %v19, 0
  %vm103 = vcmask 1042432
  %v105 = vsel %vm103, %v41, 0
  %v108 = vsel %vm103, %v42, 0
  %v111 = vsel %vm103, %v43, 0
  %v114 = vsel %vm103, %v44, 0
  %v117 = vsel %vm103, %v45, 0
  %v120 = vsel %vm103, %v46, 0
  %v123 = vsel %vm103, %v47, 0
  %125 = vmatpush.msra.mxu0 0.0
  %126 = vmatpush.msra.mxu0 0.0
  %127 = vmatpush.msra.mxu0 0.0
  %128 = vmatpush.msra.mxu0 0.0
  %129 = vmatpush.msra.mxu0 0.0
  %130 = vmatpush.msra.mxu0 0.0
  %131 = vmatpush.msra.mxu0 0.0
  %132 = vmatpush.msra.mxu0 0.0
  %133 = vmatpush.msra.mxu0 0.0
  %134 = vmatpush.msra.mxu0 0.0
  %135 = vmatpush.msra.mxu0 0.0
  %136 = vmatpush.msra.mxu0 0.0
  %137 = vmatpush.msra.mxu0 %v105
  %138 = vmatpush.msra.mxu0 %v34
  %139 = vmatpush.msra.mxu0 %v27
  %140 = vmatpush.msra.mxu0 %v20
  %141 = vmatmul.f32.gmra.mxu0 %v86
  %v142 = vpop.f32.mrf.mxu0
  %v143 = vadd.f32 %v57, %v142
  %144 = vmatmul.f32.gmra.mxu0 %v89
  %v145 = vpop.f32.mrf.mxu0
  %v146 = vadd.f32 %v62, %v145
  %147 = vmatmul.f32.gmra.mxu0 %v92
  %v148 = vpop.f32.mrf.mxu0
  %v149 = vadd.f32 %v67, %v148
  %150 = vmatmul.f32.gmra.mxu0 %v95
  %v151 = vpop.f32.mrf.mxu0
  %v152 = vadd.f32 %v72, %v151
  %153 = vmatmul.f32.gmra.mxu0 %v98
  %v154 = vpop.f32.mrf.mxu0
  %v155 = vadd.f32 %v77, %v154
  %156 = vmatmul.f32.gmra.mxu0 %v101
  %v157 = vpop.f32.mrf.mxu0
  %v158 = vadd.f32 %v82, %v157
  %159 = vdwg.mxu0
  %160 = vmatpush.msra.mxu0 0.0
  %161 = vmatpush.msra.mxu0 0.0
  %162 = vmatpush.msra.mxu0 0.0
  %163 = vmatpush.msra.mxu0 0.0
  %164 = vmatpush.msra.mxu0 0.0
  %165 = vmatpush.msra.mxu0 0.0
  %166 = vmatpush.msra.mxu0 0.0
  %167 = vmatpush.msra.mxu0 0.0
  %168 = vmatpush.msra.mxu0 0.0
  %169 = vmatpush.msra.mxu0 0.0
  %170 = vmatpush.msra.mxu0 0.0
  %171 = vmatpush.msra.mxu0 0.0
  %172 = vmatpush.msra.mxu0 %v108
  %173 = vmatpush.msra.mxu0 %v35
  %174 = vmatpush.msra.mxu0 %v28
  %175 = vmatpush.msra.mxu0 %v21
  %176 = vmatmul.f32.gmra.mxu0 %v86
  %v177 = vpop.f32.mrf.mxu0
  %v178 = vadd.f32 %v57, %v177
  %179 = vmatmul.f32.gmra.mxu0 %v89
  %v180 = vpop.f32.mrf.mxu0
  %v181 = vadd.f32 %v62, %v180
  %182 = vmatmul.f32.gmra.mxu0 %v92
  %v183 = vpop.f32.mrf.mxu0
  %v184 = vadd.f32 %v67, %v183
  %185 = vmatmul.f32.gmra.mxu0 %v95
  %v186 = vpop.f32.mrf.mxu0
  %v187 = vadd.f32 %v72, %v186
  %188 = vmatmul.f32.gmra.mxu0 %v98
  %v189 = vpop.f32.mrf.mxu0
  %v190 = vadd.f32 %v77, %v189
  %191 = vmatmul.f32.gmra.mxu0 %v101
  %v192 = vpop.f32.mrf.mxu0
  %v193 = vadd.f32 %v82, %v192
  %194 = vdwg.mxu0
  %195 = vmatpush.msra.mxu0 0.0
  %196 = vmatpush.msra.mxu0 0.0
  %197 = vmatpush.msra.mxu0 0.0
  %198 = vmatpush.msra.mxu0 0.0
  %199 = vmatpush.msra.mxu0 0.0
  %200 = vmatpush.msra.mxu0 0.0
  %201 = vmatpush.msra.mxu0 0.0
  %202 = vmatpush.msra.mxu0 0.0
  %203 = vmatpush.msra.mxu0 0.0
  %204 = vmatpush.msra.mxu0 0.0
  %205 = vmatpush.msra.mxu0 0.0
  %206 = vmatpush.msra.mxu0 0.0
  %207 = vmatpush.msra.mxu0 %v111
  %208 = vmatpush.msra.mxu0 %v36
  %209 = vmatpush.msra.mxu0 %v29
  %210 = vmatpush.msra.mxu0 %v22
  %211 = vmatmul.f32.gmra.mxu0 %v86
  %v212 = vpop.f32.mrf.mxu0
  %v213 = vadd.f32 %v57, %v212
  %214 = vmatmul.f32.gmra.mxu0 %v89
  %v215 = vpop.f32.mrf.mxu0
  %v216 = vadd.f32 %v62, %v215
  %217 = vmatmul.f32.gmra.mxu0 %v92
  %v218 = vpop.f32.mrf.mxu0
  %v219 = vadd.f32 %v67, %v218
  %220 = vmatmul.f32.gmra.mxu0 %v95
  %v221 = vpop.f32.mrf.mxu0
  %v222 = vadd.f32 %v72, %v221
  %223 = vmatmul.f32.gmra.mxu0 %v98
  %v224 = vpop.f32.mrf.mxu0
  %v225 = vadd.f32 %v77, %v224
  %226 = vmatmul.f32.gmra.mxu0 %v101
  %v227 = vpop.f32.mrf.mxu0
  %v228 = vadd.f32 %v82, %v227
  %229 = vdwg.mxu0
  %230 = vmatpush.msra.mxu0 0.0
  %231 = vmatpush.msra.mxu0 0.0
  %232 = vmatpush.msra.mxu0 0.0
  %233 = vmatpush.msra.mxu0 0.0
  %234 = vmatpush.msra.mxu0 0.0
  %235 = vmatpush.msra.mxu0 0.0
  %236 = vmatpush.msra.mxu0 0.0
  %237 = vmatpush.msra.mxu0 0.0
  %238 = vmatpush.msra.mxu0 0.0
  %239 = vmatpush.msra.mxu0 0.0
  %240 = vmatpush.msra.mxu0 0.0
  %241 = vmatpush.msra.mxu0 0.0
  %242 = vmatpush.msra.mxu0 %v114
  %243 = vmatpush.msra.mxu0 %v37
  %244 = vmatpush.msra.mxu0 %v30
  %245 = vmatpush.msra.mxu0 %v23
  %246 = vmatmul.f32.gmra.mxu0 %v86
  %v247 = vpop.f32.mrf.mxu0
  %v248 = vadd.f32 %v57, %v247
  %249 = vmatmul.f32.gmra.mxu0 %v89
  %v250 = vpop.f32.mrf.mxu0
  %v251 = vadd.f32 %v62, %v250
  %252 = vmatmul.f32.gmra.mxu0 %v92
  %v253 = vpop.f32.mrf.mxu0
  %v254 = vadd.f32 %v67, %v253
  %255 = vmatmul.f32.gmra.mxu0 %v95
  %v256 = vpop.f32.mrf.mxu0
  %v257 = vadd.f32 %v72, %v256
  %258 = vmatmul.f32.gmra.mxu0 %v98
  %v259 = vpop.f32.mrf.mxu0
  %v260 = vadd.f32 %v77, %v259
  %261 = vmatmul.f32.gmra.mxu0 %v101
  %v262 = vpop.f32.mrf.mxu0
  %v263 = vadd.f32 %v82, %v262
  %264 = vdwg.mxu0
  %265 = vmatpush.msra.mxu0 0.0
  %266 = vmatpush.msra.mxu0 0.0
  %267 = vmatpush.msra.mxu0 0.0
  %268 = vmatpush.msra.mxu0 0.0
  %269 = vmatpush.msra.mxu0 0.0
  %270 = vmatpush.msra.mxu0 0.0
  %271 = vmatpush.msra.mxu0 0.0
  %272 = vmatpush.msra.mxu0 0.0
  %273 = vmatpush.msra.mxu0 0.0
  %274 = vmatpush.msra.mxu0 0.0
  %275 = vmatpush.msra.mxu0 0.0
  %276 = vmatpush.msra.mxu0 0.0
  %277 = vmatpush.msra.mxu0 %v117
  %278 = vmatpush.msra.mxu0 %v38
  %279 = vmatpush.msra.mxu0 %v31
  %280 = vmatpush.msra.mxu0 %v24
  %281 = vmatmul.f32.gmra.mxu0 %v86
  %v282 = vpop.f32.mrf.mxu0
  %v283 = vadd.f32 %v57, %v282
  %284 = vmatmul.f32.gmra.mxu0 %v89
  %v285 = vpop.f32.mrf.mxu0
  %v286 = vadd.f32 %v62, %v285
  %287 = vmatmul.f32.gmra.mxu0 %v92
  %v288 = vpop.f32.mrf.mxu0
  %v289 = vadd.f32 %v67, %v288
  %290 = vmatmul.f32.gmra.mxu0 %v95
  %v291 = vpop.f32.mrf.mxu0
  %v292 = vadd.f32 %v72, %v291
  %293 = vmatmul.f32.gmra.mxu0 %v98
  %v294 = vpop.f32.mrf.mxu0
  %v295 = vadd.f32 %v77, %v294
  %296 = vmatmul.f32.gmra.mxu0 %v101
  %v297 = vpop.f32.mrf.mxu0
  %v298 = vadd.f32 %v82, %v297
  %299 = vdwg.mxu0
  %300 = vmatpush.msra.mxu0 0.0
  %301 = vmatpush.msra.mxu0 0.0
  %302 = vmatpush.msra.mxu0 0.0
  %303 = vmatpush.msra.mxu0 0.0
  %304 = vmatpush.msra.mxu0 0.0
  %305 = vmatpush.msra.mxu0 0.0
  %306 = vmatpush.msra.mxu0 0.0
  %307 = vmatpush.msra.mxu0 0.0
  %308 = vmatpush.msra.mxu0 0.0
  %309 = vmatpush.msra.mxu0 0.0
  %310 = vmatpush.msra.mxu0 0.0
  %311 = vmatpush.msra.mxu0 0.0
  %312 = vmatpush.msra.mxu0 %v120
  %313 = vmatpush.msra.mxu0 %v39
  %314 = vmatpush.msra.mxu0 %v32
  %315 = vmatpush.msra.mxu0 %v25
  %316 = vmatmul.f32.gmra.mxu0 %v86
  %v317 = vpop.f32.mrf.mxu0
  %v318 = vadd.f32 %v57, %v317
  %319 = vmatmul.f32.gmra.mxu0 %v89
  %v320 = vpop.f32.mrf.mxu0
  %v321 = vadd.f32 %v62, %v320
  %322 = vmatmul.f32.gmra.mxu0 %v92
  %v323 = vpop.f32.mrf.mxu0
  %v324 = vadd.f32 %v67, %v323
  %325 = vmatmul.f32.gmra.mxu0 %v95
  %v326 = vpop.f32.mrf.mxu0
  %v327 = vadd.f32 %v72, %v326
  %328 = vmatmul.f32.gmra.mxu0 %v98
  %v329 = vpop.f32.mrf.mxu0
  %v330 = vadd.f32 %v77, %v329
  %331 = vmatmul.f32.gmra.mxu0 %v101
  %v332 = vpop.f32.mrf.mxu0
  %v333 = vadd.f32 %v82, %v332
  %334 = vdwg.mxu0
  %335 = vmatpush.msra.mxu0 0.0
  %336 = vmatpush.msra.mxu0 0.0
  %337 = vmatpush.msra.mxu0 0.0
  %338 = vmatpush.msra.mxu0 0.0
  %339 = vmatpush.msra.mxu0 0.0
  %340 = vmatpush.msra.mxu0 0.0
  %341 = vmatpush.msra.mxu0 0.0
  %342 = vmatpush.msra.mxu0 0.0
  %343 = vmatpush.msra.mxu0 0.0
  %344 = vmatpush.msra.mxu0 0.0
  %345 = vmatpush.msra.mxu0 0.0
  %346 = vmatpush.msra.mxu0 0.0
  %347 = vmatpush.msra.mxu0 %v123
  %348 = vmatpush.msra.mxu0 %v40
  %349 = vmatpush.msra.mxu0 %v33
  %350 = vmatpush.msra.mxu0 %v26
  %351 = vmatmul.f32.gmra.mxu0 %v86
  %v352 = vpop.f32.mrf.mxu0
  %v353 = vadd.f32 %v57, %v352
  %354 = vmatmul.f32.gmra.mxu0 %v89
  %v355 = vpop.f32.mrf.mxu0
  %v356 = vadd.f32 %v62, %v355
  %357 = vmatmul.f32.gmra.mxu0 %v92
  %v358 = vpop.f32.mrf.mxu0
  %v359 = vadd.f32 %v67, %v358
  %360 = vmatmul.f32.gmra.mxu0 %v95
  %v361 = vpop.f32.mrf.mxu0
  %v362 = vadd.f32 %v72, %v361
  %363 = vmatmul.f32.gmra.mxu0 %v98
  %v364 = vpop.f32.mrf.mxu0
  %v365 = vadd.f32 %v77, %v364
  %366 = vmatmul.f32.gmra.mxu0 %v101
  %v367 = vpop.f32.mrf.mxu0
  %v368 = vadd.f32 %v82, %v367
  %369 = vdwg.mxu0
  %v370 = vmax.f32 %v143, 0.0
  %v371 = vmax.f32 %v178, 0.0
  %v372 = vmax.f32 %v213, 0.0
  %v373 = vmax.f32 %v248, 0.0
  %v374 = vmax.f32 %v283, 0.0
  %v375 = vmax.f32 %v318, 0.0
  %v376 = vmax.f32 %v353, 0.0
  %v377 = vmax.f32 %v146, 0.0
  %v378 = vmax.f32 %v181, 0.0
  %v379 = vmax.f32 %v216, 0.0
  %v380 = vmax.f32 %v251, 0.0
  %v381 = vmax.f32 %v286, 0.0
  %v382 = vmax.f32 %v321, 0.0
  %v383 = vmax.f32 %v356, 0.0
  %v384 = vmax.f32 %v149, 0.0
  %v385 = vmax.f32 %v184, 0.0
  %v386 = vmax.f32 %v219, 0.0
  %v387 = vmax.f32 %v254, 0.0
  %v388 = vmax.f32 %v289, 0.0
  %v389 = vmax.f32 %v324, 0.0
  %v390 = vmax.f32 %v359, 0.0
  %v391 = vmax.f32 %v152, 0.0
  %v392 = vmax.f32 %v187, 0.0
  %v393 = vmax.f32 %v222, 0.0
  %v394 = vmax.f32 %v257, 0.0
  %v395 = vmax.f32 %v292, 0.0
  %v396 = vmax.f32 %v327, 0.0
  %v397 = vmax.f32 %v362, 0.0
  %v398 = vmax.f32 %v155, 0.0
  %v399 = vmax.f32 %v190, 0.0
  %v400 = vmax.f32 %v225, 0.0
  %v401 = vmax.f32 %v260, 0.0
  %v402 = vmax.f32 %v295, 0.0
  %v403 = vmax.f32 %v330, 0.0
  %v404 = vmax.f32 %v365, 0.0
  %v405 = vmax.f32 %v158, 0.0
  %v406 = vmax.f32 %v193, 0.0
  %v407 = vmax.f32 %v228, 0.0
  %v408 = vmax.f32 %v263, 0.0
  %v409 = vmax.f32 %v298, 0.0
  %v410 = vmax.f32 %v333, 0.0
  %v411 = vmax.f32 %v368, 0.0
  %v412 = vpack.c.bf16 %v371, %v370
  %v413 = vpack.c.bf16 %v373, %v372
  %v414 = vpack.c.bf16 %v375, %v374
  %v415 = vpack.c.bf16 %v376, %v376
  %v416 = vpack.c.bf16 %v378, %v377
  %v417 = vpack.c.bf16 %v380, %v379
  %v418 = vpack.c.bf16 %v382, %v381
  %v419 = vpack.c.bf16 %v383, %v383
  %v420 = vpack.c.bf16 %v385, %v384
  %v421 = vpack.c.bf16 %v387, %v386
  %v422 = vpack.c.bf16 %v389, %v388
  %v423 = vpack.c.bf16 %v390, %v390
  %v424 = vpack.c.bf16 %v392, %v391
  %v425 = vpack.c.bf16 %v394, %v393
  %v426 = vpack.c.bf16 %v396, %v395
  %v427 = vpack.c.bf16 %v397, %v397
  %v428 = vpack.c.bf16 %v399, %v398
  %v429 = vpack.c.bf16 %v401, %v400
  %v430 = vpack.c.bf16 %v403, %v402
  %v431 = vpack.c.bf16 %v404, %v404
  %v432 = vpack.c.bf16 %v406, %v405
  %v433 = vpack.c.bf16 %v408, %v407
  %v434 = vpack.c.bf16 %v410, %v409
  %v435 = vpack.c.bf16 %v411, %v411
  %436 = vst [vmem:[%s3] sm:$0xff] %v412
  %437 = vst [vmem:[%s3 + $0x8] sm:$0xff] %v413
  %438 = vst [vmem:[%s3 + $0x10] sm:$0xff] %v414
  %vm439 = vcmask 125952
  %440 = vst.msk [vmem:[%s3 + $0x18] sm:$0xf] %vm439, %v415
  %441 = vst [vmem:[%s3 + $0x1c] sm:$0xff] %v416
  %442 = vst [vmem:[%s3 + $0x24] sm:$0xff] %v417
  %443 = vst [vmem:[%s3 + $0x2c] sm:$0xff] %v418
  %444 = vst.msk [vmem:[%s3 + $0x34] sm:$0xf] %vm439, %v419
  %445 = vst [vmem:[%s3 + $0x38] sm:$0xff] %v420
  %446 = vst [vmem:[%s3 + $0x40] sm:$0xff] %v421
  %447 = vst [vmem:[%s3 + $0x48] sm:$0xff] %v422
  %448 = vst.msk [vmem:[%s3 + $0x50] sm:$0xf] %vm439, %v423
  %449 = vst [vmem:[%s3 + $0x54] sm:$0xff] %v424
  %450 = vst [vmem:[%s3 + $0x5c] sm:$0xff] %v425
  %451 = vst [vmem:[%s3 + $0x64] sm:$0xff] %v426
  %452 = vst.msk [vmem:[%s3 + $0x6c] sm:$0xf] %vm439, %v427
  %453 = vst [vmem:[%s3 + $0x70] sm:$0xff] %v428
  %454 = vst [vmem:[%s3 + $0x78] sm:$0xff] %v429
  %455 = vst [vmem:[%s3 + $0x80] sm:$0xff] %v430
  %456 = vst.msk [vmem:[%s3 + $0x88] sm:$0xf] %vm439, %v431
  %457 = vst [vmem:[%s3 + $0x8c] sm:$0xff] %v432
  %458 = vst [vmem:[%s3 + $0x94] sm:$0xff] %v433
  %459 = vst [vmem:[%s3 + $0x9c] sm:$0xff] %v434
  %460 = vst.msk [vmem:[%s3 + $0xa4] sm:$0xf] %vm439, %v435
  // Predicated region
  $region14: #{forward.4} parent=0 // pred_check
    _
  $region15: #{forward.4} parent=0 // pred_check_branch
    %462 = sbr.rel (0) target = $region17
  $region16: #{forward.4} parent=0 // pred_region
    _
  $region17: #{forward.4} parent=0 // pred_fallthru
    _
  // Predicated region
  $region18: #{forward.4} parent=0 // pred_check
    _
  $region19: #{forward.4} parent=0 // pred_check_branch
    %464 = sbr.rel (0) target = $region21
  $region20: #{forward.4} parent=0 // pred_region
    _
  $region21: #{forward.4} parent=0 // pred_fallthru
    _

// kernel: forward.3
$region0: #{forward.3}
  #allocation0 [shape = 'u32[]', space=smem, size = 0x4, offset = 0x4, fixed_abs, tag = 'smem constant byte address 0x4 - core index']
  #allocation1 [shape = 'u32[72,128]{1,0:T(1,128)}', space=vmem, size = 0x9000, scoped, tag = 'internal scratch']
  #allocation2 [shape = 'f32[1,1]{1,0:T(1,128)S(1)}', space=vmem, size = 0x200, scoped, tag = 'scoped memory for forward.3']
  #allocation3 [shape = 'f32[1,1]{1,0:T(1,128)S(1)}', space=vmem, size = 0x200, scoped, tag = 'scoped memory for forward.3']
  %s0 = inlined_call_operand.vmem [shape: f32[512,49], index: 0, kind: input, shape index: {}]
  %s1 = inlined_call_operand.vmem [shape: f32[512,49], index: 1, kind: input, shape index: {}]
  %s2 = inlined_call_operand.vmem [shape: f32[1,25], index: 2, kind: input, shape index: {}]
  %s3 = inlined_call_operand.hbm [shape: f32[18,512], index: 3, kind: input, shape index: {}]
  %s4 = inlined_call_operand.hbm [shape: f32[18,512], index: 4, kind: input, shape index: {}]
  %s5 = inlined_call_operand.vmem [shape: f32[2,1], index: 5, kind: input, shape index: {}]
  %s6 = inlined_call_operand.hbm [shape: f32[49,225], index: 6, kind: input, shape index: {}]
  %s7 = inlined_call_operand.hbm [shape: f32[25,25], index: 7, kind: input, shape index: {}]
  %s8 = inlined_call_operand.hbm [shape: f32[25,25], index: 8, kind: input, shape index: {}]
  %s9 = inlined_call_operand.<no memory space> [shape: f32[1,1], index: 9, kind: input, shape index: {}]
  %s10 = inlined_call_operand.<no memory space> [shape: f32[1,1], index: 10, kind: input, shape index: {}]
  %s11 = inlined_call_operand.hbm [shape: f32[5,25], index: 11, kind: input, shape index: {}]
  %s12 = inlined_call_operand.vmem [shape: f32[25,15], index: 12, kind: input, shape index: {}]
  %s13 = inlined_call_operand.vmem [shape: f32[25,15], index: 13, kind: input, shape index: {}]
  %s14 = inlined_call_operand.vmem [shape: f32[25,15], index: 14, kind: input, shape index: {}]
  %s15 = inlined_call_operand.vmem [shape: f32[448,45], index: 15, kind: input, shape index: {}]
  %s16 = inlined_call_operand.vmem [shape: f32[448,1], index: 16, kind: input, shape index: {}]
  %s17 = inlined_call_operand.hbm [shape: f32[20,1344], index: 17, kind: input, shape index: {}]
  %s18 = inlined_call_operand.vmem [shape: f32[20,1], index: 18, kind: input, shape index: {}]
  %s19 = inlined_call_operand.vmem [shape: f32[780,5], index: 19, kind: input, shape index: {}]
  %s20 = inlined_call_operand.hbm [shape: f32[5,260], index: 20, kind: input, shape index: {}]
  %s21 = inlined_call_operand.vmem [shape: f32[78,1], index: 21, kind: input, shape index: {}]
  %s22 = inlined_call_operand.vmem [shape: f32[5,5], index: 22, kind: output, shape index: {0}]
  %s23 = inlined_call_operand.vmem [shape: f32[5,5], index: 23, kind: output, shape index: {1}]
  %s24 = inlined_call_operand.vmem [shape: f32[78,26], index: 24, kind: output, shape index: {2}]
  %25 = xla_tuple %s22, %s23, %s24
  %s26 = sld [smem:[#allocation0]]
  $region146: #{forward.3} parent=0
    _
  %s28 = ssub.s32 1, %s26
  %s29 = scalar_select 0, %s28, %s26
  %v30 = vstv %s9
  %31 = vst [vmem:[#allocation2] sm:$0x1] %v30
  %v32 = vstv %s10
  %33 = vst [vmem:[#allocation3] sm:$0x1] %v32
  $region1: #{forward.3} parent=0
    #allocation4 [shape = 'u8[49152]{0}', space=vmem, size = 0xc000, scoped, tag = 'input window, operand 3, single buffered']
    #allocation5 [shape = 's32[1]{0}', space=sflag, size = 0x4, scoped, tag = 'scoped memory for forward.3']
    #allocation6 [shape = 'u8[49152]{0}', space=vmem, size = 0xc000, scoped, tag = 'input window, operand 4, single buffered']
    #allocation7 [shape = 's32[1]{0}', space=sflag, size = 0x4, scoped, tag = 'scoped memory for forward.3']
    #allocation8 [shape = 'u8[57344]{0}', space=vmem, size = 0xe000, scoped, tag = 'input window, operand 6, single buffered']
    #allocation9 [shape = 'u8[16384]{0}', space=vmem, size = 0x4000, scoped, tag = 'input window, operand 7, single buffered']
    #allocation10 [shape = 's32[1]{0}', space=sflag, size = 0x4, scoped, tag = 'scoped memory for forward.3']
    #allocation11 [shape = 'u8[16384]{0}', space=vmem, size = 0x4000, scoped, tag = 'input window, operand 8, single buffered']
    #allocation12 [shape = 'u8[4096]{0}', space=vmem, size = 0x1000, scoped, tag = 'input window, operand 11, single buffered']
    #allocation13 [shape = 's32[1]{0}', space=sflag, size = 0x4, scoped, tag = 'scoped memory for forward.3']
    #allocation14 [shape = 'u8[135168]{0}', space=vmem, size = 0x21000, scoped, tag = 'input window, operand 17, single buffered']
    #allocation15 [shape = 'u8[12288]{0}', space=vmem, size = 0x3000, scoped, tag = 'input window, operand 20, single buffered']
    #allocation16 [shape = 's32[1]{0}', space=sflag, size = 0x4, scoped, tag = 'scoped memory for forward.3']
    %34 = vsyncpa [#allocation5], 0
    %35 = vsyncpa [#allocation7], 0
    %36 = vsyncpa [#allocation10], 0
    %37 = vsyncpa [#allocation13], 0
    %38 = vsyncpa [#allocation16], 0
    // Predicated region
    $region2: #{forward.3} parent=1 // pred_check
      _
    $region3: #{forward.3} parent=1 // pred_check_branch
      %40 = sbr.rel (0) target = $region5
    $region4: #{forward.3} parent=1 // pred_region
      _
    $region5: #{forward.3} parent=1 // pred_fallthru
      _
    // Predicated region
    $region6: #{forward.3} parent=1 // pred_check
      _
    $region7: #{forward.3} parent=1 // pred_check_branch
      %42 = sbr.rel (0) target = $region9
    $region8: #{forward.3} parent=1 // pred_region
      _
    $region9: #{forward.3} parent=1 // pred_fallthru
      _
    // Predicated region
    $region10: #{forward.3} parent=1 // pred_check
      _
    $region11: #{forward.3} parent=1 // pred_check_branch
      %44 = sbr.rel (0) target = $region13
    $region12: #{forward.3} parent=1 // pred_region
      _
    $region13: #{forward.3} parent=1 // pred_fallthru
      _
    // Predicated region
    $region14: #{forward.3} parent=1 // pred_check
      _
    $region15: #{forward.3} parent=1 // pred_check_branch
      %46 = sbr.rel (0) target = $region17
    $region16: #{forward.3} parent=1 // pred_region
      %48 = vsyncadd [#allocation5], 0
      %s49 = sshll.u32 %s3, 4
      %s50 = int_to_ptr.hbm [resolvable:$true] %s49
      %s51 = sshll.u32 [#allocation4], 4
      %s52 = int_to_ptr.vmem [resolvable:$true] %s51
      %57 = dma.hbm_to_vmem [thread:$0]  %s50, 1536, %s52, [#allocation5], 512, 512, 32
    $region17: #{forward.3} parent=1 // pred_fallthru
      _
    // Predicated region
    $region18: #{forward.3} parent=1 // pred_check
      _
    $region19: #{forward.3} parent=1 // pred_check_branch
      %59 = sbr.rel (0) target = $region21
    $region20: #{forward.3} parent=1 // pred_region
      %61 = vsyncadd [#allocation7], 0
      %s62 = sshll.u32 %s4, 4
      %s63 = int_to_ptr.hbm [resolvable:$true] %s62
      %s64 = sshll.u32 [#allocation6], 4
      %s65 = int_to_ptr.vmem [resolvable:$true] %s64
      %70 = dma.hbm_to_vmem [thread:$0]  %s63, 1536, %s65, [#allocation7], 512, 512, 32
    $region21: #{forward.3} parent=1 // pred_fallthru
      _
    // Predicated region
    $region22: #{forward.3} parent=1 // pred_check
      _
    $region23: #{forward.3} parent=1 // pred_check_branch
      %72 = sbr.rel (0) target = $region25
    $region24: #{forward.3} parent=1 // pred_region
      _
    $region25: #{forward.3} parent=1 // pred_fallthru
      _
    // Predicated region
    $region26: #{forward.3} parent=1 // pred_check
      _
    $region27: #{forward.3} parent=1 // pred_check_branch
      %74 = sbr.rel (0) target = $region29
    $region28: #{forward.3} parent=1 // pred_region
      %76 = vsyncadd [#allocation7], 0
      %s77 = sshll.u32 %s6, 4
      %s78 = int_to_ptr.hbm [resolvable:$true] %s77
      %s79 = sshll.u32 [#allocation8], 4
      %s80 = int_to_ptr.vmem [resolvable:$true] %s79
      %85 = dma.hbm_to_vmem [thread:$0]  %s78, 1792, %s80, [#allocation7], 256, 256, 16
    $region29: #{forward.3} parent=1 // pred_fallthru
      _
    // Predicated region
    $region30: #{forward.3} parent=1 // pred_check
      _
    $region31: #{forward.3} parent=1 // pred_check_branch
      %87 = sbr.rel (0) target = $region33
    $region32: #{forward.3} parent=1 // pred_region
      %89 = vsyncadd [#allocation10], 0
      %s90 = sshll.u32 %s7, 4
      %s91 = int_to_ptr.hbm [resolvable:$true] %s90
      %s92 = sshll.u32 [#allocation9], 4
      %s93 = int_to_ptr.vmem [resolvable:$true] %s92
      %98 = dma.hbm_to_vmem [thread:$0]  %s91, 512, %s93, [#allocation10], 128, 128, 8
    $region33: #{forward.3} parent=1 // pred_fallthru
      _
    // Predicated region
    $region34: #{forward.3} parent=1 // pred_check
      _
    $region35: #{forward.3} parent=1 // pred_check_branch
      %100 = sbr.rel (0) target = $region37
    $region36: #{forward.3} parent=1 // pred_region
      %102 = vsyncadd [#allocation10], 0
      %s103 = sshll.u32 %s8, 4
      %s104 = int_to_ptr.hbm [resolvable:$true] %s103
      %s105 = sshll.u32 [#allocation11], 4
      %s106 = int_to_ptr.vmem [resolvable:$true] %s105
      %111 = dma.hbm_to_vmem [thread:$0]  %s104, 512, %s106, [#allocation10], 128, 128, 8
    $region37: #{forward.3} parent=1 // pred_fallthru
      _
    // Predicated region
    $region38: #{forward.3} parent=1 // pred_check
      _
    $region39: #{forward.3} parent=1 // pred_check_branch
      %113 = sbr.rel (0) target = $region41
    $region40: #{forward.3} parent=1 // pred_region
      _
    $region41: #{forward.3} parent=1 // pred_fallthru
      _
    // Predicated region
    $region42: #{forward.3} parent=1 // pred_check
      _
    $region43: #{forward.3} parent=1 // pred_check_branch
      %115 = sbr.rel (0) target = $region45
    $region44: #{forward.3} parent=1 // pred_region
      _
    $region45: #{forward.3} parent=1 // pred_fallthru
      _
    // Predicated region
    $region46: #{forward.3} parent=1 // pred_check
      _
    $region47: #{forward.3} parent=1 // pred_check_branch
      %117 = sbr.rel (0) target = $region49
    $region48: #{forward.3} parent=1 // pred_region
      %119 = vsyncadd [#allocation13], 0
      %s121 = sshll.u32 %s11, 4
      %s122 = int_to_ptr.hbm [resolvable:$true] %s121
      %s123 = sshll.u32 [#allocation12], 4
      %s124 = int_to_ptr.vmem [resolvable:$true] %s123
      %126 = dma.hbm_to_vmem [thread:$0]  %s122, 128, %s124, [#allocation13]
    $region49: #{forward.3} parent=1 // pred_fallthru
      _
    // Predicated region
    $region50: #{forward.3} parent=1 // pred_check
      _
    $region51: #{forward.3} parent=1 // pred_check_branch
      %128 = sbr.rel (0) target = $region53
    $region52: #{forward.3} parent=1 // pred_region
      _
    $region53: #{forward.3} parent=1 // pred_fallthru
      _
    // Predicated region
    $region54: #{forward.3} parent=1 // pred_check
      _
    $region55: #{forward.3} parent=1 // pred_check_branch
      %130 = sbr.rel (0) target = $region57
    $region56: #{forward.3} parent=1 // pred_region
      _
    $region57: #{forward.3} parent=1 // pred_fallthru
      _
    // Predicated region
    $region58: #{forward.3} parent=1 // pred_check
      _
    $region59: #{forward.3} parent=1 // pred_check_branch
      %132 = sbr.rel (0) target = $region61
    $region60: #{forward.3} parent=1 // pred_region
      _
    $region61: #{forward.3} parent=1 // pred_fallthru
      _
    // Predicated region
    $region62: #{forward.3} parent=1 // pred_check
      _
    $region63: #{forward.3} parent=1 // pred_check_branch
      %134 = sbr.rel (0) target = $region65
    $region64: #{forward.3} parent=1 // pred_region
      _
    $region65: #{forward.3} parent=1 // pred_fallthru
      _
    // Predicated region
    $region66: #{forward.3} parent=1 // pred_check
      _
    $region67: #{forward.3} parent=1 // pred_check_branch
      %136 = sbr.rel (0) target = $region69
    $region68: #{forward.3} parent=1 // pred_region
      _
    $region69: #{forward.3} parent=1 // pred_fallthru
      _
    // Predicated region
    $region70: #{forward.3} parent=1 // pred_check
      _
    $region71: #{forward.3} parent=1 // pred_check_branch
      %138 = sbr.rel (0) target = $region73
    $region72: #{forward.3} parent=1 // pred_region
      %140 = vsyncadd [#allocation13], 0
      %s141 = sshll.u32 %s17, 4
      %s142 = int_to_ptr.hbm [resolvable:$true] %s141
      %s143 = sshll.u32 [#allocation14], 4
      %s144 = int_to_ptr.vmem [resolvable:$true] %s143
      %149 = dma.hbm_to_vmem [thread:$0]  %s142, 4224, %s144, [#allocation13], 1408, 1408, 88
    $region73: #{forward.3} parent=1 // pred_fallthru
      _
    // Predicated region
    $region74: #{forward.3} parent=1 // pred_check
      _
    $region75: #{forward.3} parent=1 // pred_check_branch
      %151 = sbr.rel (0) target = $region77
    $region76: #{forward.3} parent=1 // pred_region
      _
    $region77: #{forward.3} parent=1 // pred_fallthru
      _
    // Predicated region
    $region78: #{forward.3} parent=1 // pred_check
      _
    $region79: #{forward.3} parent=1 // pred_check_branch
      %153 = sbr.rel (0) target = $region81
    $region80: #{forward.3} parent=1 // pred_region
      _
    $region81: #{forward.3} parent=1 // pred_fallthru
      _
    // Predicated region
    $region82: #{forward.3} parent=1 // pred_check
      _
    $region83: #{forward.3} parent=1 // pred_check_branch
      %155 = sbr.rel (0) target = $region85
    $region84: #{forward.3} parent=1 // pred_region
      %157 = vsyncadd [#allocation16], 0
      %s159 = sshll.u32 %s20, 4
      %s160 = int_to_ptr.hbm [resolvable:$true] %s159
      %s161 = sshll.u32 [#allocation15], 4
      %s162 = int_to_ptr.vmem [resolvable:$true] %s161
      %164 = dma.hbm_to_vmem [thread:$0]  %s160, 384, %s162, [#allocation16]
    $region85: #{forward.3} parent=1 // pred_fallthru
      _
    // Predicated region
    $region86: #{forward.3} parent=1 // pred_check
      _
    $region87: #{forward.3} parent=1 // pred_check_branch
      %166 = sbr.rel (0) target = $region89
    $region88: #{forward.3} parent=1 // pred_region
      _
    $region89: #{forward.3} parent=1 // pred_fallthru
      _
    // Predicated region
    $region90: #{forward.3} parent=1 // pred_check
      _
    $region91: #{forward.3} parent=1 // pred_check_branch
      %168 = sbr.rel (0) target = $region93
    $region92: #{forward.3} parent=1 // pred_region
      %170 = dma.done [#allocation5], 1536
    $region93: #{forward.3} parent=1 // pred_fallthru
      _
    // Predicated region
    $region94: #{forward.3} parent=1 // pred_check
      _
    $region95: #{forward.3} parent=1 // pred_check_branch
      %172 = sbr.rel (0) target = $region97
    $region96: #{forward.3} parent=1 // pred_region
      %174 = dma.done [#allocation7], 1536
    $region97: #{forward.3} parent=1 // pred_fallthru
      _
    // Predicated region
    $region98: #{forward.3} parent=1 // pred_check
      _
    $region99: #{forward.3} parent=1 // pred_check_branch
      %176 = sbr.rel (0) target = $region101
    $region100: #{forward.3} parent=1 // pred_region
      %178 = dma.done [#allocation7], 1792
    $region101: #{forward.3} parent=1 // pred_fallthru
      _
    // Predicated region
    $region102: #{forward.3} parent=1 // pred_check
      _
    $region103: #{forward.3} parent=1 // pred_check_branch
      %180 = sbr.rel (0) target = $region105
    $region104: #{forward.3} parent=1 // pred_region
      %182 = dma.done [#allocation10], 512
    $region105: #{forward.3} parent=1 // pred_fallthru
      _
    // Predicated region
    $region106: #{forward.3} parent=1 // pred_check
      _
    $region107: #{forward.3} parent=1 // pred_check_branch
      %184 = sbr.rel (0) target = $region109
    $region108: #{forward.3} parent=1 // pred_region
      %186 = dma.done [#allocation10], 512
    $region109: #{forward.3} parent=1 // pred_fallthru
      _
    // Predicated region
    $region110: #{forward.3} parent=1 // pred_check
      _
    $region111: #{forward.3} parent=1 // pred_check_branch
      %188 = sbr.rel (0) target = $region113
    $region112: #{forward.3} parent=1 // pred_region
      %190 = dma.done [#allocation13], 128
    $region113: #{forward.3} parent=1 // pred_fallthru
      _
    // Predicated region
    $region114: #{forward.3} parent=1 // pred_check
      _
    $region115: #{forward.3} parent=1 // pred_check_branch
      %192 = sbr.rel (0) target = $region117
    $region116: #{forward.3} parent=1 // pred_region
      %194 = dma.done [#allocation13], 4224
    $region117: #{forward.3} parent=1 // pred_fallthru
      _
    // Predicated region
    $region118: #{forward.3} parent=1 // pred_check
      _
    $region119: #{forward.3} parent=1 // pred_check_branch
      %196 = sbr.rel (0) target = $region121
    $region120: #{forward.3} parent=1 // pred_region
      %198 = dma.done [#allocation16], 384
    $region121: #{forward.3} parent=1 // pred_fallthru
      _
    %v199 = vld [vmem:[%s0] sm:$0xff]
    %v200 = vld [vmem:[%s0 + $0x8] sm:$0xff]
    %v201 = vld [vmem:[%s0 + $0x10] sm:$0xff]
    %v202 = vld [vmem:[%s0 + $0x18] sm:$0xff]
    %v203 = vld [vmem:[%s0 + $0x20] sm:$0xff]
    %v204 = vld [vmem:[%s0 + $0x28] sm:$0xff]
    %v205 = vld [vmem:[%s0 + $0x30] sm:$0xff]
    %v206 = vld [vmem:[%s0 + $0x38] sm:$0xff]
    %v207 = vld [vmem:[%s0 + $0x40] sm:$0xff]
    %v208 = vld [vmem:[%s0 + $0x48] sm:$0xff]
    %v209 = vld [vmem:[%s0 + $0x50] sm:$0xff]
    %v210 = vld [vmem:[%s0 + $0x58] sm:$0xff]
    %v211 = vld [vmem:[%s0 + $0x60] sm:$0xff]
    %v212 = vld [vmem:[%s0 + $0x68] sm:$0xff]
    %v213 = vld [vmem:[%s0 + $0x70] sm:$0xff]
    %v214 = vld [vmem:[%s0 + $0x78] sm:$0xff]
    %v215 = vld [vmem:[%s0 + $0x80] sm:$0xff]
    %v216 = vld [vmem:[%s0 + $0x88] sm:$0xff]
    %v217 = vld [vmem:[%s0 + $0x90] sm:$0xff]
    %v218 = vld [vmem:[%s0 + $0x98] sm:$0xff]
    %v219 = vld [vmem:[%s0 + $0xa0] sm:$0xff]
    %v220 = vld [vmem:[%s0 + $0xa8] sm:$0xff]
    %v221 = vld [vmem:[%s0 + $0xb0] sm:$0xff]
    %v222 = vld [vmem:[%s0 + $0xb8] sm:$0xff]
    %v223 = vld [vmem:[%s0 + $0xc0] sm:$0xff]
    %v224 = vld [vmem:[%s0 + $0xc8] sm:$0xff]
    %v225 = vld [vmem:[%s0 + $0xd0] sm:$0xff]
    %v226 = vld [vmem:[%s0 + $0xd8] sm:$0xff]
    %v227 = vld [vmem:[%s0 + $0xe0] sm:$0xff]
    %v228 = vld [vmem:[%s0 + $0xe8] sm:$0xff]
    %v229 = vld [vmem:[%s0 + $0xf0] sm:$0xff]
    %v230 = vld [vmem:[%s0 + $0xf8] sm:$0xff]
    %v231 = vld [vmem:[%s0 + $0x100] sm:$0xff]
    %v232 = vld [vmem:[%s0 + $0x108] sm:$0xff]
    %v233 = vld [vmem:[%s0 + $0x110] sm:$0xff]
    %v234 = vld [vmem:[%s0 + $0x118] sm:$0xff]
    %v235 = vld [vmem:[%s0 + $0x120] sm:$0xff]
    %v236 = vld [vmem:[%s0 + $0x128] sm:$0xff]
    %v237 = vld [vmem:[%s0 + $0x130] sm:$0xff]
    %v238 = vld [vmem:[%s0 + $0x138] sm:$0xff]
    %v239 = vld [vmem:[%s0 + $0x140] sm:$0xff]
    %v240 = vld [vmem:[%s0 + $0x148] sm:$0xff]
    %v241 = vld [vmem:[%s0 + $0x150] sm:$0xff]
    %v242 = vld [vmem:[%s0 + $0x158] sm:$0xff]
    %v243 = vld [vmem:[%s0 + $0x160] sm:$0xff]
    %v244 = vld [vmem:[%s0 + $0x168] sm:$0xff]
    %v245 = vld [vmem:[%s0 + $0x170] sm:$0xff]
    %v246 = vld [vmem:[%s0 + $0x178] sm:$0xff]
    %v247 = vld [vmem:[%s0 + $0x180] sm:$0xff]
    %v248 = vld [vmem:[%s0 + $0x188] sm:$0xff]
    %v249 = vld [vmem:[%s0 + $0x190] sm:$0xff]
    %v250 = vld [vmem:[%s0 + $0x198] sm:$0xff]
    %v251 = vld [vmem:[%s0 + $0x1a0] sm:$0xff]
    %v252 = vld [vmem:[%s0 + $0x1a8] sm:$0xff]
    %v253 = vld [vmem:[%s0 + $0x1b0] sm:$0xff]
    %v254 = vld [vmem:[%s0 + $0x1b8] sm:$0xff]
    %v255 = vld [vmem:[%s0 + $0x1c0] sm:$0xff]
    %v256 = vld [vmem:[%s0 + $0x1c8] sm:$0xff]
    %v257 = vld [vmem:[%s0 + $0x1d0] sm:$0xff]
    %v258 = vld [vmem:[%s0 + $0x1d8] sm:$0xff]
    %v259 = vld [vmem:[%s0 + $0x1e0] sm:$0xff]
    %v260 = vld [vmem:[%s0 + $0x1e8] sm:$0xff]
    %v261 = vld [vmem:[%s0 + $0x1f0] sm:$0xff]
    %v262 = vld [vmem:[%s0 + $0x1f8] sm:$0xff]
    %v263 = vmax.f32 %v199, 0.0
    %v264 = vmax.f32 %v200, 0.0
    %v265 = vmax.f32 %v201, 0.0
    %v266 = vmax.f32 %v202, 0.0
    %v267 = vmax.f32 %v203, 0.0
    %v268 = vmax.f32 %v204, 0.0
    %v269 = vmax.f32 %v205, 0.0
    %v270 = vmax.f32 %v206, 0.0
    %v271 = vmax.f32 %v207, 0.0
    %v272 = vmax.f32 %v208, 0.0
    %v273 = vmax.f32 %v209, 0.0
    %v274 = vmax.f32 %v210, 0.0
    %v275 = vmax.f32 %v211, 0.0
    %v276 = vmax.f32 %v212, 0.0
    %v277 = vmax.f32 %v213, 0.0
    %v278 = vmax.f32 %v214, 0.0
    %v279 = vmax.f32 %v215, 0.0
    %v280 = vmax.f32 %v216, 0.0
    %v281 = vmax.f32 %v217, 0.0
    %v282 = vmax.f32 %v218, 0.0
    %v283 = vmax.f32 %v219, 0.0
    %v284 = vmax.f32 %v220, 0.0
    %v285 = vmax.f32 %v221, 0.0
    %v286 = vmax.f32 %v222, 0.0
    %v287 = vmax.f32 %v223, 0.0
    %v288 = vmax.f32 %v224, 0.0
    %v289 = vmax.f32 %v225, 0.0
    %v290 = vmax.f32 %v226, 0.0
    %v291 = vmax.f32 %v227, 0.0
    %v292 = vmax.f32 %v228, 0.0
    %v293 = vmax.f32 %v229, 0.0
    %v294 = vmax.f32 %v230, 0.0
    %v295 = vmax.f32 %v231, 0.0
    %v296 = vmax.f32 %v232, 0.0
    %v297 = vmax.f32 %v233, 0.0
    %v298 = vmax.f32 %v234, 0.0
    %v299 = vmax.f32 %v235, 0.0
    %v300 = vmax.f32 %v236, 0.0
    %v301 = vmax.f32 %v237, 0.0
    %v302 = vmax.f32 %v238, 0.0
    %v303 = vmax.f32 %v239, 0.0
    %v304 = vmax.f32 %v240, 0.0
    %v305 = vmax.f32 %v241, 0.0
    %v306 = vmax.f32 %v242, 0.0
    %v307 = vmax.f32 %v243, 0.0
    %v308 = vmax.f32 %v244, 0.0
    %v309 = vmax.f32 %v245, 0.0
    %v310 = vmax.f32 %v246, 0.0
    %v311 = vmax.f32 %v247, 0.0
    %v312 = vmax.f32 %v248, 0.0
    %v313 = vmax.f32 %v249, 0.0
    %v314 = vmax.f32 %v250, 0.0
    %v315 = vmax.f32 %v251, 0.0
    %v316 = vmax.f32 %v252, 0.0
    %v317 = vmax.f32 %v253, 0.0
    %v318 = vmax.f32 %v254, 0.0
    %v319 = vmax.f32 %v255, 0.0
    %v320 = vmax.f32 %v256, 0.0
    %v321 = vmax.f32 %v257, 0.0
    %v322 = vmax.f32 %v258, 0.0
    %v323 = vmax.f32 %v259, 0.0
    %v324 = vmax.f32 %v260, 0.0
    %v325 = vmax.f32 %v261, 0.0
    %v326 = vmax.f32 %v262, 0.0
    %v327 = vld [vmem:[%s1] sm:$0xff]
    %v328 = vld [vmem:[%s1 + $0x8] sm:$0xff]
    %v329 = vld [vmem:[%s1 + $0x10] sm:$0xff]
    %v330 = vld [vmem:[%s1 + $0x18] sm:$0xff]
    %v331 = vld [vmem:[%s1 + $0x20] sm:$0xff]
    %v332 = vld [vmem:[%s1 + $0x28] sm:$0xff]
    %v333 = vld [vmem:[%s1 + $0x30] sm:$0xff]
    %v334 = vld [vmem:[%s1 + $0x38] sm:$0xff]
    %v335 = vld [vmem:[%s1 + $0x40] sm:$0xff]
    %v336 = vld [vmem:[%s1 + $0x48] sm:$0xff]
    %v337 = vld [vmem:[%s1 + $0x50] sm:$0xff]
    %v338 = vld [vmem:[%s1 + $0x58] sm:$0xff]
    %v339 = vld [vmem:[%s1 + $0x60] sm:$0xff]
    %v340 = vld [vmem:[%s1 + $0x68] sm:$0xff]
    %v341 = vld [vmem:[%s1 + $0x70] sm:$0xff]
    %v342 = vld [vmem:[%s1 + $0x78] sm:$0xff]
    %v343 = vld [vmem:[%s1 + $0x80] sm:$0xff]
    %v344 = vld [vmem:[%s1 + $0x88] sm:$0xff]
    %v345 = vld [vmem:[%s1 + $0x90] sm:$0xff]
    %v346 = vld [vmem:[%s1 + $0x98] sm:$0xff]
    %v347 = vld [vmem:[%s1 + $0xa0] sm:$0xff]
    %v348 = vld [vmem:[%s1 + $0xa8] sm:$0xff]
    %v349 = vld [vmem:[%s1 + $0xb0] sm:$0xff]
    %v350 = vld [vmem:[%s1 + $0xb8] sm:$0xff]
    %v351 = vld [vmem:[%s1 + $0xc0] sm:$0xff]
    %v352 = vld [vmem:[%s1 + $0xc8] sm:$0xff]
    %v353 = vld [vmem:[%s1 + $0xd0] sm:$0xff]
    %v354 = vld [vmem:[%s1 + $0xd8] sm:$0xff]
    %v355 = vld [vmem:[%s1 + $0xe0] sm:$0xff]
    %v356 = vld [vmem:[%s1 + $0xe8] sm:$0xff]
    %v357 = vld [vmem:[%s1 + $0xf0] sm:$0xff]
    %v358 = vld [vmem:[%s1 + $0xf8] sm:$0xff]
    %v359 = vld [vmem:[%s1 + $0x100] sm:$0xff]
    %v360 = vld [vmem:[%s1 + $0x108] sm:$0xff]
    %v361 = vld [vmem:[%s1 + $0x110] sm:$0xff]
    %v362 = vld [vmem:[%s1 + $0x118] sm:$0xff]
    %v363 = vld [vmem:[%s1 + $0x120] sm:$0xff]
    %v364 = vld [vmem:[%s1 + $0x128] sm:$0xff]
    %v365 = vld [vmem:[%s1 + $0x130] sm:$0xff]
    %v366 = vld [vmem:[%s1 + $0x138] sm:$0xff]
    %v367 = vld [vmem:[%s1 + $0x140] sm:$0xff]
    %v368 = vld [vmem:[%s1 + $0x148] sm:$0xff]
    %v369 = vld [vmem:[%s1 + $0x150] sm:$0xff]
    %v370 = vld [vmem:[%s1 + $0x158] sm:$0xff]
    %v371 = vld [vmem:[%s1 + $0x160] sm:$0xff]
    %v372 = vld [vmem:[%s1 + $0x168] sm:$0xff]
    %v373 = vld [vmem:[%s1 + $0x170] sm:$0xff]
    %v374 = vld [vmem:[%s1 + $0x178] sm:$0xff]
    %v375 = vld [vmem:[%s1 + $0x180] sm:$0xff]
    %v376 = vld [vmem:[%s1 + $0x188] sm:$0xff]
    %v377 = vld [vmem:[%s1 + $0x190] sm:$0xff]
    %v378 = vld [vmem:[%s1 + $0x198] sm:$0xff]
    %v379 = vld [vmem:[%s1 + $0x1a0] sm:$0xff]
    %v380 = vld [vmem:[%s1 + $0x1a8] sm:$0xff]
    %v381 = vld [vmem:[%s1 + $0x1b0] sm:$0xff]
    %v382 = vld [vmem:[%s1 + $0x1b8] sm:$0xff]
    %v383 = vld [vmem:[%s1 + $0x1c0] sm:$0xff]
    %v384 = vld [vmem:[%s1 + $0x1c8] sm:$0xff]
    %v385 = vld [vmem:[%s1 + $0x1d0] sm:$0xff]
    %v386 = vld [vmem:[%s1 + $0x1d8] sm:$0xff]
    %v387 = vld [vmem:[%s1 + $0x1e0] sm:$0xff]
    %v388 = vld [vmem:[%s1 + $0x1e8] sm:$0xff]
    %v389 = vld [vmem:[%s1 + $0x1f0] sm:$0xff]
    %v390 = vld [vmem:[%s1 + $0x1f8] sm:$0xff]
    %v391 = vmax.f32 %v327, 0.0
    %v392 = vmax.f32 %v328, 0.0
    %v393 = vmax.f32 %v329, 0.0
    %v394 = vmax.f32 %v330, 0.0
    %v395 = vmax.f32 %v331, 0.0
    %v396 = vmax.f32 %v332, 0.0
    %v397 = vmax.f32 %v333, 0.0
    %v398 = vmax.f32 %v334, 0.0
    %v399 = vmax.f32 %v335, 0.0
    %v400 = vmax.f32 %v336, 0.0
    %v401 = vmax.f32 %v337, 0.0
    %v402 = vmax.f32 %v338, 0.0
    %v403 = vmax.f32 %v339, 0.0
    %v404 = vmax.f32 %v340, 0.0
    %v405 = vmax.f32 %v341, 0.0
    %v406 = vmax.f32 %v342, 0.0
    %v407 = vmax.f32 %v343, 0.0
    %v408 = vmax.f32 %v344, 0.0
    %v409 = vmax.f32 %v345, 0.0
    %v410 = vmax.f32 %v346, 0.0
    %v411 = vmax.f32 %v347, 0.0
    %v412 = vmax.f32 %v348, 0.0
    %v413 = vmax.f32 %v349, 0.0
    %v414 = vmax.f32 %v350, 0.0
    %v415 = vmax.f32 %v351, 0.0
    %v416 = vmax.f32 %v352, 0.0
    %v417 = vmax.f32 %v353, 0.0
    %v418 = vmax.f32 %v354, 0.0
    %v419 = vmax.f32 %v355, 0.0
    %v420 = vmax.f32 %v356, 0.0
    %v421 = vmax.f32 %v357, 0.0
    %v422 = vmax.f32 %v358, 0.0
    %v423 = vmax.f32 %v359, 0.0
    %v424 = vmax.f32 %v360, 0.0
    %v425 = vmax.f32 %v361, 0.0
    %v426 = vmax.f32 %v362, 0.0
    %v427 = vmax.f32 %v363, 0.0
    %v428 = vmax.f32 %v364, 0.0
    %v429 = vmax.f32 %v365, 0.0
    %v430 = vmax.f32 %v366, 0.0
    %v431 = vmax.f32 %v367, 0.0
    %v432 = vmax.f32 %v368, 0.0
    %v433 = vmax.f32 %v369, 0.0
    %v434 = vmax.f32 %v370, 0.0
    %v435 = vmax.f32 %v371, 0.0
    %v436 = vmax.f32 %v372, 0.0
    %v437 = vmax.f32 %v373, 0.0
    %v438 = vmax.f32 %v374, 0.0
    %v439 = vmax.f32 %v375, 0.0
    %v440 = vmax.f32 %v376, 0.0
    %v441 = vmax.f32 %v377, 0.0
    %v442 = vmax.f32 %v378, 0.0
    %v443 = vmax.f32 %v379, 0.0
    %v444 = vmax.f32 %v380, 0.0
    %v445 = vmax.f32 %v381, 0.0
    %v446 = vmax.f32 %v382, 0.0
    %v447 = vmax.f32 %v383, 0.0
    %v448 = vmax.f32 %v384, 0.0
    %v449 = vmax.f32 %v385, 0.0
    %v450 = vmax.f32 %v386, 0.0
    %v451 = vmax.f32 %v387, 0.0
    %v452 = vmax.f32 %v388, 0.0
    %v453 = vmax.f32 %v389, 0.0
    %v454 = vmax.f32 %v390, 0.0
    %v455 = vld [vmem:[#allocation4] sm:$0xff]
    %v456 = vld [vmem:[#allocation4 + $0x8] sm:$0xff]
    %v457 = vld [vmem:[#allocation4 + $0x10] sm:$0xff]
    %v458 = vld [vmem:[#allocation4 + $0x18] sm:$0xff]
    %v459 = vld [vmem:[#allocation4 + $0x20] sm:$0xff]
    %v460 = vld [vmem:[#allocation4 + $0x28] sm:$0xff]
    %v461 = vld [vmem:[#allocation4 + $0x30] sm:$0xff]
    %v462 = vld [vmem:[#allocation4 + $0x38] sm:$0xff]
    %v463 = vld [vmem:[#allocation4 + $0x40] sm:$0x3]
    %v464 = vld [vmem:[#allocation4 + $0x48] sm:$0x3]
    %v465 = vld [vmem:[#allocation4 + $0x50] sm:$0x3]
    %v466 = vld [vmem:[#allocation4 + $0x58] sm:$0x3]
    %v467 = vld [vmem:[#allocation6] sm:$0xff]
    %v468 = vld [vmem:[#allocation6 + $0x8] sm:$0xff]
    %v469 = vld [vmem:[#allocation6 + $0x10] sm:$0xff]
    %v470 = vld [vmem:[#allocation6 + $0x18] sm:$0xff]
    %v471 = vld [vmem:[#allocation6 + $0x20] sm:$0xff]
    %v472 = vld [vmem:[#allocation6 + $0x28] sm:$0xff]
    %v473 = vld [vmem:[#allocation6 + $0x30] sm:$0xff]
    %v474 = vld [vmem:[#allocation6 + $0x38] sm:$0xff]
    %v475 = vld [vmem:[#allocation6 + $0x40] sm:$0x3]
    %v476 = vld [vmem:[#allocation6 + $0x48] sm:$0x3]
    %v477 = vld [vmem:[#allocation6 + $0x50] sm:$0x3]
    %v478 = vld [vmem:[#allocation6 + $0x58] sm:$0x3]
    %479 = vmatpush.msra.mxu0 %v406
    %480 = vmatpush.msra.mxu0 %v405
    %481 = vmatpush.msra.mxu0 %v404
    %482 = vmatpush.msra.mxu0 %v403
    %483 = vmatpush.msra.mxu0 %v402
    %484 = vmatpush.msra.mxu0 %v401
    %485 = vmatpush.msra.mxu0 %v400
    %486 = vmatpush.msra.mxu0 %v399
    %487 = vmatpush.msra.mxu0 %v398
    %488 = vmatpush.msra.mxu0 %v397
    %489 = vmatpush.msra.mxu0 %v396
    %490 = vmatpush.msra.mxu0 %v395
    %491 = vmatpush.msra.mxu0 %v394
    %492 = vmatpush.msra.mxu0 %v393
    %493 = vmatpush.msra.mxu0 %v392
    %494 = vmatpush.msra.mxu0 %v391
    %495 = vmatmul.f32.gmra.mxu0 %v467
    %v496 = vpop.f32.mrf.mxu0
    %v497 = vadd.f32 0.0, %v496
    %498 = vmatmul.f32.gmra.mxu0 %v471
    %v499 = vpop.f32.mrf.mxu0
    %v500 = vadd.f32 0.0, %v499
    %501 = vmatmul.f32.gmra.mxu0 %v475
    %v502 = vpop.f32.mrf.mxu0
    %v503 = vadd.f32 0.0, %v502
    %504 = vdwg.mxu0
    %505 = vmatpush.msra.mxu0 %v422
    %506 = vmatpush.msra.mxu0 %v421
    %507 = vmatpush.msra.mxu0 %v420
    %508 = vmatpush.msra.mxu0 %v419
    %509 = vmatpush.msra.mxu0 %v418
    %510 = vmatpush.msra.mxu0 %v417
    %511 = vmatpush.msra.mxu0 %v416
    %512 = vmatpush.msra.mxu0 %v415
    %513 = vmatpush.msra.mxu0 %v414
    %514 = vmatpush.msra.mxu0 %v413
    %515 = vmatpush.msra.mxu0 %v412
    %516 = vmatpush.msra.mxu0 %v411
    %517 = vmatpush.msra.mxu0 %v410
    %518 = vmatpush.msra.mxu0 %v409
    %519 = vmatpush.msra.mxu0 %v408
    %520 = vmatpush.msra.mxu0 %v407
    %521 = vmatmul.f32.gmra.mxu0 %v468
    %v522 = vpop.f32.mrf.mxu0
    %v523 = vadd.f32 %v497, %v522
    %524 = vmatmul.f32.gmra.mxu0 %v472
    %v525 = vpop.f32.mrf.mxu0
    %v526 = vadd.f32 %v500, %v525
    %527 = vmatmul.f32.gmra.mxu0 %v476
    %v528 = vpop.f32.mrf.mxu0
    %v529 = vadd.f32 %v503, %v528
    %530 = vdwg.mxu0
    %531 = vmatpush.msra.mxu0 %v438
    %532 = vmatpush.msra.mxu0 %v437
    %533 = vmatpush.msra.mxu0 %v436
    %534 = vmatpush.msra.mxu0 %v435
    %535 = vmatpush.msra.mxu0 %v434
    %536 = vmatpush.msra.mxu0 %v433
    %537 = vmatpush.msra.mxu0 %v432
    %538 = vmatpush.msra.mxu0 %v431
    %539 = vmatpush.msra.mxu0 %v430
    %540 = vmatpush.msra.mxu0 %v429
    %541 = vmatpush.msra.mxu0 %v428
    %542 = vmatpush.msra.mxu0 %v427
    %543 = vmatpush.msra.mxu0 %v426
    %544 = vmatpush.msra.mxu0 %v425
    %545 = vmatpush.msra.mxu0 %v424
    %546 = vmatpush.msra.mxu0 %v423
    %547 = vmatmul.f32.gmra.mxu0 %v469
    %v548 = vpop.f32.mrf.mxu0
    %v549 = vadd.f32 %v523, %v548
    %550 = vmatmul.f32.gmra.mxu0 %v473
    %v551 = vpop.f32.mrf.mxu0
    %v552 = vadd.f32 %v526, %v551
    %553 = vmatmul.f32.gmra.mxu0 %v477
    %v554 = vpop.f32.mrf.mxu0
    %v555 = vadd.f32 %v529, %v554
    %556 = vdwg.mxu0
    %557 = vmatpush.msra.mxu0 %v454
    %558 = vmatpush.msra.mxu0 %v453
    %559 = vmatpush.msra.mxu0 %v452
    %560 = vmatpush.msra.mxu0 %v451
    %561 = vmatpush.msra.mxu0 %v450
    %562 = vmatpush.msra.mxu0 %v449
    %563 = vmatpush.msra.mxu0 %v448
    %564 = vmatpush.msra.mxu0 %v447
    %565 = vmatpush.msra.mxu0 %v446
    %566 = vmatpush.msra.mxu0 %v445
    %567 = vmatpush.msra.mxu0 %v444
    %568 = vmatpush.msra.mxu0 %v443
    %569 = vmatpush.msra.mxu0 %v442
    %570 = vmatpush.msra.mxu0 %v441
    %571 = vmatpush.msra.mxu0 %v440
    %572 = vmatpush.msra.mxu0 %v439
    %573 = vmatmul.f32.gmra.mxu0 %v470
    %v574 = vpop.f32.mrf.mxu0
    %v575 = vadd.f32 %v549, %v574
    %576 = vmatmul.f32.gmra.mxu0 %v474
    %v577 = vpop.f32.mrf.mxu0
    %v578 = vadd.f32 %v552, %v577
    %579 = vmatmul.f32.gmra.mxu0 %v478
    %v580 = vpop.f32.mrf.mxu0
    %v581 = vadd.f32 %v555, %v580
    %582 = vdwg.mxu0
    %583 = vmatpush.msra.mxu0 %v278
    %584 = vmatpush.msra.mxu0 %v277
    %585 = vmatpush.msra.mxu0 %v276
    %586 = vmatpush.msra.mxu0 %v275
    %587 = vmatpush.msra.mxu0 %v274
    %588 = vmatpush.msra.mxu0 %v273
    %589 = vmatpush.msra.mxu0 %v272
    %590 = vmatpush.msra.mxu0 %v271
    %591 = vmatpush.msra.mxu0 %v270
    %592 = vmatpush.msra.mxu0 %v269
    %593 = vmatpush.msra.mxu0 %v268
    %594 = vmatpush.msra.mxu0 %v267
    %595 = vmatpush.msra.mxu0 %v266
    %596 = vmatpush.msra.mxu0 %v265
    %597 = vmatpush.msra.mxu0 %v264
    %598 = vmatpush.msra.mxu0 %v263
    %599 = vmatmul.f32.gmra.mxu0 %v455
    %v600 = vpop.f32.mrf.mxu0
    %v601 = vadd.f32 %v575, %v600
    %602 = vmatmul.f32.gmra.mxu0 %v459
    %v603 = vpop.f32.mrf.mxu0
    %v604 = vadd.f32 %v578, %v603
    %605 = vmatmul.f32.gmra.mxu0 %v463
    %v606 = vpop.f32.mrf.mxu0
    %v607 = vadd.f32 %v581, %v606
    %608 = vdwg.mxu0
    %609 = vmatpush.msra.mxu0 %v294
    %610 = vmatpush.msra.mxu0 %v293
    %611 = vmatpush.msra.mxu0 %v292
    %612 = vmatpush.msra.mxu0 %v291
    %613 = vmatpush.msra.mxu0 %v290
    %614 = vmatpush.msra.mxu0 %v289
    %615 = vmatpush.msra.mxu0 %v288
    %616 = vmatpush.msra.mxu0 %v287
    %617 = vmatpush.msra.mxu0 %v286
    %618 = vmatpush.msra.mxu0 %v285
    %619 = vmatpush.msra.mxu0 %v284
    %620 = vmatpush.msra.mxu0 %v283
    %621 = vmatpush.msra.mxu0 %v282
    %622 = vmatpush.msra.mxu0 %v281
    %623 = vmatpush.msra.mxu0 %v280
    %624 = vmatpush.msra.mxu0 %v279
    %625 = vmatmul.f32.gmra.mxu0 %v456
    %v626 = vpop.f32.mrf.mxu0
    %v627 = vadd.f32 %v601, %v626
    %628 = vmatmul.f32.gmra.mxu0 %v460
    %v629 = vpop.f32.mrf.mxu0
    %v630 = vadd.f32 %v604, %v629
    %631 = vmatmul.f32.gmra.mxu0 %v464
    %v632 = vpop.f32.mrf.mxu0
    %v633 = vadd.f32 %v607, %v632
    %634 = vdwg.mxu0
    %635 = vmatpush.msra.mxu0 %v310
    %636 = vmatpush.msra.mxu0 %v309
    %637 = vmatpush.msra.mxu0 %v308
    %638 = vmatpush.msra.mxu0 %v307
    %639 = vmatpush.msra.mxu0 %v306
    %640 = vmatpush.msra.mxu0 %v305
    %641 = vmatpush.msra.mxu0 %v304
    %642 = vmatpush.msra.mxu0 %v303
    %643 = vmatpush.msra.mxu0 %v302
    %644 = vmatpush.msra.mxu0 %v301
    %645 = vmatpush.msra.mxu0 %v300
    %646 = vmatpush.msra.mxu0 %v299
    %647 = vmatpush.msra.mxu0 %v298
    %648 = vmatpush.msra.mxu0 %v297
    %649 = vmatpush.msra.mxu0 %v296
    %650 = vmatpush.msra.mxu0 %v295
    %651 = vmatmul.f32.gmra.mxu0 %v457
    %v652 = vpop.f32.mrf.mxu0
    %v653 = vadd.f32 %v627, %v652
    %654 = vmatmul.f32.gmra.mxu0 %v461
    %v655 = vpop.f32.mrf.mxu0
    %v656 = vadd.f32 %v630, %v655
    %657 = vmatmul.f32.gmra.mxu0 %v465
    %v658 = vpop.f32.mrf.mxu0
    %v659 = vadd.f32 %v633, %v658
    %660 = vdwg.mxu0
    %661 = vmatpush.msra.mxu0 %v326
    %662 = vmatpush.msra.mxu0 %v325
    %663 = vmatpush.msra.mxu0 %v324
    %664 = vmatpush.msra.mxu0 %v323
    %665 = vmatpush.msra.mxu0 %v322
    %666 = vmatpush.msra.mxu0 %v321
    %667 = vmatpush.msra.mxu0 %v320
    %668 = vmatpush.msra.mxu0 %v319
    %669 = vmatpush.msra.mxu0 %v318
    %670 = vmatpush.msra.mxu0 %v317
    %671 = vmatpush.msra.mxu0 %v316
    %672 = vmatpush.msra.mxu0 %v315
    %673 = vmatpush.msra.mxu0 %v314
    %674 = vmatpush.msra.mxu0 %v313
    %675 = vmatpush.msra.mxu0 %v312
    %676 = vmatpush.msra.mxu0 %v311
    %677 = vmatmul.f32.gmra.mxu0 %v458
    %v678 = vpop.f32.mrf.mxu0
    %v679 = vadd.f32 %v653, %v678
    %680 = vmatmul.f32.gmra.mxu0 %v462
    %v681 = vpop.f32.mrf.mxu0
    %v682 = vadd.f32 %v656, %v681
    %683 = vmatmul.f32.gmra.mxu0 %v466
    %v684 = vpop.f32.mrf.mxu0
    %v685 = vadd.f32 %v659, %v684
    %686 = vdwg.mxu0
    %v687 = vld [vmem:[#allocation8] sm:$0xff]
    %v688 = vld [vmem:[#allocation8 + $0x10] sm:$0xff]
    %v689 = vld [vmem:[#allocation8 + $0x20] sm:$0xff]
    %v690 = vld [vmem:[#allocation8 + $0x30] sm:$0xff]
    %v691 = vld [vmem:[#allocation8 + $0x40] sm:$0xff]
    %v692 = vld [vmem:[#allocation8 + $0x50] sm:$0xff]
    %v693 = vld [vmem:[#allocation8 + $0x60] sm:$0x1]
    %v695 = vrot.slane %v679, 2
    %703 = vrot.lane.b32.xlu0 %v687, 103
    %v704 = vpop.permute.xlu0 %703
    %705 = vrot.lane.b32.xlu0 %v688, 103
    %v706 = vpop.permute.xlu0 %705
    %707 = vrot.lane.b32.xlu0 %v689, 103
    %v708 = vpop.permute.xlu0 %707
    %709 = vrot.lane.b32.xlu0 %v690, 103
    %v710 = vpop.permute.xlu0 %709
    %711 = vrot.lane.b32.xlu0 %v691, 103
    %v712 = vpop.permute.xlu0 %711
    %713 = vrot.lane.b32.xlu0 %v692, 103
    %v714 = vpop.permute.xlu0 %713
    %715 = vrot.lane.b32.xlu0 %v693, 103
    %v716 = vpop.permute.xlu0 %715
    %vm723 = vcmask 400384
    %v724 = vsel %vm723, %v695, 0
    %vm726 = vcmask 1040384
    %v727 = vsel %vm726, %v716, 0
    %729 = vmatpush.msra.mxu0 0.0
    %730 = vmatpush.msra.mxu0 0.0
    %731 = vmatpush.msra.mxu0 0.0
    %732 = vmatpush.msra.mxu0 0.0
    %733 = vmatpush.msra.mxu0 0.0
    %734 = vmatpush.msra.mxu0 0.0
    %735 = vmatpush.msra.mxu0 0.0
    %736 = vmatpush.msra.mxu0 0.0
    %737 = vmatpush.msra.mxu0 0.0
    %738 = vmatpush.msra.mxu0 %v727
    %739 = vmatpush.msra.mxu0 %v714
    %740 = vmatpush.msra.mxu0 %v712
    %741 = vmatpush.msra.mxu0 %v710
    %742 = vmatpush.msra.mxu0 %v708
    %743 = vmatpush.msra.mxu0 %v706
    %744 = vmatpush.msra.mxu0 %v704
    %745 = vmatmul.f32.gmra.mxu0 %v724
    %v746 = vpop.f32.mrf.mxu0
    %v747 = vadd.f32 0.0, %v746
    %748 = vdwg.mxu0
    %v749 = vsel %vm723, %v679, 0
    %v751 = vsel %vm726, %v693, 0
    %753 = vmatpush.msra.mxu0 0.0
    %754 = vmatpush.msra.mxu0 0.0
    %755 = vmatpush.msra.mxu0 0.0
    %756 = vmatpush.msra.mxu0 0.0
    %757 = vmatpush.msra.mxu0 0.0
    %758 = vmatpush.msra.mxu0 0.0
    %759 = vmatpush.msra.mxu0 0.0
    %760 = vmatpush.msra.mxu0 0.0
    %761 = vmatpush.msra.mxu0 0.0
    %762 = vmatpush.msra.mxu0 %v751
    %763 = vmatpush.msra.mxu0 %v692
    %764 = vmatpush.msra.mxu0 %v691
    %765 = vmatpush.msra.mxu0 %v690
    %766 = vmatpush.msra.mxu0 %v689
    %767 = vmatpush.msra.mxu0 %v688
    %768 = vmatpush.msra.mxu0 %v687
    %769 = vmatmul.f32.gmra.mxu0 %v749
    %v770 = vpop.f32.mrf.mxu0
    %v771 = vadd.f32 %v747, %v770
    %772 = vdwg.mxu0
    %v773 = vrot.slane %v679, 4
    %774 = vrot.lane.b32.xlu0 %v687, 78
    %v775 = vpop.permute.xlu0 %774
    %776 = vrot.lane.b32.xlu0 %v688, 78
    %v777 = vpop.permute.xlu0 %776
    %778 = vrot.lane.b32.xlu0 %v689, 78
    %v779 = vpop.permute.xlu0 %778
    %780 = vrot.lane.b32.xlu0 %v690, 78
    %v781 = vpop.permute.xlu0 %780
    %782 = vrot.lane.b32.xlu0 %v691, 78
    %v783 = vpop.permute.xlu0 %782
    %784 = vrot.lane.b32.xlu0 %v692, 78
    %v785 = vpop.permute.xlu0 %784
    %786 = vrot.lane.b32.xlu0 %v693, 78
    %v787 = vpop.permute.xlu0 %786
    %v794 = vsel %vm723, %v773, 0
    %v796 = vsel %vm726, %v787, 0
    %798 = vmatpush.msra.mxu0 0.0
    %799 = vmatpush.msra.mxu0 0.0
    %800 = vmatpush.msra.mxu0 0.0
    %801 = vmatpush.msra.mxu0 0.0
    %802 = vmatpush.msra.mxu0 0.0
    %803 = vmatpush.msra.mxu0 0.0
    %804 = vmatpush.msra.mxu0 0.0
    %805 = vmatpush.msra.mxu0 0.0
    %806 = vmatpush.msra.mxu0 0.0
    %807 = vmatpush.msra.mxu0 %v796
    %808 = vmatpush.msra.mxu0 %v785
    %809 = vmatpush.msra.mxu0 %v783
    %810 = vmatpush.msra.mxu0 %v781
    %811 = vmatpush.msra.mxu0 %v779
    %812 = vmatpush.msra.mxu0 %v777
    %813 = vmatpush.msra.mxu0 %v775
    %814 = vmatmul.f32.gmra.mxu0 %v794
    %v815 = vpop.f32.mrf.mxu0
    %v816 = vadd.f32 0.0, %v815
    %817 = vdwg.mxu0
    %v818 = vadd.f32 %v771, %v816
    %v819 = vrot.slane %v679, 6
    %820 = vrot.lane.b32.xlu0 %v687, 53
    %v821 = vpop.permute.xlu0 %820
    %822 = vrot.lane.b32.xlu0 %v688, 53
    %v823 = vpop.permute.xlu0 %822
    %824 = vrot.lane.b32.xlu0 %v689, 53
    %v825 = vpop.permute.xlu0 %824
    %826 = vrot.lane.b32.xlu0 %v690, 53
    %v827 = vpop.permute.xlu0 %826
    %828 = vrot.lane.b32.xlu0 %v691, 53
    %v829 = vpop.permute.xlu0 %828
    %830 = vrot.lane.b32.xlu0 %v692, 53
    %v831 = vpop.permute.xlu0 %830
    %832 = vrot.lane.b32.xlu0 %v693, 53
    %v833 = vpop.permute.xlu0 %832
    %v840 = vsel %vm723, %v819, 0
    %v842 = vsel %vm726, %v833, 0
    %844 = vmatpush.msra.mxu0 0.0
    %845 = vmatpush.msra.mxu0 0.0
    %846 = vmatpush.msra.mxu0 0.0
    %847 = vmatpush.msra.mxu0 0.0
    %848 = vmatpush.msra.mxu0 0.0
    %849 = vmatpush.msra.mxu0 0.0
    %850 = vmatpush.msra.mxu0 0.0
    %851 = vmatpush.msra.mxu0 0.0
    %852 = vmatpush.msra.mxu0 0.0
    %853 = vmatpush.msra.mxu0 %v842
    %854 = vmatpush.msra.mxu0 %v831
    %855 = vmatpush.msra.mxu0 %v829
    %856 = vmatpush.msra.mxu0 %v827
    %857 = vmatpush.msra.mxu0 %v825
    %858 = vmatpush.msra.mxu0 %v823
    %859 = vmatpush.msra.mxu0 %v821
    %860 = vmatmul.f32.gmra.mxu0 %v840
    %v861 = vpop.f32.mrf.mxu0
    %v862 = vadd.f32 0.0, %v861
    %863 = vdwg.mxu0
    %v864 = vadd.f32 %v818, %v862
    %865 = vrot.lane.b32.xlu0 %v687, 28
    %v866 = vpop.permute.xlu0 %865
    %867 = vrot.lane.b32.xlu0 %v688, 28
    %v868 = vpop.permute.xlu0 %867
    %869 = vrot.lane.b32.xlu0 %v689, 28
    %v870 = vpop.permute.xlu0 %869
    %871 = vrot.lane.b32.xlu0 %v690, 28
    %v872 = vpop.permute.xlu0 %871
    %873 = vrot.lane.b32.xlu0 %v691, 28
    %v874 = vpop.permute.xlu0 %873
    %875 = vrot.lane.b32.xlu0 %v692, 28
    %v876 = vpop.permute.xlu0 %875
    %877 = vrot.lane.b32.xlu0 %v693, 28
    %v878 = vpop.permute.xlu0 %877
    %v886 = vsel %vm723, %v682, 0
    %v888 = vsel %vm726, %v878, 0
    %890 = vmatpush.msra.mxu0 0.0
    %891 = vmatpush.msra.mxu0 0.0
    %892 = vmatpush.msra.mxu0 0.0
    %893 = vmatpush.msra.mxu0 0.0
    %894 = vmatpush.msra.mxu0 0.0
    %895 = vmatpush.msra.mxu0 0.0
    %896 = vmatpush.msra.mxu0 0.0
    %897 = vmatpush.msra.mxu0 0.0
    %898 = vmatpush.msra.mxu0 0.0
    %899 = vmatpush.msra.mxu0 %v888
    %900 = vmatpush.msra.mxu0 %v876
    %901 = vmatpush.msra.mxu0 %v874
    %902 = vmatpush.msra.mxu0 %v872
    %903 = vmatpush.msra.mxu0 %v870
    %904 = vmatpush.msra.mxu0 %v868
    %905 = vmatpush.msra.mxu0 %v866
    %906 = vmatmul.f32.gmra.mxu0 %v886
    %v907 = vpop.f32.mrf.mxu0
    %v908 = vadd.f32 0.0, %v907
    %909 = vdwg.mxu0
    %v910 = vadd.f32 %v864, %v908
    %v911 = vld [vmem:[#allocation8] sm:$0xff]
    %v912 = vld [vmem:[#allocation8 + $0x8] sm:$0xff]
    %v913 = vld [vmem:[#allocation8 + $0x10] sm:$0xff]
    %v914 = vld [vmem:[#allocation8 + $0x18] sm:$0xff]
    %v915 = vld [vmem:[#allocation8 + $0x20] sm:$0xff]
    %v916 = vld [vmem:[#allocation8 + $0x28] sm:$0xff]
    %v917 = vld [vmem:[#allocation8 + $0x30] sm:$0xff]
    %v918 = vld [vmem:[#allocation8 + $0x38] sm:$0xff]
    %v919 = vld [vmem:[#allocation8 + $0x40] sm:$0xff]
    %v920 = vld [vmem:[#allocation8 + $0x48] sm:$0xff]
    %v921 = vld [vmem:[#allocation8 + $0x50] sm:$0xff]
    %v922 = vld [vmem:[#allocation8 + $0x58] sm:$0xff]
    %v923 = vld [vmem:[#allocation8 + $0x60] sm:$0x1]
    %v924 = vld [vmem:[#allocation8 + $0x68] sm:$0x1]
    %v925 = vrot.slane %v682, 2
    %940 = vrot.lane.b32.xlu0 %v911, 3
    %v941 = vpop.permute.xlu0 %940
    %942 = vrot.lane.b32.xlu0 %v912, 3
    %v943 = vpop.permute.xlu0 %942
    %944 = vrot.lane.b32.xlu0 %v913, 3
    %v945 = vpop.permute.xlu0 %944
    %946 = vrot.lane.b32.xlu0 %v914, 3
    %v947 = vpop.permute.xlu0 %946
    %948 = vrot.lane.b32.xlu0 %v915, 3
    %v949 = vpop.permute.xlu0 %948
    %950 = vrot.lane.b32.xlu0 %v916, 3
    %v951 = vpop.permute.xlu0 %950
    %952 = vrot.lane.b32.xlu0 %v917, 3
    %v953 = vpop.permute.xlu0 %952
    %954 = vrot.lane.b32.xlu0 %v918, 3
    %v955 = vpop.permute.xlu0 %954
    %956 = vrot.lane.b32.xlu0 %v919, 3
    %v957 = vpop.permute.xlu0 %956
    %958 = vrot.lane.b32.xlu0 %v920, 3
    %v959 = vpop.permute.xlu0 %958
    %960 = vrot.lane.b32.xlu0 %v921, 3
    %v961 = vpop.permute.xlu0 %960
    %962 = vrot.lane.b32.xlu0 %v922, 3
    %v963 = vpop.permute.xlu0 %962
    %964 = vrot.lane.b32.xlu0 %v923, 3
    %v965 = vpop.permute.xlu0 %964
    %966 = vrot.lane.b32.xlu0 %v924, 3
    %v967 = vpop.permute.xlu0 %966
    %vm968 = vcmask 23552
    %v969 = vsel %vm968, %v941, %v943
    %v970 = vsel %vm968, %v945, %v947
    %v971 = vsel %vm968, %v949, %v951
    %v972 = vsel %vm968, %v953, %v955
    %v973 = vsel %vm968, %v957, %v959
    %v974 = vsel %vm968, %v961, %v963
    %v975 = vsel %vm968, %v965, %v967
    %v982 = vsel %vm723, %v925, 0
    %v984 = vsel %vm726, %v975, 0
    %986 = vmatpush.msra.mxu0 0.0
    %987 = vmatpush.msra.mxu0 0.0
    %988 = vmatpush.msra.mxu0 0.0
    %989 = vmatpush.msra.mxu0 0.0
    %990 = vmatpush.msra.mxu0 0.0
    %991 = vmatpush.msra.mxu0 0.0
    %992 = vmatpush.msra.mxu0 0.0
    %993 = vmatpush.msra.mxu0 0.0
    %994 = vmatpush.msra.mxu0 0.0
    %995 = vmatpush.msra.mxu0 %v984
    %996 = vmatpush.msra.mxu0 %v974
    %997 = vmatpush.msra.mxu0 %v973
    %998 = vmatpush.msra.mxu0 %v972
    %999 = vmatpush.msra.mxu0 %v971
    %1000 = vmatpush.msra.mxu0 %v970
    %1001 = vmatpush.msra.mxu0 %v969
    %1002 = vmatmul.f32.gmra.mxu0 %v982
    %v1003 = vpop.f32.mrf.mxu0
    %v1004 = vadd.f32 0.0, %v1003
    %1005 = vdwg.mxu0
    %v1006 = vadd.f32 %v910, %v1004
    %v1007 = vrot.slane %v682, 4
    %1008 = vrot.lane.b32.xlu0 %v912, 106
    %v1009 = vpop.permute.xlu0 %1008
    %1010 = vrot.lane.b32.xlu0 %v914, 106
    %v1011 = vpop.permute.xlu0 %1010
    %1012 = vrot.lane.b32.xlu0 %v916, 106
    %v1013 = vpop.permute.xlu0 %1012
    %1014 = vrot.lane.b32.xlu0 %v918, 106
    %v1015 = vpop.permute.xlu0 %1014
    %1016 = vrot.lane.b32.xlu0 %v920, 106
    %v1017 = vpop.permute.xlu0 %1016
    %1018 = vrot.lane.b32.xlu0 %v922, 106
    %v1019 = vpop.permute.xlu0 %1018
    %1020 = vrot.lane.b32.xlu0 %v924, 106
    %v1021 = vpop.permute.xlu0 %1020
    %v1028 = vsel %vm723, %v1007, 0
    %v1030 = vsel %vm726, %v1021, 0
    %1032 = vmatpush.msra.mxu0 0.0
    %1033 = vmatpush.msra.mxu0 0.0
    %1034 = vmatpush.msra.mxu0 0.0
    %1035 = vmatpush.msra.mxu0 0.0
    %1036 = vmatpush.msra.mxu0 0.0
    %1037 = vmatpush.msra.mxu0 0.0
    %1038 = vmatpush.msra.mxu0 0.0
    %1039 = vmatpush.msra.mxu0 0.0
    %1040 = vmatpush.msra.mxu0 0.0
    %1041 = vmatpush.msra.mxu0 %v1030
    %1042 = vmatpush.msra.mxu0 %v1019
    %1043 = vmatpush.msra.mxu0 %v1017
    %1044 = vmatpush.msra.mxu0 %v1015
    %1045 = vmatpush.msra.mxu0 %v1013
    %1046 = vmatpush.msra.mxu0 %v1011
    %1047 = vmatpush.msra.mxu0 %v1009
    %1048 = vmatmul.f32.gmra.mxu0 %v1028
    %v1049 = vpop.f32.mrf.mxu0
    %v1050 = vadd.f32 0.0, %v1049
    %1051 = vdwg.mxu0
    %v1052 = vadd.f32 %v1006, %v1050
    %v1053 = vrot.slane %v682, 6
    %1054 = vrot.lane.b32.xlu0 %v912, 81
    %v1055 = vpop.permute.xlu0 %1054
    %1056 = vrot.lane.b32.xlu0 %v914, 81
    %v1057 = vpop.permute.xlu0 %1056
    %1058 = vrot.lane.b32.xlu0 %v916, 81
    %v1059 = vpop.permute.xlu0 %1058
    %1060 = vrot.lane.b32.xlu0 %v918, 81
    %v1061 = vpop.permute.xlu0 %1060
    %1062 = vrot.lane.b32.xlu0 %v920, 81
    %v1063 = vpop.permute.xlu0 %1062
    %1064 = vrot.lane.b32.xlu0 %v922, 81
    %v1065 = vpop.permute.xlu0 %1064
    %1066 = vrot.lane.b32.xlu0 %v924, 81
    %v1067 = vpop.permute.xlu0 %1066
    %v1074 = vsel %vm723, %v1053, 0
    %v1076 = vsel %vm726, %v1067, 0
    %1078 = vmatpush.msra.mxu0 0.0
    %1079 = vmatpush.msra.mxu0 0.0
    %1080 = vmatpush.msra.mxu0 0.0
    %1081 = vmatpush.msra.mxu0 0.0
    %1082 = vmatpush.msra.mxu0 0.0
    %1083 = vmatpush.msra.mxu0 0.0
    %1084 = vmatpush.msra.mxu0 0.0
    %1085 = vmatpush.msra.mxu0 0.0
    %1086 = vmatpush.msra.mxu0 0.0
    %1087 = vmatpush.msra.mxu0 %v1076
    %1088 = vmatpush.msra.mxu0 %v1065
    %1089 = vmatpush.msra.mxu0 %v1063
    %1090 = vmatpush.msra.mxu0 %v1061
    %1091 = vmatpush.msra.mxu0 %v1059
    %1092 = vmatpush.msra.mxu0 %v1057
    %1093 = vmatpush.msra.mxu0 %v1055
    %1094 = vmatmul.f32.gmra.mxu0 %v1074
    %v1095 = vpop.f32.mrf.mxu0
    %v1096 = vadd.f32 0.0, %v1095
    %1097 = vdwg.mxu0
    %v1098 = vadd.f32 %v1052, %v1096
    %1099 = vrot.lane.b32.xlu0 %v912, 56
    %v1100 = vpop.permute.xlu0 %1099
    %1101 = vrot.lane.b32.xlu0 %v914, 56
    %v1102 = vpop.permute.xlu0 %1101
    %1103 = vrot.lane.b32.xlu0 %v916, 56
    %v1104 = vpop.permute.xlu0 %1103
    %1105 = vrot.lane.b32.xlu0 %v918, 56
    %v1106 = vpop.permute.xlu0 %1105
    %1107 = vrot.lane.b32.xlu0 %v920, 56
    %v1108 = vpop.permute.xlu0 %1107
    %1109 = vrot.lane.b32.xlu0 %v922, 56
    %v1110 = vpop.permute.xlu0 %1109
    %1111 = vrot.lane.b32.xlu0 %v924, 56
    %v1112 = vpop.permute.xlu0 %1111
    %v1120 = vsel %vm723, %v685, 0
    %v1122 = vsel %vm726, %v1112, 0
    %1124 = vmatpush.msra.mxu0 0.0
    %1125 = vmatpush.msra.mxu0 0.0
    %1126 = vmatpush.msra.mxu0 0.0
    %1127 = vmatpush.msra.mxu0 0.0
    %1128 = vmatpush.msra.mxu0 0.0
    %1129 = vmatpush.msra.mxu0 0.0
    %1130 = vmatpush.msra.mxu0 0.0
    %1131 = vmatpush.msra.mxu0 0.0
    %1132 = vmatpush.msra.mxu0 0.0
    %1133 = vmatpush.msra.mxu0 %v1122
    %1134 = vmatpush.msra.mxu0 %v1110
    %1135 = vmatpush.msra.mxu0 %v1108
    %1136 = vmatpush.msra.mxu0 %v1106
    %1137 = vmatpush.msra.mxu0 %v1104
    %1138 = vmatpush.msra.mxu0 %v1102
    %1139 = vmatpush.msra.mxu0 %v1100
    %1140 = vmatmul.f32.gmra.mxu0 %v1120
    %v1141 = vpop.f32.mrf.mxu0
    %v1142 = vadd.f32 0.0, %v1141
    %1143 = vdwg.mxu0
    %v1144 = vadd.f32 %v1098, %v1142
    %v1145 = vld [vmem:[%s5] sm:$0x3]
    %1147 = vset.pattern.permute.xlu0 0
    %1148 = vperm.xlu0 %1147, %v1145
    %v1149 = vpop.permute.xlu0 %1148
    %v1151 = vadd.f32 %v1144, %v1149
    %v1152 = vmax.f32 %v1151, 0.0
    %v1153 = vld [vmem:[#allocation9] sm:$0xff]
    %v1154 = vld [vmem:[#allocation9 + $0x8] sm:$0xff]
    %v1155 = vld [vmem:[#allocation9 + $0x10] sm:$0xff]
    %v1156 = vld [vmem:[#allocation9 + $0x18] sm:$0x1]
    %v1157 = vld [vmem:[#allocation2] sm:$0x1]
    %1159 = vset.pattern.permute.xlu0 0
    %1160 = vperm.xlu0 %1159, %v1157
    %v1161 = vpop.permute.xlu0 %1160
    %v1163 = vperm.slane %v1161, 0
    %vm1164 = vcmask 203776
    %v1166 = vsel %vm1164, %v1152, 0
    %v1169 = vsel %vm726, %v1156, 0
    %1171 = vmatpush.msra.mxu0 0.0
    %1172 = vmatpush.msra.mxu0 0.0
    %1173 = vmatpush.msra.mxu0 0.0
    %1174 = vmatpush.msra.mxu0 0.0
    %1175 = vmatpush.msra.mxu0 0.0
    %1176 = vmatpush.msra.mxu0 0.0
    %1177 = vmatpush.msra.mxu0 0.0
    %1178 = vmatpush.msra.mxu0 0.0
    %1179 = vmatpush.msra.mxu0 0.0
    %1180 = vmatpush.msra.mxu0 0.0
    %1181 = vmatpush.msra.mxu0 0.0
    %1182 = vmatpush.msra.mxu0 0.0
    %1183 = vmatpush.msra.mxu0 %v1169
    %1184 = vmatpush.msra.mxu0 %v1155
    %1185 = vmatpush.msra.mxu0 %v1154
    %1186 = vmatpush.msra.mxu0 %v1153
    %1187 = vmatmul.f32.gmra.mxu0 %v1166
    %v1188 = vpop.f32.mrf.mxu0
    %v1189 = vadd.f32 %v1163, %v1188
    %1190 = vdwg.mxu0
    %v1191 = vmax.f32 %v1189, 0.0
    %v1192 = vld [vmem:[#allocation11] sm:$0xff]
    %v1193 = vld [vmem:[#allocation11 + $0x8] sm:$0xff]
    %v1194 = vld [vmem:[#allocation11 + $0x10] sm:$0xff]
    %v1195 = vld [vmem:[#allocation11 + $0x18] sm:$0x1]
    %v1196 = vld [vmem:[#allocation3] sm:$0x1]
    %1198 = vset.pattern.permute.xlu0 0
    %1199 = vperm.xlu0 %1198, %v1196
    %v1200 = vpop.permute.xlu0 %1199
    %v1202 = vperm.slane %v1200, 0
    %v1203 = vrot.slane %v1152, 1
    %v1204 = vsel %vm1164, %v1203, 0
    %v1207 = vsel %vm726, %v1195, 0
    %1209 = vmatpush.msra.mxu0 0.0
    %1210 = vmatpush.msra.mxu0 0.0
    %1211 = vmatpush.msra.mxu0 0.0
    %1212 = vmatpush.msra.mxu0 0.0
    %1213 = vmatpush.msra.mxu0 0.0
    %1214 = vmatpush.msra.mxu0 0.0
    %1215 = vmatpush.msra.mxu0 0.0
    %1216 = vmatpush.msra.mxu0 0.0
    %1217 = vmatpush.msra.mxu0 0.0
    %1218 = vmatpush.msra.mxu0 0.0
    %1219 = vmatpush.msra.mxu0 0.0
    %1220 = vmatpush.msra.mxu0 0.0
    %1221 = vmatpush.msra.mxu0 %v1207
    %1222 = vmatpush.msra.mxu0 %v1194
    %1223 = vmatpush.msra.mxu0 %v1193
    %1224 = vmatpush.msra.mxu0 %v1192
    %1225 = vmatmul.f32.gmra.mxu0 %v1204
    %v1226 = vpop.f32.mrf.mxu0
    %v1227 = vadd.f32 %v1202, %v1226
    %1228 = vdwg.mxu0
    %v1229 = vmax.f32 %v1227, 0.0
    %v1230 = vld [vmem:[#allocation12] sm:$0x1f]
    %v1231 = vperm.slane %v1191, 0
    %v1232 = vmul.f32 %v1230, %v1231
    %v1233 = vld [vmem:[%s12] sm:$0xff]
    %v1234 = vld [vmem:[%s12 + $0x8] sm:$0xff]
    %v1235 = vld [vmem:[%s12 + $0x10] sm:$0xff]
    %v1236 = vld [vmem:[%s12 + $0x18] sm:$0x1]
    %v1237 = vld [vmem:[%s2] sm:$0x1]
    %v1239 = vperm.slane %v1237, 0
    %v1241 = vmul.f32 %v1230, %v1239
    %v1242 = vld [vmem:[%s13] sm:$0xff]
    %v1243 = vld [vmem:[%s13 + $0x8] sm:$0xff]
    %v1244 = vld [vmem:[%s13 + $0x10] sm:$0xff]
    %v1245 = vld [vmem:[%s13 + $0x18] sm:$0x1]
    %v1247 = vsel %vm1164, %v1241, 0
    %v1250 = vsel %vm726, %v1245, 0
    %1252 = vmatpush.msra.mxu0 0.0
    %1253 = vmatpush.msra.mxu0 0.0
    %1254 = vmatpush.msra.mxu0 0.0
    %1255 = vmatpush.msra.mxu0 0.0
    %1256 = vmatpush.msra.mxu0 0.0
    %1257 = vmatpush.msra.mxu0 0.0
    %1258 = vmatpush.msra.mxu0 0.0
    %1259 = vmatpush.msra.mxu0 0.0
    %1260 = vmatpush.msra.mxu0 0.0
    %1261 = vmatpush.msra.mxu0 0.0
    %1262 = vmatpush.msra.mxu0 0.0
    %1263 = vmatpush.msra.mxu0 0.0
    %1264 = vmatpush.msra.mxu0 %v1250
    %1265 = vmatpush.msra.mxu0 %v1244
    %1266 = vmatpush.msra.mxu0 %v1243
    %1267 = vmatpush.msra.mxu0 %v1242
    %1268 = vmatmul.f32.gmra.mxu0 %v1247
    %v1269 = vpop.f32.mrf.mxu0
    %v1270 = vadd.f32 0.0, %v1269
    %1271 = vdwg.mxu0
    %v1273 = vsel %vm1164, %v1232, 0
    %v1276 = vsel %vm726, %v1236, 0
    %1278 = vmatpush.msra.mxu0 0.0
    %1279 = vmatpush.msra.mxu0 0.0
    %1280 = vmatpush.msra.mxu0 0.0
    %1281 = vmatpush.msra.mxu0 0.0
    %1282 = vmatpush.msra.mxu0 0.0
    %1283 = vmatpush.msra.mxu0 0.0
    %1284 = vmatpush.msra.mxu0 0.0
    %1285 = vmatpush.msra.mxu0 0.0
    %1286 = vmatpush.msra.mxu0 0.0
    %1287 = vmatpush.msra.mxu0 0.0
    %1288 = vmatpush.msra.mxu0 0.0
    %1289 = vmatpush.msra.mxu0 0.0
    %1290 = vmatpush.msra.mxu0 %v1276
    %1291 = vmatpush.msra.mxu0 %v1235
    %1292 = vmatpush.msra.mxu0 %v1234
    %1293 = vmatpush.msra.mxu0 %v1233
    %1294 = vmatmul.f32.gmra.mxu0 %v1273
    %v1295 = vpop.f32.mrf.mxu0
    %v1296 = vadd.f32 %v1270, %v1295
    %1297 = vdwg.mxu0
    %v1298 = vperm.slane %v1229, 0
    %v1299 = vmul.f32 %v1230, %v1298
    %v1300 = vld [vmem:[%s14] sm:$0xff]
    %v1301 = vld [vmem:[%s14 + $0x8] sm:$0xff]
    %v1302 = vld [vmem:[%s14 + $0x10] sm:$0xff]
    %v1303 = vld [vmem:[%s14 + $0x18] sm:$0x1]
    %v1305 = vsel %vm1164, %v1299, 0
    %v1308 = vsel %vm726, %v1303, 0
    %1310 = vmatpush.msra.mxu0 0.0
    %1311 = vmatpush.msra.mxu0 0.0
    %1312 = vmatpush.msra.mxu0 0.0
    %1313 = vmatpush.msra.mxu0 0.0
    %1314 = vmatpush.msra.mxu0 0.0
    %1315 = vmatpush.msra.mxu0 0.0
    %1316 = vmatpush.msra.mxu0 0.0
    %1317 = vmatpush.msra.mxu0 0.0
    %1318 = vmatpush.msra.mxu0 0.0
    %1319 = vmatpush.msra.mxu0 0.0
    %1320 = vmatpush.msra.mxu0 0.0
    %1321 = vmatpush.msra.mxu0 0.0
    %1322 = vmatpush.msra.mxu0 %v1308
    %1323 = vmatpush.msra.mxu0 %v1302
    %1324 = vmatpush.msra.mxu0 %v1301
    %1325 = vmatpush.msra.mxu0 %v1300
    %1326 = vmatmul.f32.gmra.mxu0 %v1305
    %v1327 = vpop.f32.mrf.mxu0
    %v1328 = vadd.f32 0.0, %v1327
    %1329 = vdwg.mxu0
    %v1330 = vadd.f32 %v1296, %v1328
    %v1331 = vld [vmem:[%s15] sm:$0xff]
    %v1332 = vld [vmem:[%s15 + $0x8] sm:$0xff]
    %v1333 = vld [vmem:[%s15 + $0x10] sm:$0xff]
    %v1334 = vld [vmem:[%s15 + $0x18] sm:$0xff]
    %v1335 = vld [vmem:[%s15 + $0x20] sm:$0xff]
    %v1336 = vld [vmem:[%s15 + $0x28] sm:$0xff]
    %v1337 = vld [vmem:[%s15 + $0x30] sm:$0xff]
    %v1338 = vld [vmem:[%s15 + $0x38] sm:$0xff]
    %v1339 = vld [vmem:[%s15 + $0x40] sm:$0xff]
    %v1340 = vld [vmem:[%s15 + $0x48] sm:$0xff]
    %v1341 = vld [vmem:[%s15 + $0x50] sm:$0xff]
    %v1342 = vld [vmem:[%s15 + $0x58] sm:$0xff]
    %v1343 = vld [vmem:[%s15 + $0x60] sm:$0xff]
    %v1344 = vld [vmem:[%s15 + $0x68] sm:$0xff]
    %v1345 = vld [vmem:[%s15 + $0x70] sm:$0xff]
    %v1346 = vld [vmem:[%s15 + $0x78] sm:$0xff]
    %v1347 = vld [vmem:[%s15 + $0x80] sm:$0xff]
    %v1348 = vld [vmem:[%s15 + $0x88] sm:$0xff]
    %v1349 = vld [vmem:[%s15 + $0x90] sm:$0xff]
    %v1350 = vld [vmem:[%s15 + $0x98] sm:$0xff]
    %v1351 = vld [vmem:[%s15 + $0xa0] sm:$0xff]
    %v1352 = vld [vmem:[%s15 + $0xa8] sm:$0xff]
    %v1353 = vld [vmem:[%s15 + $0xb0] sm:$0xff]
    %v1354 = vld [vmem:[%s15 + $0xb8] sm:$0xff]
    %v1355 = vld [vmem:[%s15 + $0xc0] sm:$0xff]
    %v1356 = vld [vmem:[%s15 + $0xc8] sm:$0xff]
    %v1357 = vld [vmem:[%s15 + $0xd0] sm:$0xff]
    %v1358 = vld [vmem:[%s15 + $0xd8] sm:$0xff]
    %v1359 = vld [vmem:[%s15 + $0xe0] sm:$0xff]
    %v1360 = vld [vmem:[%s15 + $0xe8] sm:$0xff]
    %v1361 = vld [vmem:[%s15 + $0xf0] sm:$0xff]
    %v1362 = vld [vmem:[%s15 + $0xf8] sm:$0xff]
    %v1363 = vld [vmem:[%s15 + $0x100] sm:$0xff]
    %v1364 = vld [vmem:[%s15 + $0x108] sm:$0xff]
    %v1365 = vld [vmem:[%s15 + $0x110] sm:$0xff]
    %v1366 = vld [vmem:[%s15 + $0x118] sm:$0xff]
    %v1367 = vld [vmem:[%s15 + $0x120] sm:$0xff]
    %v1368 = vld [vmem:[%s15 + $0x128] sm:$0xff]
    %v1369 = vld [vmem:[%s15 + $0x130] sm:$0xff]
    %v1370 = vld [vmem:[%s15 + $0x138] sm:$0xff]
    %v1371 = vld [vmem:[%s15 + $0x140] sm:$0xff]
    %v1372 = vld [vmem:[%s15 + $0x148] sm:$0xff]
    %v1373 = vld [vmem:[%s15 + $0x150] sm:$0xff]
    %v1374 = vld [vmem:[%s15 + $0x158] sm:$0xff]
    %v1375 = vld [vmem:[%s15 + $0x160] sm:$0xff]
    %v1376 = vld [vmem:[%s15 + $0x168] sm:$0xff]
    %v1377 = vld [vmem:[%s15 + $0x170] sm:$0xff]
    %v1378 = vld [vmem:[%s15 + $0x178] sm:$0xff]
    %v1379 = vld [vmem:[%s15 + $0x180] sm:$0xff]
    %v1380 = vld [vmem:[%s15 + $0x188] sm:$0xff]
    %v1381 = vld [vmem:[%s15 + $0x190] sm:$0xff]
    %v1382 = vld [vmem:[%s15 + $0x198] sm:$0xff]
    %v1383 = vld [vmem:[%s15 + $0x1a0] sm:$0xff]
    %v1384 = vld [vmem:[%s15 + $0x1a8] sm:$0xff]
    %v1385 = vld [vmem:[%s15 + $0x1b0] sm:$0xff]
    %v1386 = vld [vmem:[%s15 + $0x1b8] sm:$0xff]
    %1443 = vrot.lane.b32.xlu0 %v1331, 123
    %v1444 = vpop.permute.xlu0 %1443
    %1445 = vrot.lane.b32.xlu0 %v1332, 123
    %v1446 = vpop.permute.xlu0 %1445
    %1447 = vrot.lane.b32.xlu0 %v1333, 123
    %v1448 = vpop.permute.xlu0 %1447
    %1449 = vrot.lane.b32.xlu0 %v1334, 123
    %v1450 = vpop.permute.xlu0 %1449
    %1451 = vrot.lane.b32.xlu0 %v1335, 123
    %v1452 = vpop.permute.xlu0 %1451
    %1453 = vrot.lane.b32.xlu0 %v1336, 123
    %v1454 = vpop.permute.xlu0 %1453
    %1455 = vrot.lane.b32.xlu0 %v1337, 123
    %v1456 = vpop.permute.xlu0 %1455
    %1457 = vrot.lane.b32.xlu0 %v1338, 123
    %v1458 = vpop.permute.xlu0 %1457
    %1459 = vrot.lane.b32.xlu0 %v1339, 123
    %v1460 = vpop.permute.xlu0 %1459
    %1461 = vrot.lane.b32.xlu0 %v1340, 123
    %v1462 = vpop.permute.xlu0 %1461
    %1463 = vrot.lane.b32.xlu0 %v1341, 123
    %v1464 = vpop.permute.xlu0 %1463
    %1465 = vrot.lane.b32.xlu0 %v1342, 123
    %v1466 = vpop.permute.xlu0 %1465
    %1467 = vrot.lane.b32.xlu0 %v1343, 123
    %v1468 = vpop.permute.xlu0 %1467
    %1469 = vrot.lane.b32.xlu0 %v1344, 123
    %v1470 = vpop.permute.xlu0 %1469
    %1471 = vrot.lane.b32.xlu0 %v1345, 123
    %v1472 = vpop.permute.xlu0 %1471
    %1473 = vrot.lane.b32.xlu0 %v1346, 123
    %v1474 = vpop.permute.xlu0 %1473
    %1475 = vrot.lane.b32.xlu0 %v1347, 123
    %v1476 = vpop.permute.xlu0 %1475
    %1477 = vrot.lane.b32.xlu0 %v1348, 123
    %v1478 = vpop.permute.xlu0 %1477
    %1479 = vrot.lane.b32.xlu0 %v1349, 123
    %v1480 = vpop.permute.xlu0 %1479
    %1481 = vrot.lane.b32.xlu0 %v1350, 123
    %v1482 = vpop.permute.xlu0 %1481
    %1483 = vrot.lane.b32.xlu0 %v1351, 123
    %v1484 = vpop.permute.xlu0 %1483
    %1485 = vrot.lane.b32.xlu0 %v1352, 123
    %v1486 = vpop.permute.xlu0 %1485
    %1487 = vrot.lane.b32.xlu0 %v1353, 123
    %v1488 = vpop.permute.xlu0 %1487
    %1489 = vrot.lane.b32.xlu0 %v1354, 123
    %v1490 = vpop.permute.xlu0 %1489
    %1491 = vrot.lane.b32.xlu0 %v1355, 123
    %v1492 = vpop.permute.xlu0 %1491
    %1493 = vrot.lane.b32.xlu0 %v1356, 123
    %v1494 = vpop.permute.xlu0 %1493
    %1495 = vrot.lane.b32.xlu0 %v1357, 123
    %v1496 = vpop.permute.xlu0 %1495
    %1497 = vrot.lane.b32.xlu0 %v1358, 123
    %v1498 = vpop.permute.xlu0 %1497
    %1499 = vrot.lane.b32.xlu0 %v1359, 123
    %v1500 = vpop.permute.xlu0 %1499
    %1501 = vrot.lane.b32.xlu0 %v1360, 123
    %v1502 = vpop.permute.xlu0 %1501
    %1503 = vrot.lane.b32.xlu0 %v1361, 123
    %v1504 = vpop.permute.xlu0 %1503
    %1505 = vrot.lane.b32.xlu0 %v1362, 123
    %v1506 = vpop.permute.xlu0 %1505
    %1507 = vrot.lane.b32.xlu0 %v1363, 123
    %v1508 = vpop.permute.xlu0 %1507
    %1509 = vrot.lane.b32.xlu0 %v1364, 123
    %v1510 = vpop.permute.xlu0 %1509
    %1511 = vrot.lane.b32.xlu0 %v1365, 123
    %v1512 = vpop.permute.xlu0 %1511
    %1513 = vrot.lane.b32.xlu0 %v1366, 123
    %v1514 = vpop.permute.xlu0 %1513
    %1515 = vrot.lane.b32.xlu0 %v1367, 123
    %v1516 = vpop.permute.xlu0 %1515
    %1517 = vrot.lane.b32.xlu0 %v1368, 123
    %v1518 = vpop.permute.xlu0 %1517
    %1519 = vrot.lane.b32.xlu0 %v1369, 123
    %v1520 = vpop.permute.xlu0 %1519
    %1521 = vrot.lane.b32.xlu0 %v1370, 123
    %v1522 = vpop.permute.xlu0 %1521
    %1523 = vrot.lane.b32.xlu0 %v1371, 123
    %v1524 = vpop.permute.xlu0 %1523
    %1525 = vrot.lane.b32.xlu0 %v1372, 123
    %v1526 = vpop.permute.xlu0 %1525
    %1527 = vrot.lane.b32.xlu0 %v1373, 123
    %v1528 = vpop.permute.xlu0 %1527
    %1529 = vrot.lane.b32.xlu0 %v1374, 123
    %v1530 = vpop.permute.xlu0 %1529
    %1531 = vrot.lane.b32.xlu0 %v1375, 123
    %v1532 = vpop.permute.xlu0 %1531
    %1533 = vrot.lane.b32.xlu0 %v1376, 123
    %v1534 = vpop.permute.xlu0 %1533
    %1535 = vrot.lane.b32.xlu0 %v1377, 123
    %v1536 = vpop.permute.xlu0 %1535
    %1537 = vrot.lane.b32.xlu0 %v1378, 123
    %v1538 = vpop.permute.xlu0 %1537
    %1539 = vrot.lane.b32.xlu0 %v1379, 123
    %v1540 = vpop.permute.xlu0 %1539
    %1541 = vrot.lane.b32.xlu0 %v1380, 123
    %v1542 = vpop.permute.xlu0 %1541
    %1543 = vrot.lane.b32.xlu0 %v1381, 123
    %v1544 = vpop.permute.xlu0 %1543
    %1545 = vrot.lane.b32.xlu0 %v1382, 123
    %v1546 = vpop.permute.xlu0 %1545
    %1547 = vrot.lane.b32.xlu0 %v1383, 123
    %v1548 = vpop.permute.xlu0 %1547
    %1549 = vrot.lane.b32.xlu0 %v1384, 123
    %v1550 = vpop.permute.xlu0 %1549
    %1551 = vrot.lane.b32.xlu0 %v1385, 123
    %v1552 = vpop.permute.xlu0 %1551
    %1553 = vrot.lane.b32.xlu0 %v1386, 123
    %v1554 = vpop.permute.xlu0 %1553
    %1556 = vrot.lane.b32.xlu0 %v1330, 127
    %v1557 = vpop.permute.xlu0 %1556
    %vm1558 = vcmask 39936
    %v1559 = vsel %vm1558, %v1444, 0
    %v1561 = vsel %vm1558, %v1446, 0
    %v1563 = vsel %vm1558, %v1448, 0
    %v1565 = vsel %vm1558, %v1450, 0
    %v1567 = vsel %vm1558, %v1452, 0
    %v1569 = vsel %vm1558, %v1454, 0
    %v1571 = vsel %vm1558, %v1456, 0
    %v1573 = vsel %vm1558, %v1458, 0
    %v1575 = vsel %vm1558, %v1460, 0
    %v1577 = vsel %vm1558, %v1462, 0
    %v1579 = vsel %vm1558, %v1464, 0
    %v1581 = vsel %vm1558, %v1466, 0
    %v1583 = vsel %vm1558, %v1468, 0
    %v1585 = vsel %vm1558, %v1470, 0
    %v1587 = vsel %vm1558, %v1472, 0
    %v1589 = vsel %vm1558, %v1474, 0
    %v1591 = vsel %vm1558, %v1476, 0
    %v1593 = vsel %vm1558, %v1478, 0
    %v1595 = vsel %vm1558, %v1480, 0
    %v1597 = vsel %vm1558, %v1482, 0
    %v1599 = vsel %vm1558, %v1484, 0
    %v1601 = vsel %vm1558, %v1486, 0
    %v1603 = vsel %vm1558, %v1488, 0
    %v1605 = vsel %vm1558, %v1490, 0
    %v1607 = vsel %vm1558, %v1492, 0
    %v1609 = vsel %vm1558, %v1494, 0
    %v1611 = vsel %vm1558, %v1496, 0
    %v1613 = vsel %vm1558, %v1498, 0
    %v1615 = vsel %vm1558, %v1500, 0
    %v1617 = vsel %vm1558, %v1502, 0
    %v1619 = vsel %vm1558, %v1504, 0
    %v1621 = vsel %vm1558, %v1506, 0
    %v1623 = vsel %vm1558, %v1508, 0
    %v1625 = vsel %vm1558, %v1510, 0
    %v1627 = vsel %vm1558, %v1512, 0
    %v1629 = vsel %vm1558, %v1514, 0
    %v1631 = vsel %vm1558, %v1516, 0
    %v1633 = vsel %vm1558, %v1518, 0
    %v1635 = vsel %vm1558, %v1520, 0
    %v1637 = vsel %vm1558, %v1522, 0
    %v1639 = vsel %vm1558, %v1524, 0
    %v1641 = vsel %vm1558, %v1526, 0
    %v1643 = vsel %vm1558, %v1528, 0
    %v1645 = vsel %vm1558, %v1530, 0
    %v1647 = vsel %vm1558, %v1532, 0
    %v1649 = vsel %vm1558, %v1534, 0
    %v1651 = vsel %vm1558, %v1536, 0
    %v1653 = vsel %vm1558, %v1538, 0
    %v1655 = vsel %vm1558, %v1540, 0
    %v1657 = vsel %vm1558, %v1542, 0
    %v1659 = vsel %vm1558, %v1544, 0
    %v1661 = vsel %vm1558, %v1546, 0
    %v1663 = vsel %vm1558, %v1548, 0
    %v1665 = vsel %vm1558, %v1550, 0
    %v1667 = vsel %vm1558, %v1552, 0
    %v1669 = vsel %vm1558, %v1554, 0
    %vm1671 = vcmask 1044480
    %v1672 = vsel %vm1671, %v1557, 0
    %1674 = vmatpush.msra.mxu0 0.0
    %1675 = vmatpush.msra.mxu0 0.0
    %1676 = vmatpush.msra.mxu0 0.0
    %1677 = vmatpush.msra.mxu0 0.0
    %1678 = vmatpush.msra.mxu0 0.0
    %1679 = vmatpush.msra.mxu0 0.0
    %1680 = vmatpush.msra.mxu0 0.0
    %1681 = vmatpush.msra.mxu0 0.0
    %1682 = vmatpush.msra.mxu0 0.0
    %1683 = vmatpush.msra.mxu0 0.0
    %1684 = vmatpush.msra.mxu0 0.0
    %1685 = vmatpush.msra.mxu0 0.0
    %1686 = vmatpush.msra.mxu0 0.0
    %1687 = vmatpush.msra.mxu0 0.0
    %1688 = vmatpush.msra.mxu0 0.0
    %1689 = vmatpush.msra.mxu0 %v1672
    %1690 = vmatmul.f32.gmra.mxu0 %v1559
    %v1691 = vpop.f32.mrf.mxu0
    %v1692 = vadd.f32 0.0, %v1691
    %1693 = vmatmul.f32.gmra.mxu0 %v1561
    %v1694 = vpop.f32.mrf.mxu0
    %v1695 = vadd.f32 0.0, %v1694
    %1696 = vmatmul.f32.gmra.mxu0 %v1563
    %v1697 = vpop.f32.mrf.mxu0
    %v1698 = vadd.f32 0.0, %v1697
    %1699 = vmatmul.f32.gmra.mxu0 %v1565
    %v1700 = vpop.f32.mrf.mxu0
    %v1701 = vadd.f32 0.0, %v1700
    %1702 = vmatmul.f32.gmra.mxu0 %v1567
    %v1703 = vpop.f32.mrf.mxu0
    %v1704 = vadd.f32 0.0, %v1703
    %1705 = vmatmul.f32.gmra.mxu0 %v1569
    %v1706 = vpop.f32.mrf.mxu0
    %v1707 = vadd.f32 0.0, %v1706
    %1708 = vmatmul.f32.gmra.mxu0 %v1571
    %v1709 = vpop.f32.mrf.mxu0
    %v1710 = vadd.f32 0.0, %v1709
    %1711 = vmatmul.f32.gmra.mxu0 %v1573
    %v1712 = vpop.f32.mrf.mxu0
    %v1713 = vadd.f32 0.0, %v1712
    %1714 = vmatmul.f32.gmra.mxu0 %v1575
    %v1715 = vpop.f32.mrf.mxu0
    %v1716 = vadd.f32 0.0, %v1715
    %1717 = vmatmul.f32.gmra.mxu0 %v1577
    %v1718 = vpop.f32.mrf.mxu0
    %v1719 = vadd.f32 0.0, %v1718
    %1720 = vmatmul.f32.gmra.mxu0 %v1579
    %v1721 = vpop.f32.mrf.mxu0
    %v1722 = vadd.f32 0.0, %v1721
    %1723 = vmatmul.f32.gmra.mxu0 %v1581
    %v1724 = vpop.f32.mrf.mxu0
    %v1725 = vadd.f32 0.0, %v1724
    %1726 = vmatmul.f32.gmra.mxu0 %v1583
    %v1727 = vpop.f32.mrf.mxu0
    %v1728 = vadd.f32 0.0, %v1727
    %1729 = vmatmul.f32.gmra.mxu0 %v1585
    %v1730 = vpop.f32.mrf.mxu0
    %v1731 = vadd.f32 0.0, %v1730
    %1732 = vmatmul.f32.gmra.mxu0 %v1587
    %v1733 = vpop.f32.mrf.mxu0
    %v1734 = vadd.f32 0.0, %v1733
    %1735 = vmatmul.f32.gmra.mxu0 %v1589
    %v1736 = vpop.f32.mrf.mxu0
    %v1737 = vadd.f32 0.0, %v1736
    %1738 = vmatmul.f32.gmra.mxu0 %v1591
    %v1739 = vpop.f32.mrf.mxu0
    %v1740 = vadd.f32 0.0, %v1739
    %1741 = vmatmul.f32.gmra.mxu0 %v1593
    %v1742 = vpop.f32.mrf.mxu0
    %v1743 = vadd.f32 0.0, %v1742
    %1744 = vmatmul.f32.gmra.mxu0 %v1595
    %v1745 = vpop.f32.mrf.mxu0
    %v1746 = vadd.f32 0.0, %v1745
    %1747 = vmatmul.f32.gmra.mxu0 %v1597
    %v1748 = vpop.f32.mrf.mxu0
    %v1749 = vadd.f32 0.0, %v1748
    %1750 = vmatmul.f32.gmra.mxu0 %v1599
    %v1751 = vpop.f32.mrf.mxu0
    %v1752 = vadd.f32 0.0, %v1751
    %1753 = vmatmul.f32.gmra.mxu0 %v1601
    %v1754 = vpop.f32.mrf.mxu0
    %v1755 = vadd.f32 0.0, %v1754
    %1756 = vmatmul.f32.gmra.mxu0 %v1603
    %v1757 = vpop.f32.mrf.mxu0
    %v1758 = vadd.f32 0.0, %v1757
    %1759 = vmatmul.f32.gmra.mxu0 %v1605
    %v1760 = vpop.f32.mrf.mxu0
    %v1761 = vadd.f32 0.0, %v1760
    %1762 = vmatmul.f32.gmra.mxu0 %v1607
    %v1763 = vpop.f32.mrf.mxu0
    %v1764 = vadd.f32 0.0, %v1763
    %1765 = vmatmul.f32.gmra.mxu0 %v1609
    %v1766 = vpop.f32.mrf.mxu0
    %v1767 = vadd.f32 0.0, %v1766
    %1768 = vmatmul.f32.gmra.mxu0 %v1611
    %v1769 = vpop.f32.mrf.mxu0
    %v1770 = vadd.f32 0.0, %v1769
    %1771 = vmatmul.f32.gmra.mxu0 %v1613
    %v1772 = vpop.f32.mrf.mxu0
    %v1773 = vadd.f32 0.0, %v1772
    %1774 = vmatmul.f32.gmra.mxu0 %v1615
    %v1775 = vpop.f32.mrf.mxu0
    %v1776 = vadd.f32 0.0, %v1775
    %1777 = vmatmul.f32.gmra.mxu0 %v1617
    %v1778 = vpop.f32.mrf.mxu0
    %v1779 = vadd.f32 0.0, %v1778
    %1780 = vmatmul.f32.gmra.mxu0 %v1619
    %v1781 = vpop.f32.mrf.mxu0
    %v1782 = vadd.f32 0.0, %v1781
    %1783 = vmatmul.f32.gmra.mxu0 %v1621
    %v1784 = vpop.f32.mrf.mxu0
    %v1785 = vadd.f32 0.0, %v1784
    %1786 = vmatmul.f32.gmra.mxu0 %v1623
    %v1787 = vpop.f32.mrf.mxu0
    %v1788 = vadd.f32 0.0, %v1787
    %1789 = vmatmul.f32.gmra.mxu0 %v1625
    %v1790 = vpop.f32.mrf.mxu0
    %v1791 = vadd.f32 0.0, %v1790
    %1792 = vmatmul.f32.gmra.mxu0 %v1627
    %v1793 = vpop.f32.mrf.mxu0
    %v1794 = vadd.f32 0.0, %v1793
    %1795 = vmatmul.f32.gmra.mxu0 %v1629
    %v1796 = vpop.f32.mrf.mxu0
    %v1797 = vadd.f32 0.0, %v1796
    %1798 = vmatmul.f32.gmra.mxu0 %v1631
    %v1799 = vpop.f32.mrf.mxu0
    %v1800 = vadd.f32 0.0, %v1799
    %1801 = vmatmul.f32.gmra.mxu0 %v1633
    %v1802 = vpop.f32.mrf.mxu0
    %v1803 = vadd.f32 0.0, %v1802
    %1804 = vmatmul.f32.gmra.mxu0 %v1635
    %v1805 = vpop.f32.mrf.mxu0
    %v1806 = vadd.f32 0.0, %v1805
    %1807 = vmatmul.f32.gmra.mxu0 %v1637
    %v1808 = vpop.f32.mrf.mxu0
    %v1809 = vadd.f32 0.0, %v1808
    %1810 = vmatmul.f32.gmra.mxu0 %v1639
    %v1811 = vpop.f32.mrf.mxu0
    %v1812 = vadd.f32 0.0, %v1811
    %1813 = vmatmul.f32.gmra.mxu0 %v1641
    %v1814 = vpop.f32.mrf.mxu0
    %v1815 = vadd.f32 0.0, %v1814
    %1816 = vmatmul.f32.gmra.mxu0 %v1643
    %v1817 = vpop.f32.mrf.mxu0
    %v1818 = vadd.f32 0.0, %v1817
    %1819 = vmatmul.f32.gmra.mxu0 %v1645
    %v1820 = vpop.f32.mrf.mxu0
    %v1821 = vadd.f32 0.0, %v1820
    %1822 = vmatmul.f32.gmra.mxu0 %v1647
    %v1823 = vpop.f32.mrf.mxu0
    %v1824 = vadd.f32 0.0, %v1823
    %1825 = vmatmul.f32.gmra.mxu0 %v1649
    %v1826 = vpop.f32.mrf.mxu0
    %v1827 = vadd.f32 0.0, %v1826
    %1828 = vmatmul.f32.gmra.mxu0 %v1651
    %v1829 = vpop.f32.mrf.mxu0
    %v1830 = vadd.f32 0.0, %v1829
    %1831 = vmatmul.f32.gmra.mxu0 %v1653
    %v1832 = vpop.f32.mrf.mxu0
    %v1833 = vadd.f32 0.0, %v1832
    %1834 = vmatmul.f32.gmra.mxu0 %v1655
    %v1835 = vpop.f32.mrf.mxu0
    %v1836 = vadd.f32 0.0, %v1835
    %1837 = vmatmul.f32.gmra.mxu0 %v1657
    %v1838 = vpop.f32.mrf.mxu0
    %v1839 = vadd.f32 0.0, %v1838
    %1840 = vmatmul.f32.gmra.mxu0 %v1659
    %v1841 = vpop.f32.mrf.mxu0
    %v1842 = vadd.f32 0.0, %v1841
    %1843 = vmatmul.f32.gmra.mxu0 %v1661
    %v1844 = vpop.f32.mrf.mxu0
    %v1845 = vadd.f32 0.0, %v1844
    %1846 = vmatmul.f32.gmra.mxu0 %v1663
    %v1847 = vpop.f32.mrf.mxu0
    %v1848 = vadd.f32 0.0, %v1847
    %1849 = vmatmul.f32.gmra.mxu0 %v1665
    %v1850 = vpop.f32.mrf.mxu0
    %v1851 = vadd.f32 0.0, %v1850
    %1852 = vmatmul.f32.gmra.mxu0 %v1667
    %v1853 = vpop.f32.mrf.mxu0
    %v1854 = vadd.f32 0.0, %v1853
    %1855 = vmatmul.f32.gmra.mxu0 %v1669
    %v1856 = vpop.f32.mrf.mxu0
    %v1857 = vadd.f32 0.0, %v1856
    %1858 = vdwg.mxu0
    %v1859 = vsel %vm1558, %v1331, 0
    %v1861 = vsel %vm1558, %v1332, 0
    %v1863 = vsel %vm1558, %v1333, 0
    %v1865 = vsel %vm1558, %v1334, 0
    %v1867 = vsel %vm1558, %v1335, 0
    %v1869 = vsel %vm1558, %v1336, 0
    %v1871 = vsel %vm1558, %v1337, 0
    %v1873 = vsel %vm1558, %v1338, 0
    %v1875 = vsel %vm1558, %v1339, 0
    %v1877 = vsel %vm1558, %v1340, 0
    %v1879 = vsel %vm1558, %v1341, 0
    %v1881 = vsel %vm1558, %v1342, 0
    %v1883 = vsel %vm1558, %v1343, 0
    %v1885 = vsel %vm1558, %v1344, 0
    %v1887 = vsel %vm1558, %v1345, 0
    %v1889 = vsel %vm1558, %v1346, 0
    %v1891 = vsel %vm1558, %v1347, 0
    %v1893 = vsel %vm1558, %v1348, 0
    %v1895 = vsel %vm1558, %v1349, 0
    %v1897 = vsel %vm1558, %v1350, 0
    %v1899 = vsel %vm1558, %v1351, 0
    %v1901 = vsel %vm1558, %v1352, 0
    %v1903 = vsel %vm1558, %v1353, 0
    %v1905 = vsel %vm1558, %v1354, 0
    %v1907 = vsel %vm1558, %v1355, 0
    %v1909 = vsel %vm1558, %v1356, 0
    %v1911 = vsel %vm1558, %v1357, 0
    %v1913 = vsel %vm1558, %v1358, 0
    %v1915 = vsel %vm1558, %v1359, 0
    %v1917 = vsel %vm1558, %v1360, 0
    %v1919 = vsel %vm1558, %v1361, 0
    %v1921 = vsel %vm1558, %v1362, 0
    %v1923 = vsel %vm1558, %v1363, 0
    %v1925 = vsel %vm1558, %v1364, 0
    %v1927 = vsel %vm1558, %v1365, 0
    %v1929 = vsel %vm1558, %v1366, 0
    %v1931 = vsel %vm1558, %v1367, 0
    %v1933 = vsel %vm1558, %v1368, 0
    %v1935 = vsel %vm1558, %v1369, 0
    %v1937 = vsel %vm1558, %v1370, 0
    %v1939 = vsel %vm1558, %v1371, 0
    %v1941 = vsel %vm1558, %v1372, 0
    %v1943 = vsel %vm1558, %v1373, 0
    %v1945 = vsel %vm1558, %v1374, 0
    %v1947 = vsel %vm1558, %v1375, 0
    %v1949 = vsel %vm1558, %v1376, 0
    %v1951 = vsel %vm1558, %v1377, 0
    %v1953 = vsel %vm1558, %v1378, 0
    %v1955 = vsel %vm1558, %v1379, 0
    %v1957 = vsel %vm1558, %v1380, 0
    %v1959 = vsel %vm1558, %v1381, 0
    %v1961 = vsel %vm1558, %v1382, 0
    %v1963 = vsel %vm1558, %v1383, 0
    %v1965 = vsel %vm1558, %v1384, 0
    %v1967 = vsel %vm1558, %v1385, 0
    %v1969 = vsel %vm1558, %v1386, 0
    %v1971 = vsel %vm1671, %v1330, 0
    %1973 = vmatpush.msra.mxu0 0.0
    %1974 = vmatpush.msra.mxu0 0.0
    %1975 = vmatpush.msra.mxu0 0.0
    %1976 = vmatpush.msra.mxu0 0.0
    %1977 = vmatpush.msra.mxu0 0.0
    %1978 = vmatpush.msra.mxu0 0.0
    %1979 = vmatpush.msra.mxu0 0.0
    %1980 = vmatpush.msra.mxu0 0.0
    %1981 = vmatpush.msra.mxu0 0.0
    %1982 = vmatpush.msra.mxu0 0.0
    %1983 = vmatpush.msra.mxu0 0.0
    %1984 = vmatpush.msra.mxu0 0.0
    %1985 = vmatpush.msra.mxu0 0.0
    %1986 = vmatpush.msra.mxu0 0.0
    %1987 = vmatpush.msra.mxu0 0.0
    %1988 = vmatpush.msra.mxu0 %v1971
    %1989 = vmatmul.f32.gmra.mxu0 %v1859
    %v1990 = vpop.f32.mrf.mxu0
    %v1991 = vadd.f32 %v1692, %v1990
    %1992 = vmatmul.f32.gmra.mxu0 %v1861
    %v1993 = vpop.f32.mrf.mxu0
    %v1994 = vadd.f32 %v1695, %v1993
    %1995 = vmatmul.f32.gmra.mxu0 %v1863
    %v1996 = vpop.f32.mrf.mxu0
    %v1997 = vadd.f32 %v1698, %v1996
    %1998 = vmatmul.f32.gmra.mxu0 %v1865
    %v1999 = vpop.f32.mrf.mxu0
    %v2000 = vadd.f32 %v1701, %v1999
    %2001 = vmatmul.f32.gmra.mxu0 %v1867
    %v2002 = vpop.f32.mrf.mxu0
    %v2003 = vadd.f32 %v1704, %v2002
    %2004 = vmatmul.f32.gmra.mxu0 %v1869
    %v2005 = vpop.f32.mrf.mxu0
    %v2006 = vadd.f32 %v1707, %v2005
    %2007 = vmatmul.f32.gmra.mxu0 %v1871
    %v2008 = vpop.f32.mrf.mxu0
    %v2009 = vadd.f32 %v1710, %v2008
    %2010 = vmatmul.f32.gmra.mxu0 %v1873
    %v2011 = vpop.f32.mrf.mxu0
    %v2012 = vadd.f32 %v1713, %v2011
    %2013 = vmatmul.f32.gmra.mxu0 %v1875
    %v2014 = vpop.f32.mrf.mxu0
    %v2015 = vadd.f32 %v1716, %v2014
    %2016 = vmatmul.f32.gmra.mxu0 %v1877
    %v2017 = vpop.f32.mrf.mxu0
    %v2018 = vadd.f32 %v1719, %v2017
    %2019 = vmatmul.f32.gmra.mxu0 %v1879
    %v2020 = vpop.f32.mrf.mxu0
    %v2021 = vadd.f32 %v1722, %v2020
    %2022 = vmatmul.f32.gmra.mxu0 %v1881
    %v2023 = vpop.f32.mrf.mxu0
    %v2024 = vadd.f32 %v1725, %v2023
    %2025 = vmatmul.f32.gmra.mxu0 %v1883
    %v2026 = vpop.f32.mrf.mxu0
    %v2027 = vadd.f32 %v1728, %v2026
    %2028 = vmatmul.f32.gmra.mxu0 %v1885
    %v2029 = vpop.f32.mrf.mxu0
    %v2030 = vadd.f32 %v1731, %v2029
    %2031 = vmatmul.f32.gmra.mxu0 %v1887
    %v2032 = vpop.f32.mrf.mxu0
    %v2033 = vadd.f32 %v1734, %v2032
    %2034 = vmatmul.f32.gmra.mxu0 %v1889
    %v2035 = vpop.f32.mrf.mxu0
    %v2036 = vadd.f32 %v1737, %v2035
    %2037 = vmatmul.f32.gmra.mxu0 %v1891
    %v2038 = vpop.f32.mrf.mxu0
    %v2039 = vadd.f32 %v1740, %v2038
    %2040 = vmatmul.f32.gmra.mxu0 %v1893
    %v2041 = vpop.f32.mrf.mxu0
    %v2042 = vadd.f32 %v1743, %v2041
    %2043 = vmatmul.f32.gmra.mxu0 %v1895
    %v2044 = vpop.f32.mrf.mxu0
    %v2045 = vadd.f32 %v1746, %v2044
    %2046 = vmatmul.f32.gmra.mxu0 %v1897
    %v2047 = vpop.f32.mrf.mxu0
    %v2048 = vadd.f32 %v1749, %v2047
    %2049 = vmatmul.f32.gmra.mxu0 %v1899
    %v2050 = vpop.f32.mrf.mxu0
    %v2051 = vadd.f32 %v1752, %v2050
    %2052 = vmatmul.f32.gmra.mxu0 %v1901
    %v2053 = vpop.f32.mrf.mxu0
    %v2054 = vadd.f32 %v1755, %v2053
    %2055 = vmatmul.f32.gmra.mxu0 %v1903
    %v2056 = vpop.f32.mrf.mxu0
    %v2057 = vadd.f32 %v1758, %v2056
    %2058 = vmatmul.f32.gmra.mxu0 %v1905
    %v2059 = vpop.f32.mrf.mxu0
    %v2060 = vadd.f32 %v1761, %v2059
    %2061 = vmatmul.f32.gmra.mxu0 %v1907
    %v2062 = vpop.f32.mrf.mxu0
    %v2063 = vadd.f32 %v1764, %v2062
    %2064 = vmatmul.f32.gmra.mxu0 %v1909
    %v2065 = vpop.f32.mrf.mxu0
    %v2066 = vadd.f32 %v1767, %v2065
    %2067 = vmatmul.f32.gmra.mxu0 %v1911
    %v2068 = vpop.f32.mrf.mxu0
    %v2069 = vadd.f32 %v1770, %v2068
    %2070 = vmatmul.f32.gmra.mxu0 %v1913
    %v2071 = vpop.f32.mrf.mxu0
    %v2072 = vadd.f32 %v1773, %v2071
    %2073 = vmatmul.f32.gmra.mxu0 %v1915
    %v2074 = vpop.f32.mrf.mxu0
    %v2075 = vadd.f32 %v1776, %v2074
    %2076 = vmatmul.f32.gmra.mxu0 %v1917
    %v2077 = vpop.f32.mrf.mxu0
    %v2078 = vadd.f32 %v1779, %v2077
    %2079 = vmatmul.f32.gmra.mxu0 %v1919
    %v2080 = vpop.f32.mrf.mxu0
    %v2081 = vadd.f32 %v1782, %v2080
    %2082 = vmatmul.f32.gmra.mxu0 %v1921
    %v2083 = vpop.f32.mrf.mxu0
    %v2084 = vadd.f32 %v1785, %v2083
    %2085 = vmatmul.f32.gmra.mxu0 %v1923
    %v2086 = vpop.f32.mrf.mxu0
    %v2087 = vadd.f32 %v1788, %v2086
    %2088 = vmatmul.f32.gmra.mxu0 %v1925
    %v2089 = vpop.f32.mrf.mxu0
    %v2090 = vadd.f32 %v1791, %v2089
    %2091 = vmatmul.f32.gmra.mxu0 %v1927
    %v2092 = vpop.f32.mrf.mxu0
    %v2093 = vadd.f32 %v1794, %v2092
    %2094 = vmatmul.f32.gmra.mxu0 %v1929
    %v2095 = vpop.f32.mrf.mxu0
    %v2096 = vadd.f32 %v1797, %v2095
    %2097 = vmatmul.f32.gmra.mxu0 %v1931
    %v2098 = vpop.f32.mrf.mxu0
    %v2099 = vadd.f32 %v1800, %v2098
    %2100 = vmatmul.f32.gmra.mxu0 %v1933
    %v2101 = vpop.f32.mrf.mxu0
    %v2102 = vadd.f32 %v1803, %v2101
    %2103 = vmatmul.f32.gmra.mxu0 %v1935
    %v2104 = vpop.f32.mrf.mxu0
    %v2105 = vadd.f32 %v1806, %v2104
    %2106 = vmatmul.f32.gmra.mxu0 %v1937
    %v2107 = vpop.f32.mrf.mxu0
    %v2108 = vadd.f32 %v1809, %v2107
    %2109 = vmatmul.f32.gmra.mxu0 %v1939
    %v2110 = vpop.f32.mrf.mxu0
    %v2111 = vadd.f32 %v1812, %v2110
    %2112 = vmatmul.f32.gmra.mxu0 %v1941
    %v2113 = vpop.f32.mrf.mxu0
    %v2114 = vadd.f32 %v1815, %v2113
    %2115 = vmatmul.f32.gmra.mxu0 %v1943
    %v2116 = vpop.f32.mrf.mxu0
    %v2117 = vadd.f32 %v1818, %v2116
    %2118 = vmatmul.f32.gmra.mxu0 %v1945
    %v2119 = vpop.f32.mrf.mxu0
    %v2120 = vadd.f32 %v1821, %v2119
    %2121 = vmatmul.f32.gmra.mxu0 %v1947
    %v2122 = vpop.f32.mrf.mxu0
    %v2123 = vadd.f32 %v1824, %v2122
    %2124 = vmatmul.f32.gmra.mxu0 %v1949
    %v2125 = vpop.f32.mrf.mxu0
    %v2126 = vadd.f32 %v1827, %v2125
    %2127 = vmatmul.f32.gmra.mxu0 %v1951
    %v2128 = vpop.f32.mrf.mxu0
    %v2129 = vadd.f32 %v1830, %v2128
    %2130 = vmatmul.f32.gmra.mxu0 %v1953
    %v2131 = vpop.f32.mrf.mxu0
    %v2132 = vadd.f32 %v1833, %v2131
    %2133 = vmatmul.f32.gmra.mxu0 %v1955
    %v2134 = vpop.f32.mrf.mxu0
    %v2135 = vadd.f32 %v1836, %v2134
    %2136 = vmatmul.f32.gmra.mxu0 %v1957
    %v2137 = vpop.f32.mrf.mxu0
    %v2138 = vadd.f32 %v1839, %v2137
    %2139 = vmatmul.f32.gmra.mxu0 %v1959
    %v2140 = vpop.f32.mrf.mxu0
    %v2141 = vadd.f32 %v1842, %v2140
    %2142 = vmatmul.f32.gmra.mxu0 %v1961
    %v2143 = vpop.f32.mrf.mxu0
    %v2144 = vadd.f32 %v1845, %v2143
    %2145 = vmatmul.f32.gmra.mxu0 %v1963
    %v2146 = vpop.f32.mrf.mxu0
    %v2147 = vadd.f32 %v1848, %v2146
    %2148 = vmatmul.f32.gmra.mxu0 %v1965
    %v2149 = vpop.f32.mrf.mxu0
    %v2150 = vadd.f32 %v1851, %v2149
    %2151 = vmatmul.f32.gmra.mxu0 %v1967
    %v2152 = vpop.f32.mrf.mxu0
    %v2153 = vadd.f32 %v1854, %v2152
    %2154 = vmatmul.f32.gmra.mxu0 %v1969
    %v2155 = vpop.f32.mrf.mxu0
    %v2156 = vadd.f32 %v1857, %v2155
    %2157 = vdwg.mxu0
    %2158 = vrot.lane.b32.xlu0 %v1331, 118
    %v2159 = vpop.permute.xlu0 %2158
    %2160 = vrot.lane.b32.xlu0 %v1332, 118
    %v2161 = vpop.permute.xlu0 %2160
    %2162 = vrot.lane.b32.xlu0 %v1333, 118
    %v2163 = vpop.permute.xlu0 %2162
    %2164 = vrot.lane.b32.xlu0 %v1334, 118
    %v2165 = vpop.permute.xlu0 %2164
    %2166 = vrot.lane.b32.xlu0 %v1335, 118
    %v2167 = vpop.permute.xlu0 %2166
    %2168 = vrot.lane.b32.xlu0 %v1336, 118
    %v2169 = vpop.permute.xlu0 %2168
    %2170 = vrot.lane.b32.xlu0 %v1337, 118
    %v2171 = vpop.permute.xlu0 %2170
    %2172 = vrot.lane.b32.xlu0 %v1338, 118
    %v2173 = vpop.permute.xlu0 %2172
    %2174 = vrot.lane.b32.xlu0 %v1339, 118
    %v2175 = vpop.permute.xlu0 %2174
    %2176 = vrot.lane.b32.xlu0 %v1340, 118
    %v2177 = vpop.permute.xlu0 %2176
    %2178 = vrot.lane.b32.xlu0 %v1341, 118
    %v2179 = vpop.permute.xlu0 %2178
    %2180 = vrot.lane.b32.xlu0 %v1342, 118
    %v2181 = vpop.permute.xlu0 %2180
    %2182 = vrot.lane.b32.xlu0 %v1343, 118
    %v2183 = vpop.permute.xlu0 %2182
    %2184 = vrot.lane.b32.xlu0 %v1344, 118
    %v2185 = vpop.permute.xlu0 %2184
    %2186 = vrot.lane.b32.xlu0 %v1345, 118
    %v2187 = vpop.permute.xlu0 %2186
    %2188 = vrot.lane.b32.xlu0 %v1346, 118
    %v2189 = vpop.permute.xlu0 %2188
    %2190 = vrot.lane.b32.xlu0 %v1347, 118
    %v2191 = vpop.permute.xlu0 %2190
    %2192 = vrot.lane.b32.xlu0 %v1348, 118
    %v2193 = vpop.permute.xlu0 %2192
    %2194 = vrot.lane.b32.xlu0 %v1349, 118
    %v2195 = vpop.permute.xlu0 %2194
    %2196 = vrot.lane.b32.xlu0 %v1350, 118
    %v2197 = vpop.permute.xlu0 %2196
    %2198 = vrot.lane.b32.xlu0 %v1351, 118
    %v2199 = vpop.permute.xlu0 %2198
    %2200 = vrot.lane.b32.xlu0 %v1352, 118
    %v2201 = vpop.permute.xlu0 %2200
    %2202 = vrot.lane.b32.xlu0 %v1353, 118
    %v2203 = vpop.permute.xlu0 %2202
    %2204 = vrot.lane.b32.xlu0 %v1354, 118
    %v2205 = vpop.permute.xlu0 %2204
    %2206 = vrot.lane.b32.xlu0 %v1355, 118
    %v2207 = vpop.permute.xlu0 %2206
    %2208 = vrot.lane.b32.xlu0 %v1356, 118
    %v2209 = vpop.permute.xlu0 %2208
    %2210 = vrot.lane.b32.xlu0 %v1357, 118
    %v2211 = vpop.permute.xlu0 %2210
    %2212 = vrot.lane.b32.xlu0 %v1358, 118
    %v2213 = vpop.permute.xlu0 %2212
    %2214 = vrot.lane.b32.xlu0 %v1359, 118
    %v2215 = vpop.permute.xlu0 %2214
    %2216 = vrot.lane.b32.xlu0 %v1360, 118
    %v2217 = vpop.permute.xlu0 %2216
    %2218 = vrot.lane.b32.xlu0 %v1361, 118
    %v2219 = vpop.permute.xlu0 %2218
    %2220 = vrot.lane.b32.xlu0 %v1362, 118
    %v2221 = vpop.permute.xlu0 %2220
    %2222 = vrot.lane.b32.xlu0 %v1363, 118
    %v2223 = vpop.permute.xlu0 %2222
    %2224 = vrot.lane.b32.xlu0 %v1364, 118
    %v2225 = vpop.permute.xlu0 %2224
    %2226 = vrot.lane.b32.xlu0 %v1365, 118
    %v2227 = vpop.permute.xlu0 %2226
    %2228 = vrot.lane.b32.xlu0 %v1366, 118
    %v2229 = vpop.permute.xlu0 %2228
    %2230 = vrot.lane.b32.xlu0 %v1367, 118
    %v2231 = vpop.permute.xlu0 %2230
    %2232 = vrot.lane.b32.xlu0 %v1368, 118
    %v2233 = vpop.permute.xlu0 %2232
    %2234 = vrot.lane.b32.xlu0 %v1369, 118
    %v2235 = vpop.permute.xlu0 %2234
    %2236 = vrot.lane.b32.xlu0 %v1370, 118
    %v2237 = vpop.permute.xlu0 %2236
    %2238 = vrot.lane.b32.xlu0 %v1371, 118
    %v2239 = vpop.permute.xlu0 %2238
    %2240 = vrot.lane.b32.xlu0 %v1372, 118
    %v2241 = vpop.permute.xlu0 %2240
    %2242 = vrot.lane.b32.xlu0 %v1373, 118
    %v2243 = vpop.permute.xlu0 %2242
    %2244 = vrot.lane.b32.xlu0 %v1374, 118
    %v2245 = vpop.permute.xlu0 %2244
    %2246 = vrot.lane.b32.xlu0 %v1375, 118
    %v2247 = vpop.permute.xlu0 %2246
    %2248 = vrot.lane.b32.xlu0 %v1376, 118
    %v2249 = vpop.permute.xlu0 %2248
    %2250 = vrot.lane.b32.xlu0 %v1377, 118
    %v2251 = vpop.permute.xlu0 %2250
    %2252 = vrot.lane.b32.xlu0 %v1378, 118
    %v2253 = vpop.permute.xlu0 %2252
    %2254 = vrot.lane.b32.xlu0 %v1379, 118
    %v2255 = vpop.permute.xlu0 %2254
    %2256 = vrot.lane.b32.xlu0 %v1380, 118
    %v2257 = vpop.permute.xlu0 %2256
    %2258 = vrot.lane.b32.xlu0 %v1381, 118
    %v2259 = vpop.permute.xlu0 %2258
    %2260 = vrot.lane.b32.xlu0 %v1382, 118
    %v2261 = vpop.permute.xlu0 %2260
    %2262 = vrot.lane.b32.xlu0 %v1383, 118
    %v2263 = vpop.permute.xlu0 %2262
    %2264 = vrot.lane.b32.xlu0 %v1384, 118
    %v2265 = vpop.permute.xlu0 %2264
    %2266 = vrot.lane.b32.xlu0 %v1385, 118
    %v2267 = vpop.permute.xlu0 %2266
    %2268 = vrot.lane.b32.xlu0 %v1386, 118
    %v2269 = vpop.permute.xlu0 %2268
    %2270 = vrot.lane.b32.xlu0 %v1330, 126
    %v2271 = vpop.permute.xlu0 %2270
    %v2272 = vsel %vm1558, %v2159, 0
    %v2274 = vsel %vm1558, %v2161, 0
    %v2276 = vsel %vm1558, %v2163, 0
    %v2278 = vsel %vm1558, %v2165, 0
    %v2280 = vsel %vm1558, %v2167, 0
    %v2282 = vsel %vm1558, %v2169, 0
    %v2284 = vsel %vm1558, %v2171, 0
    %v2286 = vsel %vm1558, %v2173, 0
    %v2288 = vsel %vm1558, %v2175, 0
    %v2290 = vsel %vm1558, %v2177, 0
    %v2292 = vsel %vm1558, %v2179, 0
    %v2294 = vsel %vm1558, %v2181, 0
    %v2296 = vsel %vm1558, %v2183, 0
    %v2298 = vsel %vm1558, %v2185, 0
    %v2300 = vsel %vm1558, %v2187, 0
    %v2302 = vsel %vm1558, %v2189, 0
    %v2304 = vsel %vm1558, %v2191, 0
    %v2306 = vsel %vm1558, %v2193, 0
    %v2308 = vsel %vm1558, %v2195, 0
    %v2310 = vsel %vm1558, %v2197, 0
    %v2312 = vsel %vm1558, %v2199, 0
    %v2314 = vsel %vm1558, %v2201, 0
    %v2316 = vsel %vm1558, %v2203, 0
    %v2318 = vsel %vm1558, %v2205, 0
    %v2320 = vsel %vm1558, %v2207, 0
    %v2322 = vsel %vm1558, %v2209, 0
    %v2324 = vsel %vm1558, %v2211, 0
    %v2326 = vsel %vm1558, %v2213, 0
    %v2328 = vsel %vm1558, %v2215, 0
    %v2330 = vsel %vm1558, %v2217, 0
    %v2332 = vsel %vm1558, %v2219, 0
    %v2334 = vsel %vm1558, %v2221, 0
    %v2336 = vsel %vm1558, %v2223, 0
    %v2338 = vsel %vm1558, %v2225, 0
    %v2340 = vsel %vm1558, %v2227, 0
    %v2342 = vsel %vm1558, %v2229, 0
    %v2344 = vsel %vm1558, %v2231, 0
    %v2346 = vsel %vm1558, %v2233, 0
    %v2348 = vsel %vm1558, %v2235, 0
    %v2350 = vsel %vm1558, %v2237, 0
    %v2352 = vsel %vm1558, %v2239, 0
    %v2354 = vsel %vm1558, %v2241, 0
    %v2356 = vsel %vm1558, %v2243, 0
    %v2358 = vsel %vm1558, %v2245, 0
    %v2360 = vsel %vm1558, %v2247, 0
    %v2362 = vsel %vm1558, %v2249, 0
    %v2364 = vsel %vm1558, %v2251, 0
    %v2366 = vsel %vm1558, %v2253, 0
    %v2368 = vsel %vm1558, %v2255, 0
    %v2370 = vsel %vm1558, %v2257, 0
    %v2372 = vsel %vm1558, %v2259, 0
    %v2374 = vsel %vm1558, %v2261, 0
    %v2376 = vsel %vm1558, %v2263, 0
    %v2378 = vsel %vm1558, %v2265, 0
    %v2380 = vsel %vm1558, %v2267, 0
    %v2382 = vsel %vm1558, %v2269, 0
    %v2384 = vsel %vm1671, %v2271, 0
    %2386 = vmatpush.msra.mxu0 0.0
    %2387 = vmatpush.msra.mxu0 0.0
    %2388 = vmatpush.msra.mxu0 0.0
    %2389 = vmatpush.msra.mxu0 0.0
    %2390 = vmatpush.msra.mxu0 0.0
    %2391 = vmatpush.msra.mxu0 0.0
    %2392 = vmatpush.msra.mxu0 0.0
    %2393 = vmatpush.msra.mxu0 0.0
    %2394 = vmatpush.msra.mxu0 0.0
    %2395 = vmatpush.msra.mxu0 0.0
    %2396 = vmatpush.msra.mxu0 0.0
    %2397 = vmatpush.msra.mxu0 0.0
    %2398 = vmatpush.msra.mxu0 0.0
    %2399 = vmatpush.msra.mxu0 0.0
    %2400 = vmatpush.msra.mxu0 0.0
    %2401 = vmatpush.msra.mxu0 %v2384
    %2402 = vmatmul.f32.gmra.mxu0 %v2272
    %v2403 = vpop.f32.mrf.mxu0
    %v2404 = vadd.f32 0.0, %v2403
    %2405 = vmatmul.f32.gmra.mxu0 %v2274
    %v2406 = vpop.f32.mrf.mxu0
    %v2407 = vadd.f32 0.0, %v2406
    %2408 = vmatmul.f32.gmra.mxu0 %v2276
    %v2409 = vpop.f32.mrf.mxu0
    %v2410 = vadd.f32 0.0, %v2409
    %2411 = vmatmul.f32.gmra.mxu0 %v2278
    %v2412 = vpop.f32.mrf.mxu0
    %v2413 = vadd.f32 0.0, %v2412
    %2414 = vmatmul.f32.gmra.mxu0 %v2280
    %v2415 = vpop.f32.mrf.mxu0
    %v2416 = vadd.f32 0.0, %v2415
    %2417 = vmatmul.f32.gmra.mxu0 %v2282
    %v2418 = vpop.f32.mrf.mxu0
    %v2419 = vadd.f32 0.0, %v2418
    %2420 = vmatmul.f32.gmra.mxu0 %v2284
    %v2421 = vpop.f32.mrf.mxu0
    %v2422 = vadd.f32 0.0, %v2421
    %2423 = vmatmul.f32.gmra.mxu0 %v2286
    %v2424 = vpop.f32.mrf.mxu0
    %v2425 = vadd.f32 0.0, %v2424
    %2426 = vmatmul.f32.gmra.mxu0 %v2288
    %v2427 = vpop.f32.mrf.mxu0
    %v2428 = vadd.f32 0.0, %v2427
    %2429 = vmatmul.f32.gmra.mxu0 %v2290
    %v2430 = vpop.f32.mrf.mxu0
    %v2431 = vadd.f32 0.0, %v2430
    %2432 = vmatmul.f32.gmra.mxu0 %v2292
    %v2433 = vpop.f32.mrf.mxu0
    %v2434 = vadd.f32 0.0, %v2433
    %2435 = vmatmul.f32.gmra.mxu0 %v2294
    %v2436 = vpop.f32.mrf.mxu0
    %v2437 = vadd.f32 0.0, %v2436
    %2438 = vmatmul.f32.gmra.mxu0 %v2296
    %v2439 = vpop.f32.mrf.mxu0
    %v2440 = vadd.f32 0.0, %v2439
    %2441 = vmatmul.f32.gmra.mxu0 %v2298
    %v2442 = vpop.f32.mrf.mxu0
    %v2443 = vadd.f32 0.0, %v2442
    %2444 = vmatmul.f32.gmra.mxu0 %v2300
    %v2445 = vpop.f32.mrf.mxu0
    %v2446 = vadd.f32 0.0, %v2445
    %2447 = vmatmul.f32.gmra.mxu0 %v2302
    %v2448 = vpop.f32.mrf.mxu0
    %v2449 = vadd.f32 0.0, %v2448
    %2450 = vmatmul.f32.gmra.mxu0 %v2304
    %v2451 = vpop.f32.mrf.mxu0
    %v2452 = vadd.f32 0.0, %v2451
    %2453 = vmatmul.f32.gmra.mxu0 %v2306
    %v2454 = vpop.f32.mrf.mxu0
    %v2455 = vadd.f32 0.0, %v2454
    %2456 = vmatmul.f32.gmra.mxu0 %v2308
    %v2457 = vpop.f32.mrf.mxu0
    %v2458 = vadd.f32 0.0, %v2457
    %2459 = vmatmul.f32.gmra.mxu0 %v2310
    %v2460 = vpop.f32.mrf.mxu0
    %v2461 = vadd.f32 0.0, %v2460
    %2462 = vmatmul.f32.gmra.mxu0 %v2312
    %v2463 = vpop.f32.mrf.mxu0
    %v2464 = vadd.f32 0.0, %v2463
    %2465 = vmatmul.f32.gmra.mxu0 %v2314
    %v2466 = vpop.f32.mrf.mxu0
    %v2467 = vadd.f32 0.0, %v2466
    %2468 = vmatmul.f32.gmra.mxu0 %v2316
    %v2469 = vpop.f32.mrf.mxu0
    %v2470 = vadd.f32 0.0, %v2469
    %2471 = vmatmul.f32.gmra.mxu0 %v2318
    %v2472 = vpop.f32.mrf.mxu0
    %v2473 = vadd.f32 0.0, %v2472
    %2474 = vmatmul.f32.gmra.mxu0 %v2320
    %v2475 = vpop.f32.mrf.mxu0
    %v2476 = vadd.f32 0.0, %v2475
    %2477 = vmatmul.f32.gmra.mxu0 %v2322
    %v2478 = vpop.f32.mrf.mxu0
    %v2479 = vadd.f32 0.0, %v2478
    %2480 = vmatmul.f32.gmra.mxu0 %v2324
    %v2481 = vpop.f32.mrf.mxu0
    %v2482 = vadd.f32 0.0, %v2481
    %2483 = vmatmul.f32.gmra.mxu0 %v2326
    %v2484 = vpop.f32.mrf.mxu0
    %v2485 = vadd.f32 0.0, %v2484
    %2486 = vmatmul.f32.gmra.mxu0 %v2328
    %v2487 = vpop.f32.mrf.mxu0
    %v2488 = vadd.f32 0.0, %v2487
    %2489 = vmatmul.f32.gmra.mxu0 %v2330
    %v2490 = vpop.f32.mrf.mxu0
    %v2491 = vadd.f32 0.0, %v2490
    %2492 = vmatmul.f32.gmra.mxu0 %v2332
    %v2493 = vpop.f32.mrf.mxu0
    %v2494 = vadd.f32 0.0, %v2493
    %2495 = vmatmul.f32.gmra.mxu0 %v2334
    %v2496 = vpop.f32.mrf.mxu0
    %v2497 = vadd.f32 0.0, %v2496
    %2498 = vmatmul.f32.gmra.mxu0 %v2336
    %v2499 = vpop.f32.mrf.mxu0
    %v2500 = vadd.f32 0.0, %v2499
    %2501 = vmatmul.f32.gmra.mxu0 %v2338
    %v2502 = vpop.f32.mrf.mxu0
    %v2503 = vadd.f32 0.0, %v2502
    %2504 = vmatmul.f32.gmra.mxu0 %v2340
    %v2505 = vpop.f32.mrf.mxu0
    %v2506 = vadd.f32 0.0, %v2505
    %2507 = vmatmul.f32.gmra.mxu0 %v2342
    %v2508 = vpop.f32.mrf.mxu0
    %v2509 = vadd.f32 0.0, %v2508
    %2510 = vmatmul.f32.gmra.mxu0 %v2344
    %v2511 = vpop.f32.mrf.mxu0
    %v2512 = vadd.f32 0.0, %v2511
    %2513 = vmatmul.f32.gmra.mxu0 %v2346
    %v2514 = vpop.f32.mrf.mxu0
    %v2515 = vadd.f32 0.0, %v2514
    %2516 = vmatmul.f32.gmra.mxu0 %v2348
    %v2517 = vpop.f32.mrf.mxu0
    %v2518 = vadd.f32 0.0, %v2517
    %2519 = vmatmul.f32.gmra.mxu0 %v2350
    %v2520 = vpop.f32.mrf.mxu0
    %v2521 = vadd.f32 0.0, %v2520
    %2522 = vmatmul.f32.gmra.mxu0 %v2352
    %v2523 = vpop.f32.mrf.mxu0
    %v2524 = vadd.f32 0.0, %v2523
    %2525 = vmatmul.f32.gmra.mxu0 %v2354
    %v2526 = vpop.f32.mrf.mxu0
    %v2527 = vadd.f32 0.0, %v2526
    %2528 = vmatmul.f32.gmra.mxu0 %v2356
    %v2529 = vpop.f32.mrf.mxu0
    %v2530 = vadd.f32 0.0, %v2529
    %2531 = vmatmul.f32.gmra.mxu0 %v2358
    %v2532 = vpop.f32.mrf.mxu0
    %v2533 = vadd.f32 0.0, %v2532
    %2534 = vmatmul.f32.gmra.mxu0 %v2360
    %v2535 = vpop.f32.mrf.mxu0
    %v2536 = vadd.f32 0.0, %v2535
    %2537 = vmatmul.f32.gmra.mxu0 %v2362
    %v2538 = vpop.f32.mrf.mxu0
    %v2539 = vadd.f32 0.0, %v2538
    %2540 = vmatmul.f32.gmra.mxu0 %v2364
    %v2541 = vpop.f32.mrf.mxu0
    %v2542 = vadd.f32 0.0, %v2541
    %2543 = vmatmul.f32.gmra.mxu0 %v2366
    %v2544 = vpop.f32.mrf.mxu0
    %v2545 = vadd.f32 0.0, %v2544
    %2546 = vmatmul.f32.gmra.mxu0 %v2368
    %v2547 = vpop.f32.mrf.mxu0
    %v2548 = vadd.f32 0.0, %v2547
    %2549 = vmatmul.f32.gmra.mxu0 %v2370
    %v2550 = vpop.f32.mrf.mxu0
    %v2551 = vadd.f32 0.0, %v2550
    %2552 = vmatmul.f32.gmra.mxu0 %v2372
    %v2553 = vpop.f32.mrf.mxu0
    %v2554 = vadd.f32 0.0, %v2553
    %2555 = vmatmul.f32.gmra.mxu0 %v2374
    %v2556 = vpop.f32.mrf.mxu0
    %v2557 = vadd.f32 0.0, %v2556
    %2558 = vmatmul.f32.gmra.mxu0 %v2376
    %v2559 = vpop.f32.mrf.mxu0
    %v2560 = vadd.f32 0.0, %v2559
    %2561 = vmatmul.f32.gmra.mxu0 %v2378
    %v2562 = vpop.f32.mrf.mxu0
    %v2563 = vadd.f32 0.0, %v2562
    %2564 = vmatmul.f32.gmra.mxu0 %v2380
    %v2565 = vpop.f32.mrf.mxu0
    %v2566 = vadd.f32 0.0, %v2565
    %2567 = vmatmul.f32.gmra.mxu0 %v2382
    %v2568 = vpop.f32.mrf.mxu0
    %v2569 = vadd.f32 0.0, %v2568
    %2570 = vdwg.mxu0
    %v2571 = vadd.f32 %v1991, %v2404
    %v2572 = vadd.f32 %v1994, %v2407
    %v2573 = vadd.f32 %v1997, %v2410
    %v2574 = vadd.f32 %v2000, %v2413
    %v2575 = vadd.f32 %v2003, %v2416
    %v2576 = vadd.f32 %v2006, %v2419
    %v2577 = vadd.f32 %v2009, %v2422
    %v2578 = vadd.f32 %v2012, %v2425
    %v2579 = vadd.f32 %v2015, %v2428
    %v2580 = vadd.f32 %v2018, %v2431
    %v2581 = vadd.f32 %v2021, %v2434
    %v2582 = vadd.f32 %v2024, %v2437
    %v2583 = vadd.f32 %v2027, %v2440
    %v2584 = vadd.f32 %v2030, %v2443
    %v2585 = vadd.f32 %v2033, %v2446
    %v2586 = vadd.f32 %v2036, %v2449
    %v2587 = vadd.f32 %v2039, %v2452
    %v2588 = vadd.f32 %v2042, %v2455
    %v2589 = vadd.f32 %v2045, %v2458
    %v2590 = vadd.f32 %v2048, %v2461
    %v2591 = vadd.f32 %v2051, %v2464
    %v2592 = vadd.f32 %v2054, %v2467
    %v2593 = vadd.f32 %v2057, %v2470
    %v2594 = vadd.f32 %v2060, %v2473
    %v2595 = vadd.f32 %v2063, %v2476
    %v2596 = vadd.f32 %v2066, %v2479
    %v2597 = vadd.f32 %v2069, %v2482
    %v2598 = vadd.f32 %v2072, %v2485
    %v2599 = vadd.f32 %v2075, %v2488
    %v2600 = vadd.f32 %v2078, %v2491
    %v2601 = vadd.f32 %v2081, %v2494
    %v2602 = vadd.f32 %v2084, %v2497
    %v2603 = vadd.f32 %v2087, %v2500
    %v2604 = vadd.f32 %v2090, %v2503
    %v2605 = vadd.f32 %v2093, %v2506
    %v2606 = vadd.f32 %v2096, %v2509
    %v2607 = vadd.f32 %v2099, %v2512
    %v2608 = vadd.f32 %v2102, %v2515
    %v2609 = vadd.f32 %v2105, %v2518
    %v2610 = vadd.f32 %v2108, %v2521
    %v2611 = vadd.f32 %v2111, %v2524
    %v2612 = vadd.f32 %v2114, %v2527
    %v2613 = vadd.f32 %v2117, %v2530
    %v2614 = vadd.f32 %v2120, %v2533
    %v2615 = vadd.f32 %v2123, %v2536
    %v2616 = vadd.f32 %v2126, %v2539
    %v2617 = vadd.f32 %v2129, %v2542
    %v2618 = vadd.f32 %v2132, %v2545
    %v2619 = vadd.f32 %v2135, %v2548
    %v2620 = vadd.f32 %v2138, %v2551
    %v2621 = vadd.f32 %v2141, %v2554
    %v2622 = vadd.f32 %v2144, %v2557
    %v2623 = vadd.f32 %v2147, %v2560
    %v2624 = vadd.f32 %v2150, %v2563
    %v2625 = vadd.f32 %v2153, %v2566
    %v2626 = vadd.f32 %v2156, %v2569
    %2627 = vrot.lane.b32.xlu0 %v1331, 113
    %v2628 = vpop.permute.xlu0 %2627
    %2629 = vrot.lane.b32.xlu0 %v1332, 113
    %v2630 = vpop.permute.xlu0 %2629
    %2631 = vrot.lane.b32.xlu0 %v1333, 113
    %v2632 = vpop.permute.xlu0 %2631
    %2633 = vrot.lane.b32.xlu0 %v1334, 113
    %v2634 = vpop.permute.xlu0 %2633
    %2635 = vrot.lane.b32.xlu0 %v1335, 113
    %v2636 = vpop.permute.xlu0 %2635
    %2637 = vrot.lane.b32.xlu0 %v1336, 113
    %v2638 = vpop.permute.xlu0 %2637
    %2639 = vrot.lane.b32.xlu0 %v1337, 113
    %v2640 = vpop.permute.xlu0 %2639
    %2641 = vrot.lane.b32.xlu0 %v1338, 113
    %v2642 = vpop.permute.xlu0 %2641
    %2643 = vrot.lane.b32.xlu0 %v1339, 113
    %v2644 = vpop.permute.xlu0 %2643
    %2645 = vrot.lane.b32.xlu0 %v1340, 113
    %v2646 = vpop.permute.xlu0 %2645
    %2647 = vrot.lane.b32.xlu0 %v1341, 113
    %v2648 = vpop.permute.xlu0 %2647
    %2649 = vrot.lane.b32.xlu0 %v1342, 113
    %v2650 = vpop.permute.xlu0 %2649
    %2651 = vrot.lane.b32.xlu0 %v1343, 113
    %v2652 = vpop.permute.xlu0 %2651
    %2653 = vrot.lane.b32.xlu0 %v1344, 113
    %v2654 = vpop.permute.xlu0 %2653
    %2655 = vrot.lane.b32.xlu0 %v1345, 113
    %v2656 = vpop.permute.xlu0 %2655
    %2657 = vrot.lane.b32.xlu0 %v1346, 113
    %v2658 = vpop.permute.xlu0 %2657
    %2659 = vrot.lane.b32.xlu0 %v1347, 113
    %v2660 = vpop.permute.xlu0 %2659
    %2661 = vrot.lane.b32.xlu0 %v1348, 113
    %v2662 = vpop.permute.xlu0 %2661
    %2663 = vrot.lane.b32.xlu0 %v1349, 113
    %v2664 = vpop.permute.xlu0 %2663
    %2665 = vrot.lane.b32.xlu0 %v1350, 113
    %v2666 = vpop.permute.xlu0 %2665
    %2667 = vrot.lane.b32.xlu0 %v1351, 113
    %v2668 = vpop.permute.xlu0 %2667
    %2669 = vrot.lane.b32.xlu0 %v1352, 113
    %v2670 = vpop.permute.xlu0 %2669
    %2671 = vrot.lane.b32.xlu0 %v1353, 113
    %v2672 = vpop.permute.xlu0 %2671
    %2673 = vrot.lane.b32.xlu0 %v1354, 113
    %v2674 = vpop.permute.xlu0 %2673
    %2675 = vrot.lane.b32.xlu0 %v1355, 113
    %v2676 = vpop.permute.xlu0 %2675
    %2677 = vrot.lane.b32.xlu0 %v1356, 113
    %v2678 = vpop.permute.xlu0 %2677
    %2679 = vrot.lane.b32.xlu0 %v1357, 113
    %v2680 = vpop.permute.xlu0 %2679
    %2681 = vrot.lane.b32.xlu0 %v1358, 113
    %v2682 = vpop.permute.xlu0 %2681
    %2683 = vrot.lane.b32.xlu0 %v1359, 113
    %v2684 = vpop.permute.xlu0 %2683
    %2685 = vrot.lane.b32.xlu0 %v1360, 113
    %v2686 = vpop.permute.xlu0 %2685
    %2687 = vrot.lane.b32.xlu0 %v1361, 113
    %v2688 = vpop.permute.xlu0 %2687
    %2689 = vrot.lane.b32.xlu0 %v1362, 113
    %v2690 = vpop.permute.xlu0 %2689
    %2691 = vrot.lane.b32.xlu0 %v1363, 113
    %v2692 = vpop.permute.xlu0 %2691
    %2693 = vrot.lane.b32.xlu0 %v1364, 113
    %v2694 = vpop.permute.xlu0 %2693
    %2695 = vrot.lane.b32.xlu0 %v1365, 113
    %v2696 = vpop.permute.xlu0 %2695
    %2697 = vrot.lane.b32.xlu0 %v1366, 113
    %v2698 = vpop.permute.xlu0 %2697
    %2699 = vrot.lane.b32.xlu0 %v1367, 113
    %v2700 = vpop.permute.xlu0 %2699
    %2701 = vrot.lane.b32.xlu0 %v1368, 113
    %v2702 = vpop.permute.xlu0 %2701
    %2703 = vrot.lane.b32.xlu0 %v1369, 113
    %v2704 = vpop.permute.xlu0 %2703
    %2705 = vrot.lane.b32.xlu0 %v1370, 113
    %v2706 = vpop.permute.xlu0 %2705
    %2707 = vrot.lane.b32.xlu0 %v1371, 113
    %v2708 = vpop.permute.xlu0 %2707
    %2709 = vrot.lane.b32.xlu0 %v1372, 113
    %v2710 = vpop.permute.xlu0 %2709
    %2711 = vrot.lane.b32.xlu0 %v1373, 113
    %v2712 = vpop.permute.xlu0 %2711
    %2713 = vrot.lane.b32.xlu0 %v1374, 113
    %v2714 = vpop.permute.xlu0 %2713
    %2715 = vrot.lane.b32.xlu0 %v1375, 113
    %v2716 = vpop.permute.xlu0 %2715
    %2717 = vrot.lane.b32.xlu0 %v1376, 113
    %v2718 = vpop.permute.xlu0 %2717
    %2719 = vrot.lane.b32.xlu0 %v1377, 113
    %v2720 = vpop.permute.xlu0 %2719
    %2721 = vrot.lane.b32.xlu0 %v1378, 113
    %v2722 = vpop.permute.xlu0 %2721
    %2723 = vrot.lane.b32.xlu0 %v1379, 113
    %v2724 = vpop.permute.xlu0 %2723
    %2725 = vrot.lane.b32.xlu0 %v1380, 113
    %v2726 = vpop.permute.xlu0 %2725
    %2727 = vrot.lane.b32.xlu0 %v1381, 113
    %v2728 = vpop.permute.xlu0 %2727
    %2729 = vrot.lane.b32.xlu0 %v1382, 113
    %v2730 = vpop.permute.xlu0 %2729
    %2731 = vrot.lane.b32.xlu0 %v1383, 113
    %v2732 = vpop.permute.xlu0 %2731
    %2733 = vrot.lane.b32.xlu0 %v1384, 113
    %v2734 = vpop.permute.xlu0 %2733
    %2735 = vrot.lane.b32.xlu0 %v1385, 113
    %v2736 = vpop.permute.xlu0 %2735
    %2737 = vrot.lane.b32.xlu0 %v1386, 113
    %v2738 = vpop.permute.xlu0 %2737
    %2739 = vrot.lane.b32.xlu0 %v1330, 125
    %v2740 = vpop.permute.xlu0 %2739
    %v2741 = vsel %vm1558, %v2628, 0
    %v2743 = vsel %vm1558, %v2630, 0
    %v2745 = vsel %vm1558, %v2632, 0
    %v2747 = vsel %vm1558, %v2634, 0
    %v2749 = vsel %vm1558, %v2636, 0
    %v2751 = vsel %vm1558, %v2638, 0
    %v2753 = vsel %vm1558, %v2640, 0
    %v2755 = vsel %vm1558, %v2642, 0
    %v2757 = vsel %vm1558, %v2644, 0
    %v2759 = vsel %vm1558, %v2646, 0
    %v2761 = vsel %vm1558, %v2648, 0
    %v2763 = vsel %vm1558, %v2650, 0
    %v2765 = vsel %vm1558, %v2652, 0
    %v2767 = vsel %vm1558, %v2654, 0
    %v2769 = vsel %vm1558, %v2656, 0
    %v2771 = vsel %vm1558, %v2658, 0
    %v2773 = vsel %vm1558, %v2660, 0
    %v2775 = vsel %vm1558, %v2662, 0
    %v2777 = vsel %vm1558, %v2664, 0
    %v2779 = vsel %vm1558, %v2666, 0
    %v2781 = vsel %vm1558, %v2668, 0
    %v2783 = vsel %vm1558, %v2670, 0
    %v2785 = vsel %vm1558, %v2672, 0
    %v2787 = vsel %vm1558, %v2674, 0
    %v2789 = vsel %vm1558, %v2676, 0
    %v2791 = vsel %vm1558, %v2678, 0
    %v2793 = vsel %vm1558, %v2680, 0
    %v2795 = vsel %vm1558, %v2682, 0
    %v2797 = vsel %vm1558, %v2684, 0
    %v2799 = vsel %vm1558, %v2686, 0
    %v2801 = vsel %vm1558, %v2688, 0
    %v2803 = vsel %vm1558, %v2690, 0
    %v2805 = vsel %vm1558, %v2692, 0
    %v2807 = vsel %vm1558, %v2694, 0
    %v2809 = vsel %vm1558, %v2696, 0
    %v2811 = vsel %vm1558, %v2698, 0
    %v2813 = vsel %vm1558, %v2700, 0
    %v2815 = vsel %vm1558, %v2702, 0
    %v2817 = vsel %vm1558, %v2704, 0
    %v2819 = vsel %vm1558, %v2706, 0
    %v2821 = vsel %vm1558, %v2708, 0
    %v2823 = vsel %vm1558, %v2710, 0
    %v2825 = vsel %vm1558, %v2712, 0
    %v2827 = vsel %vm1558, %v2714, 0
    %v2829 = vsel %vm1558, %v2716, 0
    %v2831 = vsel %vm1558, %v2718, 0
    %v2833 = vsel %vm1558, %v2720, 0
    %v2835 = vsel %vm1558, %v2722, 0
    %v2837 = vsel %vm1558, %v2724, 0
    %v2839 = vsel %vm1558, %v2726, 0
    %v2841 = vsel %vm1558, %v2728, 0
    %v2843 = vsel %vm1558, %v2730, 0
    %v2845 = vsel %vm1558, %v2732, 0
    %v2847 = vsel %vm1558, %v2734, 0
    %v2849 = vsel %vm1558, %v2736, 0
    %v2851 = vsel %vm1558, %v2738, 0
    %v2853 = vsel %vm1671, %v2740, 0
    %2855 = vmatpush.msra.mxu0 0.0
    %2856 = vmatpush.msra.mxu0 0.0
    %2857 = vmatpush.msra.mxu0 0.0
    %2858 = vmatpush.msra.mxu0 0.0
    %2859 = vmatpush.msra.mxu0 0.0
    %2860 = vmatpush.msra.mxu0 0.0
    %2861 = vmatpush.msra.mxu0 0.0
    %2862 = vmatpush.msra.mxu0 0.0
    %2863 = vmatpush.msra.mxu0 0.0
    %2864 = vmatpush.msra.mxu0 0.0
    %2865 = vmatpush.msra.mxu0 0.0
    %2866 = vmatpush.msra.mxu0 0.0
    %2867 = vmatpush.msra.mxu0 0.0
    %2868 = vmatpush.msra.mxu0 0.0
    %2869 = vmatpush.msra.mxu0 0.0
    %2870 = vmatpush.msra.mxu0 %v2853
    %2871 = vmatmul.f32.gmra.mxu0 %v2741
    %v2872 = vpop.f32.mrf.mxu0
    %v2873 = vadd.f32 0.0, %v2872
    %2874 = vmatmul.f32.gmra.mxu0 %v2743
    %v2875 = vpop.f32.mrf.mxu0
    %v2876 = vadd.f32 0.0, %v2875
    %2877 = vmatmul.f32.gmra.mxu0 %v2745
    %v2878 = vpop.f32.mrf.mxu0
    %v2879 = vadd.f32 0.0, %v2878
    %2880 = vmatmul.f32.gmra.mxu0 %v2747
    %v2881 = vpop.f32.mrf.mxu0
    %v2882 = vadd.f32 0.0, %v2881
    %2883 = vmatmul.f32.gmra.mxu0 %v2749
    %v2884 = vpop.f32.mrf.mxu0
    %v2885 = vadd.f32 0.0, %v2884
    %2886 = vmatmul.f32.gmra.mxu0 %v2751
    %v2887 = vpop.f32.mrf.mxu0
    %v2888 = vadd.f32 0.0, %v2887
    %2889 = vmatmul.f32.gmra.mxu0 %v2753
    %v2890 = vpop.f32.mrf.mxu0
    %v2891 = vadd.f32 0.0, %v2890
    %2892 = vmatmul.f32.gmra.mxu0 %v2755
    %v2893 = vpop.f32.mrf.mxu0
    %v2894 = vadd.f32 0.0, %v2893
    %2895 = vmatmul.f32.gmra.mxu0 %v2757
    %v2896 = vpop.f32.mrf.mxu0
    %v2897 = vadd.f32 0.0, %v2896
    %2898 = vmatmul.f32.gmra.mxu0 %v2759
    %v2899 = vpop.f32.mrf.mxu0
    %v2900 = vadd.f32 0.0, %v2899
    %2901 = vmatmul.f32.gmra.mxu0 %v2761
    %v2902 = vpop.f32.mrf.mxu0
    %v2903 = vadd.f32 0.0, %v2902
    %2904 = vmatmul.f32.gmra.mxu0 %v2763
    %v2905 = vpop.f32.mrf.mxu0
    %v2906 = vadd.f32 0.0, %v2905
    %2907 = vmatmul.f32.gmra.mxu0 %v2765
    %v2908 = vpop.f32.mrf.mxu0
    %v2909 = vadd.f32 0.0, %v2908
    %2910 = vmatmul.f32.gmra.mxu0 %v2767
    %v2911 = vpop.f32.mrf.mxu0
    %v2912 = vadd.f32 0.0, %v2911
    %2913 = vmatmul.f32.gmra.mxu0 %v2769
    %v2914 = vpop.f32.mrf.mxu0
    %v2915 = vadd.f32 0.0, %v2914
    %2916 = vmatmul.f32.gmra.mxu0 %v2771
    %v2917 = vpop.f32.mrf.mxu0
    %v2918 = vadd.f32 0.0, %v2917
    %2919 = vmatmul.f32.gmra.mxu0 %v2773
    %v2920 = vpop.f32.mrf.mxu0
    %v2921 = vadd.f32 0.0, %v2920
    %2922 = vmatmul.f32.gmra.mxu0 %v2775
    %v2923 = vpop.f32.mrf.mxu0
    %v2924 = vadd.f32 0.0, %v2923
    %2925 = vmatmul.f32.gmra.mxu0 %v2777
    %v2926 = vpop.f32.mrf.mxu0
    %v2927 = vadd.f32 0.0, %v2926
    %2928 = vmatmul.f32.gmra.mxu0 %v2779
    %v2929 = vpop.f32.mrf.mxu0
    %v2930 = vadd.f32 0.0, %v2929
    %2931 = vmatmul.f32.gmra.mxu0 %v2781
    %v2932 = vpop.f32.mrf.mxu0
    %v2933 = vadd.f32 0.0, %v2932
    %2934 = vmatmul.f32.gmra.mxu0 %v2783
    %v2935 = vpop.f32.mrf.mxu0
    %v2936 = vadd.f32 0.0, %v2935
    %2937 = vmatmul.f32.gmra.mxu0 %v2785
    %v2938 = vpop.f32.mrf.mxu0
    %v2939 = vadd.f32 0.0, %v2938
    %2940 = vmatmul.f32.gmra.mxu0 %v2787
    %v2941 = vpop.f32.mrf.mxu0
    %v2942 = vadd.f32 0.0, %v2941
    %2943 = vmatmul.f32.gmra.mxu0 %v2789
    %v2944 = vpop.f32.mrf.mxu0
    %v2945 = vadd.f32 0.0, %v2944
    %2946 = vmatmul.f32.gmra.mxu0 %v2791
    %v2947 = vpop.f32.mrf.mxu0
    %v2948 = vadd.f32 0.0, %v2947
    %2949 = vmatmul.f32.gmra.mxu0 %v2793
    %v2950 = vpop.f32.mrf.mxu0
    %v2951 = vadd.f32 0.0, %v2950
    %2952 = vmatmul.f32.gmra.mxu0 %v2795
    %v2953 = vpop.f32.mrf.mxu0
    %v2954 = vadd.f32 0.0, %v2953
    %2955 = vmatmul.f32.gmra.mxu0 %v2797
    %v2956 = vpop.f32.mrf.mxu0
    %v2957 = vadd.f32 0.0, %v2956
    %2958 = vmatmul.f32.gmra.mxu0 %v2799
    %v2959 = vpop.f32.mrf.mxu0
    %v2960 = vadd.f32 0.0, %v2959
    %2961 = vmatmul.f32.gmra.mxu0 %v2801
    %v2962 = vpop.f32.mrf.mxu0
    %v2963 = vadd.f32 0.0, %v2962
    %2964 = vmatmul.f32.gmra.mxu0 %v2803
    %v2965 = vpop.f32.mrf.mxu0
    %v2966 = vadd.f32 0.0, %v2965
    %2967 = vmatmul.f32.gmra.mxu0 %v2805
    %v2968 = vpop.f32.mrf.mxu0
    %v2969 = vadd.f32 0.0, %v2968
    %2970 = vmatmul.f32.gmra.mxu0 %v2807
    %v2971 = vpop.f32.mrf.mxu0
    %v2972 = vadd.f32 0.0, %v2971
    %2973 = vmatmul.f32.gmra.mxu0 %v2809
    %v2974 = vpop.f32.mrf.mxu0
    %v2975 = vadd.f32 0.0, %v2974
    %2976 = vmatmul.f32.gmra.mxu0 %v2811
    %v2977 = vpop.f32.mrf.mxu0
    %v2978 = vadd.f32 0.0, %v2977
    %2979 = vmatmul.f32.gmra.mxu0 %v2813
    %v2980 = vpop.f32.mrf.mxu0
    %v2981 = vadd.f32 0.0, %v2980
    %2982 = vmatmul.f32.gmra.mxu0 %v2815
    %v2983 = vpop.f32.mrf.mxu0
    %v2984 = vadd.f32 0.0, %v2983
    %2985 = vmatmul.f32.gmra.mxu0 %v2817
    %v2986 = vpop.f32.mrf.mxu0
    %v2987 = vadd.f32 0.0, %v2986
    %2988 = vmatmul.f32.gmra.mxu0 %v2819
    %v2989 = vpop.f32.mrf.mxu0
    %v2990 = vadd.f32 0.0, %v2989
    %2991 = vmatmul.f32.gmra.mxu0 %v2821
    %v2992 = vpop.f32.mrf.mxu0
    %v2993 = vadd.f32 0.0, %v2992
    %2994 = vmatmul.f32.gmra.mxu0 %v2823
    %v2995 = vpop.f32.mrf.mxu0
    %v2996 = vadd.f32 0.0, %v2995
    %2997 = vmatmul.f32.gmra.mxu0 %v2825
    %v2998 = vpop.f32.mrf.mxu0
    %v2999 = vadd.f32 0.0, %v2998
    %3000 = vmatmul.f32.gmra.mxu0 %v2827
    %v3001 = vpop.f32.mrf.mxu0
    %v3002 = vadd.f32 0.0, %v3001
    %3003 = vmatmul.f32.gmra.mxu0 %v2829
    %v3004 = vpop.f32.mrf.mxu0
    %v3005 = vadd.f32 0.0, %v3004
    %3006 = vmatmul.f32.gmra.mxu0 %v2831
    %v3007 = vpop.f32.mrf.mxu0
    %v3008 = vadd.f32 0.0, %v3007
    %3009 = vmatmul.f32.gmra.mxu0 %v2833
    %v3010 = vpop.f32.mrf.mxu0
    %v3011 = vadd.f32 0.0, %v3010
    %3012 = vmatmul.f32.gmra.mxu0 %v2835
    %v3013 = vpop.f32.mrf.mxu0
    %v3014 = vadd.f32 0.0, %v3013
    %3015 = vmatmul.f32.gmra.mxu0 %v2837
    %v3016 = vpop.f32.mrf.mxu0
    %v3017 = vadd.f32 0.0, %v3016
    %3018 = vmatmul.f32.gmra.mxu0 %v2839
    %v3019 = vpop.f32.mrf.mxu0
    %v3020 = vadd.f32 0.0, %v3019
    %3021 = vmatmul.f32.gmra.mxu0 %v2841
    %v3022 = vpop.f32.mrf.mxu0
    %v3023 = vadd.f32 0.0, %v3022
    %3024 = vmatmul.f32.gmra.mxu0 %v2843
    %v3025 = vpop.f32.mrf.mxu0
    %v3026 = vadd.f32 0.0, %v3025
    %3027 = vmatmul.f32.gmra.mxu0 %v2845
    %v3028 = vpop.f32.mrf.mxu0
    %v3029 = vadd.f32 0.0, %v3028
    %3030 = vmatmul.f32.gmra.mxu0 %v2847
    %v3031 = vpop.f32.mrf.mxu0
    %v3032 = vadd.f32 0.0, %v3031
    %3033 = vmatmul.f32.gmra.mxu0 %v2849
    %v3034 = vpop.f32.mrf.mxu0
    %v3035 = vadd.f32 0.0, %v3034
    %3036 = vmatmul.f32.gmra.mxu0 %v2851
    %v3037 = vpop.f32.mrf.mxu0
    %v3038 = vadd.f32 0.0, %v3037
    %3039 = vdwg.mxu0
    %v3040 = vadd.f32 %v2571, %v2873
    %v3041 = vadd.f32 %v2572, %v2876
    %v3042 = vadd.f32 %v2573, %v2879
    %v3043 = vadd.f32 %v2574, %v2882
    %v3044 = vadd.f32 %v2575, %v2885
    %v3045 = vadd.f32 %v2576, %v2888
    %v3046 = vadd.f32 %v2577, %v2891
    %v3047 = vadd.f32 %v2578, %v2894
    %v3048 = vadd.f32 %v2579, %v2897
    %v3049 = vadd.f32 %v2580, %v2900
    %v3050 = vadd.f32 %v2581, %v2903
    %v3051 = vadd.f32 %v2582, %v2906
    %v3052 = vadd.f32 %v2583, %v2909
    %v3053 = vadd.f32 %v2584, %v2912
    %v3054 = vadd.f32 %v2585, %v2915
    %v3055 = vadd.f32 %v2586, %v2918
    %v3056 = vadd.f32 %v2587, %v2921
    %v3057 = vadd.f32 %v2588, %v2924
    %v3058 = vadd.f32 %v2589, %v2927
    %v3059 = vadd.f32 %v2590, %v2930
    %v3060 = vadd.f32 %v2591, %v2933
    %v3061 = vadd.f32 %v2592, %v2936
    %v3062 = vadd.f32 %v2593, %v2939
    %v3063 = vadd.f32 %v2594, %v2942
    %v3064 = vadd.f32 %v2595, %v2945
    %v3065 = vadd.f32 %v2596, %v2948
    %v3066 = vadd.f32 %v2597, %v2951
    %v3067 = vadd.f32 %v2598, %v2954
    %v3068 = vadd.f32 %v2599, %v2957
    %v3069 = vadd.f32 %v2600, %v2960
    %v3070 = vadd.f32 %v2601, %v2963
    %v3071 = vadd.f32 %v2602, %v2966
    %v3072 = vadd.f32 %v2603, %v2969
    %v3073 = vadd.f32 %v2604, %v2972
    %v3074 = vadd.f32 %v2605, %v2975
    %v3075 = vadd.f32 %v2606, %v2978
    %v3076 = vadd.f32 %v2607, %v2981
    %v3077 = vadd.f32 %v2608, %v2984
    %v3078 = vadd.f32 %v2609, %v2987
    %v3079 = vadd.f32 %v2610, %v2990
    %v3080 = vadd.f32 %v2611, %v2993
    %v3081 = vadd.f32 %v2612, %v2996
    %v3082 = vadd.f32 %v2613, %v2999
    %v3083 = vadd.f32 %v2614, %v3002
    %v3084 = vadd.f32 %v2615, %v3005
    %v3085 = vadd.f32 %v2616, %v3008
    %v3086 = vadd.f32 %v2617, %v3011
    %v3087 = vadd.f32 %v2618, %v3014
    %v3088 = vadd.f32 %v2619, %v3017
    %v3089 = vadd.f32 %v2620, %v3020
    %v3090 = vadd.f32 %v2621, %v3023
    %v3091 = vadd.f32 %v2622, %v3026
    %v3092 = vadd.f32 %v2623, %v3029
    %v3093 = vadd.f32 %v2624, %v3032
    %v3094 = vadd.f32 %v2625, %v3035
    %v3095 = vadd.f32 %v2626, %v3038
    %3096 = vrot.lane.b32.xlu0 %v1331, 108
    %v3097 = vpop.permute.xlu0 %3096
    %3098 = vrot.lane.b32.xlu0 %v1332, 108
    %v3099 = vpop.permute.xlu0 %3098
    %3100 = vrot.lane.b32.xlu0 %v1333, 108
    %v3101 = vpop.permute.xlu0 %3100
    %3102 = vrot.lane.b32.xlu0 %v1334, 108
    %v3103 = vpop.permute.xlu0 %3102
    %3104 = vrot.lane.b32.xlu0 %v1335, 108
    %v3105 = vpop.permute.xlu0 %3104
    %3106 = vrot.lane.b32.xlu0 %v1336, 108
    %v3107 = vpop.permute.xlu0 %3106
    %3108 = vrot.lane.b32.xlu0 %v1337, 108
    %v3109 = vpop.permute.xlu0 %3108
    %3110 = vrot.lane.b32.xlu0 %v1338, 108
    %v3111 = vpop.permute.xlu0 %3110
    %3112 = vrot.lane.b32.xlu0 %v1339, 108
    %v3113 = vpop.permute.xlu0 %3112
    %3114 = vrot.lane.b32.xlu0 %v1340, 108
    %v3115 = vpop.permute.xlu0 %3114
    %3116 = vrot.lane.b32.xlu0 %v1341, 108
    %v3117 = vpop.permute.xlu0 %3116
    %3118 = vrot.lane.b32.xlu0 %v1342, 108
    %v3119 = vpop.permute.xlu0 %3118
    %3120 = vrot.lane.b32.xlu0 %v1343, 108
    %v3121 = vpop.permute.xlu0 %3120
    %3122 = vrot.lane.b32.xlu0 %v1344, 108
    %v3123 = vpop.permute.xlu0 %3122
    %3124 = vrot.lane.b32.xlu0 %v1345, 108
    %v3125 = vpop.permute.xlu0 %3124
    %3126 = vrot.lane.b32.xlu0 %v1346, 108
    %v3127 = vpop.permute.xlu0 %3126
    %3128 = vrot.lane.b32.xlu0 %v1347, 108
    %v3129 = vpop.permute.xlu0 %3128
    %3130 = vrot.lane.b32.xlu0 %v1348, 108
    %v3131 = vpop.permute.xlu0 %3130
    %3132 = vrot.lane.b32.xlu0 %v1349, 108
    %v3133 = vpop.permute.xlu0 %3132
    %3134 = vrot.lane.b32.xlu0 %v1350, 108
    %v3135 = vpop.permute.xlu0 %3134
    %3136 = vrot.lane.b32.xlu0 %v1351, 108
    %v3137 = vpop.permute.xlu0 %3136
    %3138 = vrot.lane.b32.xlu0 %v1352, 108
    %v3139 = vpop.permute.xlu0 %3138
    %3140 = vrot.lane.b32.xlu0 %v1353, 108
    %v3141 = vpop.permute.xlu0 %3140
    %3142 = vrot.lane.b32.xlu0 %v1354, 108
    %v3143 = vpop.permute.xlu0 %3142
    %3144 = vrot.lane.b32.xlu0 %v1355, 108
    %v3145 = vpop.permute.xlu0 %3144
    %3146 = vrot.lane.b32.xlu0 %v1356, 108
    %v3147 = vpop.permute.xlu0 %3146
    %3148 = vrot.lane.b32.xlu0 %v1357, 108
    %v3149 = vpop.permute.xlu0 %3148
    %3150 = vrot.lane.b32.xlu0 %v1358, 108
    %v3151 = vpop.permute.xlu0 %3150
    %3152 = vrot.lane.b32.xlu0 %v1359, 108
    %v3153 = vpop.permute.xlu0 %3152
    %3154 = vrot.lane.b32.xlu0 %v1360, 108
    %v3155 = vpop.permute.xlu0 %3154
    %3156 = vrot.lane.b32.xlu0 %v1361, 108
    %v3157 = vpop.permute.xlu0 %3156
    %3158 = vrot.lane.b32.xlu0 %v1362, 108
    %v3159 = vpop.permute.xlu0 %3158
    %3160 = vrot.lane.b32.xlu0 %v1363, 108
    %v3161 = vpop.permute.xlu0 %3160
    %3162 = vrot.lane.b32.xlu0 %v1364, 108
    %v3163 = vpop.permute.xlu0 %3162
    %3164 = vrot.lane.b32.xlu0 %v1365, 108
    %v3165 = vpop.permute.xlu0 %3164
    %3166 = vrot.lane.b32.xlu0 %v1366, 108
    %v3167 = vpop.permute.xlu0 %3166
    %3168 = vrot.lane.b32.xlu0 %v1367, 108
    %v3169 = vpop.permute.xlu0 %3168
    %3170 = vrot.lane.b32.xlu0 %v1368, 108
    %v3171 = vpop.permute.xlu0 %3170
    %3172 = vrot.lane.b32.xlu0 %v1369, 108
    %v3173 = vpop.permute.xlu0 %3172
    %3174 = vrot.lane.b32.xlu0 %v1370, 108
    %v3175 = vpop.permute.xlu0 %3174
    %3176 = vrot.lane.b32.xlu0 %v1371, 108
    %v3177 = vpop.permute.xlu0 %3176
    %3178 = vrot.lane.b32.xlu0 %v1372, 108
    %v3179 = vpop.permute.xlu0 %3178
    %3180 = vrot.lane.b32.xlu0 %v1373, 108
    %v3181 = vpop.permute.xlu0 %3180
    %3182 = vrot.lane.b32.xlu0 %v1374, 108
    %v3183 = vpop.permute.xlu0 %3182
    %3184 = vrot.lane.b32.xlu0 %v1375, 108
    %v3185 = vpop.permute.xlu0 %3184
    %3186 = vrot.lane.b32.xlu0 %v1376, 108
    %v3187 = vpop.permute.xlu0 %3186
    %3188 = vrot.lane.b32.xlu0 %v1377, 108
    %v3189 = vpop.permute.xlu0 %3188
    %3190 = vrot.lane.b32.xlu0 %v1378, 108
    %v3191 = vpop.permute.xlu0 %3190
    %3192 = vrot.lane.b32.xlu0 %v1379, 108
    %v3193 = vpop.permute.xlu0 %3192
    %3194 = vrot.lane.b32.xlu0 %v1380, 108
    %v3195 = vpop.permute.xlu0 %3194
    %3196 = vrot.lane.b32.xlu0 %v1381, 108
    %v3197 = vpop.permute.xlu0 %3196
    %3198 = vrot.lane.b32.xlu0 %v1382, 108
    %v3199 = vpop.permute.xlu0 %3198
    %3200 = vrot.lane.b32.xlu0 %v1383, 108
    %v3201 = vpop.permute.xlu0 %3200
    %3202 = vrot.lane.b32.xlu0 %v1384, 108
    %v3203 = vpop.permute.xlu0 %3202
    %3204 = vrot.lane.b32.xlu0 %v1385, 108
    %v3205 = vpop.permute.xlu0 %3204
    %3206 = vrot.lane.b32.xlu0 %v1386, 108
    %v3207 = vpop.permute.xlu0 %3206
    %3208 = vrot.lane.b32.xlu0 %v1330, 124
    %v3209 = vpop.permute.xlu0 %3208
    %v3210 = vsel %vm1558, %v3097, 0
    %v3212 = vsel %vm1558, %v3099, 0
    %v3214 = vsel %vm1558, %v3101, 0
    %v3216 = vsel %vm1558, %v3103, 0
    %v3218 = vsel %vm1558, %v3105, 0
    %v3220 = vsel %vm1558, %v3107, 0
    %v3222 = vsel %vm1558, %v3109, 0
    %v3224 = vsel %vm1558, %v3111, 0
    %v3226 = vsel %vm1558, %v3113, 0
    %v3228 = vsel %vm1558, %v3115, 0
    %v3230 = vsel %vm1558, %v3117, 0
    %v3232 = vsel %vm1558, %v3119, 0
    %v3234 = vsel %vm1558, %v3121, 0
    %v3236 = vsel %vm1558, %v3123, 0
    %v3238 = vsel %vm1558, %v3125, 0
    %v3240 = vsel %vm1558, %v3127, 0
    %v3242 = vsel %vm1558, %v3129, 0
    %v3244 = vsel %vm1558, %v3131, 0
    %v3246 = vsel %vm1558, %v3133, 0
    %v3248 = vsel %vm1558, %v3135, 0
    %v3250 = vsel %vm1558, %v3137, 0
    %v3252 = vsel %vm1558, %v3139, 0
    %v3254 = vsel %vm1558, %v3141, 0
    %v3256 = vsel %vm1558, %v3143, 0
    %v3258 = vsel %vm1558, %v3145, 0
    %v3260 = vsel %vm1558, %v3147, 0
    %v3262 = vsel %vm1558, %v3149, 0
    %v3264 = vsel %vm1558, %v3151, 0
    %v3266 = vsel %vm1558, %v3153, 0
    %v3268 = vsel %vm1558, %v3155, 0
    %v3270 = vsel %vm1558, %v3157, 0
    %v3272 = vsel %vm1558, %v3159, 0
    %v3274 = vsel %vm1558, %v3161, 0
    %v3276 = vsel %vm1558, %v3163, 0
    %v3278 = vsel %vm1558, %v3165, 0
    %v3280 = vsel %vm1558, %v3167, 0
    %v3282 = vsel %vm1558, %v3169, 0
    %v3284 = vsel %vm1558, %v3171, 0
    %v3286 = vsel %vm1558, %v3173, 0
    %v3288 = vsel %vm1558, %v3175, 0
    %v3290 = vsel %vm1558, %v3177, 0
    %v3292 = vsel %vm1558, %v3179, 0
    %v3294 = vsel %vm1558, %v3181, 0
    %v3296 = vsel %vm1558, %v3183, 0
    %v3298 = vsel %vm1558, %v3185, 0
    %v3300 = vsel %vm1558, %v3187, 0
    %v3302 = vsel %vm1558, %v3189, 0
    %v3304 = vsel %vm1558, %v3191, 0
    %v3306 = vsel %vm1558, %v3193, 0
    %v3308 = vsel %vm1558, %v3195, 0
    %v3310 = vsel %vm1558, %v3197, 0
    %v3312 = vsel %vm1558, %v3199, 0
    %v3314 = vsel %vm1558, %v3201, 0
    %v3316 = vsel %vm1558, %v3203, 0
    %v3318 = vsel %vm1558, %v3205, 0
    %v3320 = vsel %vm1558, %v3207, 0
    %v3322 = vsel %vm1671, %v3209, 0
    %3324 = vmatpush.msra.mxu0 0.0
    %3325 = vmatpush.msra.mxu0 0.0
    %3326 = vmatpush.msra.mxu0 0.0
    %3327 = vmatpush.msra.mxu0 0.0
    %3328 = vmatpush.msra.mxu0 0.0
    %3329 = vmatpush.msra.mxu0 0.0
    %3330 = vmatpush.msra.mxu0 0.0
    %3331 = vmatpush.msra.mxu0 0.0
    %3332 = vmatpush.msra.mxu0 0.0
    %3333 = vmatpush.msra.mxu0 0.0
    %3334 = vmatpush.msra.mxu0 0.0
    %3335 = vmatpush.msra.mxu0 0.0
    %3336 = vmatpush.msra.mxu0 0.0
    %3337 = vmatpush.msra.mxu0 0.0
    %3338 = vmatpush.msra.mxu0 0.0
    %3339 = vmatpush.msra.mxu0 %v3322
    %3340 = vmatmul.f32.gmra.mxu0 %v3210
    %v3341 = vpop.f32.mrf.mxu0
    %v3342 = vadd.f32 0.0, %v3341
    %3343 = vmatmul.f32.gmra.mxu0 %v3212
    %v3344 = vpop.f32.mrf.mxu0
    %v3345 = vadd.f32 0.0, %v3344
    %3346 = vmatmul.f32.gmra.mxu0 %v3214
    %v3347 = vpop.f32.mrf.mxu0
    %v3348 = vadd.f32 0.0, %v3347
    %3349 = vmatmul.f32.gmra.mxu0 %v3216
    %v3350 = vpop.f32.mrf.mxu0
    %v3351 = vadd.f32 0.0, %v3350
    %3352 = vmatmul.f32.gmra.mxu0 %v3218
    %v3353 = vpop.f32.mrf.mxu0
    %v3354 = vadd.f32 0.0, %v3353
    %3355 = vmatmul.f32.gmra.mxu0 %v3220
    %v3356 = vpop.f32.mrf.mxu0
    %v3357 = vadd.f32 0.0, %v3356
    %3358 = vmatmul.f32.gmra.mxu0 %v3222
    %v3359 = vpop.f32.mrf.mxu0
    %v3360 = vadd.f32 0.0, %v3359
    %3361 = vmatmul.f32.gmra.mxu0 %v3224
    %v3362 = vpop.f32.mrf.mxu0
    %v3363 = vadd.f32 0.0, %v3362
    %3364 = vmatmul.f32.gmra.mxu0 %v3226
    %v3365 = vpop.f32.mrf.mxu0
    %v3366 = vadd.f32 0.0, %v3365
    %3367 = vmatmul.f32.gmra.mxu0 %v3228
    %v3368 = vpop.f32.mrf.mxu0
    %v3369 = vadd.f32 0.0, %v3368
    %3370 = vmatmul.f32.gmra.mxu0 %v3230
    %v3371 = vpop.f32.mrf.mxu0
    %v3372 = vadd.f32 0.0, %v3371
    %3373 = vmatmul.f32.gmra.mxu0 %v3232
    %v3374 = vpop.f32.mrf.mxu0
    %v3375 = vadd.f32 0.0, %v3374
    %3376 = vmatmul.f32.gmra.mxu0 %v3234
    %v3377 = vpop.f32.mrf.mxu0
    %v3378 = vadd.f32 0.0, %v3377
    %3379 = vmatmul.f32.gmra.mxu0 %v3236
    %v3380 = vpop.f32.mrf.mxu0
    %v3381 = vadd.f32 0.0, %v3380
    %3382 = vmatmul.f32.gmra.mxu0 %v3238
    %v3383 = vpop.f32.mrf.mxu0
    %v3384 = vadd.f32 0.0, %v3383
    %3385 = vmatmul.f32.gmra.mxu0 %v3240
    %v3386 = vpop.f32.mrf.mxu0
    %v3387 = vadd.f32 0.0, %v3386
    %3388 = vmatmul.f32.gmra.mxu0 %v3242
    %v3389 = vpop.f32.mrf.mxu0
    %v3390 = vadd.f32 0.0, %v3389
    %3391 = vmatmul.f32.gmra.mxu0 %v3244
    %v3392 = vpop.f32.mrf.mxu0
    %v3393 = vadd.f32 0.0, %v3392
    %3394 = vmatmul.f32.gmra.mxu0 %v3246
    %v3395 = vpop.f32.mrf.mxu0
    %v3396 = vadd.f32 0.0, %v3395
    %3397 = vmatmul.f32.gmra.mxu0 %v3248
    %v3398 = vpop.f32.mrf.mxu0
    %v3399 = vadd.f32 0.0, %v3398
    %3400 = vmatmul.f32.gmra.mxu0 %v3250
    %v3401 = vpop.f32.mrf.mxu0
    %v3402 = vadd.f32 0.0, %v3401
    %3403 = vmatmul.f32.gmra.mxu0 %v3252
    %v3404 = vpop.f32.mrf.mxu0
    %v3405 = vadd.f32 0.0, %v3404
    %3406 = vmatmul.f32.gmra.mxu0 %v3254
    %v3407 = vpop.f32.mrf.mxu0
    %v3408 = vadd.f32 0.0, %v3407
    %3409 = vmatmul.f32.gmra.mxu0 %v3256
    %v3410 = vpop.f32.mrf.mxu0
    %v3411 = vadd.f32 0.0, %v3410
    %3412 = vmatmul.f32.gmra.mxu0 %v3258
    %v3413 = vpop.f32.mrf.mxu0
    %v3414 = vadd.f32 0.0, %v3413
    %3415 = vmatmul.f32.gmra.mxu0 %v3260
    %v3416 = vpop.f32.mrf.mxu0
    %v3417 = vadd.f32 0.0, %v3416
    %3418 = vmatmul.f32.gmra.mxu0 %v3262
    %v3419 = vpop.f32.mrf.mxu0
    %v3420 = vadd.f32 0.0, %v3419
    %3421 = vmatmul.f32.gmra.mxu0 %v3264
    %v3422 = vpop.f32.mrf.mxu0
    %v3423 = vadd.f32 0.0, %v3422
    %3424 = vmatmul.f32.gmra.mxu0 %v3266
    %v3425 = vpop.f32.mrf.mxu0
    %v3426 = vadd.f32 0.0, %v3425
    %3427 = vmatmul.f32.gmra.mxu0 %v3268
    %v3428 = vpop.f32.mrf.mxu0
    %v3429 = vadd.f32 0.0, %v3428
    %3430 = vmatmul.f32.gmra.mxu0 %v3270
    %v3431 = vpop.f32.mrf.mxu0
    %v3432 = vadd.f32 0.0, %v3431
    %3433 = vmatmul.f32.gmra.mxu0 %v3272
    %v3434 = vpop.f32.mrf.mxu0
    %v3435 = vadd.f32 0.0, %v3434
    %3436 = vmatmul.f32.gmra.mxu0 %v3274
    %v3437 = vpop.f32.mrf.mxu0
    %v3438 = vadd.f32 0.0, %v3437
    %3439 = vmatmul.f32.gmra.mxu0 %v3276
    %v3440 = vpop.f32.mrf.mxu0
    %v3441 = vadd.f32 0.0, %v3440
    %3442 = vmatmul.f32.gmra.mxu0 %v3278
    %v3443 = vpop.f32.mrf.mxu0
    %v3444 = vadd.f32 0.0, %v3443
    %3445 = vmatmul.f32.gmra.mxu0 %v3280
    %v3446 = vpop.f32.mrf.mxu0
    %v3447 = vadd.f32 0.0, %v3446
    %3448 = vmatmul.f32.gmra.mxu0 %v3282
    %v3449 = vpop.f32.mrf.mxu0
    %v3450 = vadd.f32 0.0, %v3449
    %3451 = vmatmul.f32.gmra.mxu0 %v3284
    %v3452 = vpop.f32.mrf.mxu0
    %v3453 = vadd.f32 0.0, %v3452
    %3454 = vmatmul.f32.gmra.mxu0 %v3286
    %v3455 = vpop.f32.mrf.mxu0
    %v3456 = vadd.f32 0.0, %v3455
    %3457 = vmatmul.f32.gmra.mxu0 %v3288
    %v3458 = vpop.f32.mrf.mxu0
    %v3459 = vadd.f32 0.0, %v3458
    %3460 = vmatmul.f32.gmra.mxu0 %v3290
    %v3461 = vpop.f32.mrf.mxu0
    %v3462 = vadd.f32 0.0, %v3461
    %3463 = vmatmul.f32.gmra.mxu0 %v3292
    %v3464 = vpop.f32.mrf.mxu0
    %v3465 = vadd.f32 0.0, %v3464
    %3466 = vmatmul.f32.gmra.mxu0 %v3294
    %v3467 = vpop.f32.mrf.mxu0
    %v3468 = vadd.f32 0.0, %v3467
    %3469 = vmatmul.f32.gmra.mxu0 %v3296
    %v3470 = vpop.f32.mrf.mxu0
    %v3471 = vadd.f32 0.0, %v3470
    %3472 = vmatmul.f32.gmra.mxu0 %v3298
    %v3473 = vpop.f32.mrf.mxu0
    %v3474 = vadd.f32 0.0, %v3473
    %3475 = vmatmul.f32.gmra.mxu0 %v3300
    %v3476 = vpop.f32.mrf.mxu0
    %v3477 = vadd.f32 0.0, %v3476
    %3478 = vmatmul.f32.gmra.mxu0 %v3302
    %v3479 = vpop.f32.mrf.mxu0
    %v3480 = vadd.f32 0.0, %v3479
    %3481 = vmatmul.f32.gmra.mxu0 %v3304
    %v3482 = vpop.f32.mrf.mxu0
    %v3483 = vadd.f32 0.0, %v3482
    %3484 = vmatmul.f32.gmra.mxu0 %v3306
    %v3485 = vpop.f32.mrf.mxu0
    %v3486 = vadd.f32 0.0, %v3485
    %3487 = vmatmul.f32.gmra.mxu0 %v3308
    %v3488 = vpop.f32.mrf.mxu0
    %v3489 = vadd.f32 0.0, %v3488
    %3490 = vmatmul.f32.gmra.mxu0 %v3310
    %v3491 = vpop.f32.mrf.mxu0
    %v3492 = vadd.f32 0.0, %v3491
    %3493 = vmatmul.f32.gmra.mxu0 %v3312
    %v3494 = vpop.f32.mrf.mxu0
    %v3495 = vadd.f32 0.0, %v3494
    %3496 = vmatmul.f32.gmra.mxu0 %v3314
    %v3497 = vpop.f32.mrf.mxu0
    %v3498 = vadd.f32 0.0, %v3497
    %3499 = vmatmul.f32.gmra.mxu0 %v3316
    %v3500 = vpop.f32.mrf.mxu0
    %v3501 = vadd.f32 0.0, %v3500
    %3502 = vmatmul.f32.gmra.mxu0 %v3318
    %v3503 = vpop.f32.mrf.mxu0
    %v3504 = vadd.f32 0.0, %v3503
    %3505 = vmatmul.f32.gmra.mxu0 %v3320
    %v3506 = vpop.f32.mrf.mxu0
    %v3507 = vadd.f32 0.0, %v3506
    %3508 = vdwg.mxu0
    %v3509 = vadd.f32 %v3040, %v3342
    %v3510 = vadd.f32 %v3041, %v3345
    %v3511 = vadd.f32 %v3042, %v3348
    %v3512 = vadd.f32 %v3043, %v3351
    %v3513 = vadd.f32 %v3044, %v3354
    %v3514 = vadd.f32 %v3045, %v3357
    %v3515 = vadd.f32 %v3046, %v3360
    %v3516 = vadd.f32 %v3047, %v3363
    %v3517 = vadd.f32 %v3048, %v3366
    %v3518 = vadd.f32 %v3049, %v3369
    %v3519 = vadd.f32 %v3050, %v3372
    %v3520 = vadd.f32 %v3051, %v3375
    %v3521 = vadd.f32 %v3052, %v3378
    %v3522 = vadd.f32 %v3053, %v3381
    %v3523 = vadd.f32 %v3054, %v3384
    %v3524 = vadd.f32 %v3055, %v3387
    %v3525 = vadd.f32 %v3056, %v3390
    %v3526 = vadd.f32 %v3057, %v3393
    %v3527 = vadd.f32 %v3058, %v3396
    %v3528 = vadd.f32 %v3059, %v3399
    %v3529 = vadd.f32 %v3060, %v3402
    %v3530 = vadd.f32 %v3061, %v3405
    %v3531 = vadd.f32 %v3062, %v3408
    %v3532 = vadd.f32 %v3063, %v3411
    %v3533 = vadd.f32 %v3064, %v3414
    %v3534 = vadd.f32 %v3065, %v3417
    %v3535 = vadd.f32 %v3066, %v3420
    %v3536 = vadd.f32 %v3067, %v3423
    %v3537 = vadd.f32 %v3068, %v3426
    %v3538 = vadd.f32 %v3069, %v3429
    %v3539 = vadd.f32 %v3070, %v3432
    %v3540 = vadd.f32 %v3071, %v3435
    %v3541 = vadd.f32 %v3072, %v3438
    %v3542 = vadd.f32 %v3073, %v3441
    %v3543 = vadd.f32 %v3074, %v3444
    %v3544 = vadd.f32 %v3075, %v3447
    %v3545 = vadd.f32 %v3076, %v3450
    %v3546 = vadd.f32 %v3077, %v3453
    %v3547 = vadd.f32 %v3078, %v3456
    %v3548 = vadd.f32 %v3079, %v3459
    %v3549 = vadd.f32 %v3080, %v3462
    %v3550 = vadd.f32 %v3081, %v3465
    %v3551 = vadd.f32 %v3082, %v3468
    %v3552 = vadd.f32 %v3083, %v3471
    %v3553 = vadd.f32 %v3084, %v3474
    %v3554 = vadd.f32 %v3085, %v3477
    %v3555 = vadd.f32 %v3086, %v3480
    %v3556 = vadd.f32 %v3087, %v3483
    %v3557 = vadd.f32 %v3088, %v3486
    %v3558 = vadd.f32 %v3089, %v3489
    %v3559 = vadd.f32 %v3090, %v3492
    %v3560 = vadd.f32 %v3091, %v3495
    %v3561 = vadd.f32 %v3092, %v3498
    %v3562 = vadd.f32 %v3093, %v3501
    %v3563 = vadd.f32 %v3094, %v3504
    %v3564 = vadd.f32 %v3095, %v3507
    %3565 = vrot.lane.b32.xlu0 %v1331, 103
    %v3566 = vpop.permute.xlu0 %3565
    %3567 = vrot.lane.b32.xlu0 %v1332, 103
    %v3568 = vpop.permute.xlu0 %3567
    %3569 = vrot.lane.b32.xlu0 %v1333, 103
    %v3570 = vpop.permute.xlu0 %3569
    %3571 = vrot.lane.b32.xlu0 %v1334, 103
    %v3572 = vpop.permute.xlu0 %3571
    %3573 = vrot.lane.b32.xlu0 %v1335, 103
    %v3574 = vpop.permute.xlu0 %3573
    %3575 = vrot.lane.b32.xlu0 %v1336, 103
    %v3576 = vpop.permute.xlu0 %3575
    %3577 = vrot.lane.b32.xlu0 %v1337, 103
    %v3578 = vpop.permute.xlu0 %3577
    %3579 = vrot.lane.b32.xlu0 %v1338, 103
    %v3580 = vpop.permute.xlu0 %3579
    %3581 = vrot.lane.b32.xlu0 %v1339, 103
    %v3582 = vpop.permute.xlu0 %3581
    %3583 = vrot.lane.b32.xlu0 %v1340, 103
    %v3584 = vpop.permute.xlu0 %3583
    %3585 = vrot.lane.b32.xlu0 %v1341, 103
    %v3586 = vpop.permute.xlu0 %3585
    %3587 = vrot.lane.b32.xlu0 %v1342, 103
    %v3588 = vpop.permute.xlu0 %3587
    %3589 = vrot.lane.b32.xlu0 %v1343, 103
    %v3590 = vpop.permute.xlu0 %3589
    %3591 = vrot.lane.b32.xlu0 %v1344, 103
    %v3592 = vpop.permute.xlu0 %3591
    %3593 = vrot.lane.b32.xlu0 %v1345, 103
    %v3594 = vpop.permute.xlu0 %3593
    %3595 = vrot.lane.b32.xlu0 %v1346, 103
    %v3596 = vpop.permute.xlu0 %3595
    %3597 = vrot.lane.b32.xlu0 %v1347, 103
    %v3598 = vpop.permute.xlu0 %3597
    %3599 = vrot.lane.b32.xlu0 %v1348, 103
    %v3600 = vpop.permute.xlu0 %3599
    %3601 = vrot.lane.b32.xlu0 %v1349, 103
    %v3602 = vpop.permute.xlu0 %3601
    %3603 = vrot.lane.b32.xlu0 %v1350, 103
    %v3604 = vpop.permute.xlu0 %3603
    %3605 = vrot.lane.b32.xlu0 %v1351, 103
    %v3606 = vpop.permute.xlu0 %3605
    %3607 = vrot.lane.b32.xlu0 %v1352, 103
    %v3608 = vpop.permute.xlu0 %3607
    %3609 = vrot.lane.b32.xlu0 %v1353, 103
    %v3610 = vpop.permute.xlu0 %3609
    %3611 = vrot.lane.b32.xlu0 %v1354, 103
    %v3612 = vpop.permute.xlu0 %3611
    %3613 = vrot.lane.b32.xlu0 %v1355, 103
    %v3614 = vpop.permute.xlu0 %3613
    %3615 = vrot.lane.b32.xlu0 %v1356, 103
    %v3616 = vpop.permute.xlu0 %3615
    %3617 = vrot.lane.b32.xlu0 %v1357, 103
    %v3618 = vpop.permute.xlu0 %3617
    %3619 = vrot.lane.b32.xlu0 %v1358, 103
    %v3620 = vpop.permute.xlu0 %3619
    %3621 = vrot.lane.b32.xlu0 %v1359, 103
    %v3622 = vpop.permute.xlu0 %3621
    %3623 = vrot.lane.b32.xlu0 %v1360, 103
    %v3624 = vpop.permute.xlu0 %3623
    %3625 = vrot.lane.b32.xlu0 %v1361, 103
    %v3626 = vpop.permute.xlu0 %3625
    %3627 = vrot.lane.b32.xlu0 %v1362, 103
    %v3628 = vpop.permute.xlu0 %3627
    %3629 = vrot.lane.b32.xlu0 %v1363, 103
    %v3630 = vpop.permute.xlu0 %3629
    %3631 = vrot.lane.b32.xlu0 %v1364, 103
    %v3632 = vpop.permute.xlu0 %3631
    %3633 = vrot.lane.b32.xlu0 %v1365, 103
    %v3634 = vpop.permute.xlu0 %3633
    %3635 = vrot.lane.b32.xlu0 %v1366, 103
    %v3636 = vpop.permute.xlu0 %3635
    %3637 = vrot.lane.b32.xlu0 %v1367, 103
    %v3638 = vpop.permute.xlu0 %3637
    %3639 = vrot.lane.b32.xlu0 %v1368, 103
    %v3640 = vpop.permute.xlu0 %3639
    %3641 = vrot.lane.b32.xlu0 %v1369, 103
    %v3642 = vpop.permute.xlu0 %3641
    %3643 = vrot.lane.b32.xlu0 %v1370, 103
    %v3644 = vpop.permute.xlu0 %3643
    %3645 = vrot.lane.b32.xlu0 %v1371, 103
    %v3646 = vpop.permute.xlu0 %3645
    %3647 = vrot.lane.b32.xlu0 %v1372, 103
    %v3648 = vpop.permute.xlu0 %3647
    %3649 = vrot.lane.b32.xlu0 %v1373, 103
    %v3650 = vpop.permute.xlu0 %3649
    %3651 = vrot.lane.b32.xlu0 %v1374, 103
    %v3652 = vpop.permute.xlu0 %3651
    %3653 = vrot.lane.b32.xlu0 %v1375, 103
    %v3654 = vpop.permute.xlu0 %3653
    %3655 = vrot.lane.b32.xlu0 %v1376, 103
    %v3656 = vpop.permute.xlu0 %3655
    %3657 = vrot.lane.b32.xlu0 %v1377, 103
    %v3658 = vpop.permute.xlu0 %3657
    %3659 = vrot.lane.b32.xlu0 %v1378, 103
    %v3660 = vpop.permute.xlu0 %3659
    %3661 = vrot.lane.b32.xlu0 %v1379, 103
    %v3662 = vpop.permute.xlu0 %3661
    %3663 = vrot.lane.b32.xlu0 %v1380, 103
    %v3664 = vpop.permute.xlu0 %3663
    %3665 = vrot.lane.b32.xlu0 %v1381, 103
    %v3666 = vpop.permute.xlu0 %3665
    %3667 = vrot.lane.b32.xlu0 %v1382, 103
    %v3668 = vpop.permute.xlu0 %3667
    %3669 = vrot.lane.b32.xlu0 %v1383, 103
    %v3670 = vpop.permute.xlu0 %3669
    %3671 = vrot.lane.b32.xlu0 %v1384, 103
    %v3672 = vpop.permute.xlu0 %3671
    %3673 = vrot.lane.b32.xlu0 %v1385, 103
    %v3674 = vpop.permute.xlu0 %3673
    %3675 = vrot.lane.b32.xlu0 %v1386, 103
    %v3676 = vpop.permute.xlu0 %3675
    %3677 = vrot.lane.b32.xlu0 %v1330, 123
    %v3678 = vpop.permute.xlu0 %3677
    %v3679 = vsel %vm1558, %v3566, 0
    %v3681 = vsel %vm1558, %v3568, 0
    %v3683 = vsel %vm1558, %v3570, 0
    %v3685 = vsel %vm1558, %v3572, 0
    %v3687 = vsel %vm1558, %v3574, 0
    %v3689 = vsel %vm1558, %v3576, 0
    %v3691 = vsel %vm1558, %v3578, 0
    %v3693 = vsel %vm1558, %v3580, 0
    %v3695 = vsel %vm1558, %v3582, 0
    %v3697 = vsel %vm1558, %v3584, 0
    %v3699 = vsel %vm1558, %v3586, 0
    %v3701 = vsel %vm1558, %v3588, 0
    %v3703 = vsel %vm1558, %v3590, 0
    %v3705 = vsel %vm1558, %v3592, 0
    %v3707 = vsel %vm1558, %v3594, 0
    %v3709 = vsel %vm1558, %v3596, 0
    %v3711 = vsel %vm1558, %v3598, 0
    %v3713 = vsel %vm1558, %v3600, 0
    %v3715 = vsel %vm1558, %v3602, 0
    %v3717 = vsel %vm1558, %v3604, 0
    %v3719 = vsel %vm1558, %v3606, 0
    %v3721 = vsel %vm1558, %v3608, 0
    %v3723 = vsel %vm1558, %v3610, 0
    %v3725 = vsel %vm1558, %v3612, 0
    %v3727 = vsel %vm1558, %v3614, 0
    %v3729 = vsel %vm1558, %v3616, 0
    %v3731 = vsel %vm1558, %v3618, 0
    %v3733 = vsel %vm1558, %v3620, 0
    %v3735 = vsel %vm1558, %v3622, 0
    %v3737 = vsel %vm1558, %v3624, 0
    %v3739 = vsel %vm1558, %v3626, 0
    %v3741 = vsel %vm1558, %v3628, 0
    %v3743 = vsel %vm1558, %v3630, 0
    %v3745 = vsel %vm1558, %v3632, 0
    %v3747 = vsel %vm1558, %v3634, 0
    %v3749 = vsel %vm1558, %v3636, 0
    %v3751 = vsel %vm1558, %v3638, 0
    %v3753 = vsel %vm1558, %v3640, 0
    %v3755 = vsel %vm1558, %v3642, 0
    %v3757 = vsel %vm1558, %v3644, 0
    %v3759 = vsel %vm1558, %v3646, 0
    %v3761 = vsel %vm1558, %v3648, 0
    %v3763 = vsel %vm1558, %v3650, 0
    %v3765 = vsel %vm1558, %v3652, 0
    %v3767 = vsel %vm1558, %v3654, 0
    %v3769 = vsel %vm1558, %v3656, 0
    %v3771 = vsel %vm1558, %v3658, 0
    %v3773 = vsel %vm1558, %v3660, 0
    %v3775 = vsel %vm1558, %v3662, 0
    %v3777 = vsel %vm1558, %v3664, 0
    %v3779 = vsel %vm1558, %v3666, 0
    %v3781 = vsel %vm1558, %v3668, 0
    %v3783 = vsel %vm1558, %v3670, 0
    %v3785 = vsel %vm1558, %v3672, 0
    %v3787 = vsel %vm1558, %v3674, 0
    %v3789 = vsel %vm1558, %v3676, 0
    %v3791 = vsel %vm1671, %v3678, 0
    %3793 = vmatpush.msra.mxu0 0.0
    %3794 = vmatpush.msra.mxu0 0.0
    %3795 = vmatpush.msra.mxu0 0.0
    %3796 = vmatpush.msra.mxu0 0.0
    %3797 = vmatpush.msra.mxu0 0.0
    %3798 = vmatpush.msra.mxu0 0.0
    %3799 = vmatpush.msra.mxu0 0.0
    %3800 = vmatpush.msra.mxu0 0.0
    %3801 = vmatpush.msra.mxu0 0.0
    %3802 = vmatpush.msra.mxu0 0.0
    %3803 = vmatpush.msra.mxu0 0.0
    %3804 = vmatpush.msra.mxu0 0.0
    %3805 = vmatpush.msra.mxu0 0.0
    %3806 = vmatpush.msra.mxu0 0.0
    %3807 = vmatpush.msra.mxu0 0.0
    %3808 = vmatpush.msra.mxu0 %v3791
    %3809 = vmatmul.f32.gmra.mxu0 %v3679
    %v3810 = vpop.f32.mrf.mxu0
    %v3811 = vadd.f32 0.0, %v3810
    %3812 = vmatmul.f32.gmra.mxu0 %v3681
    %v3813 = vpop.f32.mrf.mxu0
    %v3814 = vadd.f32 0.0, %v3813
    %3815 = vmatmul.f32.gmra.mxu0 %v3683
    %v3816 = vpop.f32.mrf.mxu0
    %v3817 = vadd.f32 0.0, %v3816
    %3818 = vmatmul.f32.gmra.mxu0 %v3685
    %v3819 = vpop.f32.mrf.mxu0
    %v3820 = vadd.f32 0.0, %v3819
    %3821 = vmatmul.f32.gmra.mxu0 %v3687
    %v3822 = vpop.f32.mrf.mxu0
    %v3823 = vadd.f32 0.0, %v3822
    %3824 = vmatmul.f32.gmra.mxu0 %v3689
    %v3825 = vpop.f32.mrf.mxu0
    %v3826 = vadd.f32 0.0, %v3825
    %3827 = vmatmul.f32.gmra.mxu0 %v3691
    %v3828 = vpop.f32.mrf.mxu0
    %v3829 = vadd.f32 0.0, %v3828
    %3830 = vmatmul.f32.gmra.mxu0 %v3693
    %v3831 = vpop.f32.mrf.mxu0
    %v3832 = vadd.f32 0.0, %v3831
    %3833 = vmatmul.f32.gmra.mxu0 %v3695
    %v3834 = vpop.f32.mrf.mxu0
    %v3835 = vadd.f32 0.0, %v3834
    %3836 = vmatmul.f32.gmra.mxu0 %v3697
    %v3837 = vpop.f32.mrf.mxu0
    %v3838 = vadd.f32 0.0, %v3837
    %3839 = vmatmul.f32.gmra.mxu0 %v3699
    %v3840 = vpop.f32.mrf.mxu0
    %v3841 = vadd.f32 0.0, %v3840
    %3842 = vmatmul.f32.gmra.mxu0 %v3701
    %v3843 = vpop.f32.mrf.mxu0
    %v3844 = vadd.f32 0.0, %v3843
    %3845 = vmatmul.f32.gmra.mxu0 %v3703
    %v3846 = vpop.f32.mrf.mxu0
    %v3847 = vadd.f32 0.0, %v3846
    %3848 = vmatmul.f32.gmra.mxu0 %v3705
    %v3849 = vpop.f32.mrf.mxu0
    %v3850 = vadd.f32 0.0, %v3849
    %3851 = vmatmul.f32.gmra.mxu0 %v3707
    %v3852 = vpop.f32.mrf.mxu0
    %v3853 = vadd.f32 0.0, %v3852
    %3854 = vmatmul.f32.gmra.mxu0 %v3709
    %v3855 = vpop.f32.mrf.mxu0
    %v3856 = vadd.f32 0.0, %v3855
    %3857 = vmatmul.f32.gmra.mxu0 %v3711
    %v3858 = vpop.f32.mrf.mxu0
    %v3859 = vadd.f32 0.0, %v3858
    %3860 = vmatmul.f32.gmra.mxu0 %v3713
    %v3861 = vpop.f32.mrf.mxu0
    %v3862 = vadd.f32 0.0, %v3861
    %3863 = vmatmul.f32.gmra.mxu0 %v3715
    %v3864 = vpop.f32.mrf.mxu0
    %v3865 = vadd.f32 0.0, %v3864
    %3866 = vmatmul.f32.gmra.mxu0 %v3717
    %v3867 = vpop.f32.mrf.mxu0
    %v3868 = vadd.f32 0.0, %v3867
    %3869 = vmatmul.f32.gmra.mxu0 %v3719
    %v3870 = vpop.f32.mrf.mxu0
    %v3871 = vadd.f32 0.0, %v3870
    %3872 = vmatmul.f32.gmra.mxu0 %v3721
    %v3873 = vpop.f32.mrf.mxu0
    %v3874 = vadd.f32 0.0, %v3873
    %3875 = vmatmul.f32.gmra.mxu0 %v3723
    %v3876 = vpop.f32.mrf.mxu0
    %v3877 = vadd.f32 0.0, %v3876
    %3878 = vmatmul.f32.gmra.mxu0 %v3725
    %v3879 = vpop.f32.mrf.mxu0
    %v3880 = vadd.f32 0.0, %v3879
    %3881 = vmatmul.f32.gmra.mxu0 %v3727
    %v3882 = vpop.f32.mrf.mxu0
    %v3883 = vadd.f32 0.0, %v3882
    %3884 = vmatmul.f32.gmra.mxu0 %v3729
    %v3885 = vpop.f32.mrf.mxu0
    %v3886 = vadd.f32 0.0, %v3885
    %3887 = vmatmul.f32.gmra.mxu0 %v3731
    %v3888 = vpop.f32.mrf.mxu0
    %v3889 = vadd.f32 0.0, %v3888
    %3890 = vmatmul.f32.gmra.mxu0 %v3733
    %v3891 = vpop.f32.mrf.mxu0
    %v3892 = vadd.f32 0.0, %v3891
    %3893 = vmatmul.f32.gmra.mxu0 %v3735
    %v3894 = vpop.f32.mrf.mxu0
    %v3895 = vadd.f32 0.0, %v3894
    %3896 = vmatmul.f32.gmra.mxu0 %v3737
    %v3897 = vpop.f32.mrf.mxu0
    %v3898 = vadd.f32 0.0, %v3897
    %3899 = vmatmul.f32.gmra.mxu0 %v3739
    %v3900 = vpop.f32.mrf.mxu0
    %v3901 = vadd.f32 0.0, %v3900
    %3902 = vmatmul.f32.gmra.mxu0 %v3741
    %v3903 = vpop.f32.mrf.mxu0
    %v3904 = vadd.f32 0.0, %v3903
    %3905 = vmatmul.f32.gmra.mxu0 %v3743
    %v3906 = vpop.f32.mrf.mxu0
    %v3907 = vadd.f32 0.0, %v3906
    %3908 = vmatmul.f32.gmra.mxu0 %v3745
    %v3909 = vpop.f32.mrf.mxu0
    %v3910 = vadd.f32 0.0, %v3909
    %3911 = vmatmul.f32.gmra.mxu0 %v3747
    %v3912 = vpop.f32.mrf.mxu0
    %v3913 = vadd.f32 0.0, %v3912
    %3914 = vmatmul.f32.gmra.mxu0 %v3749
    %v3915 = vpop.f32.mrf.mxu0
    %v3916 = vadd.f32 0.0, %v3915
    %3917 = vmatmul.f32.gmra.mxu0 %v3751
    %v3918 = vpop.f32.mrf.mxu0
    %v3919 = vadd.f32 0.0, %v3918
    %3920 = vmatmul.f32.gmra.mxu0 %v3753
    %v3921 = vpop.f32.mrf.mxu0
    %v3922 = vadd.f32 0.0, %v3921
    %3923 = vmatmul.f32.gmra.mxu0 %v3755
    %v3924 = vpop.f32.mrf.mxu0
    %v3925 = vadd.f32 0.0, %v3924
    %3926 = vmatmul.f32.gmra.mxu0 %v3757
    %v3927 = vpop.f32.mrf.mxu0
    %v3928 = vadd.f32 0.0, %v3927
    %3929 = vmatmul.f32.gmra.mxu0 %v3759
    %v3930 = vpop.f32.mrf.mxu0
    %v3931 = vadd.f32 0.0, %v3930
    %3932 = vmatmul.f32.gmra.mxu0 %v3761
    %v3933 = vpop.f32.mrf.mxu0
    %v3934 = vadd.f32 0.0, %v3933
    %3935 = vmatmul.f32.gmra.mxu0 %v3763
    %v3936 = vpop.f32.mrf.mxu0
    %v3937 = vadd.f32 0.0, %v3936
    %3938 = vmatmul.f32.gmra.mxu0 %v3765
    %v3939 = vpop.f32.mrf.mxu0
    %v3940 = vadd.f32 0.0, %v3939
    %3941 = vmatmul.f32.gmra.mxu0 %v3767
    %v3942 = vpop.f32.mrf.mxu0
    %v3943 = vadd.f32 0.0, %v3942
    %3944 = vmatmul.f32.gmra.mxu0 %v3769
    %v3945 = vpop.f32.mrf.mxu0
    %v3946 = vadd.f32 0.0, %v3945
    %3947 = vmatmul.f32.gmra.mxu0 %v3771
    %v3948 = vpop.f32.mrf.mxu0
    %v3949 = vadd.f32 0.0, %v3948
    %3950 = vmatmul.f32.gmra.mxu0 %v3773
    %v3951 = vpop.f32.mrf.mxu0
    %v3952 = vadd.f32 0.0, %v3951
    %3953 = vmatmul.f32.gmra.mxu0 %v3775
    %v3954 = vpop.f32.mrf.mxu0
    %v3955 = vadd.f32 0.0, %v3954
    %3956 = vmatmul.f32.gmra.mxu0 %v3777
    %v3957 = vpop.f32.mrf.mxu0
    %v3958 = vadd.f32 0.0, %v3957
    %3959 = vmatmul.f32.gmra.mxu0 %v3779
    %v3960 = vpop.f32.mrf.mxu0
    %v3961 = vadd.f32 0.0, %v3960
    %3962 = vmatmul.f32.gmra.mxu0 %v3781
    %v3963 = vpop.f32.mrf.mxu0
    %v3964 = vadd.f32 0.0, %v3963
    %3965 = vmatmul.f32.gmra.mxu0 %v3783
    %v3966 = vpop.f32.mrf.mxu0
    %v3967 = vadd.f32 0.0, %v3966
    %3968 = vmatmul.f32.gmra.mxu0 %v3785
    %v3969 = vpop.f32.mrf.mxu0
    %v3970 = vadd.f32 0.0, %v3969
    %3971 = vmatmul.f32.gmra.mxu0 %v3787
    %v3972 = vpop.f32.mrf.mxu0
    %v3973 = vadd.f32 0.0, %v3972
    %3974 = vmatmul.f32.gmra.mxu0 %v3789
    %v3975 = vpop.f32.mrf.mxu0
    %v3976 = vadd.f32 0.0, %v3975
    %3977 = vdwg.mxu0
    %v3978 = vadd.f32 %v3509, %v3811
    %v3979 = vadd.f32 %v3510, %v3814
    %v3980 = vadd.f32 %v3511, %v3817
    %v3981 = vadd.f32 %v3512, %v3820
    %v3982 = vadd.f32 %v3513, %v3823
    %v3983 = vadd.f32 %v3514, %v3826
    %v3984 = vadd.f32 %v3515, %v3829
    %v3985 = vadd.f32 %v3516, %v3832
    %v3986 = vadd.f32 %v3517, %v3835
    %v3987 = vadd.f32 %v3518, %v3838
    %v3988 = vadd.f32 %v3519, %v3841
    %v3989 = vadd.f32 %v3520, %v3844
    %v3990 = vadd.f32 %v3521, %v3847
    %v3991 = vadd.f32 %v3522, %v3850
    %v3992 = vadd.f32 %v3523, %v3853
    %v3993 = vadd.f32 %v3524, %v3856
    %v3994 = vadd.f32 %v3525, %v3859
    %v3995 = vadd.f32 %v3526, %v3862
    %v3996 = vadd.f32 %v3527, %v3865
    %v3997 = vadd.f32 %v3528, %v3868
    %v3998 = vadd.f32 %v3529, %v3871
    %v3999 = vadd.f32 %v3530, %v3874
    %v4000 = vadd.f32 %v3531, %v3877
    %v4001 = vadd.f32 %v3532, %v3880
    %v4002 = vadd.f32 %v3533, %v3883
    %v4003 = vadd.f32 %v3534, %v3886
    %v4004 = vadd.f32 %v3535, %v3889
    %v4005 = vadd.f32 %v3536, %v3892
    %v4006 = vadd.f32 %v3537, %v3895
    %v4007 = vadd.f32 %v3538, %v3898
    %v4008 = vadd.f32 %v3539, %v3901
    %v4009 = vadd.f32 %v3540, %v3904
    %v4010 = vadd.f32 %v3541, %v3907
    %v4011 = vadd.f32 %v3542, %v3910
    %v4012 = vadd.f32 %v3543, %v3913
    %v4013 = vadd.f32 %v3544, %v3916
    %v4014 = vadd.f32 %v3545, %v3919
    %v4015 = vadd.f32 %v3546, %v3922
    %v4016 = vadd.f32 %v3547, %v3925
    %v4017 = vadd.f32 %v3548, %v3928
    %v4018 = vadd.f32 %v3549, %v3931
    %v4019 = vadd.f32 %v3550, %v3934
    %v4020 = vadd.f32 %v3551, %v3937
    %v4021 = vadd.f32 %v3552, %v3940
    %v4022 = vadd.f32 %v3553, %v3943
    %v4023 = vadd.f32 %v3554, %v3946
    %v4024 = vadd.f32 %v3555, %v3949
    %v4025 = vadd.f32 %v3556, %v3952
    %v4026 = vadd.f32 %v3557, %v3955
    %v4027 = vadd.f32 %v3558, %v3958
    %v4028 = vadd.f32 %v3559, %v3961
    %v4029 = vadd.f32 %v3560, %v3964
    %v4030 = vadd.f32 %v3561, %v3967
    %v4031 = vadd.f32 %v3562, %v3970
    %v4032 = vadd.f32 %v3563, %v3973
    %v4033 = vadd.f32 %v3564, %v3976
    %4034 = vrot.lane.b32.xlu0 %v1331, 98
    %v4035 = vpop.permute.xlu0 %4034
    %4036 = vrot.lane.b32.xlu0 %v1332, 98
    %v4037 = vpop.permute.xlu0 %4036
    %4038 = vrot.lane.b32.xlu0 %v1333, 98
    %v4039 = vpop.permute.xlu0 %4038
    %4040 = vrot.lane.b32.xlu0 %v1334, 98
    %v4041 = vpop.permute.xlu0 %4040
    %4042 = vrot.lane.b32.xlu0 %v1335, 98
    %v4043 = vpop.permute.xlu0 %4042
    %4044 = vrot.lane.b32.xlu0 %v1336, 98
    %v4045 = vpop.permute.xlu0 %4044
    %4046 = vrot.lane.b32.xlu0 %v1337, 98
    %v4047 = vpop.permute.xlu0 %4046
    %4048 = vrot.lane.b32.xlu0 %v1338, 98
    %v4049 = vpop.permute.xlu0 %4048
    %4050 = vrot.lane.b32.xlu0 %v1339, 98
    %v4051 = vpop.permute.xlu0 %4050
    %4052 = vrot.lane.b32.xlu0 %v1340, 98
    %v4053 = vpop.permute.xlu0 %4052
    %4054 = vrot.lane.b32.xlu0 %v1341, 98
    %v4055 = vpop.permute.xlu0 %4054
    %4056 = vrot.lane.b32.xlu0 %v1342, 98
    %v4057 = vpop.permute.xlu0 %4056
    %4058 = vrot.lane.b32.xlu0 %v1343, 98
    %v4059 = vpop.permute.xlu0 %4058
    %4060 = vrot.lane.b32.xlu0 %v1344, 98
    %v4061 = vpop.permute.xlu0 %4060
    %4062 = vrot.lane.b32.xlu0 %v1345, 98
    %v4063 = vpop.permute.xlu0 %4062
    %4064 = vrot.lane.b32.xlu0 %v1346, 98
    %v4065 = vpop.permute.xlu0 %4064
    %4066 = vrot.lane.b32.xlu0 %v1347, 98
    %v4067 = vpop.permute.xlu0 %4066
    %4068 = vrot.lane.b32.xlu0 %v1348, 98
    %v4069 = vpop.permute.xlu0 %4068
    %4070 = vrot.lane.b32.xlu0 %v1349, 98
    %v4071 = vpop.permute.xlu0 %4070
    %4072 = vrot.lane.b32.xlu0 %v1350, 98
    %v4073 = vpop.permute.xlu0 %4072
    %4074 = vrot.lane.b32.xlu0 %v1351, 98
    %v4075 = vpop.permute.xlu0 %4074
    %4076 = vrot.lane.b32.xlu0 %v1352, 98
    %v4077 = vpop.permute.xlu0 %4076
    %4078 = vrot.lane.b32.xlu0 %v1353, 98
    %v4079 = vpop.permute.xlu0 %4078
    %4080 = vrot.lane.b32.xlu0 %v1354, 98
    %v4081 = vpop.permute.xlu0 %4080
    %4082 = vrot.lane.b32.xlu0 %v1355, 98
    %v4083 = vpop.permute.xlu0 %4082
    %4084 = vrot.lane.b32.xlu0 %v1356, 98
    %v4085 = vpop.permute.xlu0 %4084
    %4086 = vrot.lane.b32.xlu0 %v1357, 98
    %v4087 = vpop.permute.xlu0 %4086
    %4088 = vrot.lane.b32.xlu0 %v1358, 98
    %v4089 = vpop.permute.xlu0 %4088
    %4090 = vrot.lane.b32.xlu0 %v1359, 98
    %v4091 = vpop.permute.xlu0 %4090
    %4092 = vrot.lane.b32.xlu0 %v1360, 98
    %v4093 = vpop.permute.xlu0 %4092
    %4094 = vrot.lane.b32.xlu0 %v1361, 98
    %v4095 = vpop.permute.xlu0 %4094
    %4096 = vrot.lane.b32.xlu0 %v1362, 98
    %v4097 = vpop.permute.xlu0 %4096
    %4098 = vrot.lane.b32.xlu0 %v1363, 98
    %v4099 = vpop.permute.xlu0 %4098
    %4100 = vrot.lane.b32.xlu0 %v1364, 98
    %v4101 = vpop.permute.xlu0 %4100
    %4102 = vrot.lane.b32.xlu0 %v1365, 98
    %v4103 = vpop.permute.xlu0 %4102
    %4104 = vrot.lane.b32.xlu0 %v1366, 98
    %v4105 = vpop.permute.xlu0 %4104
    %4106 = vrot.lane.b32.xlu0 %v1367, 98
    %v4107 = vpop.permute.xlu0 %4106
    %4108 = vrot.lane.b32.xlu0 %v1368, 98
    %v4109 = vpop.permute.xlu0 %4108
    %4110 = vrot.lane.b32.xlu0 %v1369, 98
    %v4111 = vpop.permute.xlu0 %4110
    %4112 = vrot.lane.b32.xlu0 %v1370, 98
    %v4113 = vpop.permute.xlu0 %4112
    %4114 = vrot.lane.b32.xlu0 %v1371, 98
    %v4115 = vpop.permute.xlu0 %4114
    %4116 = vrot.lane.b32.xlu0 %v1372, 98
    %v4117 = vpop.permute.xlu0 %4116
    %4118 = vrot.lane.b32.xlu0 %v1373, 98
    %v4119 = vpop.permute.xlu0 %4118
    %4120 = vrot.lane.b32.xlu0 %v1374, 98
    %v4121 = vpop.permute.xlu0 %4120
    %4122 = vrot.lane.b32.xlu0 %v1375, 98
    %v4123 = vpop.permute.xlu0 %4122
    %4124 = vrot.lane.b32.xlu0 %v1376, 98
    %v4125 = vpop.permute.xlu0 %4124
    %4126 = vrot.lane.b32.xlu0 %v1377, 98
    %v4127 = vpop.permute.xlu0 %4126
    %4128 = vrot.lane.b32.xlu0 %v1378, 98
    %v4129 = vpop.permute.xlu0 %4128
    %4130 = vrot.lane.b32.xlu0 %v1379, 98
    %v4131 = vpop.permute.xlu0 %4130
    %4132 = vrot.lane.b32.xlu0 %v1380, 98
    %v4133 = vpop.permute.xlu0 %4132
    %4134 = vrot.lane.b32.xlu0 %v1381, 98
    %v4135 = vpop.permute.xlu0 %4134
    %4136 = vrot.lane.b32.xlu0 %v1382, 98
    %v4137 = vpop.permute.xlu0 %4136
    %4138 = vrot.lane.b32.xlu0 %v1383, 98
    %v4139 = vpop.permute.xlu0 %4138
    %4140 = vrot.lane.b32.xlu0 %v1384, 98
    %v4141 = vpop.permute.xlu0 %4140
    %4142 = vrot.lane.b32.xlu0 %v1385, 98
    %v4143 = vpop.permute.xlu0 %4142
    %4144 = vrot.lane.b32.xlu0 %v1386, 98
    %v4145 = vpop.permute.xlu0 %4144
    %4146 = vrot.lane.b32.xlu0 %v1330, 122
    %v4147 = vpop.permute.xlu0 %4146
    %v4148 = vsel %vm1558, %v4035, 0
    %v4150 = vsel %vm1558, %v4037, 0
    %v4152 = vsel %vm1558, %v4039, 0
    %v4154 = vsel %vm1558, %v4041, 0
    %v4156 = vsel %vm1558, %v4043, 0
    %v4158 = vsel %vm1558, %v4045, 0
    %v4160 = vsel %vm1558, %v4047, 0
    %v4162 = vsel %vm1558, %v4049, 0
    %v4164 = vsel %vm1558, %v4051, 0
    %v4166 = vsel %vm1558, %v4053, 0
    %v4168 = vsel %vm1558, %v4055, 0
    %v4170 = vsel %vm1558, %v4057, 0
    %v4172 = vsel %vm1558, %v4059, 0
    %v4174 = vsel %vm1558, %v4061, 0
    %v4176 = vsel %vm1558, %v4063, 0
    %v4178 = vsel %vm1558, %v4065, 0
    %v4180 = vsel %vm1558, %v4067, 0
    %v4182 = vsel %vm1558, %v4069, 0
    %v4184 = vsel %vm1558, %v4071, 0
    %v4186 = vsel %vm1558, %v4073, 0
    %v4188 = vsel %vm1558, %v4075, 0
    %v4190 = vsel %vm1558, %v4077, 0
    %v4192 = vsel %vm1558, %v4079, 0
    %v4194 = vsel %vm1558, %v4081, 0
    %v4196 = vsel %vm1558, %v4083, 0
    %v4198 = vsel %vm1558, %v4085, 0
    %v4200 = vsel %vm1558, %v4087, 0
    %v4202 = vsel %vm1558, %v4089, 0
    %v4204 = vsel %vm1558, %v4091, 0
    %v4206 = vsel %vm1558, %v4093, 0
    %v4208 = vsel %vm1558, %v4095, 0
    %v4210 = vsel %vm1558, %v4097, 0
    %v4212 = vsel %vm1558, %v4099, 0
    %v4214 = vsel %vm1558, %v4101, 0
    %v4216 = vsel %vm1558, %v4103, 0
    %v4218 = vsel %vm1558, %v4105, 0
    %v4220 = vsel %vm1558, %v4107, 0
    %v4222 = vsel %vm1558, %v4109, 0
    %v4224 = vsel %vm1558, %v4111, 0
    %v4226 = vsel %vm1558, %v4113, 0
    %v4228 = vsel %vm1558, %v4115, 0
    %v4230 = vsel %vm1558, %v4117, 0
    %v4232 = vsel %vm1558, %v4119, 0
    %v4234 = vsel %vm1558, %v4121, 0
    %v4236 = vsel %vm1558, %v4123, 0
    %v4238 = vsel %vm1558, %v4125, 0
    %v4240 = vsel %vm1558, %v4127, 0
    %v4242 = vsel %vm1558, %v4129, 0
    %v4244 = vsel %vm1558, %v4131, 0
    %v4246 = vsel %vm1558, %v4133, 0
    %v4248 = vsel %vm1558, %v4135, 0
    %v4250 = vsel %vm1558, %v4137, 0
    %v4252 = vsel %vm1558, %v4139, 0
    %v4254 = vsel %vm1558, %v4141, 0
    %v4256 = vsel %vm1558, %v4143, 0
    %v4258 = vsel %vm1558, %v4145, 0
    %v4260 = vsel %vm1671, %v4147, 0
    %4262 = vmatpush.msra.mxu0 0.0
    %4263 = vmatpush.msra.mxu0 0.0
    %4264 = vmatpush.msra.mxu0 0.0
    %4265 = vmatpush.msra.mxu0 0.0
    %4266 = vmatpush.msra.mxu0 0.0
    %4267 = vmatpush.msra.mxu0 0.0
    %4268 = vmatpush.msra.mxu0 0.0
    %4269 = vmatpush.msra.mxu0 0.0
    %4270 = vmatpush.msra.mxu0 0.0
    %4271 = vmatpush.msra.mxu0 0.0
    %4272 = vmatpush.msra.mxu0 0.0
    %4273 = vmatpush.msra.mxu0 0.0
    %4274 = vmatpush.msra.mxu0 0.0
    %4275 = vmatpush.msra.mxu0 0.0
    %4276 = vmatpush.msra.mxu0 0.0
    %4277 = vmatpush.msra.mxu0 %v4260
    %4278 = vmatmul.f32.gmra.mxu0 %v4148
    %v4279 = vpop.f32.mrf.mxu0
    %v4280 = vadd.f32 0.0, %v4279
    %4281 = vmatmul.f32.gmra.mxu0 %v4150
    %v4282 = vpop.f32.mrf.mxu0
    %v4283 = vadd.f32 0.0, %v4282
    %4284 = vmatmul.f32.gmra.mxu0 %v4152
    %v4285 = vpop.f32.mrf.mxu0
    %v4286 = vadd.f32 0.0, %v4285
    %4287 = vmatmul.f32.gmra.mxu0 %v4154
    %v4288 = vpop.f32.mrf.mxu0
    %v4289 = vadd.f32 0.0, %v4288
    %4290 = vmatmul.f32.gmra.mxu0 %v4156
    %v4291 = vpop.f32.mrf.mxu0
    %v4292 = vadd.f32 0.0, %v4291
    %4293 = vmatmul.f32.gmra.mxu0 %v4158
    %v4294 = vpop.f32.mrf.mxu0
    %v4295 = vadd.f32 0.0, %v4294
    %4296 = vmatmul.f32.gmra.mxu0 %v4160
    %v4297 = vpop.f32.mrf.mxu0
    %v4298 = vadd.f32 0.0, %v4297
    %4299 = vmatmul.f32.gmra.mxu0 %v4162
    %v4300 = vpop.f32.mrf.mxu0
    %v4301 = vadd.f32 0.0, %v4300
    %4302 = vmatmul.f32.gmra.mxu0 %v4164
    %v4303 = vpop.f32.mrf.mxu0
    %v4304 = vadd.f32 0.0, %v4303
    %4305 = vmatmul.f32.gmra.mxu0 %v4166
    %v4306 = vpop.f32.mrf.mxu0
    %v4307 = vadd.f32 0.0, %v4306
    %4308 = vmatmul.f32.gmra.mxu0 %v4168
    %v4309 = vpop.f32.mrf.mxu0
    %v4310 = vadd.f32 0.0, %v4309
    %4311 = vmatmul.f32.gmra.mxu0 %v4170
    %v4312 = vpop.f32.mrf.mxu0
    %v4313 = vadd.f32 0.0, %v4312
    %4314 = vmatmul.f32.gmra.mxu0 %v4172
    %v4315 = vpop.f32.mrf.mxu0
    %v4316 = vadd.f32 0.0, %v4315
    %4317 = vmatmul.f32.gmra.mxu0 %v4174
    %v4318 = vpop.f32.mrf.mxu0
    %v4319 = vadd.f32 0.0, %v4318
    %4320 = vmatmul.f32.gmra.mxu0 %v4176
    %v4321 = vpop.f32.mrf.mxu0
    %v4322 = vadd.f32 0.0, %v4321
    %4323 = vmatmul.f32.gmra.mxu0 %v4178
    %v4324 = vpop.f32.mrf.mxu0
    %v4325 = vadd.f32 0.0, %v4324
    %4326 = vmatmul.f32.gmra.mxu0 %v4180
    %v4327 = vpop.f32.mrf.mxu0
    %v4328 = vadd.f32 0.0, %v4327
    %4329 = vmatmul.f32.gmra.mxu0 %v4182
    %v4330 = vpop.f32.mrf.mxu0
    %v4331 = vadd.f32 0.0, %v4330
    %4332 = vmatmul.f32.gmra.mxu0 %v4184
    %v4333 = vpop.f32.mrf.mxu0
    %v4334 = vadd.f32 0.0, %v4333
    %4335 = vmatmul.f32.gmra.mxu0 %v4186
    %v4336 = vpop.f32.mrf.mxu0
    %v4337 = vadd.f32 0.0, %v4336
    %4338 = vmatmul.f32.gmra.mxu0 %v4188
    %v4339 = vpop.f32.mrf.mxu0
    %v4340 = vadd.f32 0.0, %v4339
    %4341 = vmatmul.f32.gmra.mxu0 %v4190
    %v4342 = vpop.f32.mrf.mxu0
    %v4343 = vadd.f32 0.0, %v4342
    %4344 = vmatmul.f32.gmra.mxu0 %v4192
    %v4345 = vpop.f32.mrf.mxu0
    %v4346 = vadd.f32 0.0, %v4345
    %4347 = vmatmul.f32.gmra.mxu0 %v4194
    %v4348 = vpop.f32.mrf.mxu0
    %v4349 = vadd.f32 0.0, %v4348
    %4350 = vmatmul.f32.gmra.mxu0 %v4196
    %v4351 = vpop.f32.mrf.mxu0
    %v4352 = vadd.f32 0.0, %v4351
    %4353 = vmatmul.f32.gmra.mxu0 %v4198
    %v4354 = vpop.f32.mrf.mxu0
    %v4355 = vadd.f32 0.0, %v4354
    %4356 = vmatmul.f32.gmra.mxu0 %v4200
    %v4357 = vpop.f32.mrf.mxu0
    %v4358 = vadd.f32 0.0, %v4357
    %4359 = vmatmul.f32.gmra.mxu0 %v4202
    %v4360 = vpop.f32.mrf.mxu0
    %v4361 = vadd.f32 0.0, %v4360
    %4362 = vmatmul.f32.gmra.mxu0 %v4204
    %v4363 = vpop.f32.mrf.mxu0
    %v4364 = vadd.f32 0.0, %v4363
    %4365 = vmatmul.f32.gmra.mxu0 %v4206
    %v4366 = vpop.f32.mrf.mxu0
    %v4367 = vadd.f32 0.0, %v4366
    %4368 = vmatmul.f32.gmra.mxu0 %v4208
    %v4369 = vpop.f32.mrf.mxu0
    %v4370 = vadd.f32 0.0, %v4369
    %4371 = vmatmul.f32.gmra.mxu0 %v4210
    %v4372 = vpop.f32.mrf.mxu0
    %v4373 = vadd.f32 0.0, %v4372
    %4374 = vmatmul.f32.gmra.mxu0 %v4212
    %v4375 = vpop.f32.mrf.mxu0
    %v4376 = vadd.f32 0.0, %v4375
    %4377 = vmatmul.f32.gmra.mxu0 %v4214
    %v4378 = vpop.f32.mrf.mxu0
    %v4379 = vadd.f32 0.0, %v4378
    %4380 = vmatmul.f32.gmra.mxu0 %v4216
    %v4381 = vpop.f32.mrf.mxu0
    %v4382 = vadd.f32 0.0, %v4381
    %4383 = vmatmul.f32.gmra.mxu0 %v4218
    %v4384 = vpop.f32.mrf.mxu0
    %v4385 = vadd.f32 0.0, %v4384
    %4386 = vmatmul.f32.gmra.mxu0 %v4220
    %v4387 = vpop.f32.mrf.mxu0
    %v4388 = vadd.f32 0.0, %v4387
    %4389 = vmatmul.f32.gmra.mxu0 %v4222
    %v4390 = vpop.f32.mrf.mxu0
    %v4391 = vadd.f32 0.0, %v4390
    %4392 = vmatmul.f32.gmra.mxu0 %v4224
    %v4393 = vpop.f32.mrf.mxu0
    %v4394 = vadd.f32 0.0, %v4393
    %4395 = vmatmul.f32.gmra.mxu0 %v4226
    %v4396 = vpop.f32.mrf.mxu0
    %v4397 = vadd.f32 0.0, %v4396
    %4398 = vmatmul.f32.gmra.mxu0 %v4228
    %v4399 = vpop.f32.mrf.mxu0
    %v4400 = vadd.f32 0.0, %v4399
    %4401 = vmatmul.f32.gmra.mxu0 %v4230
    %v4402 = vpop.f32.mrf.mxu0
    %v4403 = vadd.f32 0.0, %v4402
    %4404 = vmatmul.f32.gmra.mxu0 %v4232
    %v4405 = vpop.f32.mrf.mxu0
    %v4406 = vadd.f32 0.0, %v4405
    %4407 = vmatmul.f32.gmra.mxu0 %v4234
    %v4408 = vpop.f32.mrf.mxu0
    %v4409 = vadd.f32 0.0, %v4408
    %4410 = vmatmul.f32.gmra.mxu0 %v4236
    %v4411 = vpop.f32.mrf.mxu0
    %v4412 = vadd.f32 0.0, %v4411
    %4413 = vmatmul.f32.gmra.mxu0 %v4238
    %v4414 = vpop.f32.mrf.mxu0
    %v4415 = vadd.f32 0.0, %v4414
    %4416 = vmatmul.f32.gmra.mxu0 %v4240
    %v4417 = vpop.f32.mrf.mxu0
    %v4418 = vadd.f32 0.0, %v4417
    %4419 = vmatmul.f32.gmra.mxu0 %v4242
    %v4420 = vpop.f32.mrf.mxu0
    %v4421 = vadd.f32 0.0, %v4420
    %4422 = vmatmul.f32.gmra.mxu0 %v4244
    %v4423 = vpop.f32.mrf.mxu0
    %v4424 = vadd.f32 0.0, %v4423
    %4425 = vmatmul.f32.gmra.mxu0 %v4246
    %v4426 = vpop.f32.mrf.mxu0
    %v4427 = vadd.f32 0.0, %v4426
    %4428 = vmatmul.f32.gmra.mxu0 %v4248
    %v4429 = vpop.f32.mrf.mxu0
    %v4430 = vadd.f32 0.0, %v4429
    %4431 = vmatmul.f32.gmra.mxu0 %v4250
    %v4432 = vpop.f32.mrf.mxu0
    %v4433 = vadd.f32 0.0, %v4432
    %4434 = vmatmul.f32.gmra.mxu0 %v4252
    %v4435 = vpop.f32.mrf.mxu0
    %v4436 = vadd.f32 0.0, %v4435
    %4437 = vmatmul.f32.gmra.mxu0 %v4254
    %v4438 = vpop.f32.mrf.mxu0
    %v4439 = vadd.f32 0.0, %v4438
    %4440 = vmatmul.f32.gmra.mxu0 %v4256
    %v4441 = vpop.f32.mrf.mxu0
    %v4442 = vadd.f32 0.0, %v4441
    %4443 = vmatmul.f32.gmra.mxu0 %v4258
    %v4444 = vpop.f32.mrf.mxu0
    %v4445 = vadd.f32 0.0, %v4444
    %4446 = vdwg.mxu0
    %v4447 = vadd.f32 %v3978, %v4280
    %v4448 = vadd.f32 %v3979, %v4283
    %v4449 = vadd.f32 %v3980, %v4286
    %v4450 = vadd.f32 %v3981, %v4289
    %v4451 = vadd.f32 %v3982, %v4292
    %v4452 = vadd.f32 %v3983, %v4295
    %v4453 = vadd.f32 %v3984, %v4298
    %v4454 = vadd.f32 %v3985, %v4301
    %v4455 = vadd.f32 %v3986, %v4304
    %v4456 = vadd.f32 %v3987, %v4307
    %v4457 = vadd.f32 %v3988, %v4310
    %v4458 = vadd.f32 %v3989, %v4313
    %v4459 = vadd.f32 %v3990, %v4316
    %v4460 = vadd.f32 %v3991, %v4319
    %v4461 = vadd.f32 %v3992, %v4322
    %v4462 = vadd.f32 %v3993, %v4325
    %v4463 = vadd.f32 %v3994, %v4328
    %v4464 = vadd.f32 %v3995, %v4331
    %v4465 = vadd.f32 %v3996, %v4334
    %v4466 = vadd.f32 %v3997, %v4337
    %v4467 = vadd.f32 %v3998, %v4340
    %v4468 = vadd.f32 %v3999, %v4343
    %v4469 = vadd.f32 %v4000, %v4346
    %v4470 = vadd.f32 %v4001, %v4349
    %v4471 = vadd.f32 %v4002, %v4352
    %v4472 = vadd.f32 %v4003, %v4355
    %v4473 = vadd.f32 %v4004, %v4358
    %v4474 = vadd.f32 %v4005, %v4361
    %v4475 = vadd.f32 %v4006, %v4364
    %v4476 = vadd.f32 %v4007, %v4367
    %v4477 = vadd.f32 %v4008, %v4370
    %v4478 = vadd.f32 %v4009, %v4373
    %v4479 = vadd.f32 %v4010, %v4376
    %v4480 = vadd.f32 %v4011, %v4379
    %v4481 = vadd.f32 %v4012, %v4382
    %v4482 = vadd.f32 %v4013, %v4385
    %v4483 = vadd.f32 %v4014, %v4388
    %v4484 = vadd.f32 %v4015, %v4391
    %v4485 = vadd.f32 %v4016, %v4394
    %v4486 = vadd.f32 %v4017, %v4397
    %v4487 = vadd.f32 %v4018, %v4400
    %v4488 = vadd.f32 %v4019, %v4403
    %v4489 = vadd.f32 %v4020, %v4406
    %v4490 = vadd.f32 %v4021, %v4409
    %v4491 = vadd.f32 %v4022, %v4412
    %v4492 = vadd.f32 %v4023, %v4415
    %v4493 = vadd.f32 %v4024, %v4418
    %v4494 = vadd.f32 %v4025, %v4421
    %v4495 = vadd.f32 %v4026, %v4424
    %v4496 = vadd.f32 %v4027, %v4427
    %v4497 = vadd.f32 %v4028, %v4430
    %v4498 = vadd.f32 %v4029, %v4433
    %v4499 = vadd.f32 %v4030, %v4436
    %v4500 = vadd.f32 %v4031, %v4439
    %v4501 = vadd.f32 %v4032, %v4442
    %v4502 = vadd.f32 %v4033, %v4445
    %4503 = vrot.lane.b32.xlu0 %v1331, 93
    %v4504 = vpop.permute.xlu0 %4503
    %4505 = vrot.lane.b32.xlu0 %v1332, 93
    %v4506 = vpop.permute.xlu0 %4505
    %4507 = vrot.lane.b32.xlu0 %v1333, 93
    %v4508 = vpop.permute.xlu0 %4507
    %4509 = vrot.lane.b32.xlu0 %v1334, 93
    %v4510 = vpop.permute.xlu0 %4509
    %4511 = vrot.lane.b32.xlu0 %v1335, 93
    %v4512 = vpop.permute.xlu0 %4511
    %4513 = vrot.lane.b32.xlu0 %v1336, 93
    %v4514 = vpop.permute.xlu0 %4513
    %4515 = vrot.lane.b32.xlu0 %v1337, 93
    %v4516 = vpop.permute.xlu0 %4515
    %4517 = vrot.lane.b32.xlu0 %v1338, 93
    %v4518 = vpop.permute.xlu0 %4517
    %4519 = vrot.lane.b32.xlu0 %v1339, 93
    %v4520 = vpop.permute.xlu0 %4519
    %4521 = vrot.lane.b32.xlu0 %v1340, 93
    %v4522 = vpop.permute.xlu0 %4521
    %4523 = vrot.lane.b32.xlu0 %v1341, 93
    %v4524 = vpop.permute.xlu0 %4523
    %4525 = vrot.lane.b32.xlu0 %v1342, 93
    %v4526 = vpop.permute.xlu0 %4525
    %4527 = vrot.lane.b32.xlu0 %v1343, 93
    %v4528 = vpop.permute.xlu0 %4527
    %4529 = vrot.lane.b32.xlu0 %v1344, 93
    %v4530 = vpop.permute.xlu0 %4529
    %4531 = vrot.lane.b32.xlu0 %v1345, 93
    %v4532 = vpop.permute.xlu0 %4531
    %4533 = vrot.lane.b32.xlu0 %v1346, 93
    %v4534 = vpop.permute.xlu0 %4533
    %4535 = vrot.lane.b32.xlu0 %v1347, 93
    %v4536 = vpop.permute.xlu0 %4535
    %4537 = vrot.lane.b32.xlu0 %v1348, 93
    %v4538 = vpop.permute.xlu0 %4537
    %4539 = vrot.lane.b32.xlu0 %v1349, 93
    %v4540 = vpop.permute.xlu0 %4539
    %4541 = vrot.lane.b32.xlu0 %v1350, 93
    %v4542 = vpop.permute.xlu0 %4541
    %4543 = vrot.lane.b32.xlu0 %v1351, 93
    %v4544 = vpop.permute.xlu0 %4543
    %4545 = vrot.lane.b32.xlu0 %v1352, 93
    %v4546 = vpop.permute.xlu0 %4545
    %4547 = vrot.lane.b32.xlu0 %v1353, 93
    %v4548 = vpop.permute.xlu0 %4547
    %4549 = vrot.lane.b32.xlu0 %v1354, 93
    %v4550 = vpop.permute.xlu0 %4549
    %4551 = vrot.lane.b32.xlu0 %v1355, 93
    %v4552 = vpop.permute.xlu0 %4551
    %4553 = vrot.lane.b32.xlu0 %v1356, 93
    %v4554 = vpop.permute.xlu0 %4553
    %4555 = vrot.lane.b32.xlu0 %v1357, 93
    %v4556 = vpop.permute.xlu0 %4555
    %4557 = vrot.lane.b32.xlu0 %v1358, 93
    %v4558 = vpop.permute.xlu0 %4557
    %4559 = vrot.lane.b32.xlu0 %v1359, 93
    %v4560 = vpop.permute.xlu0 %4559
    %4561 = vrot.lane.b32.xlu0 %v1360, 93
    %v4562 = vpop.permute.xlu0 %4561
    %4563 = vrot.lane.b32.xlu0 %v1361, 93
    %v4564 = vpop.permute.xlu0 %4563
    %4565 = vrot.lane.b32.xlu0 %v1362, 93
    %v4566 = vpop.permute.xlu0 %4565
    %4567 = vrot.lane.b32.xlu0 %v1363, 93
    %v4568 = vpop.permute.xlu0 %4567
    %4569 = vrot.lane.b32.xlu0 %v1364, 93
    %v4570 = vpop.permute.xlu0 %4569
    %4571 = vrot.lane.b32.xlu0 %v1365, 93
    %v4572 = vpop.permute.xlu0 %4571
    %4573 = vrot.lane.b32.xlu0 %v1366, 93
    %v4574 = vpop.permute.xlu0 %4573
    %4575 = vrot.lane.b32.xlu0 %v1367, 93
    %v4576 = vpop.permute.xlu0 %4575
    %4577 = vrot.lane.b32.xlu0 %v1368, 93
    %v4578 = vpop.permute.xlu0 %4577
    %4579 = vrot.lane.b32.xlu0 %v1369, 93
    %v4580 = vpop.permute.xlu0 %4579
    %4581 = vrot.lane.b32.xlu0 %v1370, 93
    %v4582 = vpop.permute.xlu0 %4581
    %4583 = vrot.lane.b32.xlu0 %v1371, 93
    %v4584 = vpop.permute.xlu0 %4583
    %4585 = vrot.lane.b32.xlu0 %v1372, 93
    %v4586 = vpop.permute.xlu0 %4585
    %4587 = vrot.lane.b32.xlu0 %v1373, 93
    %v4588 = vpop.permute.xlu0 %4587
    %4589 = vrot.lane.b32.xlu0 %v1374, 93
    %v4590 = vpop.permute.xlu0 %4589
    %4591 = vrot.lane.b32.xlu0 %v1375, 93
    %v4592 = vpop.permute.xlu0 %4591
    %4593 = vrot.lane.b32.xlu0 %v1376, 93
    %v4594 = vpop.permute.xlu0 %4593
    %4595 = vrot.lane.b32.xlu0 %v1377, 93
    %v4596 = vpop.permute.xlu0 %4595
    %4597 = vrot.lane.b32.xlu0 %v1378, 93
    %v4598 = vpop.permute.xlu0 %4597
    %4599 = vrot.lane.b32.xlu0 %v1379, 93
    %v4600 = vpop.permute.xlu0 %4599
    %4601 = vrot.lane.b32.xlu0 %v1380, 93
    %v4602 = vpop.permute.xlu0 %4601
    %4603 = vrot.lane.b32.xlu0 %v1381, 93
    %v4604 = vpop.permute.xlu0 %4603
    %4605 = vrot.lane.b32.xlu0 %v1382, 93
    %v4606 = vpop.permute.xlu0 %4605
    %4607 = vrot.lane.b32.xlu0 %v1383, 93
    %v4608 = vpop.permute.xlu0 %4607
    %4609 = vrot.lane.b32.xlu0 %v1384, 93
    %v4610 = vpop.permute.xlu0 %4609
    %4611 = vrot.lane.b32.xlu0 %v1385, 93
    %v4612 = vpop.permute.xlu0 %4611
    %4613 = vrot.lane.b32.xlu0 %v1386, 93
    %v4614 = vpop.permute.xlu0 %4613
    %4615 = vrot.lane.b32.xlu0 %v1330, 121
    %v4616 = vpop.permute.xlu0 %4615
    %v4617 = vsel %vm1558, %v4504, 0
    %v4619 = vsel %vm1558, %v4506, 0
    %v4621 = vsel %vm1558, %v4508, 0
    %v4623 = vsel %vm1558, %v4510, 0
    %v4625 = vsel %vm1558, %v4512, 0
    %v4627 = vsel %vm1558, %v4514, 0
    %v4629 = vsel %vm1558, %v4516, 0
    %v4631 = vsel %vm1558, %v4518, 0
    %v4633 = vsel %vm1558, %v4520, 0
    %v4635 = vsel %vm1558, %v4522, 0
    %v4637 = vsel %vm1558, %v4524, 0
    %v4639 = vsel %vm1558, %v4526, 0
    %v4641 = vsel %vm1558, %v4528, 0
    %v4643 = vsel %vm1558, %v4530, 0
    %v4645 = vsel %vm1558, %v4532, 0
    %v4647 = vsel %vm1558, %v4534, 0
    %v4649 = vsel %vm1558, %v4536, 0
    %v4651 = vsel %vm1558, %v4538, 0
    %v4653 = vsel %vm1558, %v4540, 0
    %v4655 = vsel %vm1558, %v4542, 0
    %v4657 = vsel %vm1558, %v4544, 0
    %v4659 = vsel %vm1558, %v4546, 0
    %v4661 = vsel %vm1558, %v4548, 0
    %v4663 = vsel %vm1558, %v4550, 0
    %v4665 = vsel %vm1558, %v4552, 0
    %v4667 = vsel %vm1558, %v4554, 0
    %v4669 = vsel %vm1558, %v4556, 0
    %v4671 = vsel %vm1558, %v4558, 0
    %v4673 = vsel %vm1558, %v4560, 0
    %v4675 = vsel %vm1558, %v4562, 0
    %v4677 = vsel %vm1558, %v4564, 0
    %v4679 = vsel %vm1558, %v4566, 0
    %v4681 = vsel %vm1558, %v4568, 0
    %v4683 = vsel %vm1558, %v4570, 0
    %v4685 = vsel %vm1558, %v4572, 0
    %v4687 = vsel %vm1558, %v4574, 0
    %v4689 = vsel %vm1558, %v4576, 0
    %v4691 = vsel %vm1558, %v4578, 0
    %v4693 = vsel %vm1558, %v4580, 0
    %v4695 = vsel %vm1558, %v4582, 0
    %v4697 = vsel %vm1558, %v4584, 0
    %v4699 = vsel %vm1558, %v4586, 0
    %v4701 = vsel %vm1558, %v4588, 0
    %v4703 = vsel %vm1558, %v4590, 0
    %v4705 = vsel %vm1558, %v4592, 0
    %v4707 = vsel %vm1558, %v4594, 0
    %v4709 = vsel %vm1558, %v4596, 0
    %v4711 = vsel %vm1558, %v4598, 0
    %v4713 = vsel %vm1558, %v4600, 0
    %v4715 = vsel %vm1558, %v4602, 0
    %v4717 = vsel %vm1558, %v4604, 0
    %v4719 = vsel %vm1558, %v4606, 0
    %v4721 = vsel %vm1558, %v4608, 0
    %v4723 = vsel %vm1558, %v4610, 0
    %v4725 = vsel %vm1558, %v4612, 0
    %v4727 = vsel %vm1558, %v4614, 0
    %v4729 = vsel %vm1671, %v4616, 0
    %4731 = vmatpush.msra.mxu0 0.0
    %4732 = vmatpush.msra.mxu0 0.0
    %4733 = vmatpush.msra.mxu0 0.0
    %4734 = vmatpush.msra.mxu0 0.0
    %4735 = vmatpush.msra.mxu0 0.0
    %4736 = vmatpush.msra.mxu0 0.0
    %4737 = vmatpush.msra.mxu0 0.0
    %4738 = vmatpush.msra.mxu0 0.0
    %4739 = vmatpush.msra.mxu0 0.0
    %4740 = vmatpush.msra.mxu0 0.0
    %4741 = vmatpush.msra.mxu0 0.0
    %4742 = vmatpush.msra.mxu0 0.0
    %4743 = vmatpush.msra.mxu0 0.0
    %4744 = vmatpush.msra.mxu0 0.0
    %4745 = vmatpush.msra.mxu0 0.0
    %4746 = vmatpush.msra.mxu0 %v4729
    %4747 = vmatmul.f32.gmra.mxu0 %v4617
    %v4748 = vpop.f32.mrf.mxu0
    %v4749 = vadd.f32 0.0, %v4748
    %4750 = vmatmul.f32.gmra.mxu0 %v4619
    %v4751 = vpop.f32.mrf.mxu0
    %v4752 = vadd.f32 0.0, %v4751
    %4753 = vmatmul.f32.gmra.mxu0 %v4621
    %v4754 = vpop.f32.mrf.mxu0
    %v4755 = vadd.f32 0.0, %v4754
    %4756 = vmatmul.f32.gmra.mxu0 %v4623
    %v4757 = vpop.f32.mrf.mxu0
    %v4758 = vadd.f32 0.0, %v4757
    %4759 = vmatmul.f32.gmra.mxu0 %v4625
    %v4760 = vpop.f32.mrf.mxu0
    %v4761 = vadd.f32 0.0, %v4760
    %4762 = vmatmul.f32.gmra.mxu0 %v4627
    %v4763 = vpop.f32.mrf.mxu0
    %v4764 = vadd.f32 0.0, %v4763
    %4765 = vmatmul.f32.gmra.mxu0 %v4629
    %v4766 = vpop.f32.mrf.mxu0
    %v4767 = vadd.f32 0.0, %v4766
    %4768 = vmatmul.f32.gmra.mxu0 %v4631
    %v4769 = vpop.f32.mrf.mxu0
    %v4770 = vadd.f32 0.0, %v4769
    %4771 = vmatmul.f32.gmra.mxu0 %v4633
    %v4772 = vpop.f32.mrf.mxu0
    %v4773 = vadd.f32 0.0, %v4772
    %4774 = vmatmul.f32.gmra.mxu0 %v4635
    %v4775 = vpop.f32.mrf.mxu0
    %v4776 = vadd.f32 0.0, %v4775
    %4777 = vmatmul.f32.gmra.mxu0 %v4637
    %v4778 = vpop.f32.mrf.mxu0
    %v4779 = vadd.f32 0.0, %v4778
    %4780 = vmatmul.f32.gmra.mxu0 %v4639
    %v4781 = vpop.f32.mrf.mxu0
    %v4782 = vadd.f32 0.0, %v4781
    %4783 = vmatmul.f32.gmra.mxu0 %v4641
    %v4784 = vpop.f32.mrf.mxu0
    %v4785 = vadd.f32 0.0, %v4784
    %4786 = vmatmul.f32.gmra.mxu0 %v4643
    %v4787 = vpop.f32.mrf.mxu0
    %v4788 = vadd.f32 0.0, %v4787
    %4789 = vmatmul.f32.gmra.mxu0 %v4645
    %v4790 = vpop.f32.mrf.mxu0
    %v4791 = vadd.f32 0.0, %v4790
    %4792 = vmatmul.f32.gmra.mxu0 %v4647
    %v4793 = vpop.f32.mrf.mxu0
    %v4794 = vadd.f32 0.0, %v4793
    %4795 = vmatmul.f32.gmra.mxu0 %v4649
    %v4796 = vpop.f32.mrf.mxu0
    %v4797 = vadd.f32 0.0, %v4796
    %4798 = vmatmul.f32.gmra.mxu0 %v4651
    %v4799 = vpop.f32.mrf.mxu0
    %v4800 = vadd.f32 0.0, %v4799
    %4801 = vmatmul.f32.gmra.mxu0 %v4653
    %v4802 = vpop.f32.mrf.mxu0
    %v4803 = vadd.f32 0.0, %v4802
    %4804 = vmatmul.f32.gmra.mxu0 %v4655
    %v4805 = vpop.f32.mrf.mxu0
    %v4806 = vadd.f32 0.0, %v4805
    %4807 = vmatmul.f32.gmra.mxu0 %v4657
    %v4808 = vpop.f32.mrf.mxu0
    %v4809 = vadd.f32 0.0, %v4808
    %4810 = vmatmul.f32.gmra.mxu0 %v4659
    %v4811 = vpop.f32.mrf.mxu0
    %v4812 = vadd.f32 0.0, %v4811
    %4813 = vmatmul.f32.gmra.mxu0 %v4661
    %v4814 = vpop.f32.mrf.mxu0
    %v4815 = vadd.f32 0.0, %v4814
    %4816 = vmatmul.f32.gmra.mxu0 %v4663
    %v4817 = vpop.f32.mrf.mxu0
    %v4818 = vadd.f32 0.0, %v4817
    %4819 = vmatmul.f32.gmra.mxu0 %v4665
    %v4820 = vpop.f32.mrf.mxu0
    %v4821 = vadd.f32 0.0, %v4820
    %4822 = vmatmul.f32.gmra.mxu0 %v4667
    %v4823 = vpop.f32.mrf.mxu0
    %v4824 = vadd.f32 0.0, %v4823
    %4825 = vmatmul.f32.gmra.mxu0 %v4669
    %v4826 = vpop.f32.mrf.mxu0
    %v4827 = vadd.f32 0.0, %v4826
    %4828 = vmatmul.f32.gmra.mxu0 %v4671
    %v4829 = vpop.f32.mrf.mxu0
    %v4830 = vadd.f32 0.0, %v4829
    %4831 = vmatmul.f32.gmra.mxu0 %v4673
    %v4832 = vpop.f32.mrf.mxu0
    %v4833 = vadd.f32 0.0, %v4832
    %4834 = vmatmul.f32.gmra.mxu0 %v4675
    %v4835 = vpop.f32.mrf.mxu0
    %v4836 = vadd.f32 0.0, %v4835
    %4837 = vmatmul.f32.gmra.mxu0 %v4677
    %v4838 = vpop.f32.mrf.mxu0
    %v4839 = vadd.f32 0.0, %v4838
    %4840 = vmatmul.f32.gmra.mxu0 %v4679
    %v4841 = vpop.f32.mrf.mxu0
    %v4842 = vadd.f32 0.0, %v4841
    %4843 = vmatmul.f32.gmra.mxu0 %v4681
    %v4844 = vpop.f32.mrf.mxu0
    %v4845 = vadd.f32 0.0, %v4844
    %4846 = vmatmul.f32.gmra.mxu0 %v4683
    %v4847 = vpop.f32.mrf.mxu0
    %v4848 = vadd.f32 0.0, %v4847
    %4849 = vmatmul.f32.gmra.mxu0 %v4685
    %v4850 = vpop.f32.mrf.mxu0
    %v4851 = vadd.f32 0.0, %v4850
    %4852 = vmatmul.f32.gmra.mxu0 %v4687
    %v4853 = vpop.f32.mrf.mxu0
    %v4854 = vadd.f32 0.0, %v4853
    %4855 = vmatmul.f32.gmra.mxu0 %v4689
    %v4856 = vpop.f32.mrf.mxu0
    %v4857 = vadd.f32 0.0, %v4856
    %4858 = vmatmul.f32.gmra.mxu0 %v4691
    %v4859 = vpop.f32.mrf.mxu0
    %v4860 = vadd.f32 0.0, %v4859
    %4861 = vmatmul.f32.gmra.mxu0 %v4693
    %v4862 = vpop.f32.mrf.mxu0
    %v4863 = vadd.f32 0.0, %v4862
    %4864 = vmatmul.f32.gmra.mxu0 %v4695
    %v4865 = vpop.f32.mrf.mxu0
    %v4866 = vadd.f32 0.0, %v4865
    %4867 = vmatmul.f32.gmra.mxu0 %v4697
    %v4868 = vpop.f32.mrf.mxu0
    %v4869 = vadd.f32 0.0, %v4868
    %4870 = vmatmul.f32.gmra.mxu0 %v4699
    %v4871 = vpop.f32.mrf.mxu0
    %v4872 = vadd.f32 0.0, %v4871
    %4873 = vmatmul.f32.gmra.mxu0 %v4701
    %v4874 = vpop.f32.mrf.mxu0
    %v4875 = vadd.f32 0.0, %v4874
    %4876 = vmatmul.f32.gmra.mxu0 %v4703
    %v4877 = vpop.f32.mrf.mxu0
    %v4878 = vadd.f32 0.0, %v4877
    %4879 = vmatmul.f32.gmra.mxu0 %v4705
    %v4880 = vpop.f32.mrf.mxu0
    %v4881 = vadd.f32 0.0, %v4880
    %4882 = vmatmul.f32.gmra.mxu0 %v4707
    %v4883 = vpop.f32.mrf.mxu0
    %v4884 = vadd.f32 0.0, %v4883
    %4885 = vmatmul.f32.gmra.mxu0 %v4709
    %v4886 = vpop.f32.mrf.mxu0
    %v4887 = vadd.f32 0.0, %v4886
    %4888 = vmatmul.f32.gmra.mxu0 %v4711
    %v4889 = vpop.f32.mrf.mxu0
    %v4890 = vadd.f32 0.0, %v4889
    %4891 = vmatmul.f32.gmra.mxu0 %v4713
    %v4892 = vpop.f32.mrf.mxu0
    %v4893 = vadd.f32 0.0, %v4892
    %4894 = vmatmul.f32.gmra.mxu0 %v4715
    %v4895 = vpop.f32.mrf.mxu0
    %v4896 = vadd.f32 0.0, %v4895
    %4897 = vmatmul.f32.gmra.mxu0 %v4717
    %v4898 = vpop.f32.mrf.mxu0
    %v4899 = vadd.f32 0.0, %v4898
    %4900 = vmatmul.f32.gmra.mxu0 %v4719
    %v4901 = vpop.f32.mrf.mxu0
    %v4902 = vadd.f32 0.0, %v4901
    %4903 = vmatmul.f32.gmra.mxu0 %v4721
    %v4904 = vpop.f32.mrf.mxu0
    %v4905 = vadd.f32 0.0, %v4904
    %4906 = vmatmul.f32.gmra.mxu0 %v4723
    %v4907 = vpop.f32.mrf.mxu0
    %v4908 = vadd.f32 0.0, %v4907
    %4909 = vmatmul.f32.gmra.mxu0 %v4725
    %v4910 = vpop.f32.mrf.mxu0
    %v4911 = vadd.f32 0.0, %v4910
    %4912 = vmatmul.f32.gmra.mxu0 %v4727
    %v4913 = vpop.f32.mrf.mxu0
    %v4914 = vadd.f32 0.0, %v4913
    %4915 = vdwg.mxu0
    %v4916 = vadd.f32 %v4447, %v4749
    %v4917 = vadd.f32 %v4448, %v4752
    %v4918 = vadd.f32 %v4449, %v4755
    %v4919 = vadd.f32 %v4450, %v4758
    %v4920 = vadd.f32 %v4451, %v4761
    %v4921 = vadd.f32 %v4452, %v4764
    %v4922 = vadd.f32 %v4453, %v4767
    %v4923 = vadd.f32 %v4454, %v4770
    %v4924 = vadd.f32 %v4455, %v4773
    %v4925 = vadd.f32 %v4456, %v4776
    %v4926 = vadd.f32 %v4457, %v4779
    %v4927 = vadd.f32 %v4458, %v4782
    %v4928 = vadd.f32 %v4459, %v4785
    %v4929 = vadd.f32 %v4460, %v4788
    %v4930 = vadd.f32 %v4461, %v4791
    %v4931 = vadd.f32 %v4462, %v4794
    %v4932 = vadd.f32 %v4463, %v4797
    %v4933 = vadd.f32 %v4464, %v4800
    %v4934 = vadd.f32 %v4465, %v4803
    %v4935 = vadd.f32 %v4466, %v4806
    %v4936 = vadd.f32 %v4467, %v4809
    %v4937 = vadd.f32 %v4468, %v4812
    %v4938 = vadd.f32 %v4469, %v4815
    %v4939 = vadd.f32 %v4470, %v4818
    %v4940 = vadd.f32 %v4471, %v4821
    %v4941 = vadd.f32 %v4472, %v4824
    %v4942 = vadd.f32 %v4473, %v4827
    %v4943 = vadd.f32 %v4474, %v4830
    %v4944 = vadd.f32 %v4475, %v4833
    %v4945 = vadd.f32 %v4476, %v4836
    %v4946 = vadd.f32 %v4477, %v4839
    %v4947 = vadd.f32 %v4478, %v4842
    %v4948 = vadd.f32 %v4479, %v4845
    %v4949 = vadd.f32 %v4480, %v4848
    %v4950 = vadd.f32 %v4481, %v4851
    %v4951 = vadd.f32 %v4482, %v4854
    %v4952 = vadd.f32 %v4483, %v4857
    %v4953 = vadd.f32 %v4484, %v4860
    %v4954 = vadd.f32 %v4485, %v4863
    %v4955 = vadd.f32 %v4486, %v4866
    %v4956 = vadd.f32 %v4487, %v4869
    %v4957 = vadd.f32 %v4488, %v4872
    %v4958 = vadd.f32 %v4489, %v4875
    %v4959 = vadd.f32 %v4490, %v4878
    %v4960 = vadd.f32 %v4491, %v4881
    %v4961 = vadd.f32 %v4492, %v4884
    %v4962 = vadd.f32 %v4493, %v4887
    %v4963 = vadd.f32 %v4494, %v4890
    %v4964 = vadd.f32 %v4495, %v4893
    %v4965 = vadd.f32 %v4496, %v4896
    %v4966 = vadd.f32 %v4497, %v4899
    %v4967 = vadd.f32 %v4498, %v4902
    %v4968 = vadd.f32 %v4499, %v4905
    %v4969 = vadd.f32 %v4500, %v4908
    %v4970 = vadd.f32 %v4501, %v4911
    %v4971 = vadd.f32 %v4502, %v4914
    %4972 = vrot.lane.b32.xlu0 %v1331, 88
    %v4973 = vpop.permute.xlu0 %4972
    %4974 = vrot.lane.b32.xlu0 %v1332, 88
    %v4975 = vpop.permute.xlu0 %4974
    %4976 = vrot.lane.b32.xlu0 %v1333, 88
    %v4977 = vpop.permute.xlu0 %4976
    %4978 = vrot.lane.b32.xlu0 %v1334, 88
    %v4979 = vpop.permute.xlu0 %4978
    %4980 = vrot.lane.b32.xlu0 %v1335, 88
    %v4981 = vpop.permute.xlu0 %4980
    %4982 = vrot.lane.b32.xlu0 %v1336, 88
    %v4983 = vpop.permute.xlu0 %4982
    %4984 = vrot.lane.b32.xlu0 %v1337, 88
    %v4985 = vpop.permute.xlu0 %4984
    %4986 = vrot.lane.b32.xlu0 %v1338, 88
    %v4987 = vpop.permute.xlu0 %4986
    %4988 = vrot.lane.b32.xlu0 %v1339, 88
    %v4989 = vpop.permute.xlu0 %4988
    %4990 = vrot.lane.b32.xlu0 %v1340, 88
    %v4991 = vpop.permute.xlu0 %4990
    %4992 = vrot.lane.b32.xlu0 %v1341, 88
    %v4993 = vpop.permute.xlu0 %4992
    %4994 = vrot.lane.b32.xlu0 %v1342, 88
    %v4995 = vpop.permute.xlu0 %4994
    %4996 = vrot.lane.b32.xlu0 %v1343, 88
    %v4997 = vpop.permute.xlu0 %4996
    %4998 = vrot.lane.b32.xlu0 %v1344, 88
    %v4999 = vpop.permute.xlu0 %4998
    %5000 = vrot.lane.b32.xlu0 %v1345, 88
    %v5001 = vpop.permute.xlu0 %5000
    %5002 = vrot.lane.b32.xlu0 %v1346, 88
    %v5003 = vpop.permute.xlu0 %5002
    %5004 = vrot.lane.b32.xlu0 %v1347, 88
    %v5005 = vpop.permute.xlu0 %5004
    %5006 = vrot.lane.b32.xlu0 %v1348, 88
    %v5007 = vpop.permute.xlu0 %5006
    %5008 = vrot.lane.b32.xlu0 %v1349, 88
    %v5009 = vpop.permute.xlu0 %5008
    %5010 = vrot.lane.b32.xlu0 %v1350, 88
    %v5011 = vpop.permute.xlu0 %5010
    %5012 = vrot.lane.b32.xlu0 %v1351, 88
    %v5013 = vpop.permute.xlu0 %5012
    %5014 = vrot.lane.b32.xlu0 %v1352, 88
    %v5015 = vpop.permute.xlu0 %5014
    %5016 = vrot.lane.b32.xlu0 %v1353, 88
    %v5017 = vpop.permute.xlu0 %5016
    %5018 = vrot.lane.b32.xlu0 %v1354, 88
    %v5019 = vpop.permute.xlu0 %5018
    %5020 = vrot.lane.b32.xlu0 %v1355, 88
    %v5021 = vpop.permute.xlu0 %5020
    %5022 = vrot.lane.b32.xlu0 %v1356, 88
    %v5023 = vpop.permute.xlu0 %5022
    %5024 = vrot.lane.b32.xlu0 %v1357, 88
    %v5025 = vpop.permute.xlu0 %5024
    %5026 = vrot.lane.b32.xlu0 %v1358, 88
    %v5027 = vpop.permute.xlu0 %5026
    %5028 = vrot.lane.b32.xlu0 %v1359, 88
    %v5029 = vpop.permute.xlu0 %5028
    %5030 = vrot.lane.b32.xlu0 %v1360, 88
    %v5031 = vpop.permute.xlu0 %5030
    %5032 = vrot.lane.b32.xlu0 %v1361, 88
    %v5033 = vpop.permute.xlu0 %5032
    %5034 = vrot.lane.b32.xlu0 %v1362, 88
    %v5035 = vpop.permute.xlu0 %5034
    %5036 = vrot.lane.b32.xlu0 %v1363, 88
    %v5037 = vpop.permute.xlu0 %5036
    %5038 = vrot.lane.b32.xlu0 %v1364, 88
    %v5039 = vpop.permute.xlu0 %5038
    %5040 = vrot.lane.b32.xlu0 %v1365, 88
    %v5041 = vpop.permute.xlu0 %5040
    %5042 = vrot.lane.b32.xlu0 %v1366, 88
    %v5043 = vpop.permute.xlu0 %5042
    %5044 = vrot.lane.b32.xlu0 %v1367, 88
    %v5045 = vpop.permute.xlu0 %5044
    %5046 = vrot.lane.b32.xlu0 %v1368, 88
    %v5047 = vpop.permute.xlu0 %5046
    %5048 = vrot.lane.b32.xlu0 %v1369, 88
    %v5049 = vpop.permute.xlu0 %5048
    %5050 = vrot.lane.b32.xlu0 %v1370, 88
    %v5051 = vpop.permute.xlu0 %5050
    %5052 = vrot.lane.b32.xlu0 %v1371, 88
    %v5053 = vpop.permute.xlu0 %5052
    %5054 = vrot.lane.b32.xlu0 %v1372, 88
    %v5055 = vpop.permute.xlu0 %5054
    %5056 = vrot.lane.b32.xlu0 %v1373, 88
    %v5057 = vpop.permute.xlu0 %5056
    %5058 = vrot.lane.b32.xlu0 %v1374, 88
    %v5059 = vpop.permute.xlu0 %5058
    %5060 = vrot.lane.b32.xlu0 %v1375, 88
    %v5061 = vpop.permute.xlu0 %5060
    %5062 = vrot.lane.b32.xlu0 %v1376, 88
    %v5063 = vpop.permute.xlu0 %5062
    %5064 = vrot.lane.b32.xlu0 %v1377, 88
    %v5065 = vpop.permute.xlu0 %5064
    %5066 = vrot.lane.b32.xlu0 %v1378, 88
    %v5067 = vpop.permute.xlu0 %5066
    %5068 = vrot.lane.b32.xlu0 %v1379, 88
    %v5069 = vpop.permute.xlu0 %5068
    %5070 = vrot.lane.b32.xlu0 %v1380, 88
    %v5071 = vpop.permute.xlu0 %5070
    %5072 = vrot.lane.b32.xlu0 %v1381, 88
    %v5073 = vpop.permute.xlu0 %5072
    %5074 = vrot.lane.b32.xlu0 %v1382, 88
    %v5075 = vpop.permute.xlu0 %5074
    %5076 = vrot.lane.b32.xlu0 %v1383, 88
    %v5077 = vpop.permute.xlu0 %5076
    %5078 = vrot.lane.b32.xlu0 %v1384, 88
    %v5079 = vpop.permute.xlu0 %5078
    %5080 = vrot.lane.b32.xlu0 %v1385, 88
    %v5081 = vpop.permute.xlu0 %5080
    %5082 = vrot.lane.b32.xlu0 %v1386, 88
    %v5083 = vpop.permute.xlu0 %5082
    %5084 = vrot.lane.b32.xlu0 %v1330, 120
    %v5085 = vpop.permute.xlu0 %5084
    %v5086 = vsel %vm1558, %v4973, 0
    %v5088 = vsel %vm1558, %v4975, 0
    %v5090 = vsel %vm1558, %v4977, 0
    %v5092 = vsel %vm1558, %v4979, 0
    %v5094 = vsel %vm1558, %v4981, 0
    %v5096 = vsel %vm1558, %v4983, 0
    %v5098 = vsel %vm1558, %v4985, 0
    %v5100 = vsel %vm1558, %v4987, 0
    %v5102 = vsel %vm1558, %v4989, 0
    %v5104 = vsel %vm1558, %v4991, 0
    %v5106 = vsel %vm1558, %v4993, 0
    %v5108 = vsel %vm1558, %v4995, 0
    %v5110 = vsel %vm1558, %v4997, 0
    %v5112 = vsel %vm1558, %v4999, 0
    %v5114 = vsel %vm1558, %v5001, 0
    %v5116 = vsel %vm1558, %v5003, 0
    %v5118 = vsel %vm1558, %v5005, 0
    %v5120 = vsel %vm1558, %v5007, 0
    %v5122 = vsel %vm1558, %v5009, 0
    %v5124 = vsel %vm1558, %v5011, 0
    %v5126 = vsel %vm1558, %v5013, 0
    %v5128 = vsel %vm1558, %v5015, 0
    %v5130 = vsel %vm1558, %v5017, 0
    %v5132 = vsel %vm1558, %v5019, 0
    %v5134 = vsel %vm1558, %v5021, 0
    %v5136 = vsel %vm1558, %v5023, 0
    %v5138 = vsel %vm1558, %v5025, 0
    %v5140 = vsel %vm1558, %v5027, 0
    %v5142 = vsel %vm1558, %v5029, 0
    %v5144 = vsel %vm1558, %v5031, 0
    %v5146 = vsel %vm1558, %v5033, 0
    %v5148 = vsel %vm1558, %v5035, 0
    %v5150 = vsel %vm1558, %v5037, 0
    %v5152 = vsel %vm1558, %v5039, 0
    %v5154 = vsel %vm1558, %v5041, 0
    %v5156 = vsel %vm1558, %v5043, 0
    %v5158 = vsel %vm1558, %v5045, 0
    %v5160 = vsel %vm1558, %v5047, 0
    %v5162 = vsel %vm1558, %v5049, 0
    %v5164 = vsel %vm1558, %v5051, 0
    %v5166 = vsel %vm1558, %v5053, 0
    %v5168 = vsel %vm1558, %v5055, 0
    %v5170 = vsel %vm1558, %v5057, 0
    %v5172 = vsel %vm1558, %v5059, 0
    %v5174 = vsel %vm1558, %v5061, 0
    %v5176 = vsel %vm1558, %v5063, 0
    %v5178 = vsel %vm1558, %v5065, 0
    %v5180 = vsel %vm1558, %v5067, 0
    %v5182 = vsel %vm1558, %v5069, 0
    %v5184 = vsel %vm1558, %v5071, 0
    %v5186 = vsel %vm1558, %v5073, 0
    %v5188 = vsel %vm1558, %v5075, 0
    %v5190 = vsel %vm1558, %v5077, 0
    %v5192 = vsel %vm1558, %v5079, 0
    %v5194 = vsel %vm1558, %v5081, 0
    %v5196 = vsel %vm1558, %v5083, 0
    %v5198 = vsel %vm1671, %v5085, 0
    %5200 = vmatpush.msra.mxu0 0.0
    %5201 = vmatpush.msra.mxu0 0.0
    %5202 = vmatpush.msra.mxu0 0.0
    %5203 = vmatpush.msra.mxu0 0.0
    %5204 = vmatpush.msra.mxu0 0.0
    %5205 = vmatpush.msra.mxu0 0.0
    %5206 = vmatpush.msra.mxu0 0.0
    %5207 = vmatpush.msra.mxu0 0.0
    %5208 = vmatpush.msra.mxu0 0.0
    %5209 = vmatpush.msra.mxu0 0.0
    %5210 = vmatpush.msra.mxu0 0.0
    %5211 = vmatpush.msra.mxu0 0.0
    %5212 = vmatpush.msra.mxu0 0.0
    %5213 = vmatpush.msra.mxu0 0.0
    %5214 = vmatpush.msra.mxu0 0.0
    %5215 = vmatpush.msra.mxu0 %v5198
    %5216 = vmatmul.f32.gmra.mxu0 %v5086
    %v5217 = vpop.f32.mrf.mxu0
    %v5218 = vadd.f32 0.0, %v5217
    %5219 = vmatmul.f32.gmra.mxu0 %v5088
    %v5220 = vpop.f32.mrf.mxu0
    %v5221 = vadd.f32 0.0, %v5220
    %5222 = vmatmul.f32.gmra.mxu0 %v5090
    %v5223 = vpop.f32.mrf.mxu0
    %v5224 = vadd.f32 0.0, %v5223
    %5225 = vmatmul.f32.gmra.mxu0 %v5092
    %v5226 = vpop.f32.mrf.mxu0
    %v5227 = vadd.f32 0.0, %v5226
    %5228 = vmatmul.f32.gmra.mxu0 %v5094
    %v5229 = vpop.f32.mrf.mxu0
    %v5230 = vadd.f32 0.0, %v5229
    %5231 = vmatmul.f32.gmra.mxu0 %v5096
    %v5232 = vpop.f32.mrf.mxu0
    %v5233 = vadd.f32 0.0, %v5232
    %5234 = vmatmul.f32.gmra.mxu0 %v5098
    %v5235 = vpop.f32.mrf.mxu0
    %v5236 = vadd.f32 0.0, %v5235
    %5237 = vmatmul.f32.gmra.mxu0 %v5100
    %v5238 = vpop.f32.mrf.mxu0
    %v5239 = vadd.f32 0.0, %v5238
    %5240 = vmatmul.f32.gmra.mxu0 %v5102
    %v5241 = vpop.f32.mrf.mxu0
    %v5242 = vadd.f32 0.0, %v5241
    %5243 = vmatmul.f32.gmra.mxu0 %v5104
    %v5244 = vpop.f32.mrf.mxu0
    %v5245 = vadd.f32 0.0, %v5244
    %5246 = vmatmul.f32.gmra.mxu0 %v5106
    %v5247 = vpop.f32.mrf.mxu0
    %v5248 = vadd.f32 0.0, %v5247
    %5249 = vmatmul.f32.gmra.mxu0 %v5108
    %v5250 = vpop.f32.mrf.mxu0
    %v5251 = vadd.f32 0.0, %v5250
    %5252 = vmatmul.f32.gmra.mxu0 %v5110
    %v5253 = vpop.f32.mrf.mxu0
    %v5254 = vadd.f32 0.0, %v5253
    %5255 = vmatmul.f32.gmra.mxu0 %v5112
    %v5256 = vpop.f32.mrf.mxu0
    %v5257 = vadd.f32 0.0, %v5256
    %5258 = vmatmul.f32.gmra.mxu0 %v5114
    %v5259 = vpop.f32.mrf.mxu0
    %v5260 = vadd.f32 0.0, %v5259
    %5261 = vmatmul.f32.gmra.mxu0 %v5116
    %v5262 = vpop.f32.mrf.mxu0
    %v5263 = vadd.f32 0.0, %v5262
    %5264 = vmatmul.f32.gmra.mxu0 %v5118
    %v5265 = vpop.f32.mrf.mxu0
    %v5266 = vadd.f32 0.0, %v5265
    %5267 = vmatmul.f32.gmra.mxu0 %v5120
    %v5268 = vpop.f32.mrf.mxu0
    %v5269 = vadd.f32 0.0, %v5268
    %5270 = vmatmul.f32.gmra.mxu0 %v5122
    %v5271 = vpop.f32.mrf.mxu0
    %v5272 = vadd.f32 0.0, %v5271
    %5273 = vmatmul.f32.gmra.mxu0 %v5124
    %v5274 = vpop.f32.mrf.mxu0
    %v5275 = vadd.f32 0.0, %v5274
    %5276 = vmatmul.f32.gmra.mxu0 %v5126
    %v5277 = vpop.f32.mrf.mxu0
    %v5278 = vadd.f32 0.0, %v5277
    %5279 = vmatmul.f32.gmra.mxu0 %v5128
    %v5280 = vpop.f32.mrf.mxu0
    %v5281 = vadd.f32 0.0, %v5280
    %5282 = vmatmul.f32.gmra.mxu0 %v5130
    %v5283 = vpop.f32.mrf.mxu0
    %v5284 = vadd.f32 0.0, %v5283
    %5285 = vmatmul.f32.gmra.mxu0 %v5132
    %v5286 = vpop.f32.mrf.mxu0
    %v5287 = vadd.f32 0.0, %v5286
    %5288 = vmatmul.f32.gmra.mxu0 %v5134
    %v5289 = vpop.f32.mrf.mxu0
    %v5290 = vadd.f32 0.0, %v5289
    %5291 = vmatmul.f32.gmra.mxu0 %v5136
    %v5292 = vpop.f32.mrf.mxu0
    %v5293 = vadd.f32 0.0, %v5292
    %5294 = vmatmul.f32.gmra.mxu0 %v5138
    %v5295 = vpop.f32.mrf.mxu0
    %v5296 = vadd.f32 0.0, %v5295
    %5297 = vmatmul.f32.gmra.mxu0 %v5140
    %v5298 = vpop.f32.mrf.mxu0
    %v5299 = vadd.f32 0.0, %v5298
    %5300 = vmatmul.f32.gmra.mxu0 %v5142
    %v5301 = vpop.f32.mrf.mxu0
    %v5302 = vadd.f32 0.0, %v5301
    %5303 = vmatmul.f32.gmra.mxu0 %v5144
    %v5304 = vpop.f32.mrf.mxu0
    %v5305 = vadd.f32 0.0, %v5304
    %5306 = vmatmul.f32.gmra.mxu0 %v5146
    %v5307 = vpop.f32.mrf.mxu0
    %v5308 = vadd.f32 0.0, %v5307
    %5309 = vmatmul.f32.gmra.mxu0 %v5148
    %v5310 = vpop.f32.mrf.mxu0
    %v5311 = vadd.f32 0.0, %v5310
    %5312 = vmatmul.f32.gmra.mxu0 %v5150
    %v5313 = vpop.f32.mrf.mxu0
    %v5314 = vadd.f32 0.0, %v5313
    %5315 = vmatmul.f32.gmra.mxu0 %v5152
    %v5316 = vpop.f32.mrf.mxu0
    %v5317 = vadd.f32 0.0, %v5316
    %5318 = vmatmul.f32.gmra.mxu0 %v5154
    %v5319 = vpop.f32.mrf.mxu0
    %v5320 = vadd.f32 0.0, %v5319
    %5321 = vmatmul.f32.gmra.mxu0 %v5156
    %v5322 = vpop.f32.mrf.mxu0
    %v5323 = vadd.f32 0.0, %v5322
    %5324 = vmatmul.f32.gmra.mxu0 %v5158
    %v5325 = vpop.f32.mrf.mxu0
    %v5326 = vadd.f32 0.0, %v5325
    %5327 = vmatmul.f32.gmra.mxu0 %v5160
    %v5328 = vpop.f32.mrf.mxu0
    %v5329 = vadd.f32 0.0, %v5328
    %5330 = vmatmul.f32.gmra.mxu0 %v5162
    %v5331 = vpop.f32.mrf.mxu0
    %v5332 = vadd.f32 0.0, %v5331
    %5333 = vmatmul.f32.gmra.mxu0 %v5164
    %v5334 = vpop.f32.mrf.mxu0
    %v5335 = vadd.f32 0.0, %v5334
    %5336 = vmatmul.f32.gmra.mxu0 %v5166
    %v5337 = vpop.f32.mrf.mxu0
    %v5338 = vadd.f32 0.0, %v5337
    %5339 = vmatmul.f32.gmra.mxu0 %v5168
    %v5340 = vpop.f32.mrf.mxu0
    %v5341 = vadd.f32 0.0, %v5340
    %5342 = vmatmul.f32.gmra.mxu0 %v5170
    %v5343 = vpop.f32.mrf.mxu0
    %v5344 = vadd.f32 0.0, %v5343
    %5345 = vmatmul.f32.gmra.mxu0 %v5172
    %v5346 = vpop.f32.mrf.mxu0
    %v5347 = vadd.f32 0.0, %v5346
    %5348 = vmatmul.f32.gmra.mxu0 %v5174
    %v5349 = vpop.f32.mrf.mxu0
    %v5350 = vadd.f32 0.0, %v5349
    %5351 = vmatmul.f32.gmra.mxu0 %v5176
    %v5352 = vpop.f32.mrf.mxu0
    %v5353 = vadd.f32 0.0, %v5352
    %5354 = vmatmul.f32.gmra.mxu0 %v5178
    %v5355 = vpop.f32.mrf.mxu0
    %v5356 = vadd.f32 0.0, %v5355
    %5357 = vmatmul.f32.gmra.mxu0 %v5180
    %v5358 = vpop.f32.mrf.mxu0
    %v5359 = vadd.f32 0.0, %v5358
    %5360 = vmatmul.f32.gmra.mxu0 %v5182
    %v5361 = vpop.f32.mrf.mxu0
    %v5362 = vadd.f32 0.0, %v5361
    %5363 = vmatmul.f32.gmra.mxu0 %v5184
    %v5364 = vpop.f32.mrf.mxu0
    %v5365 = vadd.f32 0.0, %v5364
    %5366 = vmatmul.f32.gmra.mxu0 %v5186
    %v5367 = vpop.f32.mrf.mxu0
    %v5368 = vadd.f32 0.0, %v5367
    %5369 = vmatmul.f32.gmra.mxu0 %v5188
    %v5370 = vpop.f32.mrf.mxu0
    %v5371 = vadd.f32 0.0, %v5370
    %5372 = vmatmul.f32.gmra.mxu0 %v5190
    %v5373 = vpop.f32.mrf.mxu0
    %v5374 = vadd.f32 0.0, %v5373
    %5375 = vmatmul.f32.gmra.mxu0 %v5192
    %v5376 = vpop.f32.mrf.mxu0
    %v5377 = vadd.f32 0.0, %v5376
    %5378 = vmatmul.f32.gmra.mxu0 %v5194
    %v5379 = vpop.f32.mrf.mxu0
    %v5380 = vadd.f32 0.0, %v5379
    %5381 = vmatmul.f32.gmra.mxu0 %v5196
    %v5382 = vpop.f32.mrf.mxu0
    %v5383 = vadd.f32 0.0, %v5382
    %5384 = vdwg.mxu0
    %v5385 = vadd.f32 %v4916, %v5218
    %v5386 = vadd.f32 %v4917, %v5221
    %v5387 = vadd.f32 %v4918, %v5224
    %v5388 = vadd.f32 %v4919, %v5227
    %v5389 = vadd.f32 %v4920, %v5230
    %v5390 = vadd.f32 %v4921, %v5233
    %v5391 = vadd.f32 %v4922, %v5236
    %v5392 = vadd.f32 %v4923, %v5239
    %v5393 = vadd.f32 %v4924, %v5242
    %v5394 = vadd.f32 %v4925, %v5245
    %v5395 = vadd.f32 %v4926, %v5248
    %v5396 = vadd.f32 %v4927, %v5251
    %v5397 = vadd.f32 %v4928, %v5254
    %v5398 = vadd.f32 %v4929, %v5257
    %v5399 = vadd.f32 %v4930, %v5260
    %v5400 = vadd.f32 %v4931, %v5263
    %v5401 = vadd.f32 %v4932, %v5266
    %v5402 = vadd.f32 %v4933, %v5269
    %v5403 = vadd.f32 %v4934, %v5272
    %v5404 = vadd.f32 %v4935, %v5275
    %v5405 = vadd.f32 %v4936, %v5278
    %v5406 = vadd.f32 %v4937, %v5281
    %v5407 = vadd.f32 %v4938, %v5284
    %v5408 = vadd.f32 %v4939, %v5287
    %v5409 = vadd.f32 %v4940, %v5290
    %v5410 = vadd.f32 %v4941, %v5293
    %v5411 = vadd.f32 %v4942, %v5296
    %v5412 = vadd.f32 %v4943, %v5299
    %v5413 = vadd.f32 %v4944, %v5302
    %v5414 = vadd.f32 %v4945, %v5305
    %v5415 = vadd.f32 %v4946, %v5308
    %v5416 = vadd.f32 %v4947, %v5311
    %v5417 = vadd.f32 %v4948, %v5314
    %v5418 = vadd.f32 %v4949, %v5317
    %v5419 = vadd.f32 %v4950, %v5320
    %v5420 = vadd.f32 %v4951, %v5323
    %v5421 = vadd.f32 %v4952, %v5326
    %v5422 = vadd.f32 %v4953, %v5329
    %v5423 = vadd.f32 %v4954, %v5332
    %v5424 = vadd.f32 %v4955, %v5335
    %v5425 = vadd.f32 %v4956, %v5338
    %v5426 = vadd.f32 %v4957, %v5341
    %v5427 = vadd.f32 %v4958, %v5344
    %v5428 = vadd.f32 %v4959, %v5347
    %v5429 = vadd.f32 %v4960, %v5350
    %v5430 = vadd.f32 %v4961, %v5353
    %v5431 = vadd.f32 %v4962, %v5356
    %v5432 = vadd.f32 %v4963, %v5359
    %v5433 = vadd.f32 %v4964, %v5362
    %v5434 = vadd.f32 %v4965, %v5365
    %v5435 = vadd.f32 %v4966, %v5368
    %v5436 = vadd.f32 %v4967, %v5371
    %v5437 = vadd.f32 %v4968, %v5374
    %v5438 = vadd.f32 %v4969, %v5377
    %v5439 = vadd.f32 %v4970, %v5380
    %v5440 = vadd.f32 %v4971, %v5383
    %v5441 = vld [vmem:[%s16] sm:$0xff]
    %v5442 = vld [vmem:[%s16 + $0x8] sm:$0xff]
    %v5443 = vld [vmem:[%s16 + $0x10] sm:$0xff]
    %v5444 = vld [vmem:[%s16 + $0x18] sm:$0xff]
    %v5445 = vld [vmem:[%s16 + $0x20] sm:$0xff]
    %v5446 = vld [vmem:[%s16 + $0x28] sm:$0xff]
    %v5447 = vld [vmem:[%s16 + $0x30] sm:$0xff]
    %v5448 = vld [vmem:[%s16 + $0x38] sm:$0xff]
    %v5449 = vld [vmem:[%s16 + $0x40] sm:$0xff]
    %v5450 = vld [vmem:[%s16 + $0x48] sm:$0xff]
    %v5451 = vld [vmem:[%s16 + $0x50] sm:$0xff]
    %v5452 = vld [vmem:[%s16 + $0x58] sm:$0xff]
    %v5453 = vld [vmem:[%s16 + $0x60] sm:$0xff]
    %v5454 = vld [vmem:[%s16 + $0x68] sm:$0xff]
    %v5455 = vld [vmem:[%s16 + $0x70] sm:$0xff]
    %v5456 = vld [vmem:[%s16 + $0x78] sm:$0xff]
    %v5457 = vld [vmem:[%s16 + $0x80] sm:$0xff]
    %v5458 = vld [vmem:[%s16 + $0x88] sm:$0xff]
    %v5459 = vld [vmem:[%s16 + $0x90] sm:$0xff]
    %v5460 = vld [vmem:[%s16 + $0x98] sm:$0xff]
    %v5461 = vld [vmem:[%s16 + $0xa0] sm:$0xff]
    %v5462 = vld [vmem:[%s16 + $0xa8] sm:$0xff]
    %v5463 = vld [vmem:[%s16 + $0xb0] sm:$0xff]
    %v5464 = vld [vmem:[%s16 + $0xb8] sm:$0xff]
    %v5465 = vld [vmem:[%s16 + $0xc0] sm:$0xff]
    %v5466 = vld [vmem:[%s16 + $0xc8] sm:$0xff]
    %v5467 = vld [vmem:[%s16 + $0xd0] sm:$0xff]
    %v5468 = vld [vmem:[%s16 + $0xd8] sm:$0xff]
    %v5469 = vld [vmem:[%s16 + $0xe0] sm:$0xff]
    %v5470 = vld [vmem:[%s16 + $0xe8] sm:$0xff]
    %v5471 = vld [vmem:[%s16 + $0xf0] sm:$0xff]
    %v5472 = vld [vmem:[%s16 + $0xf8] sm:$0xff]
    %v5473 = vld [vmem:[%s16 + $0x100] sm:$0xff]
    %v5474 = vld [vmem:[%s16 + $0x108] sm:$0xff]
    %v5475 = vld [vmem:[%s16 + $0x110] sm:$0xff]
    %v5476 = vld [vmem:[%s16 + $0x118] sm:$0xff]
    %v5477 = vld [vmem:[%s16 + $0x120] sm:$0xff]
    %v5478 = vld [vmem:[%s16 + $0x128] sm:$0xff]
    %v5479 = vld [vmem:[%s16 + $0x130] sm:$0xff]
    %v5480 = vld [vmem:[%s16 + $0x138] sm:$0xff]
    %v5481 = vld [vmem:[%s16 + $0x140] sm:$0xff]
    %v5482 = vld [vmem:[%s16 + $0x148] sm:$0xff]
    %v5483 = vld [vmem:[%s16 + $0x150] sm:$0xff]
    %v5484 = vld [vmem:[%s16 + $0x158] sm:$0xff]
    %v5485 = vld [vmem:[%s16 + $0x160] sm:$0xff]
    %v5486 = vld [vmem:[%s16 + $0x168] sm:$0xff]
    %v5487 = vld [vmem:[%s16 + $0x170] sm:$0xff]
    %v5488 = vld [vmem:[%s16 + $0x178] sm:$0xff]
    %v5489 = vld [vmem:[%s16 + $0x180] sm:$0xff]
    %v5490 = vld [vmem:[%s16 + $0x188] sm:$0xff]
    %v5491 = vld [vmem:[%s16 + $0x190] sm:$0xff]
    %v5492 = vld [vmem:[%s16 + $0x198] sm:$0xff]
    %v5493 = vld [vmem:[%s16 + $0x1a0] sm:$0xff]
    %v5494 = vld [vmem:[%s16 + $0x1a8] sm:$0xff]
    %v5495 = vld [vmem:[%s16 + $0x1b0] sm:$0xff]
    %v5496 = vld [vmem:[%s16 + $0x1b8] sm:$0xff]
    %5498 = vset.pattern.permute.xlu0 0
    %5499 = vperm.xlu0 %5498, %v5441
    %v5500 = vpop.permute.xlu0 %5499
    %5503 = vset.pattern.permute.xlu0 0
    %5504 = vperm.xlu0 %5503, %v5442
    %v5505 = vpop.permute.xlu0 %5504
    %5508 = vset.pattern.permute.xlu0 0
    %5509 = vperm.xlu0 %5508, %v5443
    %v5510 = vpop.permute.xlu0 %5509
    %5513 = vset.pattern.permute.xlu0 0
    %5514 = vperm.xlu0 %5513, %v5444
    %v5515 = vpop.permute.xlu0 %5514
    %5518 = vset.pattern.permute.xlu0 0
    %5519 = vperm.xlu0 %5518, %v5445
    %v5520 = vpop.permute.xlu0 %5519
    %5523 = vset.pattern.permute.xlu0 0
    %5524 = vperm.xlu0 %5523, %v5446
    %v5525 = vpop.permute.xlu0 %5524
    %5528 = vset.pattern.permute.xlu0 0
    %5529 = vperm.xlu0 %5528, %v5447
    %v5530 = vpop.permute.xlu0 %5529
    %5533 = vset.pattern.permute.xlu0 0
    %5534 = vperm.xlu0 %5533, %v5448
    %v5535 = vpop.permute.xlu0 %5534
    %5538 = vset.pattern.permute.xlu0 0
    %5539 = vperm.xlu0 %5538, %v5449
    %v5540 = vpop.permute.xlu0 %5539
    %5543 = vset.pattern.permute.xlu0 0
    %5544 = vperm.xlu0 %5543, %v5450
    %v5545 = vpop.permute.xlu0 %5544
    %5548 = vset.pattern.permute.xlu0 0
    %5549 = vperm.xlu0 %5548, %v5451
    %v5550 = vpop.permute.xlu0 %5549
    %5553 = vset.pattern.permute.xlu0 0
    %5554 = vperm.xlu0 %5553, %v5452
    %v5555 = vpop.permute.xlu0 %5554
    %5558 = vset.pattern.permute.xlu0 0
    %5559 = vperm.xlu0 %5558, %v5453
    %v5560 = vpop.permute.xlu0 %5559
    %5563 = vset.pattern.permute.xlu0 0
    %5564 = vperm.xlu0 %5563, %v5454
    %v5565 = vpop.permute.xlu0 %5564
    %5568 = vset.pattern.permute.xlu0 0
    %5569 = vperm.xlu0 %5568, %v5455
    %v5570 = vpop.permute.xlu0 %5569
    %5573 = vset.pattern.permute.xlu0 0
    %5574 = vperm.xlu0 %5573, %v5456
    %v5575 = vpop.permute.xlu0 %5574
    %5578 = vset.pattern.permute.xlu0 0
    %5579 = vperm.xlu0 %5578, %v5457
    %v5580 = vpop.permute.xlu0 %5579
    %5583 = vset.pattern.permute.xlu0 0
    %5584 = vperm.xlu0 %5583, %v5458
    %v5585 = vpop.permute.xlu0 %5584
    %5588 = vset.pattern.permute.xlu0 0
    %5589 = vperm.xlu0 %5588, %v5459
    %v5590 = vpop.permute.xlu0 %5589
    %5593 = vset.pattern.permute.xlu0 0
    %5594 = vperm.xlu0 %5593, %v5460
    %v5595 = vpop.permute.xlu0 %5594
    %5598 = vset.pattern.permute.xlu0 0
    %5599 = vperm.xlu0 %5598, %v5461
    %v5600 = vpop.permute.xlu0 %5599
    %5603 = vset.pattern.permute.xlu0 0
    %5604 = vperm.xlu0 %5603, %v5462
    %v5605 = vpop.permute.xlu0 %5604
    %5608 = vset.pattern.permute.xlu0 0
    %5609 = vperm.xlu0 %5608, %v5463
    %v5610 = vpop.permute.xlu0 %5609
    %5613 = vset.pattern.permute.xlu0 0
    %5614 = vperm.xlu0 %5613, %v5464
    %v5615 = vpop.permute.xlu0 %5614
    %5618 = vset.pattern.permute.xlu0 0
    %5619 = vperm.xlu0 %5618, %v5465
    %v5620 = vpop.permute.xlu0 %5619
    %5623 = vset.pattern.permute.xlu0 0
    %5624 = vperm.xlu0 %5623, %v5466
    %v5625 = vpop.permute.xlu0 %5624
    %5628 = vset.pattern.permute.xlu0 0
    %5629 = vperm.xlu0 %5628, %v5467
    %v5630 = vpop.permute.xlu0 %5629
    %5633 = vset.pattern.permute.xlu0 0
    %5634 = vperm.xlu0 %5633, %v5468
    %v5635 = vpop.permute.xlu0 %5634
    %5638 = vset.pattern.permute.xlu0 0
    %5639 = vperm.xlu0 %5638, %v5469
    %v5640 = vpop.permute.xlu0 %5639
    %5643 = vset.pattern.permute.xlu0 0
    %5644 = vperm.xlu0 %5643, %v5470
    %v5645 = vpop.permute.xlu0 %5644
    %5648 = vset.pattern.permute.xlu0 0
    %5649 = vperm.xlu0 %5648, %v5471
    %v5650 = vpop.permute.xlu0 %5649
    %5653 = vset.pattern.permute.xlu0 0
    %5654 = vperm.xlu0 %5653, %v5472
    %v5655 = vpop.permute.xlu0 %5654
    %5658 = vset.pattern.permute.xlu0 0
    %5659 = vperm.xlu0 %5658, %v5473
    %v5660 = vpop.permute.xlu0 %5659
    %5663 = vset.pattern.permute.xlu0 0
    %5664 = vperm.xlu0 %5663, %v5474
    %v5665 = vpop.permute.xlu0 %5664
    %5668 = vset.pattern.permute.xlu0 0
    %5669 = vperm.xlu0 %5668, %v5475
    %v5670 = vpop.permute.xlu0 %5669
    %5673 = vset.pattern.permute.xlu0 0
    %5674 = vperm.xlu0 %5673, %v5476
    %v5675 = vpop.permute.xlu0 %5674
    %5678 = vset.pattern.permute.xlu0 0
    %5679 = vperm.xlu0 %5678, %v5477
    %v5680 = vpop.permute.xlu0 %5679
    %5683 = vset.pattern.permute.xlu0 0
    %5684 = vperm.xlu0 %5683, %v5478
    %v5685 = vpop.permute.xlu0 %5684
    %5688 = vset.pattern.permute.xlu0 0
    %5689 = vperm.xlu0 %5688, %v5479
    %v5690 = vpop.permute.xlu0 %5689
    %5693 = vset.pattern.permute.xlu0 0
    %5694 = vperm.xlu0 %5693, %v5480
    %v5695 = vpop.permute.xlu0 %5694
    %5698 = vset.pattern.permute.xlu0 0
    %5699 = vperm.xlu0 %5698, %v5481
    %v5700 = vpop.permute.xlu0 %5699
    %5703 = vset.pattern.permute.xlu0 0
    %5704 = vperm.xlu0 %5703, %v5482
    %v5705 = vpop.permute.xlu0 %5704
    %5708 = vset.pattern.permute.xlu0 0
    %5709 = vperm.xlu0 %5708, %v5483
    %v5710 = vpop.permute.xlu0 %5709
    %5713 = vset.pattern.permute.xlu0 0
    %5714 = vperm.xlu0 %5713, %v5484
    %v5715 = vpop.permute.xlu0 %5714
    %5718 = vset.pattern.permute.xlu0 0
    %5719 = vperm.xlu0 %5718, %v5485
    %v5720 = vpop.permute.xlu0 %5719
    %5723 = vset.pattern.permute.xlu0 0
    %5724 = vperm.xlu0 %5723, %v5486
    %v5725 = vpop.permute.xlu0 %5724
    %5728 = vset.pattern.permute.xlu0 0
    %5729 = vperm.xlu0 %5728, %v5487
    %v5730 = vpop.permute.xlu0 %5729
    %5733 = vset.pattern.permute.xlu0 0
    %5734 = vperm.xlu0 %5733, %v5488
    %v5735 = vpop.permute.xlu0 %5734
    %5738 = vset.pattern.permute.xlu0 0
    %5739 = vperm.xlu0 %5738, %v5489
    %v5740 = vpop.permute.xlu0 %5739
    %5743 = vset.pattern.permute.xlu0 0
    %5744 = vperm.xlu0 %5743, %v5490
    %v5745 = vpop.permute.xlu0 %5744
    %5748 = vset.pattern.permute.xlu0 0
    %5749 = vperm.xlu0 %5748, %v5491
    %v5750 = vpop.permute.xlu0 %5749
    %5753 = vset.pattern.permute.xlu0 0
    %5754 = vperm.xlu0 %5753, %v5492
    %v5755 = vpop.permute.xlu0 %5754
    %5758 = vset.pattern.permute.xlu0 0
    %5759 = vperm.xlu0 %5758, %v5493
    %v5760 = vpop.permute.xlu0 %5759
    %5763 = vset.pattern.permute.xlu0 0
    %5764 = vperm.xlu0 %5763, %v5494
    %v5765 = vpop.permute.xlu0 %5764
    %5768 = vset.pattern.permute.xlu0 0
    %5769 = vperm.xlu0 %5768, %v5495
    %v5770 = vpop.permute.xlu0 %5769
    %5773 = vset.pattern.permute.xlu0 0
    %5774 = vperm.xlu0 %5773, %v5496
    %v5775 = vpop.permute.xlu0 %5774
    %v5777 = vadd.f32 %v5385, %v5500
    %v5778 = vadd.f32 %v5386, %v5505
    %v5779 = vadd.f32 %v5387, %v5510
    %v5780 = vadd.f32 %v5388, %v5515
    %v5781 = vadd.f32 %v5389, %v5520
    %v5782 = vadd.f32 %v5390, %v5525
    %v5783 = vadd.f32 %v5391, %v5530
    %v5784 = vadd.f32 %v5392, %v5535
    %v5785 = vadd.f32 %v5393, %v5540
    %v5786 = vadd.f32 %v5394, %v5545
    %v5787 = vadd.f32 %v5395, %v5550
    %v5788 = vadd.f32 %v5396, %v5555
    %v5789 = vadd.f32 %v5397, %v5560
    %v5790 = vadd.f32 %v5398, %v5565
    %v5791 = vadd.f32 %v5399, %v5570
    %v5792 = vadd.f32 %v5400, %v5575
    %v5793 = vadd.f32 %v5401, %v5580
    %v5794 = vadd.f32 %v5402, %v5585
    %v5795 = vadd.f32 %v5403, %v5590
    %v5796 = vadd.f32 %v5404, %v5595
    %v5797 = vadd.f32 %v5405, %v5600
    %v5798 = vadd.f32 %v5406, %v5605
    %v5799 = vadd.f32 %v5407, %v5610
    %v5800 = vadd.f32 %v5408, %v5615
    %v5801 = vadd.f32 %v5409, %v5620
    %v5802 = vadd.f32 %v5410, %v5625
    %v5803 = vadd.f32 %v5411, %v5630
    %v5804 = vadd.f32 %v5412, %v5635
    %v5805 = vadd.f32 %v5413, %v5640
    %v5806 = vadd.f32 %v5414, %v5645
    %v5807 = vadd.f32 %v5415, %v5650
    %v5808 = vadd.f32 %v5416, %v5655
    %v5809 = vadd.f32 %v5417, %v5660
    %v5810 = vadd.f32 %v5418, %v5665
    %v5811 = vadd.f32 %v5419, %v5670
    %v5812 = vadd.f32 %v5420, %v5675
    %v5813 = vadd.f32 %v5421, %v5680
    %v5814 = vadd.f32 %v5422, %v5685
    %v5815 = vadd.f32 %v5423, %v5690
    %v5816 = vadd.f32 %v5424, %v5695
    %v5817 = vadd.f32 %v5425, %v5700
    %v5818 = vadd.f32 %v5426, %v5705
    %v5819 = vadd.f32 %v5427, %v5710
    %v5820 = vadd.f32 %v5428, %v5715
    %v5821 = vadd.f32 %v5429, %v5720
    %v5822 = vadd.f32 %v5430, %v5725
    %v5823 = vadd.f32 %v5431, %v5730
    %v5824 = vadd.f32 %v5432, %v5735
    %v5825 = vadd.f32 %v5433, %v5740
    %v5826 = vadd.f32 %v5434, %v5745
    %v5827 = vadd.f32 %v5435, %v5750
    %v5828 = vadd.f32 %v5436, %v5755
    %v5829 = vadd.f32 %v5437, %v5760
    %v5830 = vadd.f32 %v5438, %v5765
    %v5831 = vadd.f32 %v5439, %v5770
    %v5832 = vadd.f32 %v5440, %v5775
    %v5833 = vmax.f32 %v5777, 0.0
    %v5834 = vmax.f32 %v5778, 0.0
    %v5835 = vmax.f32 %v5779, 0.0
    %v5836 = vmax.f32 %v5780, 0.0
    %v5837 = vmax.f32 %v5781, 0.0
    %v5838 = vmax.f32 %v5782, 0.0
    %v5839 = vmax.f32 %v5783, 0.0
    %v5840 = vmax.f32 %v5784, 0.0
    %v5841 = vmax.f32 %v5785, 0.0
    %v5842 = vmax.f32 %v5786, 0.0
    %v5843 = vmax.f32 %v5787, 0.0
    %v5844 = vmax.f32 %v5788, 0.0
    %v5845 = vmax.f32 %v5789, 0.0
    %v5846 = vmax.f32 %v5790, 0.0
    %v5847 = vmax.f32 %v5791, 0.0
    %v5848 = vmax.f32 %v5792, 0.0
    %v5849 = vmax.f32 %v5793, 0.0
    %v5850 = vmax.f32 %v5794, 0.0
    %v5851 = vmax.f32 %v5795, 0.0
    %v5852 = vmax.f32 %v5796, 0.0
    %v5853 = vmax.f32 %v5797, 0.0
    %v5854 = vmax.f32 %v5798, 0.0
    %v5855 = vmax.f32 %v5799, 0.0
    %v5856 = vmax.f32 %v5800, 0.0
    %v5857 = vmax.f32 %v5801, 0.0
    %v5858 = vmax.f32 %v5802, 0.0
    %v5859 = vmax.f32 %v5803, 0.0
    %v5860 = vmax.f32 %v5804, 0.0
    %v5861 = vmax.f32 %v5805, 0.0
    %v5862 = vmax.f32 %v5806, 0.0
    %v5863 = vmax.f32 %v5807, 0.0
    %v5864 = vmax.f32 %v5808, 0.0
    %v5865 = vmax.f32 %v5809, 0.0
    %v5866 = vmax.f32 %v5810, 0.0
    %v5867 = vmax.f32 %v5811, 0.0
    %v5868 = vmax.f32 %v5812, 0.0
    %v5869 = vmax.f32 %v5813, 0.0
    %v5870 = vmax.f32 %v5814, 0.0
    %v5871 = vmax.f32 %v5815, 0.0
    %v5872 = vmax.f32 %v5816, 0.0
    %v5873 = vmax.f32 %v5817, 0.0
    %v5874 = vmax.f32 %v5818, 0.0
    %v5875 = vmax.f32 %v5819, 0.0
    %v5876 = vmax.f32 %v5820, 0.0
    %v5877 = vmax.f32 %v5821, 0.0
    %v5878 = vmax.f32 %v5822, 0.0
    %v5879 = vmax.f32 %v5823, 0.0
    %v5880 = vmax.f32 %v5824, 0.0
    %v5881 = vmax.f32 %v5825, 0.0
    %v5882 = vmax.f32 %v5826, 0.0
    %v5883 = vmax.f32 %v5827, 0.0
    %v5884 = vmax.f32 %v5828, 0.0
    %v5885 = vmax.f32 %v5829, 0.0
    %v5886 = vmax.f32 %v5830, 0.0
    %v5887 = vmax.f32 %v5831, 0.0
    %v5888 = vmax.f32 %v5832, 0.0
    %v5889 = vld [vmem:[#allocation14] sm:$0xff]
    %v5890 = vld [vmem:[#allocation14 + $0x8] sm:$0xff]
    %v5891 = vld [vmem:[#allocation14 + $0x10] sm:$0xff]
    %v5892 = vld [vmem:[#allocation14 + $0x18] sm:$0xff]
    %v5893 = vld [vmem:[#allocation14 + $0x58] sm:$0xff]
    %v5894 = vld [vmem:[#allocation14 + $0x60] sm:$0xff]
    %v5895 = vld [vmem:[#allocation14 + $0x68] sm:$0xff]
    %v5896 = vld [vmem:[#allocation14 + $0x70] sm:$0xff]
    %v5897 = vld [vmem:[#allocation14 + $0xb0] sm:$0xf]
    %v5898 = vld [vmem:[#allocation14 + $0xb8] sm:$0xf]
    %v5899 = vld [vmem:[#allocation14 + $0xc0] sm:$0xf]
    %v5900 = vld [vmem:[#allocation14 + $0xc8] sm:$0xf]
    %v5901 = vld [vmem:[#allocation14 + $0x20] sm:$0xff]
    %v5902 = vld [vmem:[#allocation14 + $0x28] sm:$0xff]
    %v5903 = vld [vmem:[#allocation14 + $0x30] sm:$0xff]
    %v5904 = vld [vmem:[#allocation14 + $0x78] sm:$0xff]
    %v5905 = vld [vmem:[#allocation14 + $0x80] sm:$0xff]
    %v5906 = vld [vmem:[#allocation14 + $0x88] sm:$0xff]
    %v5907 = vld [vmem:[#allocation14 + $0xd0] sm:$0xf]
    %v5908 = vld [vmem:[#allocation14 + $0xd8] sm:$0xf]
    %v5909 = vld [vmem:[#allocation14 + $0xe0] sm:$0xf]
    %5922 = vrot.lane.b32.xlu0 %v5892, 64
    %v5923 = vpop.permute.xlu0 %5922
    %5924 = vrot.lane.b32.xlu0 %v5901, 64
    %v5925 = vpop.permute.xlu0 %5924
    %5926 = vrot.lane.b32.xlu0 %v5902, 64
    %v5927 = vpop.permute.xlu0 %5926
    %5928 = vrot.lane.b32.xlu0 %v5903, 64
    %v5929 = vpop.permute.xlu0 %5928
    %5930 = vrot.lane.b32.xlu0 %v5896, 64
    %v5931 = vpop.permute.xlu0 %5930
    %5932 = vrot.lane.b32.xlu0 %v5904, 64
    %v5933 = vpop.permute.xlu0 %5932
    %5934 = vrot.lane.b32.xlu0 %v5905, 64
    %v5935 = vpop.permute.xlu0 %5934
    %5936 = vrot.lane.b32.xlu0 %v5906, 64
    %v5937 = vpop.permute.xlu0 %5936
    %5938 = vrot.lane.b32.xlu0 %v5900, 64
    %v5939 = vpop.permute.xlu0 %5938
    %5940 = vrot.lane.b32.xlu0 %v5907, 64
    %v5941 = vpop.permute.xlu0 %5940
    %5942 = vrot.lane.b32.xlu0 %v5908, 64
    %v5943 = vpop.permute.xlu0 %5942
    %5944 = vrot.lane.b32.xlu0 %v5909, 64
    %v5945 = vpop.permute.xlu0 %5944
    %vm5946 = vcmask 523264
    %v5947 = vsel %vm5946, %v5923, %v5925
    %v5948 = vsel %vm5946, %v5925, %v5927
    %v5949 = vsel %vm5946, %v5927, %v5929
    %v5950 = vsel %vm5946, %v5931, %v5933
    %v5951 = vsel %vm5946, %v5933, %v5935
    %v5952 = vsel %vm5946, %v5935, %v5937
    %v5953 = vsel %vm5946, %v5939, %v5941
    %v5954 = vsel %vm5946, %v5941, %v5943
    %v5955 = vsel %vm5946, %v5943, %v5945
    %6021 = vrot.lane.b32.xlu0 %v5833, 127
    %v6022 = vpop.permute.xlu0 %6021
    %6023 = vrot.lane.b32.xlu0 %v5834, 127
    %v6024 = vpop.permute.xlu0 %6023
    %6025 = vrot.lane.b32.xlu0 %v5835, 127
    %v6026 = vpop.permute.xlu0 %6025
    %6027 = vrot.lane.b32.xlu0 %v5836, 127
    %v6028 = vpop.permute.xlu0 %6027
    %6029 = vrot.lane.b32.xlu0 %v5837, 127
    %v6030 = vpop.permute.xlu0 %6029
    %6031 = vrot.lane.b32.xlu0 %v5838, 127
    %v6032 = vpop.permute.xlu0 %6031
    %6033 = vrot.lane.b32.xlu0 %v5839, 127
    %v6034 = vpop.permute.xlu0 %6033
    %6035 = vrot.lane.b32.xlu0 %v5840, 127
    %v6036 = vpop.permute.xlu0 %6035
    %6037 = vrot.lane.b32.xlu0 %v5841, 127
    %v6038 = vpop.permute.xlu0 %6037
    %6039 = vrot.lane.b32.xlu0 %v5842, 127
    %v6040 = vpop.permute.xlu0 %6039
    %6041 = vrot.lane.b32.xlu0 %v5843, 127
    %v6042 = vpop.permute.xlu0 %6041
    %6043 = vrot.lane.b32.xlu0 %v5844, 127
    %v6044 = vpop.permute.xlu0 %6043
    %6045 = vrot.lane.b32.xlu0 %v5845, 127
    %v6046 = vpop.permute.xlu0 %6045
    %6047 = vrot.lane.b32.xlu0 %v5846, 127
    %v6048 = vpop.permute.xlu0 %6047
    %6049 = vrot.lane.b32.xlu0 %v5847, 127
    %v6050 = vpop.permute.xlu0 %6049
    %6051 = vrot.lane.b32.xlu0 %v5848, 127
    %v6052 = vpop.permute.xlu0 %6051
    %6053 = vrot.lane.b32.xlu0 %v5849, 127
    %v6054 = vpop.permute.xlu0 %6053
    %6055 = vrot.lane.b32.xlu0 %v5850, 127
    %v6056 = vpop.permute.xlu0 %6055
    %6057 = vrot.lane.b32.xlu0 %v5851, 127
    %v6058 = vpop.permute.xlu0 %6057
    %6059 = vrot.lane.b32.xlu0 %v5852, 127
    %v6060 = vpop.permute.xlu0 %6059
    %6061 = vrot.lane.b32.xlu0 %v5853, 127
    %v6062 = vpop.permute.xlu0 %6061
    %6063 = vrot.lane.b32.xlu0 %v5854, 127
    %v6064 = vpop.permute.xlu0 %6063
    %6065 = vrot.lane.b32.xlu0 %v5855, 127
    %v6066 = vpop.permute.xlu0 %6065
    %6067 = vrot.lane.b32.xlu0 %v5856, 127
    %v6068 = vpop.permute.xlu0 %6067
    %6069 = vrot.lane.b32.xlu0 %v5857, 127
    %v6070 = vpop.permute.xlu0 %6069
    %6071 = vrot.lane.b32.xlu0 %v5858, 127
    %v6072 = vpop.permute.xlu0 %6071
    %6073 = vrot.lane.b32.xlu0 %v5859, 127
    %v6074 = vpop.permute.xlu0 %6073
    %6075 = vrot.lane.b32.xlu0 %v5860, 127
    %v6076 = vpop.permute.xlu0 %6075
    %6077 = vrot.lane.b32.xlu0 %v5861, 127
    %v6078 = vpop.permute.xlu0 %6077
    %6079 = vrot.lane.b32.xlu0 %v5862, 127
    %v6080 = vpop.permute.xlu0 %6079
    %6081 = vrot.lane.b32.xlu0 %v5863, 127
    %v6082 = vpop.permute.xlu0 %6081
    %6083 = vrot.lane.b32.xlu0 %v5864, 127
    %v6084 = vpop.permute.xlu0 %6083
    %6085 = vrot.lane.b32.xlu0 %v5865, 127
    %v6086 = vpop.permute.xlu0 %6085
    %6087 = vrot.lane.b32.xlu0 %v5866, 127
    %v6088 = vpop.permute.xlu0 %6087
    %6089 = vrot.lane.b32.xlu0 %v5867, 127
    %v6090 = vpop.permute.xlu0 %6089
    %6091 = vrot.lane.b32.xlu0 %v5868, 127
    %v6092 = vpop.permute.xlu0 %6091
    %6093 = vrot.lane.b32.xlu0 %v5869, 127
    %v6094 = vpop.permute.xlu0 %6093
    %6095 = vrot.lane.b32.xlu0 %v5870, 127
    %v6096 = vpop.permute.xlu0 %6095
    %6097 = vrot.lane.b32.xlu0 %v5871, 127
    %v6098 = vpop.permute.xlu0 %6097
    %6099 = vrot.lane.b32.xlu0 %v5872, 127
    %v6100 = vpop.permute.xlu0 %6099
    %6101 = vrot.lane.b32.xlu0 %v5873, 127
    %v6102 = vpop.permute.xlu0 %6101
    %6103 = vrot.lane.b32.xlu0 %v5874, 127
    %v6104 = vpop.permute.xlu0 %6103
    %6105 = vrot.lane.b32.xlu0 %v5875, 127
    %v6106 = vpop.permute.xlu0 %6105
    %6107 = vrot.lane.b32.xlu0 %v5876, 127
    %v6108 = vpop.permute.xlu0 %6107
    %6109 = vrot.lane.b32.xlu0 %v5877, 127
    %v6110 = vpop.permute.xlu0 %6109
    %6111 = vrot.lane.b32.xlu0 %v5878, 127
    %v6112 = vpop.permute.xlu0 %6111
    %6113 = vrot.lane.b32.xlu0 %v5879, 127
    %v6114 = vpop.permute.xlu0 %6113
    %6115 = vrot.lane.b32.xlu0 %v5880, 127
    %v6116 = vpop.permute.xlu0 %6115
    %6117 = vrot.lane.b32.xlu0 %v5881, 127
    %v6118 = vpop.permute.xlu0 %6117
    %6119 = vrot.lane.b32.xlu0 %v5882, 127
    %v6120 = vpop.permute.xlu0 %6119
    %6121 = vrot.lane.b32.xlu0 %v5883, 127
    %v6122 = vpop.permute.xlu0 %6121
    %6123 = vrot.lane.b32.xlu0 %v5884, 127
    %v6124 = vpop.permute.xlu0 %6123
    %6125 = vrot.lane.b32.xlu0 %v5885, 127
    %v6126 = vpop.permute.xlu0 %6125
    %6127 = vrot.lane.b32.xlu0 %v5886, 127
    %v6128 = vpop.permute.xlu0 %6127
    %6129 = vrot.lane.b32.xlu0 %v5887, 127
    %v6130 = vpop.permute.xlu0 %6129
    %6131 = vrot.lane.b32.xlu0 %v5888, 127
    %v6132 = vpop.permute.xlu0 %6131
    %v6189 = vsel %vm5946, %v5929, 0
    %v6191 = vsel %vm5946, %v5937, 0
    %v6193 = vsel %vm5946, %v5945, 0
    %6195 = vmatpush.msra.mxu0 %v6052
    %6196 = vmatpush.msra.mxu0 %v6050
    %6197 = vmatpush.msra.mxu0 %v6048
    %6198 = vmatpush.msra.mxu0 %v6046
    %6199 = vmatpush.msra.mxu0 %v6044
    %6200 = vmatpush.msra.mxu0 %v6042
    %6201 = vmatpush.msra.mxu0 %v6040
    %6202 = vmatpush.msra.mxu0 %v6038
    %6203 = vmatpush.msra.mxu0 %v6036
    %6204 = vmatpush.msra.mxu0 %v6034
    %6205 = vmatpush.msra.mxu0 %v6032
    %6206 = vmatpush.msra.mxu0 %v6030
    %6207 = vmatpush.msra.mxu0 %v6028
    %6208 = vmatpush.msra.mxu0 %v6026
    %6209 = vmatpush.msra.mxu0 %v6024
    %6210 = vmatpush.msra.mxu0 %v6022
    %6211 = vmatmul.f32.gmra.mxu0 %v5947
    %v6212 = vpop.f32.mrf.mxu0
    %v6213 = vadd.f32 0.0, %v6212
    %6214 = vmatmul.f32.gmra.mxu0 %v5950
    %v6215 = vpop.f32.mrf.mxu0
    %v6216 = vadd.f32 0.0, %v6215
    %6217 = vmatmul.f32.gmra.mxu0 %v5953
    %v6218 = vpop.f32.mrf.mxu0
    %v6219 = vadd.f32 0.0, %v6218
    %6220 = vdwg.mxu0
    %6221 = vmatpush.msra.mxu0 %v6084
    %6222 = vmatpush.msra.mxu0 %v6082
    %6223 = vmatpush.msra.mxu0 %v6080
    %6224 = vmatpush.msra.mxu0 %v6078
    %6225 = vmatpush.msra.mxu0 %v6076
    %6226 = vmatpush.msra.mxu0 %v6074
    %6227 = vmatpush.msra.mxu0 %v6072
    %6228 = vmatpush.msra.mxu0 %v6070
    %6229 = vmatpush.msra.mxu0 %v6068
    %6230 = vmatpush.msra.mxu0 %v6066
    %6231 = vmatpush.msra.mxu0 %v6064
    %6232 = vmatpush.msra.mxu0 %v6062
    %6233 = vmatpush.msra.mxu0 %v6060
    %6234 = vmatpush.msra.mxu0 %v6058
    %6235 = vmatpush.msra.mxu0 %v6056
    %6236 = vmatpush.msra.mxu0 %v6054
    %6237 = vmatmul.f32.gmra.mxu0 %v5948
    %v6238 = vpop.f32.mrf.mxu0
    %v6239 = vadd.f32 %v6213, %v6238
    %6240 = vmatmul.f32.gmra.mxu0 %v5951
    %v6241 = vpop.f32.mrf.mxu0
    %v6242 = vadd.f32 %v6216, %v6241
    %6243 = vmatmul.f32.gmra.mxu0 %v5954
    %v6244 = vpop.f32.mrf.mxu0
    %v6245 = vadd.f32 %v6219, %v6244
    %6246 = vdwg.mxu0
    %6247 = vmatpush.msra.mxu0 %v6116
    %6248 = vmatpush.msra.mxu0 %v6114
    %6249 = vmatpush.msra.mxu0 %v6112
    %6250 = vmatpush.msra.mxu0 %v6110
    %6251 = vmatpush.msra.mxu0 %v6108
    %6252 = vmatpush.msra.mxu0 %v6106
    %6253 = vmatpush.msra.mxu0 %v6104
    %6254 = vmatpush.msra.mxu0 %v6102
    %6255 = vmatpush.msra.mxu0 %v6100
    %6256 = vmatpush.msra.mxu0 %v6098
    %6257 = vmatpush.msra.mxu0 %v6096
    %6258 = vmatpush.msra.mxu0 %v6094
    %6259 = vmatpush.msra.mxu0 %v6092
    %6260 = vmatpush.msra.mxu0 %v6090
    %6261 = vmatpush.msra.mxu0 %v6088
    %6262 = vmatpush.msra.mxu0 %v6086
    %6263 = vmatmul.f32.gmra.mxu0 %v5949
    %v6264 = vpop.f32.mrf.mxu0
    %v6265 = vadd.f32 %v6239, %v6264
    %6266 = vmatmul.f32.gmra.mxu0 %v5952
    %v6267 = vpop.f32.mrf.mxu0
    %v6268 = vadd.f32 %v6242, %v6267
    %6269 = vmatmul.f32.gmra.mxu0 %v5955
    %v6270 = vpop.f32.mrf.mxu0
    %v6271 = vadd.f32 %v6245, %v6270
    %6272 = vdwg.mxu0
    %6273 = vmatpush.msra.mxu0 0.0
    %6274 = vmatpush.msra.mxu0 0.0
    %6275 = vmatpush.msra.mxu0 0.0
    %6276 = vmatpush.msra.mxu0 0.0
    %6277 = vmatpush.msra.mxu0 0.0
    %6278 = vmatpush.msra.mxu0 0.0
    %6279 = vmatpush.msra.mxu0 0.0
    %6280 = vmatpush.msra.mxu0 0.0
    %6281 = vmatpush.msra.mxu0 %v6132
    %6282 = vmatpush.msra.mxu0 %v6130
    %6283 = vmatpush.msra.mxu0 %v6128
    %6284 = vmatpush.msra.mxu0 %v6126
    %6285 = vmatpush.msra.mxu0 %v6124
    %6286 = vmatpush.msra.mxu0 %v6122
    %6287 = vmatpush.msra.mxu0 %v6120
    %6288 = vmatpush.msra.mxu0 %v6118
    %6289 = vmatmul.f32.gmra.mxu0 %v6189
    %v6290 = vpop.f32.mrf.mxu0
    %v6291 = vadd.f32 %v6265, %v6290
    %6292 = vmatmul.f32.gmra.mxu0 %v6191
    %v6293 = vpop.f32.mrf.mxu0
    %v6294 = vadd.f32 %v6268, %v6293
    %6295 = vmatmul.f32.gmra.mxu0 %v6193
    %v6296 = vpop.f32.mrf.mxu0
    %v6297 = vadd.f32 %v6271, %v6296
    %6298 = vdwg.mxu0
    %v6299 = vsel %vm5946, %v5892, 0
    %v6301 = vsel %vm5946, %v5896, 0
    %v6303 = vsel %vm5946, %v5900, 0
    %6305 = vmatpush.msra.mxu0 %v5848
    %6306 = vmatpush.msra.mxu0 %v5847
    %6307 = vmatpush.msra.mxu0 %v5846
    %6308 = vmatpush.msra.mxu0 %v5845
    %6309 = vmatpush.msra.mxu0 %v5844
    %6310 = vmatpush.msra.mxu0 %v5843
    %6311 = vmatpush.msra.mxu0 %v5842
    %6312 = vmatpush.msra.mxu0 %v5841
    %6313 = vmatpush.msra.mxu0 %v5840
    %6314 = vmatpush.msra.mxu0 %v5839
    %6315 = vmatpush.msra.mxu0 %v5838
    %6316 = vmatpush.msra.mxu0 %v5837
    %6317 = vmatpush.msra.mxu0 %v5836
    %6318 = vmatpush.msra.mxu0 %v5835
    %6319 = vmatpush.msra.mxu0 %v5834
    %6320 = vmatpush.msra.mxu0 %v5833
    %6321 = vmatmul.f32.gmra.mxu0 %v5889
    %v6322 = vpop.f32.mrf.mxu0
    %v6323 = vadd.f32 %v6291, %v6322
    %6324 = vmatmul.f32.gmra.mxu0 %v5893
    %v6325 = vpop.f32.mrf.mxu0
    %v6326 = vadd.f32 %v6294, %v6325
    %6327 = vmatmul.f32.gmra.mxu0 %v5897
    %v6328 = vpop.f32.mrf.mxu0
    %v6329 = vadd.f32 %v6297, %v6328
    %6330 = vdwg.mxu0
    %6331 = vmatpush.msra.mxu0 %v5864
    %6332 = vmatpush.msra.mxu0 %v5863
    %6333 = vmatpush.msra.mxu0 %v5862
    %6334 = vmatpush.msra.mxu0 %v5861
    %6335 = vmatpush.msra.mxu0 %v5860
    %6336 = vmatpush.msra.mxu0 %v5859
    %6337 = vmatpush.msra.mxu0 %v5858
    %6338 = vmatpush.msra.mxu0 %v5857
    %6339 = vmatpush.msra.mxu0 %v5856
    %6340 = vmatpush.msra.mxu0 %v5855
    %6341 = vmatpush.msra.mxu0 %v5854
    %6342 = vmatpush.msra.mxu0 %v5853
    %6343 = vmatpush.msra.mxu0 %v5852
    %6344 = vmatpush.msra.mxu0 %v5851
    %6345 = vmatpush.msra.mxu0 %v5850
    %6346 = vmatpush.msra.mxu0 %v5849
    %6347 = vmatmul.f32.gmra.mxu0 %v5890
    %v6348 = vpop.f32.mrf.mxu0
    %v6349 = vadd.f32 %v6323, %v6348
    %6350 = vmatmul.f32.gmra.mxu0 %v5894
    %v6351 = vpop.f32.mrf.mxu0
    %v6352 = vadd.f32 %v6326, %v6351
    %6353 = vmatmul.f32.gmra.mxu0 %v5898
    %v6354 = vpop.f32.mrf.mxu0
    %v6355 = vadd.f32 %v6329, %v6354
    %6356 = vdwg.mxu0
    %6357 = vmatpush.msra.mxu0 %v5880
    %6358 = vmatpush.msra.mxu0 %v5879
    %6359 = vmatpush.msra.mxu0 %v5878
    %6360 = vmatpush.msra.mxu0 %v5877
    %6361 = vmatpush.msra.mxu0 %v5876
    %6362 = vmatpush.msra.mxu0 %v5875
    %6363 = vmatpush.msra.mxu0 %v5874
    %6364 = vmatpush.msra.mxu0 %v5873
    %6365 = vmatpush.msra.mxu0 %v5872
    %6366 = vmatpush.msra.mxu0 %v5871
    %6367 = vmatpush.msra.mxu0 %v5870
    %6368 = vmatpush.msra.mxu0 %v5869
    %6369 = vmatpush.msra.mxu0 %v5868
    %6370 = vmatpush.msra.mxu0 %v5867
    %6371 = vmatpush.msra.mxu0 %v5866
    %6372 = vmatpush.msra.mxu0 %v5865
    %6373 = vmatmul.f32.gmra.mxu0 %v5891
    %v6374 = vpop.f32.mrf.mxu0
    %v6375 = vadd.f32 %v6349, %v6374
    %6376 = vmatmul.f32.gmra.mxu0 %v5895
    %v6377 = vpop.f32.mrf.mxu0
    %v6378 = vadd.f32 %v6352, %v6377
    %6379 = vmatmul.f32.gmra.mxu0 %v5899
    %v6380 = vpop.f32.mrf.mxu0
    %v6381 = vadd.f32 %v6355, %v6380
    %6382 = vdwg.mxu0
    %6383 = vmatpush.msra.mxu0 0.0
    %6384 = vmatpush.msra.mxu0 0.0
    %6385 = vmatpush.msra.mxu0 0.0
    %6386 = vmatpush.msra.mxu0 0.0
    %6387 = vmatpush.msra.mxu0 0.0
    %6388 = vmatpush.msra.mxu0 0.0
    %6389 = vmatpush.msra.mxu0 0.0
    %6390 = vmatpush.msra.mxu0 0.0
    %6391 = vmatpush.msra.mxu0 %v5888
    %6392 = vmatpush.msra.mxu0 %v5887
    %6393 = vmatpush.msra.mxu0 %v5886
    %6394 = vmatpush.msra.mxu0 %v5885
    %6395 = vmatpush.msra.mxu0 %v5884
    %6396 = vmatpush.msra.mxu0 %v5883
    %6397 = vmatpush.msra.mxu0 %v5882
    %6398 = vmatpush.msra.mxu0 %v5881
    %6399 = vmatmul.f32.gmra.mxu0 %v6299
    %v6400 = vpop.f32.mrf.mxu0
    %v6401 = vadd.f32 %v6375, %v6400
    %6402 = vmatmul.f32.gmra.mxu0 %v6301
    %v6403 = vpop.f32.mrf.mxu0
    %v6404 = vadd.f32 %v6378, %v6403
    %6405 = vmatmul.f32.gmra.mxu0 %v6303
    %v6406 = vpop.f32.mrf.mxu0
    %v6407 = vadd.f32 %v6381, %v6406
    %6408 = vdwg.mxu0
    %v6409 = vld [vmem:[#allocation14 + $0x38] sm:$0xff]
    %v6410 = vld [vmem:[#allocation14 + $0x40] sm:$0xff]
    %v6411 = vld [vmem:[#allocation14 + $0x48] sm:$0xff]
    %v6412 = vld [vmem:[#allocation14 + $0x50] sm:$0xff]
    %v6413 = vld [vmem:[#allocation14 + $0x90] sm:$0xff]
    %v6414 = vld [vmem:[#allocation14 + $0x98] sm:$0xff]
    %v6415 = vld [vmem:[#allocation14 + $0xa0] sm:$0xff]
    %v6416 = vld [vmem:[#allocation14 + $0xa8] sm:$0xff]
    %v6417 = vld [vmem:[#allocation14 + $0xe8] sm:$0xf]
    %v6418 = vld [vmem:[#allocation14 + $0xf0] sm:$0xf]
    %v6419 = vld [vmem:[#allocation14 + $0xf8] sm:$0xf]
    %v6420 = vld [vmem:[#allocation14 + $0x100] sm:$0xf]
    %6421 = vrot.lane.b32.xlu0 %v5833, 126
    %v6422 = vpop.permute.xlu0 %6421
    %6423 = vrot.lane.b32.xlu0 %v5834, 126
    %v6424 = vpop.permute.xlu0 %6423
    %6425 = vrot.lane.b32.xlu0 %v5835, 126
    %v6426 = vpop.permute.xlu0 %6425
    %6427 = vrot.lane.b32.xlu0 %v5836, 126
    %v6428 = vpop.permute.xlu0 %6427
    %6429 = vrot.lane.b32.xlu0 %v5837, 126
    %v6430 = vpop.permute.xlu0 %6429
    %6431 = vrot.lane.b32.xlu0 %v5838, 126
    %v6432 = vpop.permute.xlu0 %6431
    %6433 = vrot.lane.b32.xlu0 %v5839, 126
    %v6434 = vpop.permute.xlu0 %6433
    %6435 = vrot.lane.b32.xlu0 %v5840, 126
    %v6436 = vpop.permute.xlu0 %6435
    %6437 = vrot.lane.b32.xlu0 %v5841, 126
    %v6438 = vpop.permute.xlu0 %6437
    %6439 = vrot.lane.b32.xlu0 %v5842, 126
    %v6440 = vpop.permute.xlu0 %6439
    %6441 = vrot.lane.b32.xlu0 %v5843, 126
    %v6442 = vpop.permute.xlu0 %6441
    %6443 = vrot.lane.b32.xlu0 %v5844, 126
    %v6444 = vpop.permute.xlu0 %6443
    %6445 = vrot.lane.b32.xlu0 %v5845, 126
    %v6446 = vpop.permute.xlu0 %6445
    %6447 = vrot.lane.b32.xlu0 %v5846, 126
    %v6448 = vpop.permute.xlu0 %6447
    %6449 = vrot.lane.b32.xlu0 %v5847, 126
    %v6450 = vpop.permute.xlu0 %6449
    %6451 = vrot.lane.b32.xlu0 %v5848, 126
    %v6452 = vpop.permute.xlu0 %6451
    %6453 = vrot.lane.b32.xlu0 %v5849, 126
    %v6454 = vpop.permute.xlu0 %6453
    %6455 = vrot.lane.b32.xlu0 %v5850, 126
    %v6456 = vpop.permute.xlu0 %6455
    %6457 = vrot.lane.b32.xlu0 %v5851, 126
    %v6458 = vpop.permute.xlu0 %6457
    %6459 = vrot.lane.b32.xlu0 %v5852, 126
    %v6460 = vpop.permute.xlu0 %6459
    %6461 = vrot.lane.b32.xlu0 %v5853, 126
    %v6462 = vpop.permute.xlu0 %6461
    %6463 = vrot.lane.b32.xlu0 %v5854, 126
    %v6464 = vpop.permute.xlu0 %6463
    %6465 = vrot.lane.b32.xlu0 %v5855, 126
    %v6466 = vpop.permute.xlu0 %6465
    %6467 = vrot.lane.b32.xlu0 %v5856, 126
    %v6468 = vpop.permute.xlu0 %6467
    %6469 = vrot.lane.b32.xlu0 %v5857, 126
    %v6470 = vpop.permute.xlu0 %6469
    %6471 = vrot.lane.b32.xlu0 %v5858, 126
    %v6472 = vpop.permute.xlu0 %6471
    %6473 = vrot.lane.b32.xlu0 %v5859, 126
    %v6474 = vpop.permute.xlu0 %6473
    %6475 = vrot.lane.b32.xlu0 %v5860, 126
    %v6476 = vpop.permute.xlu0 %6475
    %6477 = vrot.lane.b32.xlu0 %v5861, 126
    %v6478 = vpop.permute.xlu0 %6477
    %6479 = vrot.lane.b32.xlu0 %v5862, 126
    %v6480 = vpop.permute.xlu0 %6479
    %6481 = vrot.lane.b32.xlu0 %v5863, 126
    %v6482 = vpop.permute.xlu0 %6481
    %6483 = vrot.lane.b32.xlu0 %v5864, 126
    %v6484 = vpop.permute.xlu0 %6483
    %6485 = vrot.lane.b32.xlu0 %v5865, 126
    %v6486 = vpop.permute.xlu0 %6485
    %6487 = vrot.lane.b32.xlu0 %v5866, 126
    %v6488 = vpop.permute.xlu0 %6487
    %6489 = vrot.lane.b32.xlu0 %v5867, 126
    %v6490 = vpop.permute.xlu0 %6489
    %6491 = vrot.lane.b32.xlu0 %v5868, 126
    %v6492 = vpop.permute.xlu0 %6491
    %6493 = vrot.lane.b32.xlu0 %v5869, 126
    %v6494 = vpop.permute.xlu0 %6493
    %6495 = vrot.lane.b32.xlu0 %v5870, 126
    %v6496 = vpop.permute.xlu0 %6495
    %6497 = vrot.lane.b32.xlu0 %v5871, 126
    %v6498 = vpop.permute.xlu0 %6497
    %6499 = vrot.lane.b32.xlu0 %v5872, 126
    %v6500 = vpop.permute.xlu0 %6499
    %6501 = vrot.lane.b32.xlu0 %v5873, 126
    %v6502 = vpop.permute.xlu0 %6501
    %6503 = vrot.lane.b32.xlu0 %v5874, 126
    %v6504 = vpop.permute.xlu0 %6503
    %6505 = vrot.lane.b32.xlu0 %v5875, 126
    %v6506 = vpop.permute.xlu0 %6505
    %6507 = vrot.lane.b32.xlu0 %v5876, 126
    %v6508 = vpop.permute.xlu0 %6507
    %6509 = vrot.lane.b32.xlu0 %v5877, 126
    %v6510 = vpop.permute.xlu0 %6509
    %6511 = vrot.lane.b32.xlu0 %v5878, 126
    %v6512 = vpop.permute.xlu0 %6511
    %6513 = vrot.lane.b32.xlu0 %v5879, 126
    %v6514 = vpop.permute.xlu0 %6513
    %6515 = vrot.lane.b32.xlu0 %v5880, 126
    %v6516 = vpop.permute.xlu0 %6515
    %6517 = vrot.lane.b32.xlu0 %v5881, 126
    %v6518 = vpop.permute.xlu0 %6517
    %6519 = vrot.lane.b32.xlu0 %v5882, 126
    %v6520 = vpop.permute.xlu0 %6519
    %6521 = vrot.lane.b32.xlu0 %v5883, 126
    %v6522 = vpop.permute.xlu0 %6521
    %6523 = vrot.lane.b32.xlu0 %v5884, 126
    %v6524 = vpop.permute.xlu0 %6523
    %6525 = vrot.lane.b32.xlu0 %v5885, 126
    %v6526 = vpop.permute.xlu0 %6525
    %6527 = vrot.lane.b32.xlu0 %v5886, 126
    %v6528 = vpop.permute.xlu0 %6527
    %6529 = vrot.lane.b32.xlu0 %v5887, 126
    %v6530 = vpop.permute.xlu0 %6529
    %6531 = vrot.lane.b32.xlu0 %v5888, 126
    %v6532 = vpop.permute.xlu0 %6531
    %v6590 = vsel %vm5946, %v6412, 0
    %v6593 = vsel %vm5946, %v6416, 0
    %v6596 = vsel %vm5946, %v6420, 0
    %6598 = vmatpush.msra.mxu0 %v6452
    %6599 = vmatpush.msra.mxu0 %v6450
    %6600 = vmatpush.msra.mxu0 %v6448
    %6601 = vmatpush.msra.mxu0 %v6446
    %6602 = vmatpush.msra.mxu0 %v6444
    %6603 = vmatpush.msra.mxu0 %v6442
    %6604 = vmatpush.msra.mxu0 %v6440
    %6605 = vmatpush.msra.mxu0 %v6438
    %6606 = vmatpush.msra.mxu0 %v6436
    %6607 = vmatpush.msra.mxu0 %v6434
    %6608 = vmatpush.msra.mxu0 %v6432
    %6609 = vmatpush.msra.mxu0 %v6430
    %6610 = vmatpush.msra.mxu0 %v6428
    %6611 = vmatpush.msra.mxu0 %v6426
    %6612 = vmatpush.msra.mxu0 %v6424
    %6613 = vmatpush.msra.mxu0 %v6422
    %6614 = vmatmul.f32.gmra.mxu0 %v6409
    %v6615 = vpop.f32.mrf.mxu0
    %v6616 = vadd.f32 0.0, %v6615
    %6617 = vmatmul.f32.gmra.mxu0 %v6413
    %v6618 = vpop.f32.mrf.mxu0
    %v6619 = vadd.f32 0.0, %v6618
    %6620 = vmatmul.f32.gmra.mxu0 %v6417
    %v6621 = vpop.f32.mrf.mxu0
    %v6622 = vadd.f32 0.0, %v6621
    %6623 = vdwg.mxu0
    %6624 = vmatpush.msra.mxu0 %v6484
    %6625 = vmatpush.msra.mxu0 %v6482
    %6626 = vmatpush.msra.mxu0 %v6480
    %6627 = vmatpush.msra.mxu0 %v6478
    %6628 = vmatpush.msra.mxu0 %v6476
    %6629 = vmatpush.msra.mxu0 %v6474
    %6630 = vmatpush.msra.mxu0 %v6472
    %6631 = vmatpush.msra.mxu0 %v6470
    %6632 = vmatpush.msra.mxu0 %v6468
    %6633 = vmatpush.msra.mxu0 %v6466
    %6634 = vmatpush.msra.mxu0 %v6464
    %6635 = vmatpush.msra.mxu0 %v6462
    %6636 = vmatpush.msra.mxu0 %v6460
    %6637 = vmatpush.msra.mxu0 %v6458
    %6638 = vmatpush.msra.mxu0 %v6456
    %6639 = vmatpush.msra.mxu0 %v6454
    %6640 = vmatmul.f32.gmra.mxu0 %v6410
    %v6641 = vpop.f32.mrf.mxu0
    %v6642 = vadd.f32 %v6616, %v6641
    %6643 = vmatmul.f32.gmra.mxu0 %v6414
    %v6644 = vpop.f32.mrf.mxu0
    %v6645 = vadd.f32 %v6619, %v6644
    %6646 = vmatmul.f32.gmra.mxu0 %v6418
    %v6647 = vpop.f32.mrf.mxu0
    %v6648 = vadd.f32 %v6622, %v6647
    %6649 = vdwg.mxu0
    %6650 = vmatpush.msra.mxu0 %v6516
    %6651 = vmatpush.msra.mxu0 %v6514
    %6652 = vmatpush.msra.mxu0 %v6512
    %6653 = vmatpush.msra.mxu0 %v6510
    %6654 = vmatpush.msra.mxu0 %v6508
    %6655 = vmatpush.msra.mxu0 %v6506
    %6656 = vmatpush.msra.mxu0 %v6504
    %6657 = vmatpush.msra.mxu0 %v6502
    %6658 = vmatpush.msra.mxu0 %v6500
    %6659 = vmatpush.msra.mxu0 %v6498
    %6660 = vmatpush.msra.mxu0 %v6496
    %6661 = vmatpush.msra.mxu0 %v6494
    %6662 = vmatpush.msra.mxu0 %v6492
    %6663 = vmatpush.msra.mxu0 %v6490
    %6664 = vmatpush.msra.mxu0 %v6488
    %6665 = vmatpush.msra.mxu0 %v6486
    %6666 = vmatmul.f32.gmra.mxu0 %v6411
    %v6667 = vpop.f32.mrf.mxu0
    %v6668 = vadd.f32 %v6642, %v6667
    %6669 = vmatmul.f32.gmra.mxu0 %v6415
    %v6670 = vpop.f32.mrf.mxu0
    %v6671 = vadd.f32 %v6645, %v6670
    %6672 = vmatmul.f32.gmra.mxu0 %v6419
    %v6673 = vpop.f32.mrf.mxu0
    %v6674 = vadd.f32 %v6648, %v6673
    %6675 = vdwg.mxu0
    %6676 = vmatpush.msra.mxu0 0.0
    %6677 = vmatpush.msra.mxu0 0.0
    %6678 = vmatpush.msra.mxu0 0.0
    %6679 = vmatpush.msra.mxu0 0.0
    %6680 = vmatpush.msra.mxu0 0.0
    %6681 = vmatpush.msra.mxu0 0.0
    %6682 = vmatpush.msra.mxu0 0.0
    %6683 = vmatpush.msra.mxu0 0.0
    %6684 = vmatpush.msra.mxu0 %v6532
    %6685 = vmatpush.msra.mxu0 %v6530
    %6686 = vmatpush.msra.mxu0 %v6528
    %6687 = vmatpush.msra.mxu0 %v6526
    %6688 = vmatpush.msra.mxu0 %v6524
    %6689 = vmatpush.msra.mxu0 %v6522
    %6690 = vmatpush.msra.mxu0 %v6520
    %6691 = vmatpush.msra.mxu0 %v6518
    %6692 = vmatmul.f32.gmra.mxu0 %v6590
    %v6693 = vpop.f32.mrf.mxu0
    %v6694 = vadd.f32 %v6668, %v6693
    %6695 = vmatmul.f32.gmra.mxu0 %v6593
    %v6696 = vpop.f32.mrf.mxu0
    %v6697 = vadd.f32 %v6671, %v6696
    %6698 = vmatmul.f32.gmra.mxu0 %v6596
    %v6699 = vpop.f32.mrf.mxu0
    %v6700 = vadd.f32 %v6674, %v6699
    %6701 = vdwg.mxu0
    %v6702 = vadd.f32 %v6401, %v6694
    %v6703 = vadd.f32 %v6404, %v6697
    %v6704 = vadd.f32 %v6407, %v6700
    %v6705 = vld [vmem:[%s18] sm:$0xff]
    %v6706 = vld [vmem:[%s18 + $0x8] sm:$0xff]
    %v6707 = vld [vmem:[%s18 + $0x10] sm:$0xf]
    %6709 = vset.pattern.permute.xlu0 0
    %6710 = vperm.xlu0 %6709, %v6705
    %v6711 = vpop.permute.xlu0 %6710
    %6714 = vset.pattern.permute.xlu0 0
    %6715 = vperm.xlu0 %6714, %v6706
    %v6716 = vpop.permute.xlu0 %6715
    %6719 = vset.pattern.permute.xlu0 0
    %6720 = vperm.xlu0 %6719, %v6707
    %v6721 = vpop.permute.xlu0 %6720
    %v6723 = vadd.f32 %v6702, %v6711
    %v6724 = vadd.f32 %v6703, %v6716
    %v6725 = vadd.f32 %v6704, %v6721
    %v6726 = vxor.u32 %v6723, 2147483648
    %v6727 = vmul.f32 %v6726, 1.442695
    %v6728 = vpow.pop %v6727
    %v6729 = vadd.f32 %v6728, 1.0
    %v6730 = vrcp.pop %v6729
    %v6731 = vmul.f32 %v6729, %v6730
    %v6732 = vsub.f32 1.0, %v6731
    %v6733 = vmul.f32 %v6730, %v6732
    %v6734 = vadd.f32 %v6730, %v6733
    %vm6735 = vweird.f32 %v6729
    %vm6736 = vweird.f32 %v6730
    %vm6737 = vmor %vm6735, %vm6736
    %v6738 = vsel %vm6737, %v6730, %v6734
    %v6739 = vand.u32 2147483647, %v6729
    %vm6740 = vcmp.eq.f32.partialorder %v6739, 8.507059e+37
    %v6741 = vand.u32 %v6729, 2147483648
    %v6742 = vor.u32 1.1754944e-38, %v6741
    %v6743 = vsel %vm6740, %v6742, %v6738
    %v6744 = vmul.f32 1.0, %v6743
    %v6745 = vtanh.pop %v6723
    %v6746 = vtanh.pop %v6724
    %v6747 = vxor.u32 %v6724, 2147483648
    %v6748 = vmul.f32 %v6747, 1.442695
    %v6749 = vpow.pop %v6748
    %v6750 = vadd.f32 %v6749, 1.0
    %v6751 = vrcp.pop %v6750
    %v6752 = vmul.f32 %v6750, %v6751
    %v6753 = vsub.f32 1.0, %v6752
    %v6754 = vmul.f32 %v6751, %v6753
    %v6755 = vadd.f32 %v6751, %v6754
    %vm6756 = vweird.f32 %v6750
    %vm6757 = vweird.f32 %v6751
    %vm6758 = vmor %vm6756, %vm6757
    %v6759 = vsel %vm6758, %v6751, %v6755
    %v6760 = vand.u32 2147483647, %v6750
    %vm6761 = vcmp.eq.f32.partialorder %v6760, 8.507059e+37
    %v6762 = vand.u32 %v6750, 2147483648
    %v6763 = vor.u32 1.1754944e-38, %v6762
    %v6764 = vsel %vm6761, %v6763, %v6759
    %v6765 = vmul.f32 1.0, %v6764
    %v6766 = vxor.u32 %v6725, 2147483648
    %v6767 = vmul.f32 %v6766, 1.442695
    %v6768 = vpow.pop %v6767
    %v6769 = vadd.f32 %v6768, 1.0
    %v6770 = vrcp.pop %v6769
    %v6771 = vmul.f32 %v6769, %v6770
    %v6772 = vsub.f32 1.0, %v6771
    %v6773 = vmul.f32 %v6770, %v6772
    %v6774 = vadd.f32 %v6770, %v6773
    %vm6775 = vweird.f32 %v6769
    %vm6776 = vweird.f32 %v6770
    %vm6777 = vmor %vm6775, %vm6776
    %v6778 = vsel %vm6777, %v6770, %v6774
    %v6779 = vand.u32 2147483647, %v6769
    %vm6780 = vcmp.eq.f32.partialorder %v6779, 8.507059e+37
    %v6781 = vand.u32 %v6769, 2147483648
    %v6782 = vor.u32 1.1754944e-38, %v6781
    %v6783 = vsel %vm6780, %v6782, %v6778
    %v6784 = vmul.f32 1.0, %v6783
    %v6786 = vmul.f32 %v6744, %v3678
    %v6788 = vrot.slane %v6765, 5
    %v6790 = vmul.f32 %v6745, %v6788
    %v6791 = vmul.f32 %v6746, %v6788
    %vm6794 = vcmask 1042432
    %v6795 = vrot.slane %v6790, 5
    %v6796 = vrot.slane %v6791, 5
    %v6797 = vsel %vm6794, %v6795, %v6796
    %v6799 = vadd.f32 %v6786, %v6797
    %v6800 = vtanh.pop %v6799
    %v6802 = vrot.slane %v6800, 1
    %v6804 = vmul.f32 %v6765, %v6802
    %v6805 = vmul.f32 %v6784, %v6802
    %vm6806 = vcmask 36864
    %6807 = vst.msk [vmem:[%s23] sm:$0x1f] %vm6806, %v6799
    %vm6808 = vcmask 39943
    %6809 = vst.msk [vmem:[%s22 - $0x7] sm:$0x80] %vm6808, %v6804
    %vm6810 = vcmask 35840
    %6811 = vst.msk [vmem:[%s22 + $0x1] sm:$0xf] %vm6810, %v6805
    %v6812 = vld [vmem:[%s19] sm:$0xff]
    %v6813 = vld [vmem:[%s19 + $0x8] sm:$0xff]
    %v6814 = vld [vmem:[%s19 + $0x10] sm:$0xff]
    %v6815 = vld [vmem:[%s19 + $0x18] sm:$0xff]
    %v6816 = vld [vmem:[%s19 + $0x20] sm:$0xff]
    %v6817 = vld [vmem:[%s19 + $0x28] sm:$0xff]
    %v6818 = vld [vmem:[%s19 + $0x30] sm:$0xff]
    %v6819 = vld [vmem:[%s19 + $0x38] sm:$0xff]
    %v6820 = vld [vmem:[%s19 + $0x40] sm:$0xff]
    %v6821 = vld [vmem:[%s19 + $0x48] sm:$0xff]
    %v6822 = vld [vmem:[%s19 + $0x50] sm:$0xff]
    %v6823 = vld [vmem:[%s19 + $0x58] sm:$0xff]
    %v6824 = vld [vmem:[%s19 + $0x60] sm:$0xff]
    %v6825 = vld [vmem:[%s19 + $0x68] sm:$0xff]
    %v6826 = vld [vmem:[%s19 + $0x70] sm:$0xff]
    %v6827 = vld [vmem:[%s19 + $0x78] sm:$0xff]
    %v6828 = vld [vmem:[%s19 + $0x80] sm:$0xff]
    %v6829 = vld [vmem:[%s19 + $0x88] sm:$0xff]
    %v6830 = vld [vmem:[%s19 + $0x90] sm:$0xff]
    %v6831 = vld [vmem:[%s19 + $0x98] sm:$0xff]
    %v6832 = vld [vmem:[%s19 + $0xa0] sm:$0xff]
    %v6833 = vld [vmem:[%s19 + $0xa8] sm:$0xff]
    %v6834 = vld [vmem:[%s19 + $0xb0] sm:$0xff]
    %v6835 = vld [vmem:[%s19 + $0xb8] sm:$0xff]
    %v6836 = vld [vmem:[%s19 + $0xc0] sm:$0xff]
    %v6837 = vld [vmem:[%s19 + $0xc8] sm:$0xff]
    %v6838 = vld [vmem:[%s19 + $0xd0] sm:$0xff]
    %v6839 = vld [vmem:[%s19 + $0xd8] sm:$0xff]
    %v6840 = vld [vmem:[%s19 + $0xe0] sm:$0xff]
    %v6841 = vld [vmem:[%s19 + $0xe8] sm:$0xff]
    %v6842 = vld [vmem:[%s19 + $0xf0] sm:$0xff]
    %v6843 = vld [vmem:[%s19 + $0xf8] sm:$0xff]
    %v6844 = vld [vmem:[%s19 + $0x100] sm:$0xff]
    %v6845 = vld [vmem:[%s19 + $0x108] sm:$0xff]
    %v6846 = vld [vmem:[%s19 + $0x110] sm:$0xff]
    %v6847 = vld [vmem:[%s19 + $0x118] sm:$0xff]
    %v6848 = vld [vmem:[%s19 + $0x120] sm:$0xff]
    %v6849 = vld [vmem:[%s19 + $0x128] sm:$0xff]
    %v6850 = vld [vmem:[%s19 + $0x130] sm:$0xff]
    %v6851 = vld [vmem:[%s19 + $0x138] sm:$0xff]
    %v6852 = vld [vmem:[%s19 + $0x140] sm:$0xff]
    %v6853 = vld [vmem:[%s19 + $0x148] sm:$0xff]
    %v6854 = vld [vmem:[%s19 + $0x150] sm:$0xff]
    %v6855 = vld [vmem:[%s19 + $0x158] sm:$0xff]
    %v6856 = vld [vmem:[%s19 + $0x160] sm:$0xff]
    %v6857 = vld [vmem:[%s19 + $0x168] sm:$0xff]
    %v6858 = vld [vmem:[%s19 + $0x170] sm:$0xff]
    %v6859 = vld [vmem:[%s19 + $0x178] sm:$0xff]
    %v6860 = vld [vmem:[%s19 + $0x180] sm:$0xff]
    %v6861 = vld [vmem:[%s19 + $0x188] sm:$0xff]
    %v6862 = vld [vmem:[%s19 + $0x190] sm:$0xff]
    %v6863 = vld [vmem:[%s19 + $0x198] sm:$0xff]
    %v6864 = vld [vmem:[%s19 + $0x1a0] sm:$0xff]
    %v6865 = vld [vmem:[%s19 + $0x1a8] sm:$0xff]
    %v6866 = vld [vmem:[%s19 + $0x1b0] sm:$0xff]
    %v6867 = vld [vmem:[%s19 + $0x1b8] sm:$0xff]
    %v6868 = vld [vmem:[%s19 + $0x1c0] sm:$0xff]
    %v6869 = vld [vmem:[%s19 + $0x1c8] sm:$0xff]
    %v6870 = vld [vmem:[%s19 + $0x1d0] sm:$0xff]
    %v6871 = vld [vmem:[%s19 + $0x1d8] sm:$0xff]
    %v6872 = vld [vmem:[%s19 + $0x1e0] sm:$0xff]
    %v6873 = vld [vmem:[%s19 + $0x1e8] sm:$0xff]
    %v6874 = vld [vmem:[%s19 + $0x1f0] sm:$0xff]
    %v6875 = vld [vmem:[%s19 + $0x1f8] sm:$0xff]
    %v6876 = vld [vmem:[%s19 + $0x200] sm:$0xff]
    %v6877 = vld [vmem:[%s19 + $0x208] sm:$0xff]
    %v6878 = vld [vmem:[%s19 + $0x210] sm:$0xff]
    %v6879 = vld [vmem:[%s19 + $0x218] sm:$0xff]
    %v6880 = vld [vmem:[%s19 + $0x220] sm:$0xff]
    %v6881 = vld [vmem:[%s19 + $0x228] sm:$0xff]
    %v6882 = vld [vmem:[%s19 + $0x230] sm:$0xff]
    %v6883 = vld [vmem:[%s19 + $0x238] sm:$0xff]
    %v6884 = vld [vmem:[%s19 + $0x240] sm:$0xff]
    %v6885 = vld [vmem:[%s19 + $0x248] sm:$0xff]
    %v6886 = vld [vmem:[%s19 + $0x250] sm:$0xff]
    %v6887 = vld [vmem:[%s19 + $0x258] sm:$0xff]
    %v6888 = vld [vmem:[%s19 + $0x260] sm:$0xff]
    %v6889 = vld [vmem:[%s19 + $0x268] sm:$0xff]
    %v6890 = vld [vmem:[%s19 + $0x270] sm:$0xff]
    %v6891 = vld [vmem:[%s19 + $0x278] sm:$0xff]
    %v6892 = vld [vmem:[%s19 + $0x280] sm:$0xff]
    %v6893 = vld [vmem:[%s19 + $0x288] sm:$0xff]
    %v6894 = vld [vmem:[%s19 + $0x290] sm:$0xff]
    %v6895 = vld [vmem:[%s19 + $0x298] sm:$0xff]
    %v6896 = vld [vmem:[%s19 + $0x2a0] sm:$0xff]
    %v6897 = vld [vmem:[%s19 + $0x2a8] sm:$0xff]
    %v6898 = vld [vmem:[%s19 + $0x2b0] sm:$0xff]
    %v6899 = vld [vmem:[%s19 + $0x2b8] sm:$0xff]
    %v6900 = vld [vmem:[%s19 + $0x2c0] sm:$0xff]
    %v6901 = vld [vmem:[%s19 + $0x2c8] sm:$0xff]
    %v6902 = vld [vmem:[%s19 + $0x2d0] sm:$0xff]
    %v6903 = vld [vmem:[%s19 + $0x2d8] sm:$0xff]
    %v6904 = vld [vmem:[%s19 + $0x2e0] sm:$0xff]
    %v6905 = vld [vmem:[%s19 + $0x2e8] sm:$0xff]
    %v6906 = vld [vmem:[%s19 + $0x2f0] sm:$0xff]
    %v6907 = vld [vmem:[%s19 + $0x2f8] sm:$0xff]
    %v6908 = vld [vmem:[%s19 + $0x300] sm:$0xff]
    %v6909 = vld [vmem:[%s19 + $0x308] sm:$0xf]
    %v6912 = vrot.slane %v6804, 7
    %v6913 = vrot.slane %v6805, 7
    %v6914 = vsel %vm726, %v6912, %v6913
    %v6916 = vsel %vm1558, %v6812, 0
    %v6919 = vsel %vm1558, %v6813, 0
    %v6922 = vsel %vm1558, %v6814, 0
    %v6925 = vsel %vm1558, %v6815, 0
    %v6928 = vsel %vm1558, %v6816, 0
    %v6931 = vsel %vm1558, %v6817, 0
    %v6934 = vsel %vm1558, %v6818, 0
    %v6937 = vsel %vm1558, %v6819, 0
    %v6940 = vsel %vm1558, %v6820, 0
    %v6943 = vsel %vm1558, %v6821, 0
    %v6946 = vsel %vm1558, %v6822, 0
    %v6949 = vsel %vm1558, %v6823, 0
    %v6952 = vsel %vm1558, %v6824, 0
    %v6955 = vsel %vm1558, %v6825, 0
    %v6958 = vsel %vm1558, %v6826, 0
    %v6961 = vsel %vm1558, %v6827, 0
    %v6964 = vsel %vm1558, %v6828, 0
    %v6967 = vsel %vm1558, %v6829, 0
    %v6970 = vsel %vm1558, %v6830, 0
    %v6973 = vsel %vm1558, %v6831, 0
    %v6976 = vsel %vm1558, %v6832, 0
    %v6979 = vsel %vm1558, %v6833, 0
    %v6982 = vsel %vm1558, %v6834, 0
    %v6985 = vsel %vm1558, %v6835, 0
    %v6988 = vsel %vm1558, %v6836, 0
    %v6991 = vsel %vm1558, %v6837, 0
    %v6994 = vsel %vm1558, %v6838, 0
    %v6997 = vsel %vm1558, %v6839, 0
    %v7000 = vsel %vm1558, %v6840, 0
    %v7003 = vsel %vm1558, %v6841, 0
    %v7006 = vsel %vm1558, %v6842, 0
    %v7009 = vsel %vm1558, %v6843, 0
    %v7012 = vsel %vm1558, %v6844, 0
    %v7015 = vsel %vm1558, %v6845, 0
    %v7018 = vsel %vm1558, %v6846, 0
    %v7021 = vsel %vm1558, %v6847, 0
    %v7024 = vsel %vm1558, %v6848, 0
    %v7027 = vsel %vm1558, %v6849, 0
    %v7030 = vsel %vm1558, %v6850, 0
    %v7033 = vsel %vm1558, %v6851, 0
    %v7036 = vsel %vm1558, %v6852, 0
    %v7039 = vsel %vm1558, %v6853, 0
    %v7042 = vsel %vm1558, %v6854, 0
    %v7045 = vsel %vm1558, %v6855, 0
    %v7048 = vsel %vm1558, %v6856, 0
    %v7051 = vsel %vm1558, %v6857, 0
    %v7054 = vsel %vm1558, %v6858, 0
    %v7057 = vsel %vm1558, %v6859, 0
    %v7060 = vsel %vm1558, %v6860, 0
    %v7063 = vsel %vm1558, %v6861, 0
    %v7066 = vsel %vm1558, %v6862, 0
    %v7069 = vsel %vm1558, %v6863, 0
    %v7072 = vsel %vm1558, %v6864, 0
    %v7075 = vsel %vm1558, %v6865, 0
    %v7078 = vsel %vm1558, %v6866, 0
    %v7081 = vsel %vm1558, %v6867, 0
    %v7084 = vsel %vm1558, %v6868, 0
    %v7087 = vsel %vm1558, %v6869, 0
    %v7090 = vsel %vm1558, %v6870, 0
    %v7093 = vsel %vm1558, %v6871, 0
    %v7096 = vsel %vm1558, %v6872, 0
    %v7099 = vsel %vm1558, %v6873, 0
    %v7102 = vsel %vm1558, %v6874, 0
    %v7105 = vsel %vm1558, %v6875, 0
    %v7108 = vsel %vm1558, %v6876, 0
    %v7111 = vsel %vm1558, %v6877, 0
    %v7114 = vsel %vm1558, %v6878, 0
    %v7117 = vsel %vm1558, %v6879, 0
    %v7120 = vsel %vm1558, %v6880, 0
    %v7123 = vsel %vm1558, %v6881, 0
    %v7126 = vsel %vm1558, %v6882, 0
    %v7129 = vsel %vm1558, %v6883, 0
    %v7132 = vsel %vm1558, %v6884, 0
    %v7135 = vsel %vm1558, %v6885, 0
    %v7138 = vsel %vm1558, %v6886, 0
    %v7141 = vsel %vm1558, %v6887, 0
    %v7144 = vsel %vm1558, %v6888, 0
    %v7147 = vsel %vm1558, %v6889, 0
    %v7150 = vsel %vm1558, %v6890, 0
    %v7153 = vsel %vm1558, %v6891, 0
    %v7156 = vsel %vm1558, %v6892, 0
    %v7159 = vsel %vm1558, %v6893, 0
    %v7162 = vsel %vm1558, %v6894, 0
    %v7165 = vsel %vm1558, %v6895, 0
    %v7168 = vsel %vm1558, %v6896, 0
    %v7171 = vsel %vm1558, %v6897, 0
    %v7174 = vsel %vm1558, %v6898, 0
    %v7177 = vsel %vm1558, %v6899, 0
    %v7180 = vsel %vm1558, %v6900, 0
    %v7183 = vsel %vm1558, %v6901, 0
    %v7186 = vsel %vm1558, %v6902, 0
    %v7189 = vsel %vm1558, %v6903, 0
    %v7192 = vsel %vm1558, %v6904, 0
    %v7195 = vsel %vm1558, %v6905, 0
    %v7198 = vsel %vm1558, %v6906, 0
    %v7201 = vsel %vm1558, %v6907, 0
    %v7204 = vsel %vm1558, %v6908, 0
    %v7207 = vsel %vm1558, %v6909, 0
    %v7209 = vsel %vm1671, %v6914, 0
    %7211 = vmatpush.msra.mxu0 0.0
    %7212 = vmatpush.msra.mxu0 0.0
    %7213 = vmatpush.msra.mxu0 0.0
    %7214 = vmatpush.msra.mxu0 0.0
    %7215 = vmatpush.msra.mxu0 0.0
    %7216 = vmatpush.msra.mxu0 0.0
    %7217 = vmatpush.msra.mxu0 0.0
    %7218 = vmatpush.msra.mxu0 0.0
    %7219 = vmatpush.msra.mxu0 0.0
    %7220 = vmatpush.msra.mxu0 0.0
    %7221 = vmatpush.msra.mxu0 0.0
    %7222 = vmatpush.msra.mxu0 0.0
    %7223 = vmatpush.msra.mxu0 0.0
    %7224 = vmatpush.msra.mxu0 0.0
    %7225 = vmatpush.msra.mxu0 0.0
    %7226 = vmatpush.msra.mxu0 %v7209
    %7227 = vmatmul.f32.gmra.mxu0 %v6916
    %v7228 = vpop.f32.mrf.mxu0
    %v7229 = vadd.f32 0.0, %v7228
    %7230 = vmatmul.f32.gmra.mxu0 %v6919
    %v7231 = vpop.f32.mrf.mxu0
    %v7232 = vadd.f32 0.0, %v7231
    %7233 = vmatmul.f32.gmra.mxu0 %v6922
    %v7234 = vpop.f32.mrf.mxu0
    %v7235 = vadd.f32 0.0, %v7234
    %7236 = vmatmul.f32.gmra.mxu0 %v6925
    %v7237 = vpop.f32.mrf.mxu0
    %v7238 = vadd.f32 0.0, %v7237
    %7239 = vmatmul.f32.gmra.mxu0 %v6928
    %v7240 = vpop.f32.mrf.mxu0
    %v7241 = vadd.f32 0.0, %v7240
    %7242 = vmatmul.f32.gmra.mxu0 %v6931
    %v7243 = vpop.f32.mrf.mxu0
    %v7244 = vadd.f32 0.0, %v7243
    %7245 = vmatmul.f32.gmra.mxu0 %v6934
    %v7246 = vpop.f32.mrf.mxu0
    %v7247 = vadd.f32 0.0, %v7246
    %7248 = vmatmul.f32.gmra.mxu0 %v6937
    %v7249 = vpop.f32.mrf.mxu0
    %v7250 = vadd.f32 0.0, %v7249
    %7251 = vmatmul.f32.gmra.mxu0 %v6940
    %v7252 = vpop.f32.mrf.mxu0
    %v7253 = vadd.f32 0.0, %v7252
    %7254 = vmatmul.f32.gmra.mxu0 %v6943
    %v7255 = vpop.f32.mrf.mxu0
    %v7256 = vadd.f32 0.0, %v7255
    %7257 = vmatmul.f32.gmra.mxu0 %v6946
    %v7258 = vpop.f32.mrf.mxu0
    %v7259 = vadd.f32 0.0, %v7258
    %7260 = vmatmul.f32.gmra.mxu0 %v6949
    %v7261 = vpop.f32.mrf.mxu0
    %v7262 = vadd.f32 0.0, %v7261
    %7263 = vmatmul.f32.gmra.mxu0 %v6952
    %v7264 = vpop.f32.mrf.mxu0
    %v7265 = vadd.f32 0.0, %v7264
    %7266 = vmatmul.f32.gmra.mxu0 %v6955
    %v7267 = vpop.f32.mrf.mxu0
    %v7268 = vadd.f32 0.0, %v7267
    %7269 = vmatmul.f32.gmra.mxu0 %v6958
    %v7270 = vpop.f32.mrf.mxu0
    %v7271 = vadd.f32 0.0, %v7270
    %7272 = vmatmul.f32.gmra.mxu0 %v6961
    %v7273 = vpop.f32.mrf.mxu0
    %v7274 = vadd.f32 0.0, %v7273
    %7275 = vmatmul.f32.gmra.mxu0 %v6964
    %v7276 = vpop.f32.mrf.mxu0
    %v7277 = vadd.f32 0.0, %v7276
    %7278 = vmatmul.f32.gmra.mxu0 %v6967
    %v7279 = vpop.f32.mrf.mxu0
    %v7280 = vadd.f32 0.0, %v7279
    %7281 = vmatmul.f32.gmra.mxu0 %v6970
    %v7282 = vpop.f32.mrf.mxu0
    %v7283 = vadd.f32 0.0, %v7282
    %7284 = vmatmul.f32.gmra.mxu0 %v6973
    %v7285 = vpop.f32.mrf.mxu0
    %v7286 = vadd.f32 0.0, %v7285
    %7287 = vmatmul.f32.gmra.mxu0 %v6976
    %v7288 = vpop.f32.mrf.mxu0
    %v7289 = vadd.f32 0.0, %v7288
    %7290 = vmatmul.f32.gmra.mxu0 %v6979
    %v7291 = vpop.f32.mrf.mxu0
    %v7292 = vadd.f32 0.0, %v7291
    %7293 = vmatmul.f32.gmra.mxu0 %v6982
    %v7294 = vpop.f32.mrf.mxu0
    %v7295 = vadd.f32 0.0, %v7294
    %7296 = vmatmul.f32.gmra.mxu0 %v6985
    %v7297 = vpop.f32.mrf.mxu0
    %v7298 = vadd.f32 0.0, %v7297
    %7299 = vmatmul.f32.gmra.mxu0 %v6988
    %v7300 = vpop.f32.mrf.mxu0
    %v7301 = vadd.f32 0.0, %v7300
    %7302 = vmatmul.f32.gmra.mxu0 %v6991
    %v7303 = vpop.f32.mrf.mxu0
    %v7304 = vadd.f32 0.0, %v7303
    %7305 = vmatmul.f32.gmra.mxu0 %v6994
    %v7306 = vpop.f32.mrf.mxu0
    %v7307 = vadd.f32 0.0, %v7306
    %7308 = vmatmul.f32.gmra.mxu0 %v6997
    %v7309 = vpop.f32.mrf.mxu0
    %v7310 = vadd.f32 0.0, %v7309
    %7311 = vmatmul.f32.gmra.mxu0 %v7000
    %v7312 = vpop.f32.mrf.mxu0
    %v7313 = vadd.f32 0.0, %v7312
    %7314 = vmatmul.f32.gmra.mxu0 %v7003
    %v7315 = vpop.f32.mrf.mxu0
    %v7316 = vadd.f32 0.0, %v7315
    %7317 = vmatmul.f32.gmra.mxu0 %v7006
    %v7318 = vpop.f32.mrf.mxu0
    %v7319 = vadd.f32 0.0, %v7318
    %7320 = vmatmul.f32.gmra.mxu0 %v7009
    %v7321 = vpop.f32.mrf.mxu0
    %v7322 = vadd.f32 0.0, %v7321
    %7323 = vmatmul.f32.gmra.mxu0 %v7012
    %v7324 = vpop.f32.mrf.mxu0
    %v7325 = vadd.f32 0.0, %v7324
    %7326 = vmatmul.f32.gmra.mxu0 %v7015
    %v7327 = vpop.f32.mrf.mxu0
    %v7328 = vadd.f32 0.0, %v7327
    %7329 = vmatmul.f32.gmra.mxu0 %v7018
    %v7330 = vpop.f32.mrf.mxu0
    %v7331 = vadd.f32 0.0, %v7330
    %7332 = vmatmul.f32.gmra.mxu0 %v7021
    %v7333 = vpop.f32.mrf.mxu0
    %v7334 = vadd.f32 0.0, %v7333
    %7335 = vmatmul.f32.gmra.mxu0 %v7024
    %v7336 = vpop.f32.mrf.mxu0
    %v7337 = vadd.f32 0.0, %v7336
    %7338 = vmatmul.f32.gmra.mxu0 %v7027
    %v7339 = vpop.f32.mrf.mxu0
    %v7340 = vadd.f32 0.0, %v7339
    %7341 = vmatmul.f32.gmra.mxu0 %v7030
    %v7342 = vpop.f32.mrf.mxu0
    %v7343 = vadd.f32 0.0, %v7342
    %7344 = vmatmul.f32.gmra.mxu0 %v7033
    %v7345 = vpop.f32.mrf.mxu0
    %v7346 = vadd.f32 0.0, %v7345
    %7347 = vmatmul.f32.gmra.mxu0 %v7036
    %v7348 = vpop.f32.mrf.mxu0
    %v7349 = vadd.f32 0.0, %v7348
    %7350 = vmatmul.f32.gmra.mxu0 %v7039
    %v7351 = vpop.f32.mrf.mxu0
    %v7352 = vadd.f32 0.0, %v7351
    %7353 = vmatmul.f32.gmra.mxu0 %v7042
    %v7354 = vpop.f32.mrf.mxu0
    %v7355 = vadd.f32 0.0, %v7354
    %7356 = vmatmul.f32.gmra.mxu0 %v7045
    %v7357 = vpop.f32.mrf.mxu0
    %v7358 = vadd.f32 0.0, %v7357
    %7359 = vmatmul.f32.gmra.mxu0 %v7048
    %v7360 = vpop.f32.mrf.mxu0
    %v7361 = vadd.f32 0.0, %v7360
    %7362 = vmatmul.f32.gmra.mxu0 %v7051
    %v7363 = vpop.f32.mrf.mxu0
    %v7364 = vadd.f32 0.0, %v7363
    %7365 = vmatmul.f32.gmra.mxu0 %v7054
    %v7366 = vpop.f32.mrf.mxu0
    %v7367 = vadd.f32 0.0, %v7366
    %7368 = vmatmul.f32.gmra.mxu0 %v7057
    %v7369 = vpop.f32.mrf.mxu0
    %v7370 = vadd.f32 0.0, %v7369
    %7371 = vmatmul.f32.gmra.mxu0 %v7060
    %v7372 = vpop.f32.mrf.mxu0
    %v7373 = vadd.f32 0.0, %v7372
    %7374 = vmatmul.f32.gmra.mxu0 %v7063
    %v7375 = vpop.f32.mrf.mxu0
    %v7376 = vadd.f32 0.0, %v7375
    %7377 = vmatmul.f32.gmra.mxu0 %v7066
    %v7378 = vpop.f32.mrf.mxu0
    %v7379 = vadd.f32 0.0, %v7378
    %7380 = vmatmul.f32.gmra.mxu0 %v7069
    %v7381 = vpop.f32.mrf.mxu0
    %v7382 = vadd.f32 0.0, %v7381
    %7383 = vmatmul.f32.gmra.mxu0 %v7072
    %v7384 = vpop.f32.mrf.mxu0
    %v7385 = vadd.f32 0.0, %v7384
    %7386 = vmatmul.f32.gmra.mxu0 %v7075
    %v7387 = vpop.f32.mrf.mxu0
    %v7388 = vadd.f32 0.0, %v7387
    %7389 = vmatmul.f32.gmra.mxu0 %v7078
    %v7390 = vpop.f32.mrf.mxu0
    %v7391 = vadd.f32 0.0, %v7390
    %7392 = vmatmul.f32.gmra.mxu0 %v7081
    %v7393 = vpop.f32.mrf.mxu0
    %v7394 = vadd.f32 0.0, %v7393
    %7395 = vmatmul.f32.gmra.mxu0 %v7084
    %v7396 = vpop.f32.mrf.mxu0
    %v7397 = vadd.f32 0.0, %v7396
    %7398 = vmatmul.f32.gmra.mxu0 %v7087
    %v7399 = vpop.f32.mrf.mxu0
    %v7400 = vadd.f32 0.0, %v7399
    %7401 = vmatmul.f32.gmra.mxu0 %v7090
    %v7402 = vpop.f32.mrf.mxu0
    %v7403 = vadd.f32 0.0, %v7402
    %7404 = vmatmul.f32.gmra.mxu0 %v7093
    %v7405 = vpop.f32.mrf.mxu0
    %v7406 = vadd.f32 0.0, %v7405
    %7407 = vmatmul.f32.gmra.mxu0 %v7096
    %v7408 = vpop.f32.mrf.mxu0
    %v7409 = vadd.f32 0.0, %v7408
    %7410 = vmatmul.f32.gmra.mxu0 %v7099
    %v7411 = vpop.f32.mrf.mxu0
    %v7412 = vadd.f32 0.0, %v7411
    %7413 = vmatmul.f32.gmra.mxu0 %v7102
    %v7414 = vpop.f32.mrf.mxu0
    %v7415 = vadd.f32 0.0, %v7414
    %7416 = vmatmul.f32.gmra.mxu0 %v7105
    %v7417 = vpop.f32.mrf.mxu0
    %v7418 = vadd.f32 0.0, %v7417
    %7419 = vmatmul.f32.gmra.mxu0 %v7108
    %v7420 = vpop.f32.mrf.mxu0
    %v7421 = vadd.f32 0.0, %v7420
    %7422 = vmatmul.f32.gmra.mxu0 %v7111
    %v7423 = vpop.f32.mrf.mxu0
    %v7424 = vadd.f32 0.0, %v7423
    %7425 = vmatmul.f32.gmra.mxu0 %v7114
    %v7426 = vpop.f32.mrf.mxu0
    %v7427 = vadd.f32 0.0, %v7426
    %7428 = vmatmul.f32.gmra.mxu0 %v7117
    %v7429 = vpop.f32.mrf.mxu0
    %v7430 = vadd.f32 0.0, %v7429
    %7431 = vmatmul.f32.gmra.mxu0 %v7120
    %v7432 = vpop.f32.mrf.mxu0
    %v7433 = vadd.f32 0.0, %v7432
    %7434 = vmatmul.f32.gmra.mxu0 %v7123
    %v7435 = vpop.f32.mrf.mxu0
    %v7436 = vadd.f32 0.0, %v7435
    %7437 = vmatmul.f32.gmra.mxu0 %v7126
    %v7438 = vpop.f32.mrf.mxu0
    %v7439 = vadd.f32 0.0, %v7438
    %7440 = vmatmul.f32.gmra.mxu0 %v7129
    %v7441 = vpop.f32.mrf.mxu0
    %v7442 = vadd.f32 0.0, %v7441
    %7443 = vmatmul.f32.gmra.mxu0 %v7132
    %v7444 = vpop.f32.mrf.mxu0
    %v7445 = vadd.f32 0.0, %v7444
    %7446 = vmatmul.f32.gmra.mxu0 %v7135
    %v7447 = vpop.f32.mrf.mxu0
    %v7448 = vadd.f32 0.0, %v7447
    %7449 = vmatmul.f32.gmra.mxu0 %v7138
    %v7450 = vpop.f32.mrf.mxu0
    %v7451 = vadd.f32 0.0, %v7450
    %7452 = vmatmul.f32.gmra.mxu0 %v7141
    %v7453 = vpop.f32.mrf.mxu0
    %v7454 = vadd.f32 0.0, %v7453
    %7455 = vmatmul.f32.gmra.mxu0 %v7144
    %v7456 = vpop.f32.mrf.mxu0
    %v7457 = vadd.f32 0.0, %v7456
    %7458 = vmatmul.f32.gmra.mxu0 %v7147
    %v7459 = vpop.f32.mrf.mxu0
    %v7460 = vadd.f32 0.0, %v7459
    %7461 = vmatmul.f32.gmra.mxu0 %v7150
    %v7462 = vpop.f32.mrf.mxu0
    %v7463 = vadd.f32 0.0, %v7462
    %7464 = vmatmul.f32.gmra.mxu0 %v7153
    %v7465 = vpop.f32.mrf.mxu0
    %v7466 = vadd.f32 0.0, %v7465
    %7467 = vmatmul.f32.gmra.mxu0 %v7156
    %v7468 = vpop.f32.mrf.mxu0
    %v7469 = vadd.f32 0.0, %v7468
    %7470 = vmatmul.f32.gmra.mxu0 %v7159
    %v7471 = vpop.f32.mrf.mxu0
    %v7472 = vadd.f32 0.0, %v7471
    %7473 = vmatmul.f32.gmra.mxu0 %v7162
    %v7474 = vpop.f32.mrf.mxu0
    %v7475 = vadd.f32 0.0, %v7474
    %7476 = vmatmul.f32.gmra.mxu0 %v7165
    %v7477 = vpop.f32.mrf.mxu0
    %v7478 = vadd.f32 0.0, %v7477
    %7479 = vmatmul.f32.gmra.mxu0 %v7168
    %v7480 = vpop.f32.mrf.mxu0
    %v7481 = vadd.f32 0.0, %v7480
    %7482 = vmatmul.f32.gmra.mxu0 %v7171
    %v7483 = vpop.f32.mrf.mxu0
    %v7484 = vadd.f32 0.0, %v7483
    %7485 = vmatmul.f32.gmra.mxu0 %v7174
    %v7486 = vpop.f32.mrf.mxu0
    %v7487 = vadd.f32 0.0, %v7486
    %7488 = vmatmul.f32.gmra.mxu0 %v7177
    %v7489 = vpop.f32.mrf.mxu0
    %v7490 = vadd.f32 0.0, %v7489
    %7491 = vmatmul.f32.gmra.mxu0 %v7180
    %v7492 = vpop.f32.mrf.mxu0
    %v7493 = vadd.f32 0.0, %v7492
    %7494 = vmatmul.f32.gmra.mxu0 %v7183
    %v7495 = vpop.f32.mrf.mxu0
    %v7496 = vadd.f32 0.0, %v7495
    %7497 = vmatmul.f32.gmra.mxu0 %v7186
    %v7498 = vpop.f32.mrf.mxu0
    %v7499 = vadd.f32 0.0, %v7498
    %7500 = vmatmul.f32.gmra.mxu0 %v7189
    %v7501 = vpop.f32.mrf.mxu0
    %v7502 = vadd.f32 0.0, %v7501
    %7503 = vmatmul.f32.gmra.mxu0 %v7192
    %v7504 = vpop.f32.mrf.mxu0
    %v7505 = vadd.f32 0.0, %v7504
    %7506 = vmatmul.f32.gmra.mxu0 %v7195
    %v7507 = vpop.f32.mrf.mxu0
    %v7508 = vadd.f32 0.0, %v7507
    %7509 = vmatmul.f32.gmra.mxu0 %v7198
    %v7510 = vpop.f32.mrf.mxu0
    %v7511 = vadd.f32 0.0, %v7510
    %7512 = vmatmul.f32.gmra.mxu0 %v7201
    %v7513 = vpop.f32.mrf.mxu0
    %v7514 = vadd.f32 0.0, %v7513
    %7515 = vmatmul.f32.gmra.mxu0 %v7204
    %v7516 = vpop.f32.mrf.mxu0
    %v7517 = vadd.f32 0.0, %v7516
    %7518 = vmatmul.f32.gmra.mxu0 %v7207
    %v7519 = vpop.f32.mrf.mxu0
    %v7520 = vadd.f32 0.0, %v7519
    %7521 = vdwg.mxu0
    %v7522 = vld [vmem:[#allocation15] sm:$0x1f]
    %vm7534 = vcmask 1041408
    %v7535 = vrot.slane %v7256, 6
    %v7536 = vrot.slane %v7259, 6
    %v7537 = vsel %vm7534, %v7535, %v7536
    %v7538 = vrot.slane %v7262, 6
    %v7539 = vsel %vm7534, %v7536, %v7538
    %v7540 = vrot.slane %v7265, 6
    %v7541 = vsel %vm7534, %v7538, %v7540
    %v7542 = vrot.slane %v7268, 6
    %v7543 = vsel %vm7534, %v7540, %v7542
    %v7544 = vrot.slane %v7271, 6
    %v7545 = vsel %vm7534, %v7542, %v7544
    %v7546 = vrot.slane %v7274, 6
    %v7547 = vsel %vm7534, %v7544, %v7546
    %v7548 = vrot.slane %v7277, 6
    %v7549 = vsel %vm7534, %v7546, %v7548
    %v7550 = vrot.slane %v7280, 6
    %v7551 = vsel %vm7534, %v7548, %v7550
    %v7552 = vrot.slane %v7283, 6
    %v7553 = vsel %vm7534, %v7550, %v7552
    %v7554 = vrot.slane %v7286, 6
    %v7555 = vsel %vm7534, %v7552, %v7554
    %7557 = vrot.lane.b32.xlu0 %v7522, 102
    %v7558 = vpop.permute.xlu0 %7557
    %v7559 = vsel %vm1558, %v7537, 0
    %v7561 = vsel %vm1558, %v7539, 0
    %v7563 = vsel %vm1558, %v7541, 0
    %v7565 = vsel %vm1558, %v7543, 0
    %v7567 = vsel %vm1558, %v7545, 0
    %v7569 = vsel %vm1558, %v7547, 0
    %v7571 = vsel %vm1558, %v7549, 0
    %v7573 = vsel %vm1558, %v7551, 0
    %v7575 = vsel %vm1558, %v7553, 0
    %v7577 = vsel %vm1558, %v7555, 0
    %v7579 = vsel %vm1671, %v7558, 0
    %7581 = vmatpush.msra.mxu0 0.0
    %7582 = vmatpush.msra.mxu0 0.0
    %7583 = vmatpush.msra.mxu0 0.0
    %7584 = vmatpush.msra.mxu0 0.0
    %7585 = vmatpush.msra.mxu0 0.0
    %7586 = vmatpush.msra.mxu0 0.0
    %7587 = vmatpush.msra.mxu0 0.0
    %7588 = vmatpush.msra.mxu0 0.0
    %7589 = vmatpush.msra.mxu0 0.0
    %7590 = vmatpush.msra.mxu0 0.0
    %7591 = vmatpush.msra.mxu0 0.0
    %7592 = vmatpush.msra.mxu0 0.0
    %7593 = vmatpush.msra.mxu0 0.0
    %7594 = vmatpush.msra.mxu0 0.0
    %7595 = vmatpush.msra.mxu0 0.0
    %7596 = vmatpush.msra.mxu0 %v7579
    %7597 = vmatmul.f32.gmra.mxu0 %v7559
    %v7598 = vpop.f32.mrf.mxu0
    %v7599 = vadd.f32 0.0, %v7598
    %7600 = vmatmul.f32.gmra.mxu0 %v7561
    %v7601 = vpop.f32.mrf.mxu0
    %v7602 = vadd.f32 0.0, %v7601
    %7603 = vmatmul.f32.gmra.mxu0 %v7563
    %v7604 = vpop.f32.mrf.mxu0
    %v7605 = vadd.f32 0.0, %v7604
    %7606 = vmatmul.f32.gmra.mxu0 %v7565
    %v7607 = vpop.f32.mrf.mxu0
    %v7608 = vadd.f32 0.0, %v7607
    %7609 = vmatmul.f32.gmra.mxu0 %v7567
    %v7610 = vpop.f32.mrf.mxu0
    %v7611 = vadd.f32 0.0, %v7610
    %7612 = vmatmul.f32.gmra.mxu0 %v7569
    %v7613 = vpop.f32.mrf.mxu0
    %v7614 = vadd.f32 0.0, %v7613
    %7615 = vmatmul.f32.gmra.mxu0 %v7571
    %v7616 = vpop.f32.mrf.mxu0
    %v7617 = vadd.f32 0.0, %v7616
    %7618 = vmatmul.f32.gmra.mxu0 %v7573
    %v7619 = vpop.f32.mrf.mxu0
    %v7620 = vadd.f32 0.0, %v7619
    %7621 = vmatmul.f32.gmra.mxu0 %v7575
    %v7622 = vpop.f32.mrf.mxu0
    %v7623 = vadd.f32 0.0, %v7622
    %7624 = vmatmul.f32.gmra.mxu0 %v7577
    %v7625 = vpop.f32.mrf.mxu0
    %v7626 = vadd.f32 0.0, %v7625
    %7627 = vdwg.mxu0
    %v7629 = vsel %vm1558, %v7229, 0
    %v7632 = vsel %vm1558, %v7232, 0
    %v7635 = vsel %vm1558, %v7235, 0
    %v7638 = vsel %vm1558, %v7238, 0
    %v7641 = vsel %vm1558, %v7241, 0
    %v7644 = vsel %vm1558, %v7244, 0
    %v7647 = vsel %vm1558, %v7247, 0
    %v7650 = vsel %vm1558, %v7250, 0
    %v7653 = vsel %vm1558, %v7253, 0
    %v7655 = vsel %vm1558, %v7256, 0
    %v7657 = vsel %vm1671, %v7522, 0
    %7659 = vmatpush.msra.mxu0 0.0
    %7660 = vmatpush.msra.mxu0 0.0
    %7661 = vmatpush.msra.mxu0 0.0
    %7662 = vmatpush.msra.mxu0 0.0
    %7663 = vmatpush.msra.mxu0 0.0
    %7664 = vmatpush.msra.mxu0 0.0
    %7665 = vmatpush.msra.mxu0 0.0
    %7666 = vmatpush.msra.mxu0 0.0
    %7667 = vmatpush.msra.mxu0 0.0
    %7668 = vmatpush.msra.mxu0 0.0
    %7669 = vmatpush.msra.mxu0 0.0
    %7670 = vmatpush.msra.mxu0 0.0
    %7671 = vmatpush.msra.mxu0 0.0
    %7672 = vmatpush.msra.mxu0 0.0
    %7673 = vmatpush.msra.mxu0 0.0
    %7674 = vmatpush.msra.mxu0 %v7657
    %7675 = vmatmul.f32.gmra.mxu0 %v7629
    %v7676 = vpop.f32.mrf.mxu0
    %v7677 = vadd.f32 %v7599, %v7676
    %7678 = vmatmul.f32.gmra.mxu0 %v7632
    %v7679 = vpop.f32.mrf.mxu0
    %v7680 = vadd.f32 %v7602, %v7679
    %7681 = vmatmul.f32.gmra.mxu0 %v7635
    %v7682 = vpop.f32.mrf.mxu0
    %v7683 = vadd.f32 %v7605, %v7682
    %7684 = vmatmul.f32.gmra.mxu0 %v7638
    %v7685 = vpop.f32.mrf.mxu0
    %v7686 = vadd.f32 %v7608, %v7685
    %7687 = vmatmul.f32.gmra.mxu0 %v7641
    %v7688 = vpop.f32.mrf.mxu0
    %v7689 = vadd.f32 %v7611, %v7688
    %7690 = vmatmul.f32.gmra.mxu0 %v7644
    %v7691 = vpop.f32.mrf.mxu0
    %v7692 = vadd.f32 %v7614, %v7691
    %7693 = vmatmul.f32.gmra.mxu0 %v7647
    %v7694 = vpop.f32.mrf.mxu0
    %v7695 = vadd.f32 %v7617, %v7694
    %7696 = vmatmul.f32.gmra.mxu0 %v7650
    %v7697 = vpop.f32.mrf.mxu0
    %v7698 = vadd.f32 %v7620, %v7697
    %7699 = vmatmul.f32.gmra.mxu0 %v7653
    %v7700 = vpop.f32.mrf.mxu0
    %v7701 = vadd.f32 %v7623, %v7700
    %7702 = vmatmul.f32.gmra.mxu0 %v7655
    %v7703 = vpop.f32.mrf.mxu0
    %v7704 = vadd.f32 %v7626, %v7703
    %7705 = vdwg.mxu0
    %vm7716 = vcmask 1043456
    %v7717 = vrot.slane %v7286, 4
    %v7718 = vrot.slane %v7289, 4
    %v7719 = vsel %vm7716, %v7717, %v7718
    %v7720 = vrot.slane %v7292, 4
    %v7721 = vsel %vm7716, %v7718, %v7720
    %v7722 = vrot.slane %v7295, 4
    %v7723 = vsel %vm7716, %v7720, %v7722
    %v7724 = vrot.slane %v7298, 4
    %v7725 = vsel %vm7716, %v7722, %v7724
    %v7726 = vrot.slane %v7301, 4
    %v7727 = vsel %vm7716, %v7724, %v7726
    %v7728 = vrot.slane %v7304, 4
    %v7729 = vsel %vm7716, %v7726, %v7728
    %v7730 = vrot.slane %v7307, 4
    %v7731 = vsel %vm7716, %v7728, %v7730
    %v7732 = vrot.slane %v7310, 4
    %v7733 = vsel %vm7716, %v7730, %v7732
    %v7734 = vrot.slane %v7313, 4
    %v7735 = vsel %vm7716, %v7732, %v7734
    %v7736 = vrot.slane %v7316, 4
    %v7737 = vsel %vm7716, %v7734, %v7736
    %7738 = vrot.lane.b32.xlu0 %v7522, 76
    %v7739 = vpop.permute.xlu0 %7738
    %v7740 = vsel %vm1558, %v7719, 0
    %v7742 = vsel %vm1558, %v7721, 0
    %v7744 = vsel %vm1558, %v7723, 0
    %v7746 = vsel %vm1558, %v7725, 0
    %v7748 = vsel %vm1558, %v7727, 0
    %v7750 = vsel %vm1558, %v7729, 0
    %v7752 = vsel %vm1558, %v7731, 0
    %v7754 = vsel %vm1558, %v7733, 0
    %v7756 = vsel %vm1558, %v7735, 0
    %v7758 = vsel %vm1558, %v7737, 0
    %v7760 = vsel %vm1671, %v7739, 0
    %7762 = vmatpush.msra.mxu0 0.0
    %7763 = vmatpush.msra.mxu0 0.0
    %7764 = vmatpush.msra.mxu0 0.0
    %7765 = vmatpush.msra.mxu0 0.0
    %7766 = vmatpush.msra.mxu0 0.0
    %7767 = vmatpush.msra.mxu0 0.0
    %7768 = vmatpush.msra.mxu0 0.0
    %7769 = vmatpush.msra.mxu0 0.0
    %7770 = vmatpush.msra.mxu0 0.0
    %7771 = vmatpush.msra.mxu0 0.0
    %7772 = vmatpush.msra.mxu0 0.0
    %7773 = vmatpush.msra.mxu0 0.0
    %7774 = vmatpush.msra.mxu0 0.0
    %7775 = vmatpush.msra.mxu0 0.0
    %7776 = vmatpush.msra.mxu0 0.0
    %7777 = vmatpush.msra.mxu0 %v7760
    %7778 = vmatmul.f32.gmra.mxu0 %v7740
    %v7779 = vpop.f32.mrf.mxu0
    %v7780 = vadd.f32 0.0, %v7779
    %7781 = vmatmul.f32.gmra.mxu0 %v7742
    %v7782 = vpop.f32.mrf.mxu0
    %v7783 = vadd.f32 0.0, %v7782
    %7784 = vmatmul.f32.gmra.mxu0 %v7744
    %v7785 = vpop.f32.mrf.mxu0
    %v7786 = vadd.f32 0.0, %v7785
    %7787 = vmatmul.f32.gmra.mxu0 %v7746
    %v7788 = vpop.f32.mrf.mxu0
    %v7789 = vadd.f32 0.0, %v7788
    %7790 = vmatmul.f32.gmra.mxu0 %v7748
    %v7791 = vpop.f32.mrf.mxu0
    %v7792 = vadd.f32 0.0, %v7791
    %7793 = vmatmul.f32.gmra.mxu0 %v7750
    %v7794 = vpop.f32.mrf.mxu0
    %v7795 = vadd.f32 0.0, %v7794
    %7796 = vmatmul.f32.gmra.mxu0 %v7752
    %v7797 = vpop.f32.mrf.mxu0
    %v7798 = vadd.f32 0.0, %v7797
    %7799 = vmatmul.f32.gmra.mxu0 %v7754
    %v7800 = vpop.f32.mrf.mxu0
    %v7801 = vadd.f32 0.0, %v7800
    %7802 = vmatmul.f32.gmra.mxu0 %v7756
    %v7803 = vpop.f32.mrf.mxu0
    %v7804 = vadd.f32 0.0, %v7803
    %7805 = vmatmul.f32.gmra.mxu0 %v7758
    %v7806 = vpop.f32.mrf.mxu0
    %v7807 = vadd.f32 0.0, %v7806
    %7808 = vdwg.mxu0
    %v7809 = vadd.f32 %v7677, %v7780
    %v7810 = vadd.f32 %v7680, %v7783
    %v7811 = vadd.f32 %v7683, %v7786
    %v7812 = vadd.f32 %v7686, %v7789
    %v7813 = vadd.f32 %v7689, %v7792
    %v7814 = vadd.f32 %v7692, %v7795
    %v7815 = vadd.f32 %v7695, %v7798
    %v7816 = vadd.f32 %v7698, %v7801
    %v7817 = vadd.f32 %v7701, %v7804
    %v7818 = vadd.f32 %v7704, %v7807
    %vm7828 = vcmask 1045504
    %v7829 = vrot.slane %v7316, 2
    %v7830 = vrot.slane %v7319, 2
    %v7831 = vsel %vm7828, %v7829, %v7830
    %v7832 = vrot.slane %v7322, 2
    %v7833 = vsel %vm7828, %v7830, %v7832
    %v7834 = vrot.slane %v7325, 2
    %v7835 = vsel %vm7828, %v7832, %v7834
    %v7836 = vrot.slane %v7328, 2
    %v7837 = vsel %vm7828, %v7834, %v7836
    %v7838 = vrot.slane %v7331, 2
    %v7839 = vsel %vm7828, %v7836, %v7838
    %v7840 = vrot.slane %v7334, 2
    %v7841 = vsel %vm7828, %v7838, %v7840
    %v7842 = vrot.slane %v7337, 2
    %v7843 = vsel %vm7828, %v7840, %v7842
    %v7844 = vrot.slane %v7340, 2
    %v7845 = vsel %vm7828, %v7842, %v7844
    %v7846 = vrot.slane %v7343, 2
    %v7847 = vsel %vm7828, %v7844, %v7846
    %7848 = vrot.lane.b32.xlu0 %v7522, 50
    %v7849 = vpop.permute.xlu0 %7848
    %v7850 = vsel %vm1558, %v7831, 0
    %v7852 = vsel %vm1558, %v7833, 0
    %v7854 = vsel %vm1558, %v7835, 0
    %v7856 = vsel %vm1558, %v7837, 0
    %v7858 = vsel %vm1558, %v7839, 0
    %v7860 = vsel %vm1558, %v7841, 0
    %v7862 = vsel %vm1558, %v7843, 0
    %v7864 = vsel %vm1558, %v7845, 0
    %v7866 = vsel %vm1558, %v7847, 0
    %v7868 = vsel %vm1558, %v7846, 0
    %v7870 = vsel %vm1671, %v7849, 0
    %7872 = vmatpush.msra.mxu0 0.0
    %7873 = vmatpush.msra.mxu0 0.0
    %7874 = vmatpush.msra.mxu0 0.0
    %7875 = vmatpush.msra.mxu0 0.0
    %7876 = vmatpush.msra.mxu0 0.0
    %7877 = vmatpush.msra.mxu0 0.0
    %7878 = vmatpush.msra.mxu0 0.0
    %7879 = vmatpush.msra.mxu0 0.0
    %7880 = vmatpush.msra.mxu0 0.0
    %7881 = vmatpush.msra.mxu0 0.0
    %7882 = vmatpush.msra.mxu0 0.0
    %7883 = vmatpush.msra.mxu0 0.0
    %7884 = vmatpush.msra.mxu0 0.0
    %7885 = vmatpush.msra.mxu0 0.0
    %7886 = vmatpush.msra.mxu0 0.0
    %7887 = vmatpush.msra.mxu0 %v7870
    %7888 = vmatmul.f32.gmra.mxu0 %v7850
    %v7889 = vpop.f32.mrf.mxu0
    %v7890 = vadd.f32 0.0, %v7889
    %7891 = vmatmul.f32.gmra.mxu0 %v7852
    %v7892 = vpop.f32.mrf.mxu0
    %v7893 = vadd.f32 0.0, %v7892
    %7894 = vmatmul.f32.gmra.mxu0 %v7854
    %v7895 = vpop.f32.mrf.mxu0
    %v7896 = vadd.f32 0.0, %v7895
    %7897 = vmatmul.f32.gmra.mxu0 %v7856
    %v7898 = vpop.f32.mrf.mxu0
    %v7899 = vadd.f32 0.0, %v7898
    %7900 = vmatmul.f32.gmra.mxu0 %v7858
    %v7901 = vpop.f32.mrf.mxu0
    %v7902 = vadd.f32 0.0, %v7901
    %7903 = vmatmul.f32.gmra.mxu0 %v7860
    %v7904 = vpop.f32.mrf.mxu0
    %v7905 = vadd.f32 0.0, %v7904
    %7906 = vmatmul.f32.gmra.mxu0 %v7862
    %v7907 = vpop.f32.mrf.mxu0
    %v7908 = vadd.f32 0.0, %v7907
    %7909 = vmatmul.f32.gmra.mxu0 %v7864
    %v7910 = vpop.f32.mrf.mxu0
    %v7911 = vadd.f32 0.0, %v7910
    %7912 = vmatmul.f32.gmra.mxu0 %v7866
    %v7913 = vpop.f32.mrf.mxu0
    %v7914 = vadd.f32 0.0, %v7913
    %7915 = vmatmul.f32.gmra.mxu0 %v7868
    %v7916 = vpop.f32.mrf.mxu0
    %v7917 = vadd.f32 0.0, %v7916
    %7918 = vdwg.mxu0
    %v7919 = vadd.f32 %v7809, %v7890
    %v7920 = vadd.f32 %v7810, %v7893
    %v7921 = vadd.f32 %v7811, %v7896
    %v7922 = vadd.f32 %v7812, %v7899
    %v7923 = vadd.f32 %v7813, %v7902
    %v7924 = vadd.f32 %v7814, %v7905
    %v7925 = vadd.f32 %v7815, %v7908
    %v7926 = vadd.f32 %v7816, %v7911
    %v7927 = vadd.f32 %v7817, %v7914
    %v7928 = vadd.f32 %v7818, %v7917
    %v7929 = vld [vmem:[#allocation15] sm:$0x1f]
    %v7930 = vld [vmem:[#allocation15 + $0x8] sm:$0x1f]
    %7933 = vrot.lane.b32.xlu0 %v7929, 24
    %v7934 = vpop.permute.xlu0 %7933
    %7935 = vrot.lane.b32.xlu0 %v7930, 24
    %v7936 = vpop.permute.xlu0 %7935
    %vm7937 = vcmask 195584
    %v7938 = vsel %vm7937, %v7934, %v7936
    %v7940 = vsel %vm1558, %v7346, 0
    %v7943 = vsel %vm1558, %v7349, 0
    %v7946 = vsel %vm1558, %v7352, 0
    %v7949 = vsel %vm1558, %v7355, 0
    %v7952 = vsel %vm1558, %v7358, 0
    %v7955 = vsel %vm1558, %v7361, 0
    %v7958 = vsel %vm1558, %v7364, 0
    %v7961 = vsel %vm1558, %v7367, 0
    %v7964 = vsel %vm1558, %v7370, 0
    %v7967 = vsel %vm1558, %v7373, 0
    %v7969 = vsel %vm1671, %v7938, 0
    %7971 = vmatpush.msra.mxu0 0.0
    %7972 = vmatpush.msra.mxu0 0.0
    %7973 = vmatpush.msra.mxu0 0.0
    %7974 = vmatpush.msra.mxu0 0.0
    %7975 = vmatpush.msra.mxu0 0.0
    %7976 = vmatpush.msra.mxu0 0.0
    %7977 = vmatpush.msra.mxu0 0.0
    %7978 = vmatpush.msra.mxu0 0.0
    %7979 = vmatpush.msra.mxu0 0.0
    %7980 = vmatpush.msra.mxu0 0.0
    %7981 = vmatpush.msra.mxu0 0.0
    %7982 = vmatpush.msra.mxu0 0.0
    %7983 = vmatpush.msra.mxu0 0.0
    %7984 = vmatpush.msra.mxu0 0.0
    %7985 = vmatpush.msra.mxu0 0.0
    %7986 = vmatpush.msra.mxu0 %v7969
    %7987 = vmatmul.f32.gmra.mxu0 %v7940
    %v7988 = vpop.f32.mrf.mxu0
    %v7989 = vadd.f32 0.0, %v7988
    %7990 = vmatmul.f32.gmra.mxu0 %v7943
    %v7991 = vpop.f32.mrf.mxu0
    %v7992 = vadd.f32 0.0, %v7991
    %7993 = vmatmul.f32.gmra.mxu0 %v7946
    %v7994 = vpop.f32.mrf.mxu0
    %v7995 = vadd.f32 0.0, %v7994
    %7996 = vmatmul.f32.gmra.mxu0 %v7949
    %v7997 = vpop.f32.mrf.mxu0
    %v7998 = vadd.f32 0.0, %v7997
    %7999 = vmatmul.f32.gmra.mxu0 %v7952
    %v8000 = vpop.f32.mrf.mxu0
    %v8001 = vadd.f32 0.0, %v8000
    %8002 = vmatmul.f32.gmra.mxu0 %v7955
    %v8003 = vpop.f32.mrf.mxu0
    %v8004 = vadd.f32 0.0, %v8003
    %8005 = vmatmul.f32.gmra.mxu0 %v7958
    %v8006 = vpop.f32.mrf.mxu0
    %v8007 = vadd.f32 0.0, %v8006
    %8008 = vmatmul.f32.gmra.mxu0 %v7961
    %v8009 = vpop.f32.mrf.mxu0
    %v8010 = vadd.f32 0.0, %v8009
    %8011 = vmatmul.f32.gmra.mxu0 %v7964
    %v8012 = vpop.f32.mrf.mxu0
    %v8013 = vadd.f32 0.0, %v8012
    %8014 = vmatmul.f32.gmra.mxu0 %v7967
    %v8015 = vpop.f32.mrf.mxu0
    %v8016 = vadd.f32 0.0, %v8015
    %8017 = vdwg.mxu0
    %v8018 = vadd.f32 %v7919, %v7989
    %v8019 = vadd.f32 %v7920, %v7992
    %v8020 = vadd.f32 %v7921, %v7995
    %v8021 = vadd.f32 %v7922, %v7998
    %v8022 = vadd.f32 %v7923, %v8001
    %v8023 = vadd.f32 %v7924, %v8004
    %v8024 = vadd.f32 %v7925, %v8007
    %v8025 = vadd.f32 %v7926, %v8010
    %v8026 = vadd.f32 %v7927, %v8013
    %v8027 = vadd.f32 %v7928, %v8016
    %v8038 = vrot.slane %v7373, 6
    %v8039 = vrot.slane %v7376, 6
    %v8040 = vsel %vm7534, %v8038, %v8039
    %v8041 = vrot.slane %v7379, 6
    %v8042 = vsel %vm7534, %v8039, %v8041
    %v8043 = vrot.slane %v7382, 6
    %v8044 = vsel %vm7534, %v8041, %v8043
    %v8045 = vrot.slane %v7385, 6
    %v8046 = vsel %vm7534, %v8043, %v8045
    %v8047 = vrot.slane %v7388, 6
    %v8048 = vsel %vm7534, %v8045, %v8047
    %v8049 = vrot.slane %v7391, 6
    %v8050 = vsel %vm7534, %v8047, %v8049
    %v8051 = vrot.slane %v7394, 6
    %v8052 = vsel %vm7534, %v8049, %v8051
    %v8053 = vrot.slane %v7397, 6
    %v8054 = vsel %vm7534, %v8051, %v8053
    %v8055 = vrot.slane %v7400, 6
    %v8056 = vsel %vm7534, %v8053, %v8055
    %v8057 = vrot.slane %v7403, 6
    %v8058 = vsel %vm7534, %v8055, %v8057
    %8059 = vrot.lane.b32.xlu0 %v7930, 126
    %v8060 = vpop.permute.xlu0 %8059
    %v8061 = vsel %vm1558, %v8040, 0
    %v8063 = vsel %vm1558, %v8042, 0
    %v8065 = vsel %vm1558, %v8044, 0
    %v8067 = vsel %vm1558, %v8046, 0
    %v8069 = vsel %vm1558, %v8048, 0
    %v8071 = vsel %vm1558, %v8050, 0
    %v8073 = vsel %vm1558, %v8052, 0
    %v8075 = vsel %vm1558, %v8054, 0
    %v8077 = vsel %vm1558, %v8056, 0
    %v8079 = vsel %vm1558, %v8058, 0
    %v8081 = vsel %vm1671, %v8060, 0
    %8083 = vmatpush.msra.mxu0 0.0
    %8084 = vmatpush.msra.mxu0 0.0
    %8085 = vmatpush.msra.mxu0 0.0
    %8086 = vmatpush.msra.mxu0 0.0
    %8087 = vmatpush.msra.mxu0 0.0
    %8088 = vmatpush.msra.mxu0 0.0
    %8089 = vmatpush.msra.mxu0 0.0
    %8090 = vmatpush.msra.mxu0 0.0
    %8091 = vmatpush.msra.mxu0 0.0
    %8092 = vmatpush.msra.mxu0 0.0
    %8093 = vmatpush.msra.mxu0 0.0
    %8094 = vmatpush.msra.mxu0 0.0
    %8095 = vmatpush.msra.mxu0 0.0
    %8096 = vmatpush.msra.mxu0 0.0
    %8097 = vmatpush.msra.mxu0 0.0
    %8098 = vmatpush.msra.mxu0 %v8081
    %8099 = vmatmul.f32.gmra.mxu0 %v8061
    %v8100 = vpop.f32.mrf.mxu0
    %v8101 = vadd.f32 0.0, %v8100
    %8102 = vmatmul.f32.gmra.mxu0 %v8063
    %v8103 = vpop.f32.mrf.mxu0
    %v8104 = vadd.f32 0.0, %v8103
    %8105 = vmatmul.f32.gmra.mxu0 %v8065
    %v8106 = vpop.f32.mrf.mxu0
    %v8107 = vadd.f32 0.0, %v8106
    %8108 = vmatmul.f32.gmra.mxu0 %v8067
    %v8109 = vpop.f32.mrf.mxu0
    %v8110 = vadd.f32 0.0, %v8109
    %8111 = vmatmul.f32.gmra.mxu0 %v8069
    %v8112 = vpop.f32.mrf.mxu0
    %v8113 = vadd.f32 0.0, %v8112
    %8114 = vmatmul.f32.gmra.mxu0 %v8071
    %v8115 = vpop.f32.mrf.mxu0
    %v8116 = vadd.f32 0.0, %v8115
    %8117 = vmatmul.f32.gmra.mxu0 %v8073
    %v8118 = vpop.f32.mrf.mxu0
    %v8119 = vadd.f32 0.0, %v8118
    %8120 = vmatmul.f32.gmra.mxu0 %v8075
    %v8121 = vpop.f32.mrf.mxu0
    %v8122 = vadd.f32 0.0, %v8121
    %8123 = vmatmul.f32.gmra.mxu0 %v8077
    %v8124 = vpop.f32.mrf.mxu0
    %v8125 = vadd.f32 0.0, %v8124
    %8126 = vmatmul.f32.gmra.mxu0 %v8079
    %v8127 = vpop.f32.mrf.mxu0
    %v8128 = vadd.f32 0.0, %v8127
    %8129 = vdwg.mxu0
    %v8130 = vadd.f32 %v8018, %v8101
    %v8131 = vadd.f32 %v8019, %v8104
    %v8132 = vadd.f32 %v8020, %v8107
    %v8133 = vadd.f32 %v8021, %v8110
    %v8134 = vadd.f32 %v8022, %v8113
    %v8135 = vadd.f32 %v8023, %v8116
    %v8136 = vadd.f32 %v8024, %v8119
    %v8137 = vadd.f32 %v8025, %v8122
    %v8138 = vadd.f32 %v8026, %v8125
    %v8139 = vadd.f32 %v8027, %v8128
    %v8150 = vrot.slane %v7403, 4
    %v8151 = vrot.slane %v7406, 4
    %v8152 = vsel %vm7716, %v8150, %v8151
    %v8153 = vrot.slane %v7409, 4
    %v8154 = vsel %vm7716, %v8151, %v8153
    %v8155 = vrot.slane %v7412, 4
    %v8156 = vsel %vm7716, %v8153, %v8155
    %v8157 = vrot.slane %v7415, 4
    %v8158 = vsel %vm7716, %v8155, %v8157
    %v8159 = vrot.slane %v7418, 4
    %v8160 = vsel %vm7716, %v8157, %v8159
    %v8161 = vrot.slane %v7421, 4
    %v8162 = vsel %vm7716, %v8159, %v8161
    %v8163 = vrot.slane %v7424, 4
    %v8164 = vsel %vm7716, %v8161, %v8163
    %v8165 = vrot.slane %v7427, 4
    %v8166 = vsel %vm7716, %v8163, %v8165
    %v8167 = vrot.slane %v7430, 4
    %v8168 = vsel %vm7716, %v8165, %v8167
    %v8169 = vrot.slane %v7433, 4
    %v8170 = vsel %vm7716, %v8167, %v8169
    %8171 = vrot.lane.b32.xlu0 %v7930, 100
    %v8172 = vpop.permute.xlu0 %8171
    %v8173 = vsel %vm1558, %v8152, 0
    %v8175 = vsel %vm1558, %v8154, 0
    %v8177 = vsel %vm1558, %v8156, 0
    %v8179 = vsel %vm1558, %v8158, 0
    %v8181 = vsel %vm1558, %v8160, 0
    %v8183 = vsel %vm1558, %v8162, 0
    %v8185 = vsel %vm1558, %v8164, 0
    %v8187 = vsel %vm1558, %v8166, 0
    %v8189 = vsel %vm1558, %v8168, 0
    %v8191 = vsel %vm1558, %v8170, 0
    %v8193 = vsel %vm1671, %v8172, 0
    %8195 = vmatpush.msra.mxu0 0.0
    %8196 = vmatpush.msra.mxu0 0.0
    %8197 = vmatpush.msra.mxu0 0.0
    %8198 = vmatpush.msra.mxu0 0.0
    %8199 = vmatpush.msra.mxu0 0.0
    %8200 = vmatpush.msra.mxu0 0.0
    %8201 = vmatpush.msra.mxu0 0.0
    %8202 = vmatpush.msra.mxu0 0.0
    %8203 = vmatpush.msra.mxu0 0.0
    %8204 = vmatpush.msra.mxu0 0.0
    %8205 = vmatpush.msra.mxu0 0.0
    %8206 = vmatpush.msra.mxu0 0.0
    %8207 = vmatpush.msra.mxu0 0.0
    %8208 = vmatpush.msra.mxu0 0.0
    %8209 = vmatpush.msra.mxu0 0.0
    %8210 = vmatpush.msra.mxu0 %v8193
    %8211 = vmatmul.f32.gmra.mxu0 %v8173
    %v8212 = vpop.f32.mrf.mxu0
    %v8213 = vadd.f32 0.0, %v8212
    %8214 = vmatmul.f32.gmra.mxu0 %v8175
    %v8215 = vpop.f32.mrf.mxu0
    %v8216 = vadd.f32 0.0, %v8215
    %8217 = vmatmul.f32.gmra.mxu0 %v8177
    %v8218 = vpop.f32.mrf.mxu0
    %v8219 = vadd.f32 0.0, %v8218
    %8220 = vmatmul.f32.gmra.mxu0 %v8179
    %v8221 = vpop.f32.mrf.mxu0
    %v8222 = vadd.f32 0.0, %v8221
    %8223 = vmatmul.f32.gmra.mxu0 %v8181
    %v8224 = vpop.f32.mrf.mxu0
    %v8225 = vadd.f32 0.0, %v8224
    %8226 = vmatmul.f32.gmra.mxu0 %v8183
    %v8227 = vpop.f32.mrf.mxu0
    %v8228 = vadd.f32 0.0, %v8227
    %8229 = vmatmul.f32.gmra.mxu0 %v8185
    %v8230 = vpop.f32.mrf.mxu0
    %v8231 = vadd.f32 0.0, %v8230
    %8232 = vmatmul.f32.gmra.mxu0 %v8187
    %v8233 = vpop.f32.mrf.mxu0
    %v8234 = vadd.f32 0.0, %v8233
    %8235 = vmatmul.f32.gmra.mxu0 %v8189
    %v8236 = vpop.f32.mrf.mxu0
    %v8237 = vadd.f32 0.0, %v8236
    %8238 = vmatmul.f32.gmra.mxu0 %v8191
    %v8239 = vpop.f32.mrf.mxu0
    %v8240 = vadd.f32 0.0, %v8239
    %8241 = vdwg.mxu0
    %v8242 = vadd.f32 %v8130, %v8213
    %v8243 = vadd.f32 %v8131, %v8216
    %v8244 = vadd.f32 %v8132, %v8219
    %v8245 = vadd.f32 %v8133, %v8222
    %v8246 = vadd.f32 %v8134, %v8225
    %v8247 = vadd.f32 %v8135, %v8228
    %v8248 = vadd.f32 %v8136, %v8231
    %v8249 = vadd.f32 %v8137, %v8234
    %v8250 = vadd.f32 %v8138, %v8237
    %v8251 = vadd.f32 %v8139, %v8240
    %v8261 = vrot.slane %v7433, 2
    %v8262 = vrot.slane %v7436, 2
    %v8263 = vsel %vm7828, %v8261, %v8262
    %v8264 = vrot.slane %v7439, 2
    %v8265 = vsel %vm7828, %v8262, %v8264
    %v8266 = vrot.slane %v7442, 2
    %v8267 = vsel %vm7828, %v8264, %v8266
    %v8268 = vrot.slane %v7445, 2
    %v8269 = vsel %vm7828, %v8266, %v8268
    %v8270 = vrot.slane %v7448, 2
    %v8271 = vsel %vm7828, %v8268, %v8270
    %v8272 = vrot.slane %v7451, 2
    %v8273 = vsel %vm7828, %v8270, %v8272
    %v8274 = vrot.slane %v7454, 2
    %v8275 = vsel %vm7828, %v8272, %v8274
    %v8276 = vrot.slane %v7457, 2
    %v8277 = vsel %vm7828, %v8274, %v8276
    %v8278 = vrot.slane %v7460, 2
    %v8279 = vsel %vm7828, %v8276, %v8278
    %8280 = vrot.lane.b32.xlu0 %v7930, 74
    %v8281 = vpop.permute.xlu0 %8280
    %v8282 = vsel %vm1558, %v8263, 0
    %v8284 = vsel %vm1558, %v8265, 0
    %v8286 = vsel %vm1558, %v8267, 0
    %v8288 = vsel %vm1558, %v8269, 0
    %v8290 = vsel %vm1558, %v8271, 0
    %v8292 = vsel %vm1558, %v8273, 0
    %v8294 = vsel %vm1558, %v8275, 0
    %v8296 = vsel %vm1558, %v8277, 0
    %v8298 = vsel %vm1558, %v8279, 0
    %v8300 = vsel %vm1558, %v8278, 0
    %v8302 = vsel %vm1671, %v8281, 0
    %8304 = vmatpush.msra.mxu0 0.0
    %8305 = vmatpush.msra.mxu0 0.0
    %8306 = vmatpush.msra.mxu0 0.0
    %8307 = vmatpush.msra.mxu0 0.0
    %8308 = vmatpush.msra.mxu0 0.0
    %8309 = vmatpush.msra.mxu0 0.0
    %8310 = vmatpush.msra.mxu0 0.0
    %8311 = vmatpush.msra.mxu0 0.0
    %8312 = vmatpush.msra.mxu0 0.0
    %8313 = vmatpush.msra.mxu0 0.0
    %8314 = vmatpush.msra.mxu0 0.0
    %8315 = vmatpush.msra.mxu0 0.0
    %8316 = vmatpush.msra.mxu0 0.0
    %8317 = vmatpush.msra.mxu0 0.0
    %8318 = vmatpush.msra.mxu0 0.0
    %8319 = vmatpush.msra.mxu0 %v8302
    %8320 = vmatmul.f32.gmra.mxu0 %v8282
    %v8321 = vpop.f32.mrf.mxu0
    %v8322 = vadd.f32 0.0, %v8321
    %8323 = vmatmul.f32.gmra.mxu0 %v8284
    %v8324 = vpop.f32.mrf.mxu0
    %v8325 = vadd.f32 0.0, %v8324
    %8326 = vmatmul.f32.gmra.mxu0 %v8286
    %v8327 = vpop.f32.mrf.mxu0
    %v8328 = vadd.f32 0.0, %v8327
    %8329 = vmatmul.f32.gmra.mxu0 %v8288
    %v8330 = vpop.f32.mrf.mxu0
    %v8331 = vadd.f32 0.0, %v8330
    %8332 = vmatmul.f32.gmra.mxu0 %v8290
    %v8333 = vpop.f32.mrf.mxu0
    %v8334 = vadd.f32 0.0, %v8333
    %8335 = vmatmul.f32.gmra.mxu0 %v8292
    %v8336 = vpop.f32.mrf.mxu0
    %v8337 = vadd.f32 0.0, %v8336
    %8338 = vmatmul.f32.gmra.mxu0 %v8294
    %v8339 = vpop.f32.mrf.mxu0
    %v8340 = vadd.f32 0.0, %v8339
    %8341 = vmatmul.f32.gmra.mxu0 %v8296
    %v8342 = vpop.f32.mrf.mxu0
    %v8343 = vadd.f32 0.0, %v8342
    %8344 = vmatmul.f32.gmra.mxu0 %v8298
    %v8345 = vpop.f32.mrf.mxu0
    %v8346 = vadd.f32 0.0, %v8345
    %8347 = vmatmul.f32.gmra.mxu0 %v8300
    %v8348 = vpop.f32.mrf.mxu0
    %v8349 = vadd.f32 0.0, %v8348
    %8350 = vdwg.mxu0
    %v8351 = vadd.f32 %v8242, %v8322
    %v8352 = vadd.f32 %v8243, %v8325
    %v8353 = vadd.f32 %v8244, %v8328
    %v8354 = vadd.f32 %v8245, %v8331
    %v8355 = vadd.f32 %v8246, %v8334
    %v8356 = vadd.f32 %v8247, %v8337
    %v8357 = vadd.f32 %v8248, %v8340
    %v8358 = vadd.f32 %v8249, %v8343
    %v8359 = vadd.f32 %v8250, %v8346
    %v8360 = vadd.f32 %v8251, %v8349
    %8361 = vrot.lane.b32.xlu0 %v7930, 48
    %v8362 = vpop.permute.xlu0 %8361
    %v8364 = vsel %vm1558, %v7463, 0
    %v8367 = vsel %vm1558, %v7466, 0
    %v8370 = vsel %vm1558, %v7469, 0
    %v8373 = vsel %vm1558, %v7472, 0
    %v8376 = vsel %vm1558, %v7475, 0
    %v8379 = vsel %vm1558, %v7478, 0
    %v8382 = vsel %vm1558, %v7481, 0
    %v8385 = vsel %vm1558, %v7484, 0
    %v8388 = vsel %vm1558, %v7487, 0
    %v8391 = vsel %vm1558, %v7490, 0
    %v8393 = vsel %vm1671, %v8362, 0
    %8395 = vmatpush.msra.mxu0 0.0
    %8396 = vmatpush.msra.mxu0 0.0
    %8397 = vmatpush.msra.mxu0 0.0
    %8398 = vmatpush.msra.mxu0 0.0
    %8399 = vmatpush.msra.mxu0 0.0
    %8400 = vmatpush.msra.mxu0 0.0
    %8401 = vmatpush.msra.mxu0 0.0
    %8402 = vmatpush.msra.mxu0 0.0
    %8403 = vmatpush.msra.mxu0 0.0
    %8404 = vmatpush.msra.mxu0 0.0
    %8405 = vmatpush.msra.mxu0 0.0
    %8406 = vmatpush.msra.mxu0 0.0
    %8407 = vmatpush.msra.mxu0 0.0
    %8408 = vmatpush.msra.mxu0 0.0
    %8409 = vmatpush.msra.mxu0 0.0
    %8410 = vmatpush.msra.mxu0 %v8393
    %8411 = vmatmul.f32.gmra.mxu0 %v8364
    %v8412 = vpop.f32.mrf.mxu0
    %v8413 = vadd.f32 0.0, %v8412
    %8414 = vmatmul.f32.gmra.mxu0 %v8367
    %v8415 = vpop.f32.mrf.mxu0
    %v8416 = vadd.f32 0.0, %v8415
    %8417 = vmatmul.f32.gmra.mxu0 %v8370
    %v8418 = vpop.f32.mrf.mxu0
    %v8419 = vadd.f32 0.0, %v8418
    %8420 = vmatmul.f32.gmra.mxu0 %v8373
    %v8421 = vpop.f32.mrf.mxu0
    %v8422 = vadd.f32 0.0, %v8421
    %8423 = vmatmul.f32.gmra.mxu0 %v8376
    %v8424 = vpop.f32.mrf.mxu0
    %v8425 = vadd.f32 0.0, %v8424
    %8426 = vmatmul.f32.gmra.mxu0 %v8379
    %v8427 = vpop.f32.mrf.mxu0
    %v8428 = vadd.f32 0.0, %v8427
    %8429 = vmatmul.f32.gmra.mxu0 %v8382
    %v8430 = vpop.f32.mrf.mxu0
    %v8431 = vadd.f32 0.0, %v8430
    %8432 = vmatmul.f32.gmra.mxu0 %v8385
    %v8433 = vpop.f32.mrf.mxu0
    %v8434 = vadd.f32 0.0, %v8433
    %8435 = vmatmul.f32.gmra.mxu0 %v8388
    %v8436 = vpop.f32.mrf.mxu0
    %v8437 = vadd.f32 0.0, %v8436
    %8438 = vmatmul.f32.gmra.mxu0 %v8391
    %v8439 = vpop.f32.mrf.mxu0
    %v8440 = vadd.f32 0.0, %v8439
    %8441 = vdwg.mxu0
    %v8442 = vadd.f32 %v8351, %v8413
    %v8443 = vadd.f32 %v8352, %v8416
    %v8444 = vadd.f32 %v8353, %v8419
    %v8445 = vadd.f32 %v8354, %v8422
    %v8446 = vadd.f32 %v8355, %v8425
    %v8447 = vadd.f32 %v8356, %v8428
    %v8448 = vadd.f32 %v8357, %v8431
    %v8449 = vadd.f32 %v8358, %v8434
    %v8450 = vadd.f32 %v8359, %v8437
    %v8451 = vadd.f32 %v8360, %v8440
    %v8452 = vld [vmem:[#allocation15 + $0x8] sm:$0x1f]
    %v8453 = vld [vmem:[#allocation15 + $0x10] sm:$0x1f]
    %v8464 = vrot.slane %v7490, 6
    %v8465 = vrot.slane %v7493, 6
    %v8466 = vsel %vm7534, %v8464, %v8465
    %v8467 = vrot.slane %v7496, 6
    %v8468 = vsel %vm7534, %v8465, %v8467
    %v8469 = vrot.slane %v7499, 6
    %v8470 = vsel %vm7534, %v8467, %v8469
    %v8471 = vrot.slane %v7502, 6
    %v8472 = vsel %vm7534, %v8469, %v8471
    %v8473 = vrot.slane %v7505, 6
    %v8474 = vsel %vm7534, %v8471, %v8473
    %v8475 = vrot.slane %v7508, 6
    %v8476 = vsel %vm7534, %v8473, %v8475
    %v8477 = vrot.slane %v7511, 6
    %v8478 = vsel %vm7534, %v8475, %v8477
    %v8479 = vrot.slane %v7514, 6
    %v8480 = vsel %vm7534, %v8477, %v8479
    %v8481 = vrot.slane %v7517, 6
    %v8482 = vsel %vm7534, %v8479, %v8481
    %v8483 = vrot.slane %v7520, 6
    %v8484 = vsel %vm7534, %v8481, %v8483
    %8487 = vrot.lane.b32.xlu0 %v8452, 22
    %v8488 = vpop.permute.xlu0 %8487
    %8489 = vrot.lane.b32.xlu0 %v8453, 22
    %v8490 = vpop.permute.xlu0 %8489
    %vm8491 = vcmask 179200
    %v8492 = vsel %vm8491, %v8488, %v8490
    %v8493 = vsel %vm1558, %v8466, 0
    %v8495 = vsel %vm1558, %v8468, 0
    %v8497 = vsel %vm1558, %v8470, 0
    %v8499 = vsel %vm1558, %v8472, 0
    %v8501 = vsel %vm1558, %v8474, 0
    %v8503 = vsel %vm1558, %v8476, 0
    %v8505 = vsel %vm1558, %v8478, 0
    %v8507 = vsel %vm1558, %v8480, 0
    %v8509 = vsel %vm1558, %v8482, 0
    %v8511 = vsel %vm1558, %v8484, 0
    %v8513 = vsel %vm1671, %v8492, 0
    %8515 = vmatpush.msra.mxu0 0.0
    %8516 = vmatpush.msra.mxu0 0.0
    %8517 = vmatpush.msra.mxu0 0.0
    %8518 = vmatpush.msra.mxu0 0.0
    %8519 = vmatpush.msra.mxu0 0.0
    %8520 = vmatpush.msra.mxu0 0.0
    %8521 = vmatpush.msra.mxu0 0.0
    %8522 = vmatpush.msra.mxu0 0.0
    %8523 = vmatpush.msra.mxu0 0.0
    %8524 = vmatpush.msra.mxu0 0.0
    %8525 = vmatpush.msra.mxu0 0.0
    %8526 = vmatpush.msra.mxu0 0.0
    %8527 = vmatpush.msra.mxu0 0.0
    %8528 = vmatpush.msra.mxu0 0.0
    %8529 = vmatpush.msra.mxu0 0.0
    %8530 = vmatpush.msra.mxu0 %v8513
    %8531 = vmatmul.f32.gmra.mxu0 %v8493
    %v8532 = vpop.f32.mrf.mxu0
    %v8533 = vadd.f32 0.0, %v8532
    %8534 = vmatmul.f32.gmra.mxu0 %v8495
    %v8535 = vpop.f32.mrf.mxu0
    %v8536 = vadd.f32 0.0, %v8535
    %8537 = vmatmul.f32.gmra.mxu0 %v8497
    %v8538 = vpop.f32.mrf.mxu0
    %v8539 = vadd.f32 0.0, %v8538
    %8540 = vmatmul.f32.gmra.mxu0 %v8499
    %v8541 = vpop.f32.mrf.mxu0
    %v8542 = vadd.f32 0.0, %v8541
    %8543 = vmatmul.f32.gmra.mxu0 %v8501
    %v8544 = vpop.f32.mrf.mxu0
    %v8545 = vadd.f32 0.0, %v8544
    %8546 = vmatmul.f32.gmra.mxu0 %v8503
    %v8547 = vpop.f32.mrf.mxu0
    %v8548 = vadd.f32 0.0, %v8547
    %8549 = vmatmul.f32.gmra.mxu0 %v8505
    %v8550 = vpop.f32.mrf.mxu0
    %v8551 = vadd.f32 0.0, %v8550
    %8552 = vmatmul.f32.gmra.mxu0 %v8507
    %v8553 = vpop.f32.mrf.mxu0
    %v8554 = vadd.f32 0.0, %v8553
    %8555 = vmatmul.f32.gmra.mxu0 %v8509
    %v8556 = vpop.f32.mrf.mxu0
    %v8557 = vadd.f32 0.0, %v8556
    %8558 = vmatmul.f32.gmra.mxu0 %v8511
    %v8559 = vpop.f32.mrf.mxu0
    %v8560 = vadd.f32 0.0, %v8559
    %8561 = vdwg.mxu0
    %v8562 = vadd.f32 %v8442, %v8533
    %v8563 = vadd.f32 %v8443, %v8536
    %v8564 = vadd.f32 %v8444, %v8539
    %v8565 = vadd.f32 %v8445, %v8542
    %v8566 = vadd.f32 %v8446, %v8545
    %v8567 = vadd.f32 %v8447, %v8548
    %v8568 = vadd.f32 %v8448, %v8551
    %v8569 = vadd.f32 %v8449, %v8554
    %v8570 = vadd.f32 %v8450, %v8557
    %v8571 = vadd.f32 %v8451, %v8560
    %v8572 = vld [vmem:[%s21] sm:$0xff]
    %v8573 = vld [vmem:[%s21 + $0x8] sm:$0xff]
    %v8574 = vld [vmem:[%s21 + $0x10] sm:$0xff]
    %v8575 = vld [vmem:[%s21 + $0x18] sm:$0xff]
    %v8576 = vld [vmem:[%s21 + $0x20] sm:$0xff]
    %v8577 = vld [vmem:[%s21 + $0x28] sm:$0xff]
    %v8578 = vld [vmem:[%s21 + $0x30] sm:$0xff]
    %v8579 = vld [vmem:[%s21 + $0x38] sm:$0xff]
    %v8580 = vld [vmem:[%s21 + $0x40] sm:$0xff]
    %v8581 = vld [vmem:[%s21 + $0x48] sm:$0x3f]
    %8583 = vset.pattern.permute.xlu0 0
    %8584 = vperm.xlu0 %8583, %v8572
    %v8585 = vpop.permute.xlu0 %8584
    %8588 = vset.pattern.permute.xlu0 0
    %8589 = vperm.xlu0 %8588, %v8573
    %v8590 = vpop.permute.xlu0 %8589
    %8593 = vset.pattern.permute.xlu0 0
    %8594 = vperm.xlu0 %8593, %v8574
    %v8595 = vpop.permute.xlu0 %8594
    %8598 = vset.pattern.permute.xlu0 0
    %8599 = vperm.xlu0 %8598, %v8575
    %v8600 = vpop.permute.xlu0 %8599
    %8603 = vset.pattern.permute.xlu0 0
    %8604 = vperm.xlu0 %8603, %v8576
    %v8605 = vpop.permute.xlu0 %8604
    %8608 = vset.pattern.permute.xlu0 0
    %8609 = vperm.xlu0 %8608, %v8577
    %v8610 = vpop.permute.xlu0 %8609
    %8613 = vset.pattern.permute.xlu0 0
    %8614 = vperm.xlu0 %8613, %v8578
    %v8615 = vpop.permute.xlu0 %8614
    %8618 = vset.pattern.permute.xlu0 0
    %8619 = vperm.xlu0 %8618, %v8579
    %v8620 = vpop.permute.xlu0 %8619
    %8623 = vset.pattern.permute.xlu0 0
    %8624 = vperm.xlu0 %8623, %v8580
    %v8625 = vpop.permute.xlu0 %8624
    %8628 = vset.pattern.permute.xlu0 0
    %8629 = vperm.xlu0 %8628, %v8581
    %v8630 = vpop.permute.xlu0 %8629
    %v8632 = vadd.f32 %v8562, %v8585
    %v8633 = vadd.f32 %v8563, %v8590
    %v8634 = vadd.f32 %v8564, %v8595
    %v8635 = vadd.f32 %v8565, %v8600
    %v8636 = vadd.f32 %v8566, %v8605
    %v8637 = vadd.f32 %v8567, %v8610
    %v8638 = vadd.f32 %v8568, %v8615
    %v8639 = vadd.f32 %v8569, %v8620
    %v8640 = vadd.f32 %v8570, %v8625
    %v8641 = vadd.f32 %v8571, %v8630
    %v8642 = vmax.f32 %v8632, 0.0
    %v8643 = vmax.f32 %v8633, 0.0
    %v8644 = vmax.f32 %v8634, 0.0
    %v8645 = vmax.f32 %v8635, 0.0
    %v8646 = vmax.f32 %v8636, 0.0
    %v8647 = vmax.f32 %v8637, 0.0
    %v8648 = vmax.f32 %v8638, 0.0
    %v8649 = vmax.f32 %v8639, 0.0
    %v8650 = vmax.f32 %v8640, 0.0
    %v8651 = vmax.f32 %v8641, 0.0
    %vm8652 = vcmask 211968
    %8653 = vst.msk [vmem:[%s24] sm:$0xff] %vm8652, %v8642
    %8654 = vst.msk [vmem:[%s24 + $0x8] sm:$0xff] %vm8652, %v8643
    %8655 = vst.msk [vmem:[%s24 + $0x10] sm:$0xff] %vm8652, %v8644
    %8656 = vst.msk [vmem:[%s24 + $0x18] sm:$0xff] %vm8652, %v8645
    %8657 = vst.msk [vmem:[%s24 + $0x20] sm:$0xff] %vm8652, %v8646
    %8658 = vst.msk [vmem:[%s24 + $0x28] sm:$0xff] %vm8652, %v8647
    %8659 = vst.msk [vmem:[%s24 + $0x30] sm:$0xff] %vm8652, %v8648
    %8660 = vst.msk [vmem:[%s24 + $0x38] sm:$0xff] %vm8652, %v8649
    %8661 = vst.msk [vmem:[%s24 + $0x40] sm:$0xff] %vm8652, %v8650
    %vm8662 = vcmask 209920
    %8663 = vst.msk [vmem:[%s24 + $0x48] sm:$0x3f] %vm8662, %v8651
    // Predicated region
    $region122: #{forward.3} parent=1 // pred_check
      _
    $region123: #{forward.3} parent=1 // pred_check_branch
      %8665 = sbr.rel (0) target = $region125
    $region124: #{forward.3} parent=1 // pred_region
      _
    $region125: #{forward.3} parent=1 // pred_fallthru
      _
    // Predicated region
    $region126: #{forward.3} parent=1 // pred_check
      _
    $region127: #{forward.3} parent=1 // pred_check_branch
      %8667 = sbr.rel (0) target = $region129
    $region128: #{forward.3} parent=1 // pred_region
      _
    $region129: #{forward.3} parent=1 // pred_fallthru
      _
    // Predicated region
    $region130: #{forward.3} parent=1 // pred_check
      _
    $region131: #{forward.3} parent=1 // pred_check_branch
      %8669 = sbr.rel (0) target = $region133
    $region132: #{forward.3} parent=1 // pred_region
      _
    $region133: #{forward.3} parent=1 // pred_fallthru
      _
    // Predicated region
    $region134: #{forward.3} parent=1 // pred_check
      _
    $region135: #{forward.3} parent=1 // pred_check_branch
      %8671 = sbr.rel (0) target = $region137
    $region136: #{forward.3} parent=1 // pred_region
      _
    $region137: #{forward.3} parent=1 // pred_fallthru
      _
    // Predicated region
    $region138: #{forward.3} parent=1 // pred_check
      _
    $region139: #{forward.3} parent=1 // pred_check_branch
      %8673 = sbr.rel (0) target = $region141
    $region140: #{forward.3} parent=1 // pred_region
      _
    $region141: #{forward.3} parent=1 // pred_fallthru
      _
    // Predicated region
    $region142: #{forward.3} parent=1 // pred_check
      _
    $region143: #{forward.3} parent=1 // pred_check_branch
      %8675 = sbr.rel (0) target = $region145
    $region144: #{forward.3} parent=1 // pred_region
      _
    $region145: #{forward.3} parent=1 // pred_fallthru
      _
    %8676 = vsyncpa [#allocation5], 1
    %8677 = vsyncpa [#allocation7], 1
    %8678 = vsyncpa [#allocation10], 1
    %8679 = vsyncpa [#allocation13], 1
    %8680 = vsyncpa [#allocation16], 1

// kernel: forward.5
$region0: #{forward.5}
  #allocation0 [shape = 'u32[]', space=smem, size = 0x4, offset = 0x4, fixed_abs, tag = 'smem constant byte address 0x4 - core index']
  #allocation1 [shape = 'u32[72,128]{1,0:T(1,128)}', space=vmem, size = 0x9000, scoped, tag = 'internal scratch']
  %s0 = inlined_call_operand.hbm [shape: bf16[12,12], index: 0, kind: input, shape index: {}]
  %s1 = inlined_call_operand.vmem [shape: bf16[12,12544], index: 1, kind: input, shape index: {}]
  %s2 = inlined_call_operand.vmem [shape: f32[12,1], index: 2, kind: input, shape index: {}]
  %s3 = inlined_call_operand.vmem [shape: f32[12,12544], index: 3, kind: output, shape index: {}]
  %s4 = sld [smem:[#allocation0]]
  $region26: #{forward.5} parent=0
    _
  %s6 = ssub.s32 1, %s4
  %s7 = scalar_select 0, %s6, %s4
  $region1: #{forward.5} parent=0
    #allocation2 [shape = 'u8[4096]{0}', space=vmem, size = 0x1000, scoped, tag = 'input window, operand 0, single buffered']
    #allocation3 [shape = 's32[1]{0}', space=sflag, size = 0x4, scoped, tag = 'scoped memory for forward.5']
    %8 = vsyncpa [#allocation3], 0
    // Predicated region
    $region2: #{forward.5} parent=1 // pred_check
      _
    $region3: #{forward.5} parent=1 // pred_check_branch
      %10 = sbr.rel (0) target = $region5
    $region4: #{forward.5} parent=1 // pred_region
      %12 = vsyncadd [#allocation3], 0
      %s13 = sshll.u32 %s0, 4
      %s14 = int_to_ptr.hbm [resolvable:$true] %s13
      %s15 = sshll.u32 [#allocation2], 4
      %s16 = int_to_ptr.vmem [resolvable:$true] %s15
      %21 = dma.hbm_to_vmem [thread:$0]  %s14, 128, %s16, [#allocation3], 64, 64, 4
    $region5: #{forward.5} parent=1 // pred_fallthru
      _
    // Predicated region
    $region6: #{forward.5} parent=1 // pred_check
      _
    $region7: #{forward.5} parent=1 // pred_check_branch
      %23 = sbr.rel (0) target = $region9
    $region8: #{forward.5} parent=1 // pred_region
      _
    $region9: #{forward.5} parent=1 // pred_fallthru
      _
    // Predicated region
    $region10: #{forward.5} parent=1 // pred_check
      _
    $region11: #{forward.5} parent=1 // pred_check_branch
      %25 = sbr.rel (0) target = $region13
    $region12: #{forward.5} parent=1 // pred_region
      _
    $region13: #{forward.5} parent=1 // pred_fallthru
      _
    // Predicated region
    $region14: #{forward.5} parent=1 // pred_check
      _
    $region15: #{forward.5} parent=1 // pred_check_branch
      %27 = sbr.rel (0) target = $region17
    $region16: #{forward.5} parent=1 // pred_region
      %29 = dma.done [#allocation3], 128
    $region17: #{forward.5} parent=1 // pred_fallthru
      _
    %v31 = vld [vmem:[#allocation2] sm:$0xf]
    %v32 = vld [vmem:[#allocation2 + $0x4] sm:$0x3]
    %v33 = vld [vmem:[%s1] sm:$0xff]
    %v34 = vld [vmem:[%s1 + $0x8] sm:$0xff]
    %v35 = vld [vmem:[%s1 + $0x10] sm:$0xff]
    %v36 = vld [vmem:[%s1 + $0x18] sm:$0xff]
    %v37 = vld [vmem:[%s1 + $0x20] sm:$0xff]
    %v38 = vld [vmem:[%s1 + $0x28] sm:$0xff]
    %v39 = vld [vmem:[%s1 + $0x30] sm:$0xff]
    %v40 = vld [vmem:[%s1 + $0x38] sm:$0xff]
    %v41 = vld [vmem:[%s1 + $0x40] sm:$0xff]
    %v42 = vld [vmem:[%s1 + $0x48] sm:$0xff]
    %v43 = vld [vmem:[%s1 + $0x50] sm:$0xff]
    %v44 = vld [vmem:[%s1 + $0x58] sm:$0xff]
    %v45 = vld [vmem:[%s1 + $0x60] sm:$0xff]
    %v46 = vld [vmem:[%s1 + $0x68] sm:$0xff]
    %v47 = vld [vmem:[%s1 + $0x70] sm:$0xff]
    %v48 = vld [vmem:[%s1 + $0x78] sm:$0xff]
    %v49 = vld [vmem:[%s1 + $0x80] sm:$0xff]
    %v50 = vld [vmem:[%s1 + $0x88] sm:$0xff]
    %v51 = vld [vmem:[%s1 + $0x90] sm:$0xff]
    %v52 = vld [vmem:[%s1 + $0x98] sm:$0xff]
    %v53 = vld [vmem:[%s1 + $0xa0] sm:$0xff]
    %v54 = vld [vmem:[%s1 + $0xa8] sm:$0xff]
    %v55 = vld [vmem:[%s1 + $0xb0] sm:$0xff]
    %v56 = vld [vmem:[%s1 + $0xb8] sm:$0xff]
    %v57 = vld [vmem:[%s1 + $0xc0] sm:$0xff]
    %v58 = vld [vmem:[%s1 + $0xc8] sm:$0xff]
    %v59 = vld [vmem:[%s1 + $0xd0] sm:$0xff]
    %v60 = vld [vmem:[%s1 + $0xd8] sm:$0xff]
    %v61 = vld [vmem:[%s1 + $0xe0] sm:$0xff]
    %v62 = vld [vmem:[%s1 + $0xe8] sm:$0xff]
    %v63 = vld [vmem:[%s1 + $0xf0] sm:$0xff]
    %v64 = vld [vmem:[%s1 + $0xf8] sm:$0xff]
    %v65 = vld [vmem:[%s1 + $0x100] sm:$0xff]
    %v66 = vld [vmem:[%s1 + $0x108] sm:$0xff]
    %v67 = vld [vmem:[%s1 + $0x110] sm:$0xff]
    %v68 = vld [vmem:[%s1 + $0x118] sm:$0xff]
    %v69 = vld [vmem:[%s1 + $0x120] sm:$0xff]
    %v70 = vld [vmem:[%s1 + $0x128] sm:$0xff]
    %v71 = vld [vmem:[%s1 + $0x130] sm:$0xff]
    %v72 = vld [vmem:[%s1 + $0x138] sm:$0xff]
    %v73 = vld [vmem:[%s1 + $0x140] sm:$0xff]
    %v74 = vld [vmem:[%s1 + $0x148] sm:$0xff]
    %v75 = vld [vmem:[%s1 + $0x150] sm:$0xff]
    %v76 = vld [vmem:[%s1 + $0x158] sm:$0xff]
    %v77 = vld [vmem:[%s1 + $0x160] sm:$0xff]
    %v78 = vld [vmem:[%s1 + $0x168] sm:$0xff]
    %v79 = vld [vmem:[%s1 + $0x170] sm:$0xff]
    %v80 = vld [vmem:[%s1 + $0x178] sm:$0xff]
    %v81 = vld [vmem:[%s1 + $0x180] sm:$0xff]
    %v82 = vld [vmem:[%s1 + $0x188] sm:$0x33]
    %v83 = vld [vmem:[%s1 + $0x190] sm:$0x33]
    %v84 = vld [vmem:[%s1 + $0x198] sm:$0x33]
    %v85 = vld [vmem:[%s1 + $0x1a0] sm:$0x33]
    %v86 = vld [vmem:[%s1 + $0x1a8] sm:$0x33]
    %v87 = vld [vmem:[%s1 + $0x1b0] sm:$0x33]
    %v88 = vld [vmem:[%s1 + $0x1b8] sm:$0x33]
    %v89 = vld [vmem:[%s1 + $0x1c0] sm:$0x33]
    %v90 = vld [vmem:[%s1 + $0x1c8] sm:$0x33]
    %v91 = vld [vmem:[%s1 + $0x1d0] sm:$0x33]
    %v92 = vld [vmem:[%s1 + $0x1d8] sm:$0x33]
    %v93 = vld [vmem:[%s1 + $0x1e0] sm:$0x33]
    %v94 = vld [vmem:[%s1 + $0x1e8] sm:$0x33]
    %v95 = vld [vmem:[%s1 + $0x1f0] sm:$0x33]
    %v96 = vld [vmem:[%s1 + $0x1f8] sm:$0x33]
    %v97 = vld [vmem:[%s1 + $0x200] sm:$0x33]
    %v98 = vld [vmem:[%s1 + $0x208] sm:$0x33]
    %v99 = vld [vmem:[%s1 + $0x210] sm:$0x33]
    %v100 = vld [vmem:[%s1 + $0x218] sm:$0x33]
    %v101 = vld [vmem:[%s1 + $0x220] sm:$0x33]
    %v102 = vld [vmem:[%s1 + $0x228] sm:$0x33]
    %v103 = vld [vmem:[%s1 + $0x230] sm:$0x33]
    %v104 = vld [vmem:[%s1 + $0x238] sm:$0x33]
    %v105 = vld [vmem:[%s1 + $0x240] sm:$0x33]
    %v106 = vld [vmem:[%s1 + $0x248] sm:$0x33]
    %v107 = vld [vmem:[%s1 + $0x250] sm:$0x33]
    %v108 = vld [vmem:[%s1 + $0x258] sm:$0x33]
    %v109 = vld [vmem:[%s1 + $0x260] sm:$0x33]
    %v110 = vld [vmem:[%s1 + $0x268] sm:$0x33]
    %v111 = vld [vmem:[%s1 + $0x270] sm:$0x33]
    %v112 = vld [vmem:[%s1 + $0x278] sm:$0x33]
    %v113 = vld [vmem:[%s1 + $0x280] sm:$0x33]
    %v114 = vld [vmem:[%s1 + $0x288] sm:$0x33]
    %v115 = vld [vmem:[%s1 + $0x290] sm:$0x33]
    %v116 = vld [vmem:[%s1 + $0x298] sm:$0x33]
    %v117 = vld [vmem:[%s1 + $0x2a0] sm:$0x33]
    %v118 = vld [vmem:[%s1 + $0x2a8] sm:$0x33]
    %v119 = vld [vmem:[%s1 + $0x2b0] sm:$0x33]
    %v120 = vld [vmem:[%s1 + $0x2b8] sm:$0x33]
    %v121 = vld [vmem:[%s1 + $0x2c0] sm:$0x33]
    %v122 = vld [vmem:[%s1 + $0x2c8] sm:$0x33]
    %v123 = vld [vmem:[%s1 + $0x2d0] sm:$0x33]
    %v124 = vld [vmem:[%s1 + $0x2d8] sm:$0x33]
    %v125 = vld [vmem:[%s1 + $0x2e0] sm:$0x33]
    %v126 = vld [vmem:[%s1 + $0x2e8] sm:$0x33]
    %v127 = vld [vmem:[%s1 + $0x2f0] sm:$0x33]
    %v128 = vld [vmem:[%s1 + $0x2f8] sm:$0x33]
    %v129 = vld [vmem:[%s1 + $0x300] sm:$0x33]
    %v130 = vld [vmem:[%s1 + $0x308] sm:$0x33]
    %v131 = vld [vmem:[%s2] sm:$0xff]
    %v132 = vld [vmem:[%s2 + $0x8] sm:$0xf]
    %134 = vset.pattern.permute.xlu0 0
    %135 = vperm.xlu0 %134, %v131
    %v136 = vpop.permute.xlu0 %135
    %139 = vset.pattern.permute.xlu0 0
    %140 = vperm.xlu0 %139, %v132
    %v141 = vpop.permute.xlu0 %140
    %v145 = vunpack.c.l.b16 %v31
    %v146 = vunpack.c.l.b16 %v32
    %v147 = vpack.c.b16 %v146, %v145
    %v246 = vunpack.c.l.b16 %v33
    %v247 = vunpack.c.h.b16 %v33
    %v248 = vunpack.c.l.b16 %v34
    %v249 = vunpack.c.h.b16 %v34
    %v250 = vunpack.c.l.b16 %v35
    %v251 = vunpack.c.h.b16 %v35
    %v252 = vunpack.c.l.b16 %v36
    %v253 = vunpack.c.h.b16 %v36
    %v254 = vunpack.c.l.b16 %v37
    %v255 = vunpack.c.h.b16 %v37
    %v256 = vunpack.c.l.b16 %v38
    %v257 = vunpack.c.h.b16 %v38
    %v258 = vunpack.c.l.b16 %v39
    %v259 = vunpack.c.h.b16 %v39
    %v260 = vunpack.c.l.b16 %v40
    %v261 = vunpack.c.h.b16 %v40
    %v262 = vunpack.c.l.b16 %v41
    %v263 = vunpack.c.h.b16 %v41
    %v264 = vunpack.c.l.b16 %v42
    %v265 = vunpack.c.h.b16 %v42
    %v266 = vunpack.c.l.b16 %v43
    %v267 = vunpack.c.h.b16 %v43
    %v268 = vunpack.c.l.b16 %v44
    %v269 = vunpack.c.h.b16 %v44
    %v270 = vunpack.c.l.b16 %v45
    %v271 = vunpack.c.h.b16 %v45
    %v272 = vunpack.c.l.b16 %v46
    %v273 = vunpack.c.h.b16 %v46
    %v274 = vunpack.c.l.b16 %v47
    %v275 = vunpack.c.h.b16 %v47
    %v276 = vunpack.c.l.b16 %v48
    %v277 = vunpack.c.h.b16 %v48
    %v278 = vunpack.c.l.b16 %v49
    %v279 = vunpack.c.h.b16 %v49
    %v280 = vunpack.c.l.b16 %v50
    %v281 = vunpack.c.h.b16 %v50
    %v282 = vunpack.c.l.b16 %v51
    %v283 = vunpack.c.h.b16 %v51
    %v284 = vunpack.c.l.b16 %v52
    %v285 = vunpack.c.h.b16 %v52
    %v286 = vunpack.c.l.b16 %v53
    %v287 = vunpack.c.h.b16 %v53
    %v288 = vunpack.c.l.b16 %v54
    %v289 = vunpack.c.h.b16 %v54
    %v290 = vunpack.c.l.b16 %v55
    %v291 = vunpack.c.h.b16 %v55
    %v292 = vunpack.c.l.b16 %v56
    %v293 = vunpack.c.h.b16 %v56
    %v294 = vunpack.c.l.b16 %v57
    %v295 = vunpack.c.h.b16 %v57
    %v296 = vunpack.c.l.b16 %v58
    %v297 = vunpack.c.h.b16 %v58
    %v298 = vunpack.c.l.b16 %v59
    %v299 = vunpack.c.h.b16 %v59
    %v300 = vunpack.c.l.b16 %v60
    %v301 = vunpack.c.h.b16 %v60
    %v302 = vunpack.c.l.b16 %v61
    %v303 = vunpack.c.h.b16 %v61
    %v304 = vunpack.c.l.b16 %v62
    %v305 = vunpack.c.h.b16 %v62
    %v306 = vunpack.c.l.b16 %v63
    %v307 = vunpack.c.h.b16 %v63
    %v308 = vunpack.c.l.b16 %v64
    %v309 = vunpack.c.h.b16 %v64
    %v310 = vunpack.c.l.b16 %v65
    %v311 = vunpack.c.h.b16 %v65
    %v312 = vunpack.c.l.b16 %v66
    %v313 = vunpack.c.h.b16 %v66
    %v314 = vunpack.c.l.b16 %v67
    %v315 = vunpack.c.h.b16 %v67
    %v316 = vunpack.c.l.b16 %v68
    %v317 = vunpack.c.h.b16 %v68
    %v318 = vunpack.c.l.b16 %v69
    %v319 = vunpack.c.h.b16 %v69
    %v320 = vunpack.c.l.b16 %v70
    %v321 = vunpack.c.h.b16 %v70
    %v322 = vunpack.c.l.b16 %v71
    %v323 = vunpack.c.h.b16 %v71
    %v324 = vunpack.c.l.b16 %v72
    %v325 = vunpack.c.h.b16 %v72
    %v326 = vunpack.c.l.b16 %v73
    %v327 = vunpack.c.h.b16 %v73
    %v328 = vunpack.c.l.b16 %v74
    %v329 = vunpack.c.h.b16 %v74
    %v330 = vunpack.c.l.b16 %v75
    %v331 = vunpack.c.h.b16 %v75
    %v332 = vunpack.c.l.b16 %v76
    %v333 = vunpack.c.h.b16 %v76
    %v334 = vunpack.c.l.b16 %v77
    %v335 = vunpack.c.h.b16 %v77
    %v336 = vunpack.c.l.b16 %v78
    %v337 = vunpack.c.h.b16 %v78
    %v338 = vunpack.c.l.b16 %v79
    %v339 = vunpack.c.h.b16 %v79
    %v340 = vunpack.c.l.b16 %v80
    %v341 = vunpack.c.h.b16 %v80
    %v342 = vunpack.c.l.b16 %v81
    %v343 = vunpack.c.h.b16 %v81
    %v344 = vunpack.c.l.b16 %v82
    %v345 = vunpack.c.h.b16 %v82
    %v346 = vunpack.c.l.b16 %v83
    %v347 = vunpack.c.h.b16 %v83
    %v348 = vunpack.c.l.b16 %v84
    %v349 = vunpack.c.h.b16 %v84
    %v350 = vunpack.c.l.b16 %v85
    %v351 = vunpack.c.h.b16 %v85
    %v352 = vunpack.c.l.b16 %v86
    %v353 = vunpack.c.h.b16 %v86
    %v354 = vunpack.c.l.b16 %v87
    %v355 = vunpack.c.h.b16 %v87
    %v356 = vunpack.c.l.b16 %v88
    %v357 = vunpack.c.h.b16 %v88
    %v358 = vunpack.c.l.b16 %v89
    %v359 = vunpack.c.h.b16 %v89
    %v360 = vunpack.c.l.b16 %v90
    %v361 = vunpack.c.h.b16 %v90
    %v362 = vunpack.c.l.b16 %v91
    %v363 = vunpack.c.h.b16 %v91
    %v364 = vunpack.c.l.b16 %v92
    %v365 = vunpack.c.h.b16 %v92
    %v366 = vunpack.c.l.b16 %v93
    %v367 = vunpack.c.h.b16 %v93
    %v368 = vunpack.c.l.b16 %v94
    %v369 = vunpack.c.h.b16 %v94
    %v370 = vunpack.c.l.b16 %v95
    %v371 = vunpack.c.h.b16 %v95
    %v372 = vunpack.c.l.b16 %v96
    %v373 = vunpack.c.h.b16 %v96
    %v374 = vunpack.c.l.b16 %v97
    %v375 = vunpack.c.h.b16 %v97
    %v376 = vunpack.c.l.b16 %v98
    %v377 = vunpack.c.h.b16 %v98
    %v378 = vunpack.c.l.b16 %v99
    %v379 = vunpack.c.h.b16 %v99
    %v380 = vunpack.c.l.b16 %v100
    %v381 = vunpack.c.h.b16 %v100
    %v382 = vunpack.c.l.b16 %v101
    %v383 = vunpack.c.h.b16 %v101
    %v384 = vunpack.c.l.b16 %v102
    %v385 = vunpack.c.h.b16 %v102
    %v386 = vunpack.c.l.b16 %v103
    %v387 = vunpack.c.h.b16 %v103
    %v388 = vunpack.c.l.b16 %v104
    %v389 = vunpack.c.h.b16 %v104
    %v390 = vunpack.c.l.b16 %v105
    %v391 = vunpack.c.h.b16 %v105
    %v392 = vunpack.c.l.b16 %v106
    %v393 = vunpack.c.h.b16 %v106
    %v394 = vunpack.c.l.b16 %v107
    %v395 = vunpack.c.h.b16 %v107
    %v396 = vunpack.c.l.b16 %v108
    %v397 = vunpack.c.h.b16 %v108
    %v398 = vunpack.c.l.b16 %v109
    %v399 = vunpack.c.h.b16 %v109
    %v400 = vunpack.c.l.b16 %v110
    %v401 = vunpack.c.h.b16 %v110
    %v402 = vunpack.c.l.b16 %v111
    %v403 = vunpack.c.h.b16 %v111
    %v404 = vunpack.c.l.b16 %v112
    %v405 = vunpack.c.h.b16 %v112
    %v406 = vunpack.c.l.b16 %v113
    %v407 = vunpack.c.h.b16 %v113
    %v408 = vunpack.c.l.b16 %v114
    %v409 = vunpack.c.h.b16 %v114
    %v410 = vunpack.c.l.b16 %v115
    %v411 = vunpack.c.h.b16 %v115
    %v412 = vunpack.c.l.b16 %v116
    %v413 = vunpack.c.h.b16 %v116
    %v414 = vunpack.c.l.b16 %v117
    %v415 = vunpack.c.h.b16 %v117
    %v416 = vunpack.c.l.b16 %v118
    %v417 = vunpack.c.h.b16 %v118
    %v418 = vunpack.c.l.b16 %v119
    %v419 = vunpack.c.h.b16 %v119
    %v420 = vunpack.c.l.b16 %v120
    %v421 = vunpack.c.h.b16 %v120
    %v422 = vunpack.c.l.b16 %v121
    %v423 = vunpack.c.h.b16 %v121
    %v424 = vunpack.c.l.b16 %v122
    %v425 = vunpack.c.h.b16 %v122
    %v426 = vunpack.c.l.b16 %v123
    %v427 = vunpack.c.h.b16 %v123
    %v428 = vunpack.c.l.b16 %v124
    %v429 = vunpack.c.h.b16 %v124
    %v430 = vunpack.c.l.b16 %v125
    %v431 = vunpack.c.h.b16 %v125
    %v432 = vunpack.c.l.b16 %v126
    %v433 = vunpack.c.h.b16 %v126
    %v434 = vunpack.c.l.b16 %v127
    %v435 = vunpack.c.h.b16 %v127
    %v436 = vunpack.c.l.b16 %v128
    %v437 = vunpack.c.h.b16 %v128
    %v438 = vunpack.c.l.b16 %v129
    %v439 = vunpack.c.h.b16 %v129
    %v440 = vunpack.c.l.b16 %v130
    %v441 = vunpack.c.h.b16 %v130
    %v442 = vpack.c.b16 %v344, %v246
    %v443 = vpack.c.b16 %v345, %v247
    %v444 = vpack.c.b16 %v346, %v248
    %v445 = vpack.c.b16 %v347, %v249
    %v446 = vpack.c.b16 %v348, %v250
    %v447 = vpack.c.b16 %v349, %v251
    %v448 = vpack.c.b16 %v350, %v252
    %v449 = vpack.c.b16 %v351, %v253
    %v450 = vpack.c.b16 %v352, %v254
    %v451 = vpack.c.b16 %v353, %v255
    %v452 = vpack.c.b16 %v354, %v256
    %v453 = vpack.c.b16 %v355, %v257
    %v454 = vpack.c.b16 %v356, %v258
    %v455 = vpack.c.b16 %v357, %v259
    %v456 = vpack.c.b16 %v358, %v260
    %v457 = vpack.c.b16 %v359, %v261
    %v458 = vpack.c.b16 %v360, %v262
    %v459 = vpack.c.b16 %v361, %v263
    %v460 = vpack.c.b16 %v362, %v264
    %v461 = vpack.c.b16 %v363, %v265
    %v462 = vpack.c.b16 %v364, %v266
    %v463 = vpack.c.b16 %v365, %v267
    %v464 = vpack.c.b16 %v366, %v268
    %v465 = vpack.c.b16 %v367, %v269
    %v466 = vpack.c.b16 %v368, %v270
    %v467 = vpack.c.b16 %v369, %v271
    %v468 = vpack.c.b16 %v370, %v272
    %v469 = vpack.c.b16 %v371, %v273
    %v470 = vpack.c.b16 %v372, %v274
    %v471 = vpack.c.b16 %v373, %v275
    %v472 = vpack.c.b16 %v374, %v276
    %v473 = vpack.c.b16 %v375, %v277
    %v474 = vpack.c.b16 %v376, %v278
    %v475 = vpack.c.b16 %v377, %v279
    %v476 = vpack.c.b16 %v378, %v280
    %v477 = vpack.c.b16 %v379, %v281
    %v478 = vpack.c.b16 %v380, %v282
    %v479 = vpack.c.b16 %v381, %v283
    %v480 = vpack.c.b16 %v382, %v284
    %v481 = vpack.c.b16 %v383, %v285
    %v482 = vpack.c.b16 %v384, %v286
    %v483 = vpack.c.b16 %v385, %v287
    %v484 = vpack.c.b16 %v386, %v288
    %v485 = vpack.c.b16 %v387, %v289
    %v486 = vpack.c.b16 %v388, %v290
    %v487 = vpack.c.b16 %v389, %v291
    %v488 = vpack.c.b16 %v390, %v292
    %v489 = vpack.c.b16 %v391, %v293
    %v490 = vpack.c.b16 %v392, %v294
    %v491 = vpack.c.b16 %v393, %v295
    %v492 = vpack.c.b16 %v394, %v296
    %v493 = vpack.c.b16 %v395, %v297
    %v494 = vpack.c.b16 %v396, %v298
    %v495 = vpack.c.b16 %v397, %v299
    %v496 = vpack.c.b16 %v398, %v300
    %v497 = vpack.c.b16 %v399, %v301
    %v498 = vpack.c.b16 %v400, %v302
    %v499 = vpack.c.b16 %v401, %v303
    %v500 = vpack.c.b16 %v402, %v304
    %v501 = vpack.c.b16 %v403, %v305
    %v502 = vpack.c.b16 %v404, %v306
    %v503 = vpack.c.b16 %v405, %v307
    %v504 = vpack.c.b16 %v406, %v308
    %v505 = vpack.c.b16 %v407, %v309
    %v506 = vpack.c.b16 %v408, %v310
    %v507 = vpack.c.b16 %v409, %v311
    %v508 = vpack.c.b16 %v410, %v312
    %v509 = vpack.c.b16 %v411, %v313
    %v510 = vpack.c.b16 %v412, %v314
    %v511 = vpack.c.b16 %v413, %v315
    %v512 = vpack.c.b16 %v414, %v316
    %v513 = vpack.c.b16 %v415, %v317
    %v514 = vpack.c.b16 %v416, %v318
    %v515 = vpack.c.b16 %v417, %v319
    %v516 = vpack.c.b16 %v418, %v320
    %v517 = vpack.c.b16 %v419, %v321
    %v518 = vpack.c.b16 %v420, %v322
    %v519 = vpack.c.b16 %v421, %v323
    %v520 = vpack.c.b16 %v422, %v324
    %v521 = vpack.c.b16 %v423, %v325
    %v522 = vpack.c.b16 %v424, %v326
    %v523 = vpack.c.b16 %v425, %v327
    %v524 = vpack.c.b16 %v426, %v328
    %v525 = vpack.c.b16 %v427, %v329
    %v526 = vpack.c.b16 %v428, %v330
    %v527 = vpack.c.b16 %v429, %v331
    %v528 = vpack.c.b16 %v430, %v332
    %v529 = vpack.c.b16 %v431, %v333
    %v530 = vpack.c.b16 %v432, %v334
    %v531 = vpack.c.b16 %v433, %v335
    %v532 = vpack.c.b16 %v434, %v336
    %v533 = vpack.c.b16 %v435, %v337
    %v534 = vpack.c.b16 %v436, %v338
    %v535 = vpack.c.b16 %v437, %v339
    %v536 = vpack.c.b16 %v438, %v340
    %v537 = vpack.c.b16 %v439, %v341
    %v538 = vpack.c.b16 %v440, %v342
    %v539 = vpack.c.b16 %v441, %v343
    %vm540 = vcmask 97280
    %v542 = vsel %vm540, %v147, 0
    %vm544 = vcmask 1045504
    %v546 = vsel %vm544, %v442, 0
    %v549 = vsel %vm544, %v443, 0
    %v552 = vsel %vm544, %v444, 0
    %v555 = vsel %vm544, %v445, 0
    %v558 = vsel %vm544, %v446, 0
    %v561 = vsel %vm544, %v447, 0
    %v564 = vsel %vm544, %v448, 0
    %v567 = vsel %vm544, %v449, 0
    %v570 = vsel %vm544, %v450, 0
    %v573 = vsel %vm544, %v451, 0
    %v576 = vsel %vm544, %v452, 0
    %v579 = vsel %vm544, %v453, 0
    %v582 = vsel %vm544, %v454, 0
    %v585 = vsel %vm544, %v455, 0
    %v588 = vsel %vm544, %v456, 0
    %v591 = vsel %vm544, %v457, 0
    %v594 = vsel %vm544, %v458, 0
    %v597 = vsel %vm544, %v459, 0
    %v600 = vsel %vm544, %v460, 0
    %v603 = vsel %vm544, %v461, 0
    %v606 = vsel %vm544, %v462, 0
    %v609 = vsel %vm544, %v463, 0
    %v612 = vsel %vm544, %v464, 0
    %v615 = vsel %vm544, %v465, 0
    %v618 = vsel %vm544, %v466, 0
    %v621 = vsel %vm544, %v467, 0
    %v624 = vsel %vm544, %v468, 0
    %v627 = vsel %vm544, %v469, 0
    %v630 = vsel %vm544, %v470, 0
    %v633 = vsel %vm544, %v471, 0
    %v636 = vsel %vm544, %v472, 0
    %v639 = vsel %vm544, %v473, 0
    %v642 = vsel %vm544, %v474, 0
    %v645 = vsel %vm544, %v475, 0
    %v648 = vsel %vm544, %v476, 0
    %v651 = vsel %vm544, %v477, 0
    %v654 = vsel %vm544, %v478, 0
    %v657 = vsel %vm544, %v479, 0
    %v660 = vsel %vm544, %v480, 0
    %v663 = vsel %vm544, %v481, 0
    %v666 = vsel %vm544, %v482, 0
    %v669 = vsel %vm544, %v483, 0
    %v672 = vsel %vm544, %v484, 0
    %v675 = vsel %vm544, %v485, 0
    %v678 = vsel %vm544, %v486, 0
    %v681 = vsel %vm544, %v487, 0
    %v684 = vsel %vm544, %v488, 0
    %v687 = vsel %vm544, %v489, 0
    %v690 = vsel %vm544, %v490, 0
    %v693 = vsel %vm544, %v491, 0
    %v696 = vsel %vm544, %v492, 0
    %v699 = vsel %vm544, %v493, 0
    %v702 = vsel %vm544, %v494, 0
    %v705 = vsel %vm544, %v495, 0
    %v708 = vsel %vm544, %v496, 0
    %v711 = vsel %vm544, %v497, 0
    %v714 = vsel %vm544, %v498, 0
    %v717 = vsel %vm544, %v499, 0
    %v720 = vsel %vm544, %v500, 0
    %v723 = vsel %vm544, %v501, 0
    %v726 = vsel %vm544, %v502, 0
    %v729 = vsel %vm544, %v503, 0
    %v732 = vsel %vm544, %v504, 0
    %v735 = vsel %vm544, %v505, 0
    %v738 = vsel %vm544, %v506, 0
    %v741 = vsel %vm544, %v507, 0
    %v744 = vsel %vm544, %v508, 0
    %v747 = vsel %vm544, %v509, 0
    %v750 = vsel %vm544, %v510, 0
    %v753 = vsel %vm544, %v511, 0
    %v756 = vsel %vm544, %v512, 0
    %v759 = vsel %vm544, %v513, 0
    %v762 = vsel %vm544, %v514, 0
    %v765 = vsel %vm544, %v515, 0
    %v768 = vsel %vm544, %v516, 0
    %v771 = vsel %vm544, %v517, 0
    %v774 = vsel %vm544, %v518, 0
    %v777 = vsel %vm544, %v519, 0
    %v780 = vsel %vm544, %v520, 0
    %v783 = vsel %vm544, %v521, 0
    %v786 = vsel %vm544, %v522, 0
    %v789 = vsel %vm544, %v523, 0
    %v792 = vsel %vm544, %v524, 0
    %v795 = vsel %vm544, %v525, 0
    %v798 = vsel %vm544, %v526, 0
    %v801 = vsel %vm544, %v527, 0
    %v804 = vsel %vm544, %v528, 0
    %v807 = vsel %vm544, %v529, 0
    %v810 = vsel %vm544, %v530, 0
    %v813 = vsel %vm544, %v531, 0
    %v816 = vsel %vm544, %v532, 0
    %v819 = vsel %vm544, %v533, 0
    %v822 = vsel %vm544, %v534, 0
    %v825 = vsel %vm544, %v535, 0
    %v828 = vsel %vm544, %v536, 0
    %v831 = vsel %vm544, %v537, 0
    %v834 = vsel %vm544, %v538, 0
    %v837 = vsel %vm544, %v539, 0
    %839 = vmatpush.bf16.msra.mxu0 0
    %840 = vmatpush.bf16.msra.mxu0 0
    %841 = vmatpush.bf16.msra.mxu0 0
    %842 = vmatpush.bf16.msra.mxu0 0
    %843 = vmatpush.bf16.msra.mxu0 0
    %844 = vmatpush.bf16.msra.mxu0 0
    %845 = vmatpush.bf16.msra.mxu0 0
    %846 = vmatpush.bf16.msra.mxu0 %v546
    %847 = vmatmul.bf16.gmra.mxu0 %v542
    %v848 = vpop.f32.mrf.mxu0
    %v849 = vadd.f32 %v136, %v848
    %v850 = vpop.f32.mrf.mxu0
    %v851 = vadd.f32 %v141, %v850
    %852 = vdwg.mxu0
    %853 = vmatpush.bf16.msra.mxu0 0
    %854 = vmatpush.bf16.msra.mxu0 0
    %855 = vmatpush.bf16.msra.mxu0 0
    %856 = vmatpush.bf16.msra.mxu0 0
    %857 = vmatpush.bf16.msra.mxu0 0
    %858 = vmatpush.bf16.msra.mxu0 0
    %859 = vmatpush.bf16.msra.mxu0 0
    %860 = vmatpush.bf16.msra.mxu0 %v549
    %861 = vmatmul.bf16.gmra.mxu0 %v542
    %v862 = vpop.f32.mrf.mxu0
    %v863 = vadd.f32 %v136, %v862
    %v864 = vpop.f32.mrf.mxu0
    %v865 = vadd.f32 %v141, %v864
    %866 = vdwg.mxu0
    %867 = vmatpush.bf16.msra.mxu0 0
    %868 = vmatpush.bf16.msra.mxu0 0
    %869 = vmatpush.bf16.msra.mxu0 0
    %870 = vmatpush.bf16.msra.mxu0 0
    %871 = vmatpush.bf16.msra.mxu0 0
    %872 = vmatpush.bf16.msra.mxu0 0
    %873 = vmatpush.bf16.msra.mxu0 0
    %874 = vmatpush.bf16.msra.mxu0 %v552
    %875 = vmatmul.bf16.gmra.mxu0 %v542
    %v876 = vpop.f32.mrf.mxu0
    %v877 = vadd.f32 %v136, %v876
    %v878 = vpop.f32.mrf.mxu0
    %v879 = vadd.f32 %v141, %v878
    %880 = vdwg.mxu0
    %881 = vmatpush.bf16.msra.mxu0 0
    %882 = vmatpush.bf16.msra.mxu0 0
    %883 = vmatpush.bf16.msra.mxu0 0
    %884 = vmatpush.bf16.msra.mxu0 0
    %885 = vmatpush.bf16.msra.mxu0 0
    %886 = vmatpush.bf16.msra.mxu0 0
    %887 = vmatpush.bf16.msra.mxu0 0
    %888 = vmatpush.bf16.msra.mxu0 %v555
    %889 = vmatmul.bf16.gmra.mxu0 %v542
    %v890 = vpop.f32.mrf.mxu0
    %v891 = vadd.f32 %v136, %v890
    %v892 = vpop.f32.mrf.mxu0
    %v893 = vadd.f32 %v141, %v892
    %894 = vdwg.mxu0
    %895 = vmatpush.bf16.msra.mxu0 0
    %896 = vmatpush.bf16.msra.mxu0 0
    %897 = vmatpush.bf16.msra.mxu0 0
    %898 = vmatpush.bf16.msra.mxu0 0
    %899 = vmatpush.bf16.msra.mxu0 0
    %900 = vmatpush.bf16.msra.mxu0 0
    %901 = vmatpush.bf16.msra.mxu0 0
    %902 = vmatpush.bf16.msra.mxu0 %v558
    %903 = vmatmul.bf16.gmra.mxu0 %v542
    %v904 = vpop.f32.mrf.mxu0
    %v905 = vadd.f32 %v136, %v904
    %v906 = vpop.f32.mrf.mxu0
    %v907 = vadd.f32 %v141, %v906
    %908 = vdwg.mxu0
    %909 = vmatpush.bf16.msra.mxu0 0
    %910 = vmatpush.bf16.msra.mxu0 0
    %911 = vmatpush.bf16.msra.mxu0 0
    %912 = vmatpush.bf16.msra.mxu0 0
    %913 = vmatpush.bf16.msra.mxu0 0
    %914 = vmatpush.bf16.msra.mxu0 0
    %915 = vmatpush.bf16.msra.mxu0 0
    %916 = vmatpush.bf16.msra.mxu0 %v561
    %917 = vmatmul.bf16.gmra.mxu0 %v542
    %v918 = vpop.f32.mrf.mxu0
    %v919 = vadd.f32 %v136, %v918
    %v920 = vpop.f32.mrf.mxu0
    %v921 = vadd.f32 %v141, %v920
    %922 = vdwg.mxu0
    %923 = vmatpush.bf16.msra.mxu0 0
    %924 = vmatpush.bf16.msra.mxu0 0
    %925 = vmatpush.bf16.msra.mxu0 0
    %926 = vmatpush.bf16.msra.mxu0 0
    %927 = vmatpush.bf16.msra.mxu0 0
    %928 = vmatpush.bf16.msra.mxu0 0
    %929 = vmatpush.bf16.msra.mxu0 0
    %930 = vmatpush.bf16.msra.mxu0 %v564
    %931 = vmatmul.bf16.gmra.mxu0 %v542
    %v932 = vpop.f32.mrf.mxu0
    %v933 = vadd.f32 %v136, %v932
    %v934 = vpop.f32.mrf.mxu0
    %v935 = vadd.f32 %v141, %v934
    %936 = vdwg.mxu0
    %937 = vmatpush.bf16.msra.mxu0 0
    %938 = vmatpush.bf16.msra.mxu0 0
    %939 = vmatpush.bf16.msra.mxu0 0
    %940 = vmatpush.bf16.msra.mxu0 0
    %941 = vmatpush.bf16.msra.mxu0 0
    %942 = vmatpush.bf16.msra.mxu0 0
    %943 = vmatpush.bf16.msra.mxu0 0
    %944 = vmatpush.bf16.msra.mxu0 %v567
    %945 = vmatmul.bf16.gmra.mxu0 %v542
    %v946 = vpop.f32.mrf.mxu0
    %v947 = vadd.f32 %v136, %v946
    %v948 = vpop.f32.mrf.mxu0
    %v949 = vadd.f32 %v141, %v948
    %950 = vdwg.mxu0
    %951 = vmatpush.bf16.msra.mxu0 0
    %952 = vmatpush.bf16.msra.mxu0 0
    %953 = vmatpush.bf16.msra.mxu0 0
    %954 = vmatpush.bf16.msra.mxu0 0
    %955 = vmatpush.bf16.msra.mxu0 0
    %956 = vmatpush.bf16.msra.mxu0 0
    %957 = vmatpush.bf16.msra.mxu0 0
    %958 = vmatpush.bf16.msra.mxu0 %v570
    %959 = vmatmul.bf16.gmra.mxu0 %v542
    %v960 = vpop.f32.mrf.mxu0
    %v961 = vadd.f32 %v136, %v960
    %v962 = vpop.f32.mrf.mxu0
    %v963 = vadd.f32 %v141, %v962
    %964 = vdwg.mxu0
    %965 = vmatpush.bf16.msra.mxu0 0
    %966 = vmatpush.bf16.msra.mxu0 0
    %967 = vmatpush.bf16.msra.mxu0 0
    %968 = vmatpush.bf16.msra.mxu0 0
    %969 = vmatpush.bf16.msra.mxu0 0
    %970 = vmatpush.bf16.msra.mxu0 0
    %971 = vmatpush.bf16.msra.mxu0 0
    %972 = vmatpush.bf16.msra.mxu0 %v573
    %973 = vmatmul.bf16.gmra.mxu0 %v542
    %v974 = vpop.f32.mrf.mxu0
    %v975 = vadd.f32 %v136, %v974
    %v976 = vpop.f32.mrf.mxu0
    %v977 = vadd.f32 %v141, %v976
    %978 = vdwg.mxu0
    %979 = vmatpush.bf16.msra.mxu0 0
    %980 = vmatpush.bf16.msra.mxu0 0
    %981 = vmatpush.bf16.msra.mxu0 0
    %982 = vmatpush.bf16.msra.mxu0 0
    %983 = vmatpush.bf16.msra.mxu0 0
    %984 = vmatpush.bf16.msra.mxu0 0
    %985 = vmatpush.bf16.msra.mxu0 0
    %986 = vmatpush.bf16.msra.mxu0 %v576
    %987 = vmatmul.bf16.gmra.mxu0 %v542
    %v988 = vpop.f32.mrf.mxu0
    %v989 = vadd.f32 %v136, %v988
    %v990 = vpop.f32.mrf.mxu0
    %v991 = vadd.f32 %v141, %v990
    %992 = vdwg.mxu0
    %993 = vmatpush.bf16.msra.mxu0 0
    %994 = vmatpush.bf16.msra.mxu0 0
    %995 = vmatpush.bf16.msra.mxu0 0
    %996 = vmatpush.bf16.msra.mxu0 0
    %997 = vmatpush.bf16.msra.mxu0 0
    %998 = vmatpush.bf16.msra.mxu0 0
    %999 = vmatpush.bf16.msra.mxu0 0
    %1000 = vmatpush.bf16.msra.mxu0 %v579
    %1001 = vmatmul.bf16.gmra.mxu0 %v542
    %v1002 = vpop.f32.mrf.mxu0
    %v1003 = vadd.f32 %v136, %v1002
    %v1004 = vpop.f32.mrf.mxu0
    %v1005 = vadd.f32 %v141, %v1004
    %1006 = vdwg.mxu0
    %1007 = vmatpush.bf16.msra.mxu0 0
    %1008 = vmatpush.bf16.msra.mxu0 0
    %1009 = vmatpush.bf16.msra.mxu0 0
    %1010 = vmatpush.bf16.msra.mxu0 0
    %1011 = vmatpush.bf16.msra.mxu0 0
    %1012 = vmatpush.bf16.msra.mxu0 0
    %1013 = vmatpush.bf16.msra.mxu0 0
    %1014 = vmatpush.bf16.msra.mxu0 %v582
    %1015 = vmatmul.bf16.gmra.mxu0 %v542
    %v1016 = vpop.f32.mrf.mxu0
    %v1017 = vadd.f32 %v136, %v1016
    %v1018 = vpop.f32.mrf.mxu0
    %v1019 = vadd.f32 %v141, %v1018
    %1020 = vdwg.mxu0
    %1021 = vmatpush.bf16.msra.mxu0 0
    %1022 = vmatpush.bf16.msra.mxu0 0
    %1023 = vmatpush.bf16.msra.mxu0 0
    %1024 = vmatpush.bf16.msra.mxu0 0
    %1025 = vmatpush.bf16.msra.mxu0 0
    %1026 = vmatpush.bf16.msra.mxu0 0
    %1027 = vmatpush.bf16.msra.mxu0 0
    %1028 = vmatpush.bf16.msra.mxu0 %v585
    %1029 = vmatmul.bf16.gmra.mxu0 %v542
    %v1030 = vpop.f32.mrf.mxu0
    %v1031 = vadd.f32 %v136, %v1030
    %v1032 = vpop.f32.mrf.mxu0
    %v1033 = vadd.f32 %v141, %v1032
    %1034 = vdwg.mxu0
    %1035 = vmatpush.bf16.msra.mxu0 0
    %1036 = vmatpush.bf16.msra.mxu0 0
    %1037 = vmatpush.bf16.msra.mxu0 0
    %1038 = vmatpush.bf16.msra.mxu0 0
    %1039 = vmatpush.bf16.msra.mxu0 0
    %1040 = vmatpush.bf16.msra.mxu0 0
    %1041 = vmatpush.bf16.msra.mxu0 0
    %1042 = vmatpush.bf16.msra.mxu0 %v588
    %1043 = vmatmul.bf16.gmra.mxu0 %v542
    %v1044 = vpop.f32.mrf.mxu0
    %v1045 = vadd.f32 %v136, %v1044
    %v1046 = vpop.f32.mrf.mxu0
    %v1047 = vadd.f32 %v141, %v1046
    %1048 = vdwg.mxu0
    %1049 = vmatpush.bf16.msra.mxu0 0
    %1050 = vmatpush.bf16.msra.mxu0 0
    %1051 = vmatpush.bf16.msra.mxu0 0
    %1052 = vmatpush.bf16.msra.mxu0 0
    %1053 = vmatpush.bf16.msra.mxu0 0
    %1054 = vmatpush.bf16.msra.mxu0 0
    %1055 = vmatpush.bf16.msra.mxu0 0
    %1056 = vmatpush.bf16.msra.mxu0 %v591
    %1057 = vmatmul.bf16.gmra.mxu0 %v542
    %v1058 = vpop.f32.mrf.mxu0
    %v1059 = vadd.f32 %v136, %v1058
    %v1060 = vpop.f32.mrf.mxu0
    %v1061 = vadd.f32 %v141, %v1060
    %1062 = vdwg.mxu0
    %1063 = vmatpush.bf16.msra.mxu0 0
    %1064 = vmatpush.bf16.msra.mxu0 0
    %1065 = vmatpush.bf16.msra.mxu0 0
    %1066 = vmatpush.bf16.msra.mxu0 0
    %1067 = vmatpush.bf16.msra.mxu0 0
    %1068 = vmatpush.bf16.msra.mxu0 0
    %1069 = vmatpush.bf16.msra.mxu0 0
    %1070 = vmatpush.bf16.msra.mxu0 %v594
    %1071 = vmatmul.bf16.gmra.mxu0 %v542
    %v1072 = vpop.f32.mrf.mxu0
    %v1073 = vadd.f32 %v136, %v1072
    %v1074 = vpop.f32.mrf.mxu0
    %v1075 = vadd.f32 %v141, %v1074
    %1076 = vdwg.mxu0
    %1077 = vmatpush.bf16.msra.mxu0 0
    %1078 = vmatpush.bf16.msra.mxu0 0
    %1079 = vmatpush.bf16.msra.mxu0 0
    %1080 = vmatpush.bf16.msra.mxu0 0
    %1081 = vmatpush.bf16.msra.mxu0 0
    %1082 = vmatpush.bf16.msra.mxu0 0
    %1083 = vmatpush.bf16.msra.mxu0 0
    %1084 = vmatpush.bf16.msra.mxu0 %v597
    %1085 = vmatmul.bf16.gmra.mxu0 %v542
    %v1086 = vpop.f32.mrf.mxu0
    %v1087 = vadd.f32 %v136, %v1086
    %v1088 = vpop.f32.mrf.mxu0
    %v1089 = vadd.f32 %v141, %v1088
    %1090 = vdwg.mxu0
    %1091 = vmatpush.bf16.msra.mxu0 0
    %1092 = vmatpush.bf16.msra.mxu0 0
    %1093 = vmatpush.bf16.msra.mxu0 0
    %1094 = vmatpush.bf16.msra.mxu0 0
    %1095 = vmatpush.bf16.msra.mxu0 0
    %1096 = vmatpush.bf16.msra.mxu0 0
    %1097 = vmatpush.bf16.msra.mxu0 0
    %1098 = vmatpush.bf16.msra.mxu0 %v600
    %1099 = vmatmul.bf16.gmra.mxu0 %v542
    %v1100 = vpop.f32.mrf.mxu0
    %v1101 = vadd.f32 %v136, %v1100
    %v1102 = vpop.f32.mrf.mxu0
    %v1103 = vadd.f32 %v141, %v1102
    %1104 = vdwg.mxu0
    %1105 = vmatpush.bf16.msra.mxu0 0
    %1106 = vmatpush.bf16.msra.mxu0 0
    %1107 = vmatpush.bf16.msra.mxu0 0
    %1108 = vmatpush.bf16.msra.mxu0 0
    %1109 = vmatpush.bf16.msra.mxu0 0
    %1110 = vmatpush.bf16.msra.mxu0 0
    %1111 = vmatpush.bf16.msra.mxu0 0
    %1112 = vmatpush.bf16.msra.mxu0 %v603
    %1113 = vmatmul.bf16.gmra.mxu0 %v542
    %v1114 = vpop.f32.mrf.mxu0
    %v1115 = vadd.f32 %v136, %v1114
    %v1116 = vpop.f32.mrf.mxu0
    %v1117 = vadd.f32 %v141, %v1116
    %1118 = vdwg.mxu0
    %1119 = vmatpush.bf16.msra.mxu0 0
    %1120 = vmatpush.bf16.msra.mxu0 0
    %1121 = vmatpush.bf16.msra.mxu0 0
    %1122 = vmatpush.bf16.msra.mxu0 0
    %1123 = vmatpush.bf16.msra.mxu0 0
    %1124 = vmatpush.bf16.msra.mxu0 0
    %1125 = vmatpush.bf16.msra.mxu0 0
    %1126 = vmatpush.bf16.msra.mxu0 %v606
    %1127 = vmatmul.bf16.gmra.mxu0 %v542
    %v1128 = vpop.f32.mrf.mxu0
    %v1129 = vadd.f32 %v136, %v1128
    %v1130 = vpop.f32.mrf.mxu0
    %v1131 = vadd.f32 %v141, %v1130
    %1132 = vdwg.mxu0
    %1133 = vmatpush.bf16.msra.mxu0 0
    %1134 = vmatpush.bf16.msra.mxu0 0
    %1135 = vmatpush.bf16.msra.mxu0 0
    %1136 = vmatpush.bf16.msra.mxu0 0
    %1137 = vmatpush.bf16.msra.mxu0 0
    %1138 = vmatpush.bf16.msra.mxu0 0
    %1139 = vmatpush.bf16.msra.mxu0 0
    %1140 = vmatpush.bf16.msra.mxu0 %v609
    %1141 = vmatmul.bf16.gmra.mxu0 %v542
    %v1142 = vpop.f32.mrf.mxu0
    %v1143 = vadd.f32 %v136, %v1142
    %v1144 = vpop.f32.mrf.mxu0
    %v1145 = vadd.f32 %v141, %v1144
    %1146 = vdwg.mxu0
    %1147 = vmatpush.bf16.msra.mxu0 0
    %1148 = vmatpush.bf16.msra.mxu0 0
    %1149 = vmatpush.bf16.msra.mxu0 0
    %1150 = vmatpush.bf16.msra.mxu0 0
    %1151 = vmatpush.bf16.msra.mxu0 0
    %1152 = vmatpush.bf16.msra.mxu0 0
    %1153 = vmatpush.bf16.msra.mxu0 0
    %1154 = vmatpush.bf16.msra.mxu0 %v612
    %1155 = vmatmul.bf16.gmra.mxu0 %v542
    %v1156 = vpop.f32.mrf.mxu0
    %v1157 = vadd.f32 %v136, %v1156
    %v1158 = vpop.f32.mrf.mxu0
    %v1159 = vadd.f32 %v141, %v1158
    %1160 = vdwg.mxu0
    %1161 = vmatpush.bf16.msra.mxu0 0
    %1162 = vmatpush.bf16.msra.mxu0 0
    %1163 = vmatpush.bf16.msra.mxu0 0
    %1164 = vmatpush.bf16.msra.mxu0 0
    %1165 = vmatpush.bf16.msra.mxu0 0
    %1166 = vmatpush.bf16.msra.mxu0 0
    %1167 = vmatpush.bf16.msra.mxu0 0
    %1168 = vmatpush.bf16.msra.mxu0 %v615
    %1169 = vmatmul.bf16.gmra.mxu0 %v542
    %v1170 = vpop.f32.mrf.mxu0
    %v1171 = vadd.f32 %v136, %v1170
    %v1172 = vpop.f32.mrf.mxu0
    %v1173 = vadd.f32 %v141, %v1172
    %1174 = vdwg.mxu0
    %1175 = vmatpush.bf16.msra.mxu0 0
    %1176 = vmatpush.bf16.msra.mxu0 0
    %1177 = vmatpush.bf16.msra.mxu0 0
    %1178 = vmatpush.bf16.msra.mxu0 0
    %1179 = vmatpush.bf16.msra.mxu0 0
    %1180 = vmatpush.bf16.msra.mxu0 0
    %1181 = vmatpush.bf16.msra.mxu0 0
    %1182 = vmatpush.bf16.msra.mxu0 %v618
    %1183 = vmatmul.bf16.gmra.mxu0 %v542
    %v1184 = vpop.f32.mrf.mxu0
    %v1185 = vadd.f32 %v136, %v1184
    %v1186 = vpop.f32.mrf.mxu0
    %v1187 = vadd.f32 %v141, %v1186
    %1188 = vdwg.mxu0
    %1189 = vmatpush.bf16.msra.mxu0 0
    %1190 = vmatpush.bf16.msra.mxu0 0
    %1191 = vmatpush.bf16.msra.mxu0 0
    %1192 = vmatpush.bf16.msra.mxu0 0
    %1193 = vmatpush.bf16.msra.mxu0 0
    %1194 = vmatpush.bf16.msra.mxu0 0
    %1195 = vmatpush.bf16.msra.mxu0 0
    %1196 = vmatpush.bf16.msra.mxu0 %v621
    %1197 = vmatmul.bf16.gmra.mxu0 %v542
    %v1198 = vpop.f32.mrf.mxu0
    %v1199 = vadd.f32 %v136, %v1198
    %v1200 = vpop.f32.mrf.mxu0
    %v1201 = vadd.f32 %v141, %v1200
    %1202 = vdwg.mxu0
    %1203 = vmatpush.bf16.msra.mxu0 0
    %1204 = vmatpush.bf16.msra.mxu0 0
    %1205 = vmatpush.bf16.msra.mxu0 0
    %1206 = vmatpush.bf16.msra.mxu0 0
    %1207 = vmatpush.bf16.msra.mxu0 0
    %1208 = vmatpush.bf16.msra.mxu0 0
    %1209 = vmatpush.bf16.msra.mxu0 0
    %1210 = vmatpush.bf16.msra.mxu0 %v624
    %1211 = vmatmul.bf16.gmra.mxu0 %v542
    %v1212 = vpop.f32.mrf.mxu0
    %v1213 = vadd.f32 %v136, %v1212
    %v1214 = vpop.f32.mrf.mxu0
    %v1215 = vadd.f32 %v141, %v1214
    %1216 = vdwg.mxu0
    %1217 = vmatpush.bf16.msra.mxu0 0
    %1218 = vmatpush.bf16.msra.mxu0 0
    %1219 = vmatpush.bf16.msra.mxu0 0
    %1220 = vmatpush.bf16.msra.mxu0 0
    %1221 = vmatpush.bf16.msra.mxu0 0
    %1222 = vmatpush.bf16.msra.mxu0 0
    %1223 = vmatpush.bf16.msra.mxu0 0
    %1224 = vmatpush.bf16.msra.mxu0 %v627
    %1225 = vmatmul.bf16.gmra.mxu0 %v542
    %v1226 = vpop.f32.mrf.mxu0
    %v1227 = vadd.f32 %v136, %v1226
    %v1228 = vpop.f32.mrf.mxu0
    %v1229 = vadd.f32 %v141, %v1228
    %1230 = vdwg.mxu0
    %1231 = vmatpush.bf16.msra.mxu0 0
    %1232 = vmatpush.bf16.msra.mxu0 0
    %1233 = vmatpush.bf16.msra.mxu0 0
    %1234 = vmatpush.bf16.msra.mxu0 0
    %1235 = vmatpush.bf16.msra.mxu0 0
    %1236 = vmatpush.bf16.msra.mxu0 0
    %1237 = vmatpush.bf16.msra.mxu0 0
    %1238 = vmatpush.bf16.msra.mxu0 %v630
    %1239 = vmatmul.bf16.gmra.mxu0 %v542
    %v1240 = vpop.f32.mrf.mxu0
    %v1241 = vadd.f32 %v136, %v1240
    %v1242 = vpop.f32.mrf.mxu0
    %v1243 = vadd.f32 %v141, %v1242
    %1244 = vdwg.mxu0
    %1245 = vmatpush.bf16.msra.mxu0 0
    %1246 = vmatpush.bf16.msra.mxu0 0
    %1247 = vmatpush.bf16.msra.mxu0 0
    %1248 = vmatpush.bf16.msra.mxu0 0
    %1249 = vmatpush.bf16.msra.mxu0 0
    %1250 = vmatpush.bf16.msra.mxu0 0
    %1251 = vmatpush.bf16.msra.mxu0 0
    %1252 = vmatpush.bf16.msra.mxu0 %v633
    %1253 = vmatmul.bf16.gmra.mxu0 %v542
    %v1254 = vpop.f32.mrf.mxu0
    %v1255 = vadd.f32 %v136, %v1254
    %v1256 = vpop.f32.mrf.mxu0
    %v1257 = vadd.f32 %v141, %v1256
    %1258 = vdwg.mxu0
    %1259 = vmatpush.bf16.msra.mxu0 0
    %1260 = vmatpush.bf16.msra.mxu0 0
    %1261 = vmatpush.bf16.msra.mxu0 0
    %1262 = vmatpush.bf16.msra.mxu0 0
    %1263 = vmatpush.bf16.msra.mxu0 0
    %1264 = vmatpush.bf16.msra.mxu0 0
    %1265 = vmatpush.bf16.msra.mxu0 0
    %1266 = vmatpush.bf16.msra.mxu0 %v636
    %1267 = vmatmul.bf16.gmra.mxu0 %v542
    %v1268 = vpop.f32.mrf.mxu0
    %v1269 = vadd.f32 %v136, %v1268
    %v1270 = vpop.f32.mrf.mxu0
    %v1271 = vadd.f32 %v141, %v1270
    %1272 = vdwg.mxu0
    %1273 = vmatpush.bf16.msra.mxu0 0
    %1274 = vmatpush.bf16.msra.mxu0 0
    %1275 = vmatpush.bf16.msra.mxu0 0
    %1276 = vmatpush.bf16.msra.mxu0 0
    %1277 = vmatpush.bf16.msra.mxu0 0
    %1278 = vmatpush.bf16.msra.mxu0 0
    %1279 = vmatpush.bf16.msra.mxu0 0
    %1280 = vmatpush.bf16.msra.mxu0 %v639
    %1281 = vmatmul.bf16.gmra.mxu0 %v542
    %v1282 = vpop.f32.mrf.mxu0
    %v1283 = vadd.f32 %v136, %v1282
    %v1284 = vpop.f32.mrf.mxu0
    %v1285 = vadd.f32 %v141, %v1284
    %1286 = vdwg.mxu0
    %1287 = vmatpush.bf16.msra.mxu0 0
    %1288 = vmatpush.bf16.msra.mxu0 0
    %1289 = vmatpush.bf16.msra.mxu0 0
    %1290 = vmatpush.bf16.msra.mxu0 0
    %1291 = vmatpush.bf16.msra.mxu0 0
    %1292 = vmatpush.bf16.msra.mxu0 0
    %1293 = vmatpush.bf16.msra.mxu0 0
    %1294 = vmatpush.bf16.msra.mxu0 %v642
    %1295 = vmatmul.bf16.gmra.mxu0 %v542
    %v1296 = vpop.f32.mrf.mxu0
    %v1297 = vadd.f32 %v136, %v1296
    %v1298 = vpop.f32.mrf.mxu0
    %v1299 = vadd.f32 %v141, %v1298
    %1300 = vdwg.mxu0
    %1301 = vmatpush.bf16.msra.mxu0 0
    %1302 = vmatpush.bf16.msra.mxu0 0
    %1303 = vmatpush.bf16.msra.mxu0 0
    %1304 = vmatpush.bf16.msra.mxu0 0
    %1305 = vmatpush.bf16.msra.mxu0 0
    %1306 = vmatpush.bf16.msra.mxu0 0
    %1307 = vmatpush.bf16.msra.mxu0 0
    %1308 = vmatpush.bf16.msra.mxu0 %v645
    %1309 = vmatmul.bf16.gmra.mxu0 %v542
    %v1310 = vpop.f32.mrf.mxu0
    %v1311 = vadd.f32 %v136, %v1310
    %v1312 = vpop.f32.mrf.mxu0
    %v1313 = vadd.f32 %v141, %v1312
    %1314 = vdwg.mxu0
    %1315 = vmatpush.bf16.msra.mxu0 0
    %1316 = vmatpush.bf16.msra.mxu0 0
    %1317 = vmatpush.bf16.msra.mxu0 0
    %1318 = vmatpush.bf16.msra.mxu0 0
    %1319 = vmatpush.bf16.msra.mxu0 0
    %1320 = vmatpush.bf16.msra.mxu0 0
    %1321 = vmatpush.bf16.msra.mxu0 0
    %1322 = vmatpush.bf16.msra.mxu0 %v648
    %1323 = vmatmul.bf16.gmra.mxu0 %v542
    %v1324 = vpop.f32.mrf.mxu0
    %v1325 = vadd.f32 %v136, %v1324
    %v1326 = vpop.f32.mrf.mxu0
    %v1327 = vadd.f32 %v141, %v1326
    %1328 = vdwg.mxu0
    %1329 = vmatpush.bf16.msra.mxu0 0
    %1330 = vmatpush.bf16.msra.mxu0 0
    %1331 = vmatpush.bf16.msra.mxu0 0
    %1332 = vmatpush.bf16.msra.mxu0 0
    %1333 = vmatpush.bf16.msra.mxu0 0
    %1334 = vmatpush.bf16.msra.mxu0 0
    %1335 = vmatpush.bf16.msra.mxu0 0
    %1336 = vmatpush.bf16.msra.mxu0 %v651
    %1337 = vmatmul.bf16.gmra.mxu0 %v542
    %v1338 = vpop.f32.mrf.mxu0
    %v1339 = vadd.f32 %v136, %v1338
    %v1340 = vpop.f32.mrf.mxu0
    %v1341 = vadd.f32 %v141, %v1340
    %1342 = vdwg.mxu0
    %1343 = vmatpush.bf16.msra.mxu0 0
    %1344 = vmatpush.bf16.msra.mxu0 0
    %1345 = vmatpush.bf16.msra.mxu0 0
    %1346 = vmatpush.bf16.msra.mxu0 0
    %1347 = vmatpush.bf16.msra.mxu0 0
    %1348 = vmatpush.bf16.msra.mxu0 0
    %1349 = vmatpush.bf16.msra.mxu0 0
    %1350 = vmatpush.bf16.msra.mxu0 %v654
    %1351 = vmatmul.bf16.gmra.mxu0 %v542
    %v1352 = vpop.f32.mrf.mxu0
    %v1353 = vadd.f32 %v136, %v1352
    %v1354 = vpop.f32.mrf.mxu0
    %v1355 = vadd.f32 %v141, %v1354
    %1356 = vdwg.mxu0
    %1357 = vmatpush.bf16.msra.mxu0 0
    %1358 = vmatpush.bf16.msra.mxu0 0
    %1359 = vmatpush.bf16.msra.mxu0 0
    %1360 = vmatpush.bf16.msra.mxu0 0
    %1361 = vmatpush.bf16.msra.mxu0 0
    %1362 = vmatpush.bf16.msra.mxu0 0
    %1363 = vmatpush.bf16.msra.mxu0 0
    %1364 = vmatpush.bf16.msra.mxu0 %v657
    %1365 = vmatmul.bf16.gmra.mxu0 %v542
    %v1366 = vpop.f32.mrf.mxu0
    %v1367 = vadd.f32 %v136, %v1366
    %v1368 = vpop.f32.mrf.mxu0
    %v1369 = vadd.f32 %v141, %v1368
    %1370 = vdwg.mxu0
    %1371 = vmatpush.bf16.msra.mxu0 0
    %1372 = vmatpush.bf16.msra.mxu0 0
    %1373 = vmatpush.bf16.msra.mxu0 0
    %1374 = vmatpush.bf16.msra.mxu0 0
    %1375 = vmatpush.bf16.msra.mxu0 0
    %1376 = vmatpush.bf16.msra.mxu0 0
    %1377 = vmatpush.bf16.msra.mxu0 0
    %1378 = vmatpush.bf16.msra.mxu0 %v660
    %1379 = vmatmul.bf16.gmra.mxu0 %v542
    %v1380 = vpop.f32.mrf.mxu0
    %v1381 = vadd.f32 %v136, %v1380
    %v1382 = vpop.f32.mrf.mxu0
    %v1383 = vadd.f32 %v141, %v1382
    %1384 = vdwg.mxu0
    %1385 = vmatpush.bf16.msra.mxu0 0
    %1386 = vmatpush.bf16.msra.mxu0 0
    %1387 = vmatpush.bf16.msra.mxu0 0
    %1388 = vmatpush.bf16.msra.mxu0 0
    %1389 = vmatpush.bf16.msra.mxu0 0
    %1390 = vmatpush.bf16.msra.mxu0 0
    %1391 = vmatpush.bf16.msra.mxu0 0
    %1392 = vmatpush.bf16.msra.mxu0 %v663
    %1393 = vmatmul.bf16.gmra.mxu0 %v542
    %v1394 = vpop.f32.mrf.mxu0
    %v1395 = vadd.f32 %v136, %v1394
    %v1396 = vpop.f32.mrf.mxu0
    %v1397 = vadd.f32 %v141, %v1396
    %1398 = vdwg.mxu0
    %1399 = vmatpush.bf16.msra.mxu0 0
    %1400 = vmatpush.bf16.msra.mxu0 0
    %1401 = vmatpush.bf16.msra.mxu0 0
    %1402 = vmatpush.bf16.msra.mxu0 0
    %1403 = vmatpush.bf16.msra.mxu0 0
    %1404 = vmatpush.bf16.msra.mxu0 0
    %1405 = vmatpush.bf16.msra.mxu0 0
    %1406 = vmatpush.bf16.msra.mxu0 %v666
    %1407 = vmatmul.bf16.gmra.mxu0 %v542
    %v1408 = vpop.f32.mrf.mxu0
    %v1409 = vadd.f32 %v136, %v1408
    %v1410 = vpop.f32.mrf.mxu0
    %v1411 = vadd.f32 %v141, %v1410
    %1412 = vdwg.mxu0
    %1413 = vmatpush.bf16.msra.mxu0 0
    %1414 = vmatpush.bf16.msra.mxu0 0
    %1415 = vmatpush.bf16.msra.mxu0 0
    %1416 = vmatpush.bf16.msra.mxu0 0
    %1417 = vmatpush.bf16.msra.mxu0 0
    %1418 = vmatpush.bf16.msra.mxu0 0
    %1419 = vmatpush.bf16.msra.mxu0 0
    %1420 = vmatpush.bf16.msra.mxu0 %v669
    %1421 = vmatmul.bf16.gmra.mxu0 %v542
    %v1422 = vpop.f32.mrf.mxu0
    %v1423 = vadd.f32 %v136, %v1422
    %v1424 = vpop.f32.mrf.mxu0
    %v1425 = vadd.f32 %v141, %v1424
    %1426 = vdwg.mxu0
    %1427 = vmatpush.bf16.msra.mxu0 0
    %1428 = vmatpush.bf16.msra.mxu0 0
    %1429 = vmatpush.bf16.msra.mxu0 0
    %1430 = vmatpush.bf16.msra.mxu0 0
    %1431 = vmatpush.bf16.msra.mxu0 0
    %1432 = vmatpush.bf16.msra.mxu0 0
    %1433 = vmatpush.bf16.msra.mxu0 0
    %1434 = vmatpush.bf16.msra.mxu0 %v672
    %1435 = vmatmul.bf16.gmra.mxu0 %v542
    %v1436 = vpop.f32.mrf.mxu0
    %v1437 = vadd.f32 %v136, %v1436
    %v1438 = vpop.f32.mrf.mxu0
    %v1439 = vadd.f32 %v141, %v1438
    %1440 = vdwg.mxu0
    %1441 = vmatpush.bf16.msra.mxu0 0
    %1442 = vmatpush.bf16.msra.mxu0 0
    %1443 = vmatpush.bf16.msra.mxu0 0
    %1444 = vmatpush.bf16.msra.mxu0 0
    %1445 = vmatpush.bf16.msra.mxu0 0
    %1446 = vmatpush.bf16.msra.mxu0 0
    %1447 = vmatpush.bf16.msra.mxu0 0
    %1448 = vmatpush.bf16.msra.mxu0 %v675
    %1449 = vmatmul.bf16.gmra.mxu0 %v542
    %v1450 = vpop.f32.mrf.mxu0
    %v1451 = vadd.f32 %v136, %v1450
    %v1452 = vpop.f32.mrf.mxu0
    %v1453 = vadd.f32 %v141, %v1452
    %1454 = vdwg.mxu0
    %1455 = vmatpush.bf16.msra.mxu0 0
    %1456 = vmatpush.bf16.msra.mxu0 0
    %1457 = vmatpush.bf16.msra.mxu0 0
    %1458 = vmatpush.bf16.msra.mxu0 0
    %1459 = vmatpush.bf16.msra.mxu0 0
    %1460 = vmatpush.bf16.msra.mxu0 0
    %1461 = vmatpush.bf16.msra.mxu0 0
    %1462 = vmatpush.bf16.msra.mxu0 %v678
    %1463 = vmatmul.bf16.gmra.mxu0 %v542
    %v1464 = vpop.f32.mrf.mxu0
    %v1465 = vadd.f32 %v136, %v1464
    %v1466 = vpop.f32.mrf.mxu0
    %v1467 = vadd.f32 %v141, %v1466
    %1468 = vdwg.mxu0
    %1469 = vmatpush.bf16.msra.mxu0 0
    %1470 = vmatpush.bf16.msra.mxu0 0
    %1471 = vmatpush.bf16.msra.mxu0 0
    %1472 = vmatpush.bf16.msra.mxu0 0
    %1473 = vmatpush.bf16.msra.mxu0 0
    %1474 = vmatpush.bf16.msra.mxu0 0
    %1475 = vmatpush.bf16.msra.mxu0 0
    %1476 = vmatpush.bf16.msra.mxu0 %v681
    %1477 = vmatmul.bf16.gmra.mxu0 %v542
    %v1478 = vpop.f32.mrf.mxu0
    %v1479 = vadd.f32 %v136, %v1478
    %v1480 = vpop.f32.mrf.mxu0
    %v1481 = vadd.f32 %v141, %v1480
    %1482 = vdwg.mxu0
    %1483 = vmatpush.bf16.msra.mxu0 0
    %1484 = vmatpush.bf16.msra.mxu0 0
    %1485 = vmatpush.bf16.msra.mxu0 0
    %1486 = vmatpush.bf16.msra.mxu0 0
    %1487 = vmatpush.bf16.msra.mxu0 0
    %1488 = vmatpush.bf16.msra.mxu0 0
    %1489 = vmatpush.bf16.msra.mxu0 0
    %1490 = vmatpush.bf16.msra.mxu0 %v684
    %1491 = vmatmul.bf16.gmra.mxu0 %v542
    %v1492 = vpop.f32.mrf.mxu0
    %v1493 = vadd.f32 %v136, %v1492
    %v1494 = vpop.f32.mrf.mxu0
    %v1495 = vadd.f32 %v141, %v1494
    %1496 = vdwg.mxu0
    %1497 = vmatpush.bf16.msra.mxu0 0
    %1498 = vmatpush.bf16.msra.mxu0 0
    %1499 = vmatpush.bf16.msra.mxu0 0
    %1500 = vmatpush.bf16.msra.mxu0 0
    %1501 = vmatpush.bf16.msra.mxu0 0
    %1502 = vmatpush.bf16.msra.mxu0 0
    %1503 = vmatpush.bf16.msra.mxu0 0
    %1504 = vmatpush.bf16.msra.mxu0 %v687
    %1505 = vmatmul.bf16.gmra.mxu0 %v542
    %v1506 = vpop.f32.mrf.mxu0
    %v1507 = vadd.f32 %v136, %v1506
    %v1508 = vpop.f32.mrf.mxu0
    %v1509 = vadd.f32 %v141, %v1508
    %1510 = vdwg.mxu0
    %1511 = vmatpush.bf16.msra.mxu0 0
    %1512 = vmatpush.bf16.msra.mxu0 0
    %1513 = vmatpush.bf16.msra.mxu0 0
    %1514 = vmatpush.bf16.msra.mxu0 0
    %1515 = vmatpush.bf16.msra.mxu0 0
    %1516 = vmatpush.bf16.msra.mxu0 0
    %1517 = vmatpush.bf16.msra.mxu0 0
    %1518 = vmatpush.bf16.msra.mxu0 %v690
    %1519 = vmatmul.bf16.gmra.mxu0 %v542
    %v1520 = vpop.f32.mrf.mxu0
    %v1521 = vadd.f32 %v136, %v1520
    %v1522 = vpop.f32.mrf.mxu0
    %v1523 = vadd.f32 %v141, %v1522
    %1524 = vdwg.mxu0
    %1525 = vmatpush.bf16.msra.mxu0 0
    %1526 = vmatpush.bf16.msra.mxu0 0
    %1527 = vmatpush.bf16.msra.mxu0 0
    %1528 = vmatpush.bf16.msra.mxu0 0
    %1529 = vmatpush.bf16.msra.mxu0 0
    %1530 = vmatpush.bf16.msra.mxu0 0
    %1531 = vmatpush.bf16.msra.mxu0 0
    %1532 = vmatpush.bf16.msra.mxu0 %v693
    %1533 = vmatmul.bf16.gmra.mxu0 %v542
    %v1534 = vpop.f32.mrf.mxu0
    %v1535 = vadd.f32 %v136, %v1534
    %v1536 = vpop.f32.mrf.mxu0
    %v1537 = vadd.f32 %v141, %v1536
    %1538 = vdwg.mxu0
    %1539 = vmatpush.bf16.msra.mxu0 0
    %1540 = vmatpush.bf16.msra.mxu0 0
    %1541 = vmatpush.bf16.msra.mxu0 0
    %1542 = vmatpush.bf16.msra.mxu0 0
    %1543 = vmatpush.bf16.msra.mxu0 0
    %1544 = vmatpush.bf16.msra.mxu0 0
    %1545 = vmatpush.bf16.msra.mxu0 0
    %1546 = vmatpush.bf16.msra.mxu0 %v696
    %1547 = vmatmul.bf16.gmra.mxu0 %v542
    %v1548 = vpop.f32.mrf.mxu0
    %v1549 = vadd.f32 %v136, %v1548
    %v1550 = vpop.f32.mrf.mxu0
    %v1551 = vadd.f32 %v141, %v1550
    %1552 = vdwg.mxu0
    %1553 = vmatpush.bf16.msra.mxu0 0
    %1554 = vmatpush.bf16.msra.mxu0 0
    %1555 = vmatpush.bf16.msra.mxu0 0
    %1556 = vmatpush.bf16.msra.mxu0 0
    %1557 = vmatpush.bf16.msra.mxu0 0
    %1558 = vmatpush.bf16.msra.mxu0 0
    %1559 = vmatpush.bf16.msra.mxu0 0
    %1560 = vmatpush.bf16.msra.mxu0 %v699
    %1561 = vmatmul.bf16.gmra.mxu0 %v542
    %v1562 = vpop.f32.mrf.mxu0
    %v1563 = vadd.f32 %v136, %v1562
    %v1564 = vpop.f32.mrf.mxu0
    %v1565 = vadd.f32 %v141, %v1564
    %1566 = vdwg.mxu0
    %1567 = vmatpush.bf16.msra.mxu0 0
    %1568 = vmatpush.bf16.msra.mxu0 0
    %1569 = vmatpush.bf16.msra.mxu0 0
    %1570 = vmatpush.bf16.msra.mxu0 0
    %1571 = vmatpush.bf16.msra.mxu0 0
    %1572 = vmatpush.bf16.msra.mxu0 0
    %1573 = vmatpush.bf16.msra.mxu0 0
    %1574 = vmatpush.bf16.msra.mxu0 %v702
    %1575 = vmatmul.bf16.gmra.mxu0 %v542
    %v1576 = vpop.f32.mrf.mxu0
    %v1577 = vadd.f32 %v136, %v1576
    %v1578 = vpop.f32.mrf.mxu0
    %v1579 = vadd.f32 %v141, %v1578
    %1580 = vdwg.mxu0
    %1581 = vmatpush.bf16.msra.mxu0 0
    %1582 = vmatpush.bf16.msra.mxu0 0
    %1583 = vmatpush.bf16.msra.mxu0 0
    %1584 = vmatpush.bf16.msra.mxu0 0
    %1585 = vmatpush.bf16.msra.mxu0 0
    %1586 = vmatpush.bf16.msra.mxu0 0
    %1587 = vmatpush.bf16.msra.mxu0 0
    %1588 = vmatpush.bf16.msra.mxu0 %v705
    %1589 = vmatmul.bf16.gmra.mxu0 %v542
    %v1590 = vpop.f32.mrf.mxu0
    %v1591 = vadd.f32 %v136, %v1590
    %v1592 = vpop.f32.mrf.mxu0
    %v1593 = vadd.f32 %v141, %v1592
    %1594 = vdwg.mxu0
    %1595 = vmatpush.bf16.msra.mxu0 0
    %1596 = vmatpush.bf16.msra.mxu0 0
    %1597 = vmatpush.bf16.msra.mxu0 0
    %1598 = vmatpush.bf16.msra.mxu0 0
    %1599 = vmatpush.bf16.msra.mxu0 0
    %1600 = vmatpush.bf16.msra.mxu0 0
    %1601 = vmatpush.bf16.msra.mxu0 0
    %1602 = vmatpush.bf16.msra.mxu0 %v708
    %1603 = vmatmul.bf16.gmra.mxu0 %v542
    %v1604 = vpop.f32.mrf.mxu0
    %v1605 = vadd.f32 %v136, %v1604
    %v1606 = vpop.f32.mrf.mxu0
    %v1607 = vadd.f32 %v141, %v1606
    %1608 = vdwg.mxu0
    %1609 = vmatpush.bf16.msra.mxu0 0
    %1610 = vmatpush.bf16.msra.mxu0 0
    %1611 = vmatpush.bf16.msra.mxu0 0
    %1612 = vmatpush.bf16.msra.mxu0 0
    %1613 = vmatpush.bf16.msra.mxu0 0
    %1614 = vmatpush.bf16.msra.mxu0 0
    %1615 = vmatpush.bf16.msra.mxu0 0
    %1616 = vmatpush.bf16.msra.mxu0 %v711
    %1617 = vmatmul.bf16.gmra.mxu0 %v542
    %v1618 = vpop.f32.mrf.mxu0
    %v1619 = vadd.f32 %v136, %v1618
    %v1620 = vpop.f32.mrf.mxu0
    %v1621 = vadd.f32 %v141, %v1620
    %1622 = vdwg.mxu0
    %1623 = vmatpush.bf16.msra.mxu0 0
    %1624 = vmatpush.bf16.msra.mxu0 0
    %1625 = vmatpush.bf16.msra.mxu0 0
    %1626 = vmatpush.bf16.msra.mxu0 0
    %1627 = vmatpush.bf16.msra.mxu0 0
    %1628 = vmatpush.bf16.msra.mxu0 0
    %1629 = vmatpush.bf16.msra.mxu0 0
    %1630 = vmatpush.bf16.msra.mxu0 %v714
    %1631 = vmatmul.bf16.gmra.mxu0 %v542
    %v1632 = vpop.f32.mrf.mxu0
    %v1633 = vadd.f32 %v136, %v1632
    %v1634 = vpop.f32.mrf.mxu0
    %v1635 = vadd.f32 %v141, %v1634
    %1636 = vdwg.mxu0
    %1637 = vmatpush.bf16.msra.mxu0 0
    %1638 = vmatpush.bf16.msra.mxu0 0
    %1639 = vmatpush.bf16.msra.mxu0 0
    %1640 = vmatpush.bf16.msra.mxu0 0
    %1641 = vmatpush.bf16.msra.mxu0 0
    %1642 = vmatpush.bf16.msra.mxu0 0
    %1643 = vmatpush.bf16.msra.mxu0 0
    %1644 = vmatpush.bf16.msra.mxu0 %v717
    %1645 = vmatmul.bf16.gmra.mxu0 %v542
    %v1646 = vpop.f32.mrf.mxu0
    %v1647 = vadd.f32 %v136, %v1646
    %v1648 = vpop.f32.mrf.mxu0
    %v1649 = vadd.f32 %v141, %v1648
    %1650 = vdwg.mxu0
    %1651 = vmatpush.bf16.msra.mxu0 0
    %1652 = vmatpush.bf16.msra.mxu0 0
    %1653 = vmatpush.bf16.msra.mxu0 0
    %1654 = vmatpush.bf16.msra.mxu0 0
    %1655 = vmatpush.bf16.msra.mxu0 0
    %1656 = vmatpush.bf16.msra.mxu0 0
    %1657 = vmatpush.bf16.msra.mxu0 0
    %1658 = vmatpush.bf16.msra.mxu0 %v720
    %1659 = vmatmul.bf16.gmra.mxu0 %v542
    %v1660 = vpop.f32.mrf.mxu0
    %v1661 = vadd.f32 %v136, %v1660
    %v1662 = vpop.f32.mrf.mxu0
    %v1663 = vadd.f32 %v141, %v1662
    %1664 = vdwg.mxu0
    %1665 = vmatpush.bf16.msra.mxu0 0
    %1666 = vmatpush.bf16.msra.mxu0 0
    %1667 = vmatpush.bf16.msra.mxu0 0
    %1668 = vmatpush.bf16.msra.mxu0 0
    %1669 = vmatpush.bf16.msra.mxu0 0
    %1670 = vmatpush.bf16.msra.mxu0 0
    %1671 = vmatpush.bf16.msra.mxu0 0
    %1672 = vmatpush.bf16.msra.mxu0 %v723
    %1673 = vmatmul.bf16.gmra.mxu0 %v542
    %v1674 = vpop.f32.mrf.mxu0
    %v1675 = vadd.f32 %v136, %v1674
    %v1676 = vpop.f32.mrf.mxu0
    %v1677 = vadd.f32 %v141, %v1676
    %1678 = vdwg.mxu0
    %1679 = vmatpush.bf16.msra.mxu0 0
    %1680 = vmatpush.bf16.msra.mxu0 0
    %1681 = vmatpush.bf16.msra.mxu0 0
    %1682 = vmatpush.bf16.msra.mxu0 0
    %1683 = vmatpush.bf16.msra.mxu0 0
    %1684 = vmatpush.bf16.msra.mxu0 0
    %1685 = vmatpush.bf16.msra.mxu0 0
    %1686 = vmatpush.bf16.msra.mxu0 %v726
    %1687 = vmatmul.bf16.gmra.mxu0 %v542
    %v1688 = vpop.f32.mrf.mxu0
    %v1689 = vadd.f32 %v136, %v1688
    %v1690 = vpop.f32.mrf.mxu0
    %v1691 = vadd.f32 %v141, %v1690
    %1692 = vdwg.mxu0
    %1693 = vmatpush.bf16.msra.mxu0 0
    %1694 = vmatpush.bf16.msra.mxu0 0
    %1695 = vmatpush.bf16.msra.mxu0 0
    %1696 = vmatpush.bf16.msra.mxu0 0
    %1697 = vmatpush.bf16.msra.mxu0 0
    %1698 = vmatpush.bf16.msra.mxu0 0
    %1699 = vmatpush.bf16.msra.mxu0 0
    %1700 = vmatpush.bf16.msra.mxu0 %v729
    %1701 = vmatmul.bf16.gmra.mxu0 %v542
    %v1702 = vpop.f32.mrf.mxu0
    %v1703 = vadd.f32 %v136, %v1702
    %v1704 = vpop.f32.mrf.mxu0
    %v1705 = vadd.f32 %v141, %v1704
    %1706 = vdwg.mxu0
    %1707 = vmatpush.bf16.msra.mxu0 0
    %1708 = vmatpush.bf16.msra.mxu0 0
    %1709 = vmatpush.bf16.msra.mxu0 0
    %1710 = vmatpush.bf16.msra.mxu0 0
    %1711 = vmatpush.bf16.msra.mxu0 0
    %1712 = vmatpush.bf16.msra.mxu0 0
    %1713 = vmatpush.bf16.msra.mxu0 0
    %1714 = vmatpush.bf16.msra.mxu0 %v732
    %1715 = vmatmul.bf16.gmra.mxu0 %v542
    %v1716 = vpop.f32.mrf.mxu0
    %v1717 = vadd.f32 %v136, %v1716
    %v1718 = vpop.f32.mrf.mxu0
    %v1719 = vadd.f32 %v141, %v1718
    %1720 = vdwg.mxu0
    %1721 = vmatpush.bf16.msra.mxu0 0
    %1722 = vmatpush.bf16.msra.mxu0 0
    %1723 = vmatpush.bf16.msra.mxu0 0
    %1724 = vmatpush.bf16.msra.mxu0 0
    %1725 = vmatpush.bf16.msra.mxu0 0
    %1726 = vmatpush.bf16.msra.mxu0 0
    %1727 = vmatpush.bf16.msra.mxu0 0
    %1728 = vmatpush.bf16.msra.mxu0 %v735
    %1729 = vmatmul.bf16.gmra.mxu0 %v542
    %v1730 = vpop.f32.mrf.mxu0
    %v1731 = vadd.f32 %v136, %v1730
    %v1732 = vpop.f32.mrf.mxu0
    %v1733 = vadd.f32 %v141, %v1732
    %1734 = vdwg.mxu0
    %1735 = vmatpush.bf16.msra.mxu0 0
    %1736 = vmatpush.bf16.msra.mxu0 0
    %1737 = vmatpush.bf16.msra.mxu0 0
    %1738 = vmatpush.bf16.msra.mxu0 0
    %1739 = vmatpush.bf16.msra.mxu0 0
    %1740 = vmatpush.bf16.msra.mxu0 0
    %1741 = vmatpush.bf16.msra.mxu0 0
    %1742 = vmatpush.bf16.msra.mxu0 %v738
    %1743 = vmatmul.bf16.gmra.mxu0 %v542
    %v1744 = vpop.f32.mrf.mxu0
    %v1745 = vadd.f32 %v136, %v1744
    %v1746 = vpop.f32.mrf.mxu0
    %v1747 = vadd.f32 %v141, %v1746
    %1748 = vdwg.mxu0
    %1749 = vmatpush.bf16.msra.mxu0 0
    %1750 = vmatpush.bf16.msra.mxu0 0
    %1751 = vmatpush.bf16.msra.mxu0 0
    %1752 = vmatpush.bf16.msra.mxu0 0
    %1753 = vmatpush.bf16.msra.mxu0 0
    %1754 = vmatpush.bf16.msra.mxu0 0
    %1755 = vmatpush.bf16.msra.mxu0 0
    %1756 = vmatpush.bf16.msra.mxu0 %v741
    %1757 = vmatmul.bf16.gmra.mxu0 %v542
    %v1758 = vpop.f32.mrf.mxu0
    %v1759 = vadd.f32 %v136, %v1758
    %v1760 = vpop.f32.mrf.mxu0
    %v1761 = vadd.f32 %v141, %v1760
    %1762 = vdwg.mxu0
    %1763 = vmatpush.bf16.msra.mxu0 0
    %1764 = vmatpush.bf16.msra.mxu0 0
    %1765 = vmatpush.bf16.msra.mxu0 0
    %1766 = vmatpush.bf16.msra.mxu0 0
    %1767 = vmatpush.bf16.msra.mxu0 0
    %1768 = vmatpush.bf16.msra.mxu0 0
    %1769 = vmatpush.bf16.msra.mxu0 0
    %1770 = vmatpush.bf16.msra.mxu0 %v744
    %1771 = vmatmul.bf16.gmra.mxu0 %v542
    %v1772 = vpop.f32.mrf.mxu0
    %v1773 = vadd.f32 %v136, %v1772
    %v1774 = vpop.f32.mrf.mxu0
    %v1775 = vadd.f32 %v141, %v1774
    %1776 = vdwg.mxu0
    %1777 = vmatpush.bf16.msra.mxu0 0
    %1778 = vmatpush.bf16.msra.mxu0 0
    %1779 = vmatpush.bf16.msra.mxu0 0
    %1780 = vmatpush.bf16.msra.mxu0 0
    %1781 = vmatpush.bf16.msra.mxu0 0
    %1782 = vmatpush.bf16.msra.mxu0 0
    %1783 = vmatpush.bf16.msra.mxu0 0
    %1784 = vmatpush.bf16.msra.mxu0 %v747
    %1785 = vmatmul.bf16.gmra.mxu0 %v542
    %v1786 = vpop.f32.mrf.mxu0
    %v1787 = vadd.f32 %v136, %v1786
    %v1788 = vpop.f32.mrf.mxu0
    %v1789 = vadd.f32 %v141, %v1788
    %1790 = vdwg.mxu0
    %1791 = vmatpush.bf16.msra.mxu0 0
    %1792 = vmatpush.bf16.msra.mxu0 0
    %1793 = vmatpush.bf16.msra.mxu0 0
    %1794 = vmatpush.bf16.msra.mxu0 0
    %1795 = vmatpush.bf16.msra.mxu0 0
    %1796 = vmatpush.bf16.msra.mxu0 0
    %1797 = vmatpush.bf16.msra.mxu0 0
    %1798 = vmatpush.bf16.msra.mxu0 %v750
    %1799 = vmatmul.bf16.gmra.mxu0 %v542
    %v1800 = vpop.f32.mrf.mxu0
    %v1801 = vadd.f32 %v136, %v1800
    %v1802 = vpop.f32.mrf.mxu0
    %v1803 = vadd.f32 %v141, %v1802
    %1804 = vdwg.mxu0
    %1805 = vmatpush.bf16.msra.mxu0 0
    %1806 = vmatpush.bf16.msra.mxu0 0
    %1807 = vmatpush.bf16.msra.mxu0 0
    %1808 = vmatpush.bf16.msra.mxu0 0
    %1809 = vmatpush.bf16.msra.mxu0 0
    %1810 = vmatpush.bf16.msra.mxu0 0
    %1811 = vmatpush.bf16.msra.mxu0 0
    %1812 = vmatpush.bf16.msra.mxu0 %v753
    %1813 = vmatmul.bf16.gmra.mxu0 %v542
    %v1814 = vpop.f32.mrf.mxu0
    %v1815 = vadd.f32 %v136, %v1814
    %v1816 = vpop.f32.mrf.mxu0
    %v1817 = vadd.f32 %v141, %v1816
    %1818 = vdwg.mxu0
    %1819 = vmatpush.bf16.msra.mxu0 0
    %1820 = vmatpush.bf16.msra.mxu0 0
    %1821 = vmatpush.bf16.msra.mxu0 0
    %1822 = vmatpush.bf16.msra.mxu0 0
    %1823 = vmatpush.bf16.msra.mxu0 0
    %1824 = vmatpush.bf16.msra.mxu0 0
    %1825 = vmatpush.bf16.msra.mxu0 0
    %1826 = vmatpush.bf16.msra.mxu0 %v756
    %1827 = vmatmul.bf16.gmra.mxu0 %v542
    %v1828 = vpop.f32.mrf.mxu0
    %v1829 = vadd.f32 %v136, %v1828
    %v1830 = vpop.f32.mrf.mxu0
    %v1831 = vadd.f32 %v141, %v1830
    %1832 = vdwg.mxu0
    %1833 = vmatpush.bf16.msra.mxu0 0
    %1834 = vmatpush.bf16.msra.mxu0 0
    %1835 = vmatpush.bf16.msra.mxu0 0
    %1836 = vmatpush.bf16.msra.mxu0 0
    %1837 = vmatpush.bf16.msra.mxu0 0
    %1838 = vmatpush.bf16.msra.mxu0 0
    %1839 = vmatpush.bf16.msra.mxu0 0
    %1840 = vmatpush.bf16.msra.mxu0 %v759
    %1841 = vmatmul.bf16.gmra.mxu0 %v542
    %v1842 = vpop.f32.mrf.mxu0
    %v1843 = vadd.f32 %v136, %v1842
    %v1844 = vpop.f32.mrf.mxu0
    %v1845 = vadd.f32 %v141, %v1844
    %1846 = vdwg.mxu0
    %1847 = vmatpush.bf16.msra.mxu0 0
    %1848 = vmatpush.bf16.msra.mxu0 0
    %1849 = vmatpush.bf16.msra.mxu0 0
    %1850 = vmatpush.bf16.msra.mxu0 0
    %1851 = vmatpush.bf16.msra.mxu0 0
    %1852 = vmatpush.bf16.msra.mxu0 0
    %1853 = vmatpush.bf16.msra.mxu0 0
    %1854 = vmatpush.bf16.msra.mxu0 %v762
    %1855 = vmatmul.bf16.gmra.mxu0 %v542
    %v1856 = vpop.f32.mrf.mxu0
    %v1857 = vadd.f32 %v136, %v1856
    %v1858 = vpop.f32.mrf.mxu0
    %v1859 = vadd.f32 %v141, %v1858
    %1860 = vdwg.mxu0
    %1861 = vmatpush.bf16.msra.mxu0 0
    %1862 = vmatpush.bf16.msra.mxu0 0
    %1863 = vmatpush.bf16.msra.mxu0 0
    %1864 = vmatpush.bf16.msra.mxu0 0
    %1865 = vmatpush.bf16.msra.mxu0 0
    %1866 = vmatpush.bf16.msra.mxu0 0
    %1867 = vmatpush.bf16.msra.mxu0 0
    %1868 = vmatpush.bf16.msra.mxu0 %v765
    %1869 = vmatmul.bf16.gmra.mxu0 %v542
    %v1870 = vpop.f32.mrf.mxu0
    %v1871 = vadd.f32 %v136, %v1870
    %v1872 = vpop.f32.mrf.mxu0
    %v1873 = vadd.f32 %v141, %v1872
    %1874 = vdwg.mxu0
    %1875 = vmatpush.bf16.msra.mxu0 0
    %1876 = vmatpush.bf16.msra.mxu0 0
    %1877 = vmatpush.bf16.msra.mxu0 0
    %1878 = vmatpush.bf16.msra.mxu0 0
    %1879 = vmatpush.bf16.msra.mxu0 0
    %1880 = vmatpush.bf16.msra.mxu0 0
    %1881 = vmatpush.bf16.msra.mxu0 0
    %1882 = vmatpush.bf16.msra.mxu0 %v768
    %1883 = vmatmul.bf16.gmra.mxu0 %v542
    %v1884 = vpop.f32.mrf.mxu0
    %v1885 = vadd.f32 %v136, %v1884
    %v1886 = vpop.f32.mrf.mxu0
    %v1887 = vadd.f32 %v141, %v1886
    %1888 = vdwg.mxu0
    %1889 = vmatpush.bf16.msra.mxu0 0
    %1890 = vmatpush.bf16.msra.mxu0 0
    %1891 = vmatpush.bf16.msra.mxu0 0
    %1892 = vmatpush.bf16.msra.mxu0 0
    %1893 = vmatpush.bf16.msra.mxu0 0
    %1894 = vmatpush.bf16.msra.mxu0 0
    %1895 = vmatpush.bf16.msra.mxu0 0
    %1896 = vmatpush.bf16.msra.mxu0 %v771
    %1897 = vmatmul.bf16.gmra.mxu0 %v542
    %v1898 = vpop.f32.mrf.mxu0
    %v1899 = vadd.f32 %v136, %v1898
    %v1900 = vpop.f32.mrf.mxu0
    %v1901 = vadd.f32 %v141, %v1900
    %1902 = vdwg.mxu0
    %1903 = vmatpush.bf16.msra.mxu0 0
    %1904 = vmatpush.bf16.msra.mxu0 0
    %1905 = vmatpush.bf16.msra.mxu0 0
    %1906 = vmatpush.bf16.msra.mxu0 0
    %1907 = vmatpush.bf16.msra.mxu0 0
    %1908 = vmatpush.bf16.msra.mxu0 0
    %1909 = vmatpush.bf16.msra.mxu0 0
    %1910 = vmatpush.bf16.msra.mxu0 %v774
    %1911 = vmatmul.bf16.gmra.mxu0 %v542
    %v1912 = vpop.f32.mrf.mxu0
    %v1913 = vadd.f32 %v136, %v1912
    %v1914 = vpop.f32.mrf.mxu0
    %v1915 = vadd.f32 %v141, %v1914
    %1916 = vdwg.mxu0
    %1917 = vmatpush.bf16.msra.mxu0 0
    %1918 = vmatpush.bf16.msra.mxu0 0
    %1919 = vmatpush.bf16.msra.mxu0 0
    %1920 = vmatpush.bf16.msra.mxu0 0
    %1921 = vmatpush.bf16.msra.mxu0 0
    %1922 = vmatpush.bf16.msra.mxu0 0
    %1923 = vmatpush.bf16.msra.mxu0 0
    %1924 = vmatpush.bf16.msra.mxu0 %v777
    %1925 = vmatmul.bf16.gmra.mxu0 %v542
    %v1926 = vpop.f32.mrf.mxu0
    %v1927 = vadd.f32 %v136, %v1926
    %v1928 = vpop.f32.mrf.mxu0
    %v1929 = vadd.f32 %v141, %v1928
    %1930 = vdwg.mxu0
    %1931 = vmatpush.bf16.msra.mxu0 0
    %1932 = vmatpush.bf16.msra.mxu0 0
    %1933 = vmatpush.bf16.msra.mxu0 0
    %1934 = vmatpush.bf16.msra.mxu0 0
    %1935 = vmatpush.bf16.msra.mxu0 0
    %1936 = vmatpush.bf16.msra.mxu0 0
    %1937 = vmatpush.bf16.msra.mxu0 0
    %1938 = vmatpush.bf16.msra.mxu0 %v780
    %1939 = vmatmul.bf16.gmra.mxu0 %v542
    %v1940 = vpop.f32.mrf.mxu0
    %v1941 = vadd.f32 %v136, %v1940
    %v1942 = vpop.f32.mrf.mxu0
    %v1943 = vadd.f32 %v141, %v1942
    %1944 = vdwg.mxu0
    %1945 = vmatpush.bf16.msra.mxu0 0
    %1946 = vmatpush.bf16.msra.mxu0 0
    %1947 = vmatpush.bf16.msra.mxu0 0
    %1948 = vmatpush.bf16.msra.mxu0 0
    %1949 = vmatpush.bf16.msra.mxu0 0
    %1950 = vmatpush.bf16.msra.mxu0 0
    %1951 = vmatpush.bf16.msra.mxu0 0
    %1952 = vmatpush.bf16.msra.mxu0 %v783
    %1953 = vmatmul.bf16.gmra.mxu0 %v542
    %v1954 = vpop.f32.mrf.mxu0
    %v1955 = vadd.f32 %v136, %v1954
    %v1956 = vpop.f32.mrf.mxu0
    %v1957 = vadd.f32 %v141, %v1956
    %1958 = vdwg.mxu0
    %1959 = vmatpush.bf16.msra.mxu0 0
    %1960 = vmatpush.bf16.msra.mxu0 0
    %1961 = vmatpush.bf16.msra.mxu0 0
    %1962 = vmatpush.bf16.msra.mxu0 0
    %1963 = vmatpush.bf16.msra.mxu0 0
    %1964 = vmatpush.bf16.msra.mxu0 0
    %1965 = vmatpush.bf16.msra.mxu0 0
    %1966 = vmatpush.bf16.msra.mxu0 %v786
    %1967 = vmatmul.bf16.gmra.mxu0 %v542
    %v1968 = vpop.f32.mrf.mxu0
    %v1969 = vadd.f32 %v136, %v1968
    %v1970 = vpop.f32.mrf.mxu0
    %v1971 = vadd.f32 %v141, %v1970
    %1972 = vdwg.mxu0
    %1973 = vmatpush.bf16.msra.mxu0 0
    %1974 = vmatpush.bf16.msra.mxu0 0
    %1975 = vmatpush.bf16.msra.mxu0 0
    %1976 = vmatpush.bf16.msra.mxu0 0
    %1977 = vmatpush.bf16.msra.mxu0 0
    %1978 = vmatpush.bf16.msra.mxu0 0
    %1979 = vmatpush.bf16.msra.mxu0 0
    %1980 = vmatpush.bf16.msra.mxu0 %v789
    %1981 = vmatmul.bf16.gmra.mxu0 %v542
    %v1982 = vpop.f32.mrf.mxu0
    %v1983 = vadd.f32 %v136, %v1982
    %v1984 = vpop.f32.mrf.mxu0
    %v1985 = vadd.f32 %v141, %v1984
    %1986 = vdwg.mxu0
    %1987 = vmatpush.bf16.msra.mxu0 0
    %1988 = vmatpush.bf16.msra.mxu0 0
    %1989 = vmatpush.bf16.msra.mxu0 0
    %1990 = vmatpush.bf16.msra.mxu0 0
    %1991 = vmatpush.bf16.msra.mxu0 0
    %1992 = vmatpush.bf16.msra.mxu0 0
    %1993 = vmatpush.bf16.msra.mxu0 0
    %1994 = vmatpush.bf16.msra.mxu0 %v792
    %1995 = vmatmul.bf16.gmra.mxu0 %v542
    %v1996 = vpop.f32.mrf.mxu0
    %v1997 = vadd.f32 %v136, %v1996
    %v1998 = vpop.f32.mrf.mxu0
    %v1999 = vadd.f32 %v141, %v1998
    %2000 = vdwg.mxu0
    %2001 = vmatpush.bf16.msra.mxu0 0
    %2002 = vmatpush.bf16.msra.mxu0 0
    %2003 = vmatpush.bf16.msra.mxu0 0
    %2004 = vmatpush.bf16.msra.mxu0 0
    %2005 = vmatpush.bf16.msra.mxu0 0
    %2006 = vmatpush.bf16.msra.mxu0 0
    %2007 = vmatpush.bf16.msra.mxu0 0
    %2008 = vmatpush.bf16.msra.mxu0 %v795
    %2009 = vmatmul.bf16.gmra.mxu0 %v542
    %v2010 = vpop.f32.mrf.mxu0
    %v2011 = vadd.f32 %v136, %v2010
    %v2012 = vpop.f32.mrf.mxu0
    %v2013 = vadd.f32 %v141, %v2012
    %2014 = vdwg.mxu0
    %2015 = vmatpush.bf16.msra.mxu0 0
    %2016 = vmatpush.bf16.msra.mxu0 0
    %2017 = vmatpush.bf16.msra.mxu0 0
    %2018 = vmatpush.bf16.msra.mxu0 0
    %2019 = vmatpush.bf16.msra.mxu0 0
    %2020 = vmatpush.bf16.msra.mxu0 0
    %2021 = vmatpush.bf16.msra.mxu0 0
    %2022 = vmatpush.bf16.msra.mxu0 %v798
    %2023 = vmatmul.bf16.gmra.mxu0 %v542
    %v2024 = vpop.f32.mrf.mxu0
    %v2025 = vadd.f32 %v136, %v2024
    %v2026 = vpop.f32.mrf.mxu0
    %v2027 = vadd.f32 %v141, %v2026
    %2028 = vdwg.mxu0
    %2029 = vmatpush.bf16.msra.mxu0 0
    %2030 = vmatpush.bf16.msra.mxu0 0
    %2031 = vmatpush.bf16.msra.mxu0 0
    %2032 = vmatpush.bf16.msra.mxu0 0
    %2033 = vmatpush.bf16.msra.mxu0 0
    %2034 = vmatpush.bf16.msra.mxu0 0
    %2035 = vmatpush.bf16.msra.mxu0 0
    %2036 = vmatpush.bf16.msra.mxu0 %v801
    %2037 = vmatmul.bf16.gmra.mxu0 %v542
    %v2038 = vpop.f32.mrf.mxu0
    %v2039 = vadd.f32 %v136, %v2038
    %v2040 = vpop.f32.mrf.mxu0
    %v2041 = vadd.f32 %v141, %v2040
    %2042 = vdwg.mxu0
    %2043 = vmatpush.bf16.msra.mxu0 0
    %2044 = vmatpush.bf16.msra.mxu0 0
    %2045 = vmatpush.bf16.msra.mxu0 0
    %2046 = vmatpush.bf16.msra.mxu0 0
    %2047 = vmatpush.bf16.msra.mxu0 0
    %2048 = vmatpush.bf16.msra.mxu0 0
    %2049 = vmatpush.bf16.msra.mxu0 0
    %2050 = vmatpush.bf16.msra.mxu0 %v804
    %2051 = vmatmul.bf16.gmra.mxu0 %v542
    %v2052 = vpop.f32.mrf.mxu0
    %v2053 = vadd.f32 %v136, %v2052
    %v2054 = vpop.f32.mrf.mxu0
    %v2055 = vadd.f32 %v141, %v2054
    %2056 = vdwg.mxu0
    %2057 = vmatpush.bf16.msra.mxu0 0
    %2058 = vmatpush.bf16.msra.mxu0 0
    %2059 = vmatpush.bf16.msra.mxu0 0
    %2060 = vmatpush.bf16.msra.mxu0 0
    %2061 = vmatpush.bf16.msra.mxu0 0
    %2062 = vmatpush.bf16.msra.mxu0 0
    %2063 = vmatpush.bf16.msra.mxu0 0
    %2064 = vmatpush.bf16.msra.mxu0 %v807
    %2065 = vmatmul.bf16.gmra.mxu0 %v542
    %v2066 = vpop.f32.mrf.mxu0
    %v2067 = vadd.f32 %v136, %v2066
    %v2068 = vpop.f32.mrf.mxu0
    %v2069 = vadd.f32 %v141, %v2068
    %2070 = vdwg.mxu0
    %2071 = vmatpush.bf16.msra.mxu0 0
    %2072 = vmatpush.bf16.msra.mxu0 0
    %2073 = vmatpush.bf16.msra.mxu0 0
    %2074 = vmatpush.bf16.msra.mxu0 0
    %2075 = vmatpush.bf16.msra.mxu0 0
    %2076 = vmatpush.bf16.msra.mxu0 0
    %2077 = vmatpush.bf16.msra.mxu0 0
    %2078 = vmatpush.bf16.msra.mxu0 %v810
    %2079 = vmatmul.bf16.gmra.mxu0 %v542
    %v2080 = vpop.f32.mrf.mxu0
    %v2081 = vadd.f32 %v136, %v2080
    %v2082 = vpop.f32.mrf.mxu0
    %v2083 = vadd.f32 %v141, %v2082
    %2084 = vdwg.mxu0
    %2085 = vmatpush.bf16.msra.mxu0 0
    %2086 = vmatpush.bf16.msra.mxu0 0
    %2087 = vmatpush.bf16.msra.mxu0 0
    %2088 = vmatpush.bf16.msra.mxu0 0
    %2089 = vmatpush.bf16.msra.mxu0 0
    %2090 = vmatpush.bf16.msra.mxu0 0
    %2091 = vmatpush.bf16.msra.mxu0 0
    %2092 = vmatpush.bf16.msra.mxu0 %v813
    %2093 = vmatmul.bf16.gmra.mxu0 %v542
    %v2094 = vpop.f32.mrf.mxu0
    %v2095 = vadd.f32 %v136, %v2094
    %v2096 = vpop.f32.mrf.mxu0
    %v2097 = vadd.f32 %v141, %v2096
    %2098 = vdwg.mxu0
    %2099 = vmatpush.bf16.msra.mxu0 0
    %2100 = vmatpush.bf16.msra.mxu0 0
    %2101 = vmatpush.bf16.msra.mxu0 0
    %2102 = vmatpush.bf16.msra.mxu0 0
    %2103 = vmatpush.bf16.msra.mxu0 0
    %2104 = vmatpush.bf16.msra.mxu0 0
    %2105 = vmatpush.bf16.msra.mxu0 0
    %2106 = vmatpush.bf16.msra.mxu0 %v816
    %2107 = vmatmul.bf16.gmra.mxu0 %v542
    %v2108 = vpop.f32.mrf.mxu0
    %v2109 = vadd.f32 %v136, %v2108
    %v2110 = vpop.f32.mrf.mxu0
    %v2111 = vadd.f32 %v141, %v2110
    %2112 = vdwg.mxu0
    %2113 = vmatpush.bf16.msra.mxu0 0
    %2114 = vmatpush.bf16.msra.mxu0 0
    %2115 = vmatpush.bf16.msra.mxu0 0
    %2116 = vmatpush.bf16.msra.mxu0 0
    %2117 = vmatpush.bf16.msra.mxu0 0
    %2118 = vmatpush.bf16.msra.mxu0 0
    %2119 = vmatpush.bf16.msra.mxu0 0
    %2120 = vmatpush.bf16.msra.mxu0 %v819
    %2121 = vmatmul.bf16.gmra.mxu0 %v542
    %v2122 = vpop.f32.mrf.mxu0
    %v2123 = vadd.f32 %v136, %v2122
    %v2124 = vpop.f32.mrf.mxu0
    %v2125 = vadd.f32 %v141, %v2124
    %2126 = vdwg.mxu0
    %2127 = vmatpush.bf16.msra.mxu0 0
    %2128 = vmatpush.bf16.msra.mxu0 0
    %2129 = vmatpush.bf16.msra.mxu0 0
    %2130 = vmatpush.bf16.msra.mxu0 0
    %2131 = vmatpush.bf16.msra.mxu0 0
    %2132 = vmatpush.bf16.msra.mxu0 0
    %2133 = vmatpush.bf16.msra.mxu0 0
    %2134 = vmatpush.bf16.msra.mxu0 %v822
    %2135 = vmatmul.bf16.gmra.mxu0 %v542
    %v2136 = vpop.f32.mrf.mxu0
    %v2137 = vadd.f32 %v136, %v2136
    %v2138 = vpop.f32.mrf.mxu0
    %v2139 = vadd.f32 %v141, %v2138
    %2140 = vdwg.mxu0
    %2141 = vmatpush.bf16.msra.mxu0 0
    %2142 = vmatpush.bf16.msra.mxu0 0
    %2143 = vmatpush.bf16.msra.mxu0 0
    %2144 = vmatpush.bf16.msra.mxu0 0
    %2145 = vmatpush.bf16.msra.mxu0 0
    %2146 = vmatpush.bf16.msra.mxu0 0
    %2147 = vmatpush.bf16.msra.mxu0 0
    %2148 = vmatpush.bf16.msra.mxu0 %v825
    %2149 = vmatmul.bf16.gmra.mxu0 %v542
    %v2150 = vpop.f32.mrf.mxu0
    %v2151 = vadd.f32 %v136, %v2150
    %v2152 = vpop.f32.mrf.mxu0
    %v2153 = vadd.f32 %v141, %v2152
    %2154 = vdwg.mxu0
    %2155 = vmatpush.bf16.msra.mxu0 0
    %2156 = vmatpush.bf16.msra.mxu0 0
    %2157 = vmatpush.bf16.msra.mxu0 0
    %2158 = vmatpush.bf16.msra.mxu0 0
    %2159 = vmatpush.bf16.msra.mxu0 0
    %2160 = vmatpush.bf16.msra.mxu0 0
    %2161 = vmatpush.bf16.msra.mxu0 0
    %2162 = vmatpush.bf16.msra.mxu0 %v828
    %2163 = vmatmul.bf16.gmra.mxu0 %v542
    %v2164 = vpop.f32.mrf.mxu0
    %v2165 = vadd.f32 %v136, %v2164
    %v2166 = vpop.f32.mrf.mxu0
    %v2167 = vadd.f32 %v141, %v2166
    %2168 = vdwg.mxu0
    %2169 = vmatpush.bf16.msra.mxu0 0
    %2170 = vmatpush.bf16.msra.mxu0 0
    %2171 = vmatpush.bf16.msra.mxu0 0
    %2172 = vmatpush.bf16.msra.mxu0 0
    %2173 = vmatpush.bf16.msra.mxu0 0
    %2174 = vmatpush.bf16.msra.mxu0 0
    %2175 = vmatpush.bf16.msra.mxu0 0
    %2176 = vmatpush.bf16.msra.mxu0 %v831
    %2177 = vmatmul.bf16.gmra.mxu0 %v542
    %v2178 = vpop.f32.mrf.mxu0
    %v2179 = vadd.f32 %v136, %v2178
    %v2180 = vpop.f32.mrf.mxu0
    %v2181 = vadd.f32 %v141, %v2180
    %2182 = vdwg.mxu0
    %2183 = vmatpush.bf16.msra.mxu0 0
    %2184 = vmatpush.bf16.msra.mxu0 0
    %2185 = vmatpush.bf16.msra.mxu0 0
    %2186 = vmatpush.bf16.msra.mxu0 0
    %2187 = vmatpush.bf16.msra.mxu0 0
    %2188 = vmatpush.bf16.msra.mxu0 0
    %2189 = vmatpush.bf16.msra.mxu0 0
    %2190 = vmatpush.bf16.msra.mxu0 %v834
    %2191 = vmatmul.bf16.gmra.mxu0 %v542
    %v2192 = vpop.f32.mrf.mxu0
    %v2193 = vadd.f32 %v136, %v2192
    %v2194 = vpop.f32.mrf.mxu0
    %v2195 = vadd.f32 %v141, %v2194
    %2196 = vdwg.mxu0
    %2197 = vmatpush.bf16.msra.mxu0 0
    %2198 = vmatpush.bf16.msra.mxu0 0
    %2199 = vmatpush.bf16.msra.mxu0 0
    %2200 = vmatpush.bf16.msra.mxu0 0
    %2201 = vmatpush.bf16.msra.mxu0 0
    %2202 = vmatpush.bf16.msra.mxu0 0
    %2203 = vmatpush.bf16.msra.mxu0 0
    %2204 = vmatpush.bf16.msra.mxu0 %v837
    %2205 = vmatmul.bf16.gmra.mxu0 %v542
    %v2206 = vpop.f32.mrf.mxu0
    %v2207 = vadd.f32 %v136, %v2206
    %v2208 = vpop.f32.mrf.mxu0
    %v2209 = vadd.f32 %v141, %v2208
    %2210 = vdwg.mxu0
    %2211 = vst [vmem:[%s3] sm:$0xff] %v849
    %2212 = vst [vmem:[%s3 + $0x8] sm:$0xff] %v863
    %2213 = vst [vmem:[%s3 + $0x10] sm:$0xff] %v877
    %2214 = vst [vmem:[%s3 + $0x18] sm:$0xff] %v891
    %2215 = vst [vmem:[%s3 + $0x20] sm:$0xff] %v905
    %2216 = vst [vmem:[%s3 + $0x28] sm:$0xff] %v919
    %2217 = vst [vmem:[%s3 + $0x30] sm:$0xff] %v933
    %2218 = vst [vmem:[%s3 + $0x38] sm:$0xff] %v947
    %2219 = vst [vmem:[%s3 + $0x40] sm:$0xff] %v961
    %2220 = vst [vmem:[%s3 + $0x48] sm:$0xff] %v975
    %2221 = vst [vmem:[%s3 + $0x50] sm:$0xff] %v989
    %2222 = vst [vmem:[%s3 + $0x58] sm:$0xff] %v1003
    %2223 = vst [vmem:[%s3 + $0x60] sm:$0xff] %v1017
    %2224 = vst [vmem:[%s3 + $0x68] sm:$0xff] %v1031
    %2225 = vst [vmem:[%s3 + $0x70] sm:$0xff] %v1045
    %2226 = vst [vmem:[%s3 + $0x78] sm:$0xff] %v1059
    %2227 = vst [vmem:[%s3 + $0x80] sm:$0xff] %v1073
    %2228 = vst [vmem:[%s3 + $0x88] sm:$0xff] %v1087
    %2229 = vst [vmem:[%s3 + $0x90] sm:$0xff] %v1101
    %2230 = vst [vmem:[%s3 + $0x98] sm:$0xff] %v1115
    %2231 = vst [vmem:[%s3 + $0xa0] sm:$0xff] %v1129
    %2232 = vst [vmem:[%s3 + $0xa8] sm:$0xff] %v1143
    %2233 = vst [vmem:[%s3 + $0xb0] sm:$0xff] %v1157
    %2234 = vst [vmem:[%s3 + $0xb8] sm:$0xff] %v1171
    %2235 = vst [vmem:[%s3 + $0xc0] sm:$0xff] %v1185
    %2236 = vst [vmem:[%s3 + $0xc8] sm:$0xff] %v1199
    %2237 = vst [vmem:[%s3 + $0xd0] sm:$0xff] %v1213
    %2238 = vst [vmem:[%s3 + $0xd8] sm:$0xff] %v1227
    %2239 = vst [vmem:[%s3 + $0xe0] sm:$0xff] %v1241
    %2240 = vst [vmem:[%s3 + $0xe8] sm:$0xff] %v1255
    %2241 = vst [vmem:[%s3 + $0xf0] sm:$0xff] %v1269
    %2242 = vst [vmem:[%s3 + $0xf8] sm:$0xff] %v1283
    %2243 = vst [vmem:[%s3 + $0x100] sm:$0xff] %v1297
    %2244 = vst [vmem:[%s3 + $0x108] sm:$0xff] %v1311
    %2245 = vst [vmem:[%s3 + $0x110] sm:$0xff] %v1325
    %2246 = vst [vmem:[%s3 + $0x118] sm:$0xff] %v1339
    %2247 = vst [vmem:[%s3 + $0x120] sm:$0xff] %v1353
    %2248 = vst [vmem:[%s3 + $0x128] sm:$0xff] %v1367
    %2249 = vst [vmem:[%s3 + $0x130] sm:$0xff] %v1381
    %2250 = vst [vmem:[%s3 + $0x138] sm:$0xff] %v1395
    %2251 = vst [vmem:[%s3 + $0x140] sm:$0xff] %v1409
    %2252 = vst [vmem:[%s3 + $0x148] sm:$0xff] %v1423
    %2253 = vst [vmem:[%s3 + $0x150] sm:$0xff] %v1437
    %2254 = vst [vmem:[%s3 + $0x158] sm:$0xff] %v1451
    %2255 = vst [vmem:[%s3 + $0x160] sm:$0xff] %v1465
    %2256 = vst [vmem:[%s3 + $0x168] sm:$0xff] %v1479
    %2257 = vst [vmem:[%s3 + $0x170] sm:$0xff] %v1493
    %2258 = vst [vmem:[%s3 + $0x178] sm:$0xff] %v1507
    %2259 = vst [vmem:[%s3 + $0x180] sm:$0xff] %v1521
    %2260 = vst [vmem:[%s3 + $0x188] sm:$0xff] %v1535
    %2261 = vst [vmem:[%s3 + $0x190] sm:$0xff] %v1549
    %2262 = vst [vmem:[%s3 + $0x198] sm:$0xff] %v1563
    %2263 = vst [vmem:[%s3 + $0x1a0] sm:$0xff] %v1577
    %2264 = vst [vmem:[%s3 + $0x1a8] sm:$0xff] %v1591
    %2265 = vst [vmem:[%s3 + $0x1b0] sm:$0xff] %v1605
    %2266 = vst [vmem:[%s3 + $0x1b8] sm:$0xff] %v1619
    %2267 = vst [vmem:[%s3 + $0x1c0] sm:$0xff] %v1633
    %2268 = vst [vmem:[%s3 + $0x1c8] sm:$0xff] %v1647
    %2269 = vst [vmem:[%s3 + $0x1d0] sm:$0xff] %v1661
    %2270 = vst [vmem:[%s3 + $0x1d8] sm:$0xff] %v1675
    %2271 = vst [vmem:[%s3 + $0x1e0] sm:$0xff] %v1689
    %2272 = vst [vmem:[%s3 + $0x1e8] sm:$0xff] %v1703
    %2273 = vst [vmem:[%s3 + $0x1f0] sm:$0xff] %v1717
    %2274 = vst [vmem:[%s3 + $0x1f8] sm:$0xff] %v1731
    %2275 = vst [vmem:[%s3 + $0x200] sm:$0xff] %v1745
    %2276 = vst [vmem:[%s3 + $0x208] sm:$0xff] %v1759
    %2277 = vst [vmem:[%s3 + $0x210] sm:$0xff] %v1773
    %2278 = vst [vmem:[%s3 + $0x218] sm:$0xff] %v1787
    %2279 = vst [vmem:[%s3 + $0x220] sm:$0xff] %v1801
    %2280 = vst [vmem:[%s3 + $0x228] sm:$0xff] %v1815
    %2281 = vst [vmem:[%s3 + $0x230] sm:$0xff] %v1829
    %2282 = vst [vmem:[%s3 + $0x238] sm:$0xff] %v1843
    %2283 = vst [vmem:[%s3 + $0x240] sm:$0xff] %v1857
    %2284 = vst [vmem:[%s3 + $0x248] sm:$0xff] %v1871
    %2285 = vst [vmem:[%s3 + $0x250] sm:$0xff] %v1885
    %2286 = vst [vmem:[%s3 + $0x258] sm:$0xff] %v1899
    %2287 = vst [vmem:[%s3 + $0x260] sm:$0xff] %v1913
    %2288 = vst [vmem:[%s3 + $0x268] sm:$0xff] %v1927
    %2289 = vst [vmem:[%s3 + $0x270] sm:$0xff] %v1941
    %2290 = vst [vmem:[%s3 + $0x278] sm:$0xff] %v1955
    %2291 = vst [vmem:[%s3 + $0x280] sm:$0xff] %v1969
    %2292 = vst [vmem:[%s3 + $0x288] sm:$0xff] %v1983
    %2293 = vst [vmem:[%s3 + $0x290] sm:$0xff] %v1997
    %2294 = vst [vmem:[%s3 + $0x298] sm:$0xff] %v2011
    %2295 = vst [vmem:[%s3 + $0x2a0] sm:$0xff] %v2025
    %2296 = vst [vmem:[%s3 + $0x2a8] sm:$0xff] %v2039
    %2297 = vst [vmem:[%s3 + $0x2b0] sm:$0xff] %v2053
    %2298 = vst [vmem:[%s3 + $0x2b8] sm:$0xff] %v2067
    %2299 = vst [vmem:[%s3 + $0x2c0] sm:$0xff] %v2081
    %2300 = vst [vmem:[%s3 + $0x2c8] sm:$0xff] %v2095
    %2301 = vst [vmem:[%s3 + $0x2d0] sm:$0xff] %v2109
    %2302 = vst [vmem:[%s3 + $0x2d8] sm:$0xff] %v2123
    %2303 = vst [vmem:[%s3 + $0x2e0] sm:$0xff] %v2137
    %2304 = vst [vmem:[%s3 + $0x2e8] sm:$0xff] %v2151
    %2305 = vst [vmem:[%s3 + $0x2f0] sm:$0xff] %v2165
    %2306 = vst [vmem:[%s3 + $0x2f8] sm:$0xff] %v2179
    %2307 = vst [vmem:[%s3 + $0x300] sm:$0xff] %v2193
    %2308 = vst [vmem:[%s3 + $0x308] sm:$0xff] %v2207
    %2309 = vst [vmem:[%s3 + $0x310] sm:$0xf] %v851
    %2310 = vst [vmem:[%s3 + $0x318] sm:$0xf] %v865
    %2311 = vst [vmem:[%s3 + $0x320] sm:$0xf] %v879
    %2312 = vst [vmem:[%s3 + $0x328] sm:$0xf] %v893
    %2313 = vst [vmem:[%s3 + $0x330] sm:$0xf] %v907
    %2314 = vst [vmem:[%s3 + $0x338] sm:$0xf] %v921
    %2315 = vst [vmem:[%s3 + $0x340] sm:$0xf] %v935
    %2316 = vst [vmem:[%s3 + $0x348] sm:$0xf] %v949
    %2317 = vst [vmem:[%s3 + $0x350] sm:$0xf] %v963
    %2318 = vst [vmem:[%s3 + $0x358] sm:$0xf] %v977
    %2319 = vst [vmem:[%s3 + $0x360] sm:$0xf] %v991
    %2320 = vst [vmem:[%s3 + $0x368] sm:$0xf] %v1005
    %2321 = vst [vmem:[%s3 + $0x370] sm:$0xf] %v1019
    %2322 = vst [vmem:[%s3 + $0x378] sm:$0xf] %v1033
    %2323 = vst [vmem:[%s3 + $0x380] sm:$0xf] %v1047
    %2324 = vst [vmem:[%s3 + $0x388] sm:$0xf] %v1061
    %2325 = vst [vmem:[%s3 + $0x390] sm:$0xf] %v1075
    %2326 = vst [vmem:[%s3 + $0x398] sm:$0xf] %v1089
    %2327 = vst [vmem:[%s3 + $0x3a0] sm:$0xf] %v1103
    %2328 = vst [vmem:[%s3 + $0x3a8] sm:$0xf] %v1117
    %2329 = vst [vmem:[%s3 + $0x3b0] sm:$0xf] %v1131
    %2330 = vst [vmem:[%s3 + $0x3b8] sm:$0xf] %v1145
    %2331 = vst [vmem:[%s3 + $0x3c0] sm:$0xf] %v1159
    %2332 = vst [vmem:[%s3 + $0x3c8] sm:$0xf] %v1173
    %2333 = vst [vmem:[%s3 + $0x3d0] sm:$0xf] %v1187
    %2334 = vst [vmem:[%s3 + $0x3d8] sm:$0xf] %v1201
    %2335 = vst [vmem:[%s3 + $0x3e0] sm:$0xf] %v1215
    %2336 = vst [vmem:[%s3 + $0x3e8] sm:$0xf] %v1229
    %2337 = vst [vmem:[%s3 + $0x3f0] sm:$0xf] %v1243
    %2338 = vst [vmem:[%s3 + $0x3f8] sm:$0xf] %v1257
    %2339 = vst [vmem:[%s3 + $0x400] sm:$0xf] %v1271
    %2340 = vst [vmem:[%s3 + $0x408] sm:$0xf] %v1285
    %2341 = vst [vmem:[%s3 + $0x410] sm:$0xf] %v1299
    %2342 = vst [vmem:[%s3 + $0x418] sm:$0xf] %v1313
    %2343 = vst [vmem:[%s3 + $0x420] sm:$0xf] %v1327
    %2344 = vst [vmem:[%s3 + $0x428] sm:$0xf] %v1341
    %2345 = vst [vmem:[%s3 + $0x430] sm:$0xf] %v1355
    %2346 = vst [vmem:[%s3 + $0x438] sm:$0xf] %v1369
    %2347 = vst [vmem:[%s3 + $0x440] sm:$0xf] %v1383
    %2348 = vst [vmem:[%s3 + $0x448] sm:$0xf] %v1397
    %2349 = vst [vmem:[%s3 + $0x450] sm:$0xf] %v1411
    %2350 = vst [vmem:[%s3 + $0x458] sm:$0xf] %v1425
    %2351 = vst [vmem:[%s3 + $0x460] sm:$0xf] %v1439
    %2352 = vst [vmem:[%s3 + $0x468] sm:$0xf] %v1453
    %2353 = vst [vmem:[%s3 + $0x470] sm:$0xf] %v1467
    %2354 = vst [vmem:[%s3 + $0x478] sm:$0xf] %v1481
    %2355 = vst [vmem:[%s3 + $0x480] sm:$0xf] %v1495
    %2356 = vst [vmem:[%s3 + $0x488] sm:$0xf] %v1509
    %2357 = vst [vmem:[%s3 + $0x490] sm:$0xf] %v1523
    %2358 = vst [vmem:[%s3 + $0x498] sm:$0xf] %v1537
    %2359 = vst [vmem:[%s3 + $0x4a0] sm:$0xf] %v1551
    %2360 = vst [vmem:[%s3 + $0x4a8] sm:$0xf] %v1565
    %2361 = vst [vmem:[%s3 + $0x4b0] sm:$0xf] %v1579
    %2362 = vst [vmem:[%s3 + $0x4b8] sm:$0xf] %v1593
    %2363 = vst [vmem:[%s3 + $0x4c0] sm:$0xf] %v1607
    %2364 = vst [vmem:[%s3 + $0x4c8] sm:$0xf] %v1621
    %2365 = vst [vmem:[%s3 + $0x4d0] sm:$0xf] %v1635
    %2366 = vst [vmem:[%s3 + $0x4d8] sm:$0xf] %v1649
    %2367 = vst [vmem:[%s3 + $0x4e0] sm:$0xf] %v1663
    %2368 = vst [vmem:[%s3 + $0x4e8] sm:$0xf] %v1677
    %2369 = vst [vmem:[%s3 + $0x4f0] sm:$0xf] %v1691
    %2370 = vst [vmem:[%s3 + $0x4f8] sm:$0xf] %v1705
    %2371 = vst [vmem:[%s3 + $0x500] sm:$0xf] %v1719
    %2372 = vst [vmem:[%s3 + $0x508] sm:$0xf] %v1733
    %2373 = vst [vmem:[%s3 + $0x510] sm:$0xf] %v1747
    %2374 = vst [vmem:[%s3 + $0x518] sm:$0xf] %v1761
    %2375 = vst [vmem:[%s3 + $0x520] sm:$0xf] %v1775
    %2376 = vst [vmem:[%s3 + $0x528] sm:$0xf] %v1789
    %2377 = vst [vmem:[%s3 + $0x530] sm:$0xf] %v1803
    %2378 = vst [vmem:[%s3 + $0x538] sm:$0xf] %v1817
    %2379 = vst [vmem:[%s3 + $0x540] sm:$0xf] %v1831
    %2380 = vst [vmem:[%s3 + $0x548] sm:$0xf] %v1845
    %2381 = vst [vmem:[%s3 + $0x550] sm:$0xf] %v1859
    %2382 = vst [vmem:[%s3 + $0x558] sm:$0xf] %v1873
    %2383 = vst [vmem:[%s3 + $0x560] sm:$0xf] %v1887
    %2384 = vst [vmem:[%s3 + $0x568] sm:$0xf] %v1901
    %2385 = vst [vmem:[%s3 + $0x570] sm:$0xf] %v1915
    %2386 = vst [vmem:[%s3 + $0x578] sm:$0xf] %v1929
    %2387 = vst [vmem:[%s3 + $0x580] sm:$0xf] %v1943
    %2388 = vst [vmem:[%s3 + $0x588] sm:$0xf] %v1957
    %2389 = vst [vmem:[%s3 + $0x590] sm:$0xf] %v1971
    %2390 = vst [vmem:[%s3 + $0x598] sm:$0xf] %v1985
    %2391 = vst [vmem:[%s3 + $0x5a0] sm:$0xf] %v1999
    %2392 = vst [vmem:[%s3 + $0x5a8] sm:$0xf] %v2013
    %2393 = vst [vmem:[%s3 + $0x5b0] sm:$0xf] %v2027
    %2394 = vst [vmem:[%s3 + $0x5b8] sm:$0xf] %v2041
    %2395 = vst [vmem:[%s3 + $0x5c0] sm:$0xf] %v2055
    %2396 = vst [vmem:[%s3 + $0x5c8] sm:$0xf] %v2069
    %2397 = vst [vmem:[%s3 + $0x5d0] sm:$0xf] %v2083
    %2398 = vst [vmem:[%s3 + $0x5d8] sm:$0xf] %v2097
    %2399 = vst [vmem:[%s3 + $0x5e0] sm:$0xf] %v2111
    %2400 = vst [vmem:[%s3 + $0x5e8] sm:$0xf] %v2125
    %2401 = vst [vmem:[%s3 + $0x5f0] sm:$0xf] %v2139
    %2402 = vst [vmem:[%s3 + $0x5f8] sm:$0xf] %v2153
    %2403 = vst [vmem:[%s3 + $0x600] sm:$0xf] %v2167
    %2404 = vst [vmem:[%s3 + $0x608] sm:$0xf] %v2181
    %2405 = vst [vmem:[%s3 + $0x610] sm:$0xf] %v2195
    %2406 = vst [vmem:[%s3 + $0x618] sm:$0xf] %v2209
    // Predicated region
    $region18: #{forward.5} parent=1 // pred_check
      _
    $region19: #{forward.5} parent=1 // pred_check_branch
      %2408 = sbr.rel (0) target = $region21
    $region20: #{forward.5} parent=1 // pred_region
      _
    $region21: #{forward.5} parent=1 // pred_fallthru
      _
    // Predicated region
    $region22: #{forward.5} parent=1 // pred_check
      _
    $region23: #{forward.5} parent=1 // pred_check_branch
      %2410 = sbr.rel (0) target = $region25
    $region24: #{forward.5} parent=1 // pred_region
      _
    $region25: #{forward.5} parent=1 // pred_fallthru
      _
    %2411 = vsyncpa [#allocation3], 1

</llo_original>
